<compile_context>
chip_gen: v7x
topology: tpu7x:2x2x1
jax: 0.10.0
libtpu: 0.0.40
codegen_flags: <defaults>
</compile_context>

<pallas_src>
import math

import numpy as np

import jax
import jax.numpy as jnp
from jax.experimental import pallas as pl
from jax.experimental.pallas import tpu as pltpu

NEG_SLOPE = 0.05
LANE = 128


def _lrelu(v):
    return jnp.where(v >= 0.0, v, NEG_SLOPE * v)


def _round_up(v, m):
    return ((v + m - 1) // m) * m


# ---------------------------------------------------------------------------
# Kernel 1: fused encoder + decoder conv stack (one grid step == one sample)
# ---------------------------------------------------------------------------
def _conv3(a, w_ref, b_ref, act):
    """k=3 / s=1 / p=1 conv (or flipped-kernel conv-transpose), (C, L) layout.

    a     : (Cin, L)       channels-on-sublanes, length-on-lanes
    w_ref : (3*Cout, Cin)  taps stacked along M: rows [tap0; tap1; tap2]
                           (tap k multiplies x[:, l + k - 1])
    b_ref : (Cout, 1)

    One MXU matmul per layer; the +/-1 spatial shifts are XLU rolls on the
    lane axis with boundary columns zeroed (== zero padding).
    """
    cout = b_ref.shape[0]
    L = a.shape[1]
    u = jnp.dot(w_ref[...], a, preferred_element_type=jnp.float32)   # (3*Cout, L)
    u_lo = u[0:cout]              # tap 0 -> needs x[l-1]
    u_mid = u[cout:2 * cout]      # tap 1 -> x[l]
    u_hi = u[2 * cout:3 * cout]   # tap 2 -> needs x[l+1]

    col = jax.lax.broadcasted_iota(jnp.int32, (cout, L), 1)
    t_lo = jnp.where(col == 0, 0.0, pltpu.roll(u_lo, shift=1, axis=1))
    t_hi = jnp.where(col == L - 1, 0.0, pltpu.roll(u_hi, shift=L - 1, axis=1))

    y = t_lo + u_mid + t_hi + b_ref[...]
    return _lrelu(y) if act else y


def _conv_stack_kernel(
        x_ref,
        we1, be1, we2, be2, we3, be3,
        wd1, bd1, wd2, bd2, wd3, bd3,
        p1, p2, p3, u1, u2, u3,
        h_ref, xrec_ref):
    x = x_ref[0]                                                     # (Cin, Lpad)

    # ----- encoder: [Conv -> LeakyReLU -> AvgPool(2)] x 3 -----
    a = _conv3(x, we1, be1, act=True)                                # (h1, Lpad)
    a = jnp.dot(a, p1[...], preferred_element_type=jnp.float32)      # (h1, L1)
    a = _conv3(a, we2, be2, act=True)                                # (h2, L1)
    a = jnp.dot(a, p2[...], preferred_element_type=jnp.float32)      # (h2, L2)
    a = _conv3(a, we3, be3, act=True)                                # (h3, L2)
    h = jnp.dot(a, p3[...], preferred_element_type=jnp.float32)      # (h3, L3)
    h_ref[0] = h                       # NCL latent == torch Flatten order

    # ----- decoder: [Upsample -> LeakyReLU -> ConvT] x 3 -----
    # LeakyReLU folded before the nearest upsample (they commute).
    d = jnp.dot(_lrelu(h), u1[...], preferred_element_type=jnp.float32)   # (h3, 2*L3)
    d = _conv3(d, wd1, bd1, act=False)                                    # (h2, 2*L3)
    d = jnp.dot(_lrelu(d), u2[...], preferred_element_type=jnp.float32)   # (h2, 4*L3)
    d = _conv3(d, wd2, bd2, act=False)                                    # (h1, 4*L3)
    d = jnp.dot(_lrelu(d), u3[...], preferred_element_type=jnp.float32)   # (h1, 8*L3)
    d = _conv3(d, wd3, bd3, act=False)                                    # (Cin, 8*L3)
    xrec_ref[0] = d                    # NCL reconstruction, no wrapper transpose


def _conv_stack_call(x_pad, prep):
    n, cin, lpad = x_pad.shape
    h3 = prep['w_e3'].shape[0] // 3
    l3 = prep['p3'].shape[1]
    c_out = prep['w_d3'].shape[0] // 3
    l_out = prep['u3'].shape[1]

    args = [x_pad]
    in_specs = [pl.BlockSpec((1, cin, lpad), lambda i: (i, 0, 0))]
    for name in ('e1', 'e2', 'e3', 'd1', 'd2', 'd3'):
        for pref in ('w_', 'b_'):
            a = prep[pref + name]
            args.append(a)
            in_specs.append(pl.BlockSpec(a.shape, lambda i: (0, 0)))
    for name in ('p1', 'p2', 'p3', 'u1', 'u2', 'u3'):
        a = prep[name]
        args.append(a)
        in_specs.append(pl.BlockSpec(a.shape, lambda i: (0, 0)))

    out_shape = (jax.ShapeDtypeStruct((n, h3, l3), jnp.float32),
                 jax.ShapeDtypeStruct((n, c_out, l_out), jnp.float32))
    out_specs = (pl.BlockSpec((1, h3, l3), lambda i: (i, 0, 0)),
                 pl.BlockSpec((1, c_out, l_out), lambda i: (i, 0, 0)))

    return pl.pallas_call(
        _conv_stack_kernel,
        grid=(n,),
        in_specs=in_specs,
        out_specs=out_specs,
        out_shape=out_shape,
        compiler_params=pltpu.CompilerParams(
            dimension_semantics=("parallel",)),
    )(*args)


# ---------------------------------------------------------------------------
# Kernel 2: fused mapping / predictor / classifier heads (bf16 weights, f32 acc)
# ---------------------------------------------------------------------------
def _heads_kernel(z_ref, w1_ref, b1_ref, mw2_ref, mb2_ref, pw2_ref, pb2_ref,
                  cw2_ref, cb2_ref, zmap_ref, pred_ref, cls_ref):
    z = z_ref[...].astype(jnp.bfloat16)                              # (N, flat)

    # single concatenated layer-1 matmul for all three heads
    a1 = jnp.dot(z, w1_ref[...], preferred_element_type=jnp.float32) + b1_ref[...]
    a1 = _lrelu(a1).astype(jnp.bfloat16)                             # (N, 2048)

    lat = mw2_ref.shape[0]
    ph = pw2_ref.shape[0]
    ch = cw2_ref.shape[0]
    off_p = _round_up(lat, LANE)          # chunks are lane-aligned in w1cat
    off_c = off_p + _round_up(ph, LANE)

    zmap_ref[...] = (jnp.dot(a1[:, :lat], mw2_ref[...],
                             preferred_element_type=jnp.float32) + mb2_ref[...])
    pred_ref[...] = (jnp.dot(a1[:, off_p:off_p + ph], pw2_ref[...],
                             preferred_element_type=jnp.float32) + pb2_ref[...])
    cls_ref[...] = (jnp.dot(a1[:, off_c:off_c + ch], cw2_ref[...],
                            preferred_element_type=jnp.float32) + cb2_ref[...])


def _heads_call(z, prep):
    n = z.shape[0]
    latent = prep['mw2'].shape[1]
    n_pred = prep['pw2'].shape[1]
    n_cls = prep['cw2'].shape[1]
    out_shape = (jax.ShapeDtypeStruct((n, latent), jnp.float32),
                 jax.ShapeDtypeStruct((n, n_pred), jnp.float32),
                 jax.ShapeDtypeStruct((n, n_cls), jnp.float32))
    return pl.pallas_call(
        _heads_kernel,
        out_shape=out_shape,
        compiler_params=pltpu.CompilerParams(
            vmem_limit_bytes=24 * 1024 * 1024),   # ~5.5 MB bf16 weights resident
    )(z, prep['w1cat'], prep['b1cat'],
      prep['mw2'], prep['mb2'], prep['pw2'], prep['pb2'],
      prep['cw2'], prep['cb2'])


# ---------------------------------------------------------------------------
# One-time parameter preprocessing (hoisted out of the per-call path)
# ---------------------------------------------------------------------------
def preprocess_params(params, window_size):
    l0 = window_size                    # 193
    lpad = _round_up(l0, LANE)          # 256: full lane tiles for layer-1 ops
    l1, l2, l3 = l0 // 2, l0 // 4, l0 // 8

    def conv_stack_w(w):    # Conv1d (Cout, Cin, 3) -> (3*Cout, Cin), rows [tap0;tap1;tap2]
        w = jnp.asarray(w, jnp.float32)
        cout, cin, _ = w.shape
        return jnp.transpose(w, (2, 0, 1)).reshape(3 * cout, cin)

    def convt_stack_w(w):   # ConvTranspose1d (Cin, Cout, 3) -> flipped eq. conv -> (3*Cout, Cin)
        w = jnp.asarray(w, jnp.float32)
        weq = jnp.transpose(w[:, :, ::-1], (1, 0, 2))
        cout, cin, _ = weq.shape
        return jnp.transpose(weq, (2, 0, 1)).reshape(3 * cout, cin)

    def colv(b):
        return jnp.asarray(b, jnp.float32).reshape(-1, 1)

    def rowv(b):
        return jnp.asarray(b, jnp.float32).reshape(1, -1)

    def pool_mat(lin_len, lout):        # AvgPool1d(2,2) as a right-multiply (lin, lout)
        m = np.zeros((lin_len, lout), np.float32)
        r = np.arange(lout)
        m[2 * r, r] = 0.5
        m[2 * r + 1, r] = 0.5
        return jnp.asarray(m)

    def up_mat(lin_len):                # nearest Upsample(x2) as right-multiply (lin, 2*lin)
        m = np.zeros((lin_len, 2 * lin_len), np.float32)
        r = np.arange(lin_len)
        m[r, 2 * r] = 1.0
        m[r, 2 * r + 1] = 1.0
        return jnp.asarray(m)

    prep = {}
    prep['w_e1'] = conv_stack_w(params['ew1']); prep['b_e1'] = colv(params['eb1'])
    prep['w_e2'] = conv_stack_w(params['ew2']); prep['b_e2'] = colv(params['eb2'])
    prep['w_e3'] = conv_stack_w(params['ew3']); prep['b_e3'] = colv(params['eb3'])
    prep['w_d1'] = convt_stack_w(params['dw1']); prep['b_d1'] = colv(params['db1'])
    prep['w_d2'] = convt_stack_w(params['dw2']); prep['b_d2'] = colv(params['db2'])
    prep['w_d3'] = convt_stack_w(params['dw3']); prep['b_d3'] = colv(params['db3'])

    prep['p1'] = pool_mat(lpad, l1)     # (256, 96) — only the 192 valid conv cols are read
    prep['p2'] = pool_mat(l1, l2)       # (96, 48)
    prep['p3'] = pool_mat(l2, l3)       # (48, 24)
    prep['u1'] = up_mat(l3)             # (24, 48)
    prep['u2'] = up_mat(2 * l3)         # (48, 96)
    prep['u3'] = up_mat(4 * l3)         # (96, 192)

    # Heads: concatenated layer-1 weights (columns padded to lane-aligned chunks),
    # big matrices in bf16 (HBM-bandwidth bound kernel); f32 biases.
    def pad_cols(w):
        c = w.shape[1]
        return jnp.pad(w, ((0, 0), (0, _round_up(c, LANE) - c)))

    mw1t = jnp.asarray(params['mw1'], jnp.float32).T
    pw1t = jnp.asarray(params['pw1'], jnp.float32).T
    cw1t = jnp.asarray(params['cw1'], jnp.float32).T
    prep['w1cat'] = jnp.concatenate(
        [pad_cols(mw1t), pad_cols(pw1t), pad_cols(cw1t)], axis=1).astype(jnp.bfloat16)
    prep['b1cat'] = jnp.concatenate(
        [pad_cols(rowv(params['mb1'])), pad_cols(rowv(params['pb1'])),
         pad_cols(rowv(params['cb1']))], axis=1)

    prep['mw2'] = jnp.asarray(params['mw2'], jnp.float32).T.astype(jnp.bfloat16)
    prep['mb2'] = rowv(params['mb2'])
    prep['pw2'] = jnp.asarray(params['pw2'], jnp.float32).T.astype(jnp.bfloat16)
    prep['pb2'] = rowv(params['pb2'])
    prep['cw2'] = jnp.asarray(params['cw2'], jnp.float32).T.astype(jnp.bfloat16)
    prep['cb2'] = rowv(params['cb2'])
    return prep


# ---------------------------------------------------------------------------
# Model: parameters + forward
# ---------------------------------------------------------------------------
def init_params(key, c_in, h1, h2, h3, latent, window):
    flat = h3 * ((window - 1) // 8)
    p_hid = (flat + c_in) // 2
    c_hid = (flat + 2) // 2
    specs = {
        'ew1': ((h1, c_in, 3), c_in * 3), 'eb1': ((h1,), c_in * 3),
        'ew2': ((h2, h1, 3), h1 * 3),     'eb2': ((h2,), h1 * 3),
        'ew3': ((h3, h2, 3), h2 * 3),     'eb3': ((h3,), h2 * 3),
        'dw1': ((h3, h2, 3), h3 * 3),     'db1': ((h2,), h3 * 3),
        'dw2': ((h2, h1, 3), h2 * 3),     'db2': ((h1,), h2 * 3),
        'dw3': ((h1, c_in, 3), h1 * 3),   'db3': ((c_in,), h1 * 3),
        'mw1': ((latent, flat), flat),    'mb1': ((latent,), flat),
        'mw2': ((latent, latent), latent), 'mb2': ((latent,), latent),
        'pw1': ((p_hid, flat), flat),     'pb1': ((p_hid,), flat),
        'pw2': ((c_in, p_hid), p_hid),    'pb2': ((c_in,), p_hid),
        'cw1': ((c_hid, flat), flat),     'cb1': ((c_hid,), flat),
        'cw2': ((2, c_hid), c_hid),       'cb2': ((2,), c_hid),
    }
    keys = jax.random.split(key, len(specs))
    params = {}
    for k_, (name, (shape, fan_in)) in zip(keys, specs.items()):
        bound = 1.0 / math.sqrt(fan_in)
        params[name] = jax.random.uniform(k_, shape, jnp.float32, -bound, bound)
    return params


def conv_autoencoder_forward(x_ncl, prep):
    """x_ncl: (N, C_in, window_size) float32 — NCL layout, as in PyTorch."""
    n, _, l = x_ncl.shape
    lpad = prep['p1'].shape[0]
    # Zero-pad the length to a full lane tile; the AvgPool matrix ignores the tail.
    x_pad = jnp.pad(x_ncl.astype(jnp.float32), ((0, 0), (0, 0), (0, lpad - l)))

    h, x_reconstructed = _conv_stack_call(x_pad, prep)   # (N, h3, L3) NCL, (N, Cin, 8*L3) NCL

    # torch Flatten() of the NCL feature map == contiguous reshape (free).
    z = h.reshape(n, -1)

    z_mapped, prediction, classes = _heads_call(z, prep)
    return (x_reconstructed,
            jnp.squeeze(z),
            jnp.squeeze(prediction),
            classes,
            jnp.squeeze(z_mapped))


# ---------------------------------------------------------------------------
# Pure-JAX (XLA) reference of the PyTorch forward, for numerical validation
# ---------------------------------------------------------------------------
def _reference_forward(x_ncl, params):
    def conv1d(x, w, b):                       # w: (Cout, Cin, 3), pad=1
        y = jax.lax.conv_general_dilated(
            x, w, window_strides=(1,), padding=[(1, 1)],
            dimension_numbers=('NCH', 'OIH', 'NCH'))
        return y + b[None, :, None]

    def convt1d(x, w, b):                      # w: (Cin, Cout, 3), stride=1, pad=1
        w2 = jnp.transpose(w[:, :, ::-1], (1, 0, 2))
        y = jax.lax.conv_general_dilated(
            x, w2, window_strides=(1,), padding=[(1, 1)],
            dimension_numbers=('NCH', 'OIH', 'NCH'))
        return y + b[None, :, None]

    def pool2(x):
        n, c, l = x.shape
        return x[:, :, :2 * (l // 2)].reshape(n, c, l // 2, 2).mean(-1)

    def linear(a, w, b):
        return a @ w.T + b

    h = pool2(_lrelu(conv1d(x_ncl, params['ew1'], params['eb1'])))
    h = pool2(_lrelu(conv1d(h, params['ew2'], params['eb2'])))
    h = pool2(_lrelu(conv1d(h, params['ew3'], params['eb3'])))
    n = h.shape[0]
    z = h.reshape(n, -1)
    d = convt1d(_lrelu(jnp.repeat(h, 2, axis=2)), params['dw1'], params['db1'])
    d = convt1d(_lrelu(jnp.repeat(d, 2, axis=2)), params['dw2'], params['db2'])
    d = convt1d(_lrelu(jnp.repeat(d, 2, axis=2)), params['dw3'], params['db3'])
    m = linear(_lrelu(linear(z, params['mw1'], params['mb1'])), params['mw2'], params['mb2'])
    p = linear(_lrelu(linear(z, params['pw1'], params['pb1'])), params['pw2'], params['pb2'])
    c = linear(_lrelu(linear(z, params['cw1'], params['cb1'])), params['cw2'], params['cb2'])
    return d, z, p, c, m


if __name__ == "__main__":
    # Module-consistent shapes (defaults from the source file).
    input_channels = 4
    hidden1_dim, hidden2_dim, hidden3_dim = 16, 24, 32
    latent_dim = 1024
    window_size = 192 + 1
    batch = 2

    key = jax.random.PRNGKey(0)
    pkey, xkey = jax.random.split(key)
    params = init_params(pkey, input_channels, hidden1_dim, hidden2_dim,
                         hidden3_dim, latent_dim, window_size)
    prep = preprocess_params(params, window_size)      # one-time weight re-layout
    x = jax.random.normal(xkey, (batch, input_channels, window_size), jnp.float32)

    fwd = jax.jit(conv_autoencoder_forward)
    outs = fwd(x, prep)
    jax.block_until_ready(outs)
    x_rec, z, pred, classes, z_mapped = outs

    flat = hidden3_dim * ((window_size - 1) // 8)
    assert x_rec.shape == (batch, input_channels, window_size - 1)
    assert z.shape == (batch, flat)
    assert pred.shape == (batch, input_channels)
    assert classes.shape == (batch, 2)
    assert z_mapped.shape == (batch, latent_dim)

    # Validate against a pure-JAX reference of the PyTorch module.
    # (2e-2 tolerance covers TPU default matmul precision + bf16 head weights.)
    ref = _reference_forward(x, params)
    for got, want in zip((x_rec, z, pred, classes, z_mapped), ref):
        np.testing.assert_allclose(np.asarray(got), np.asarray(want),
                                   rtol=2e-2, atol=2e-2)

    print("KERNEL_OK")
</pallas_src>

<mosaic_0001>
module attributes {stable_mosaic.version = 11 : i64} {
  func.func @_conv_stack_kernel(%arg0: i32, %arg1: memref<1x4x256xf32, #tpu.memory_space<vmem>>, %arg2: memref<48x4xf32, #tpu.memory_space<vmem>>, %arg3: memref<16x1xf32, #tpu.memory_space<vmem>>, %arg4: memref<72x16xf32, #tpu.memory_space<vmem>>, %arg5: memref<24x1xf32, #tpu.memory_space<vmem>>, %arg6: memref<96x24xf32, #tpu.memory_space<vmem>>, %arg7: memref<32x1xf32, #tpu.memory_space<vmem>>, %arg8: memref<72x32xf32, #tpu.memory_space<vmem>>, %arg9: memref<24x1xf32, #tpu.memory_space<vmem>>, %arg10: memref<48x24xf32, #tpu.memory_space<vmem>>, %arg11: memref<16x1xf32, #tpu.memory_space<vmem>>, %arg12: memref<12x16xf32, #tpu.memory_space<vmem>>, %arg13: memref<4x1xf32, #tpu.memory_space<vmem>>, %arg14: memref<256x96xf32, #tpu.memory_space<vmem>>, %arg15: memref<96x48xf32, #tpu.memory_space<vmem>>, %arg16: memref<48x24xf32, #tpu.memory_space<vmem>>, %arg17: memref<24x48xf32, #tpu.memory_space<vmem>>, %arg18: memref<48x96xf32, #tpu.memory_space<vmem>>, %arg19: memref<96x192xf32, #tpu.memory_space<vmem>>, %arg20: memref<1x32x24xf32, #tpu.memory_space<vmem>>, %arg21: memref<1x4x192xf32, #tpu.memory_space<vmem>>) attributes {dimension_semantics = [#tpu.dimension_semantics<parallel>], iteration_bounds = array<i64: 2>, scalar_prefetch = 0 : i64, scratch_operands = 0 : i64, tpu.core_type = #tpu.core_type<tc>, window_params = [{transform_indices = @transform_0, window_bounds = array<i64: 1, 4, 256>}, {pipeline_mode = #tpu.pipeline_mode<synchronous>, transform_indices = @transform_1, window_bounds = array<i64: 48, 4>}, {pipeline_mode = #tpu.pipeline_mode<synchronous>, transform_indices = @transform_2, window_bounds = array<i64: 16, 1>}, {pipeline_mode = #tpu.pipeline_mode<synchronous>, transform_indices = @transform_3, window_bounds = array<i64: 72, 16>}, {pipeline_mode = #tpu.pipeline_mode<synchronous>, transform_indices = @transform_4, window_bounds = array<i64: 24, 1>}, {pipeline_mode = #tpu.pipeline_mode<synchronous>, transform_indices = @transform_5, window_bounds = array<i64: 96, 24>}, {pipeline_mode = #tpu.pipeline_mode<synchronous>, transform_indices = @transform_6, window_bounds = array<i64: 32, 1>}, {pipeline_mode = #tpu.pipeline_mode<synchronous>, transform_indices = @transform_7, window_bounds = array<i64: 72, 32>}, {pipeline_mode = #tpu.pipeline_mode<synchronous>, transform_indices = @transform_8, window_bounds = array<i64: 24, 1>}, {pipeline_mode = #tpu.pipeline_mode<synchronous>, transform_indices = @transform_9, window_bounds = array<i64: 48, 24>}, {pipeline_mode = #tpu.pipeline_mode<synchronous>, transform_indices = @transform_10, window_bounds = array<i64: 16, 1>}, {pipeline_mode = #tpu.pipeline_mode<synchronous>, transform_indices = @transform_11, window_bounds = array<i64: 12, 16>}, {pipeline_mode = #tpu.pipeline_mode<synchronous>, transform_indices = @transform_12, window_bounds = array<i64: 4, 1>}, {pipeline_mode = #tpu.pipeline_mode<synchronous>, transform_indices = @transform_13, window_bounds = array<i64: 256, 96>}, {pipeline_mode = #tpu.pipeline_mode<synchronous>, transform_indices = @transform_14, window_bounds = array<i64: 96, 48>}, {pipeline_mode = #tpu.pipeline_mode<synchronous>, transform_indices = @transform_15, window_bounds = array<i64: 48, 24>}, {pipeline_mode = #tpu.pipeline_mode<synchronous>, transform_indices = @transform_16, window_bounds = array<i64: 24, 48>}, {pipeline_mode = #tpu.pipeline_mode<synchronous>, transform_indices = @transform_17, window_bounds = array<i64: 48, 96>}, {pipeline_mode = #tpu.pipeline_mode<synchronous>, transform_indices = @transform_18, window_bounds = array<i64: 96, 192>}, {transform_indices = @transform_19, window_bounds = array<i64: 1, 32, 24>}, {transform_indices = @transform_20, window_bounds = array<i64: 1, 4, 192>}]} {
    %c0 = arith.constant 0 : index
    %c0_0 = arith.constant 0 : index
    %c0_1 = arith.constant 0 : index
    %0 = vector.load %arg1[%c0, %c0_0, %c0_1] : memref<1x4x256xf32, #tpu.memory_space<vmem>>, vector<1x4x256xf32>
    %1 = vector.shape_cast %0 : vector<1x4x256xf32> to vector<4x256xf32>
    %c0_2 = arith.constant 0 : index
    %c0_3 = arith.constant 0 : index
    %2 = vector.load %arg2[%c0_2, %c0_3] : memref<48x4xf32, #tpu.memory_space<vmem>>, vector<48x4xf32>
    %cst = arith.constant dense<0.000000e+00> : vector<48x256xf32>
    %3 = tpu.matmul %2, %1, %cst {dimension_numbers = #tpu.dot_dimension_numbers<[1], [0], [0], [1], [0, 0, 1, 1], [], []>} : vector<48x4xf32>, vector<4x256xf32>, vector<48x256xf32> -> vector<48x256xf32>
    %4 = vector.extract_strided_slice %3 {offsets = [0, 0], sizes = [16, 256], strides = [1, 1]} : vector<48x256xf32> to vector<16x256xf32>
    %5 = vector.extract_strided_slice %3 {offsets = [16, 0], sizes = [16, 256], strides = [1, 1]} : vector<48x256xf32> to vector<16x256xf32>
    %6 = vector.extract_strided_slice %3 {offsets = [32, 0], sizes = [16, 256], strides = [1, 1]} : vector<48x256xf32> to vector<16x256xf32>
    %7 = tpu.iota {dimensions = array<i32: 1>} : vector<16x256xi32>
    %c0_i32 = arith.constant 0 : i32
    %8 = vector.broadcast %c0_i32 : i32 to vector<16x256xi32>
    %9 = arith.cmpi eq, %7, %8 : vector<16x256xi32>
    %c1_i32 = arith.constant 1 : i32
    %10 = tpu.dynamic_rotate %4 by %c1_i32 dim 1 : vector<16x256xf32>, i32 -> vector<16x256xf32>
    %cst_4 = arith.constant 0.000000e+00 : f32
    %11 = vector.broadcast %cst_4 : f32 to vector<16x256xf32>
    %12 = arith.select %9, %11, %10 : vector<16x256xi1>, vector<16x256xf32>
    %c255_i32 = arith.constant 255 : i32
    %13 = vector.broadcast %c255_i32 : i32 to vector<16x256xi32>
    %14 = arith.cmpi eq, %7, %13 : vector<16x256xi32>
    %c255_i32_5 = arith.constant 255 : i32
    %15 = tpu.dynamic_rotate %6 by %c255_i32_5 dim 1 : vector<16x256xf32>, i32 -> vector<16x256xf32>
    %cst_6 = arith.constant 0.000000e+00 : f32
    %16 = vector.broadcast %cst_6 : f32 to vector<16x256xf32>
    %17 = arith.select %14, %16, %15 : vector<16x256xi1>, vector<16x256xf32>
    %18 = arith.addf %12, %5 : vector<16x256xf32>
    %19 = arith.addf %18, %17 : vector<16x256xf32>
    %c0_7 = arith.constant 0 : index
    %c0_8 = arith.constant 0 : index
    %20 = vector.load %arg3[%c0_7, %c0_8] : memref<16x1xf32, #tpu.memory_space<vmem>>, vector<16x1xf32>
    %21 = vector.broadcast %20 : vector<16x1xf32> to vector<16x256xf32>
    %22 = arith.addf %19, %21 : vector<16x256xf32>
    %cst_9 = arith.constant 0.000000e+00 : f32
    %23 = vector.broadcast %cst_9 : f32 to vector<16x256xf32>
    %24 = arith.cmpf oge, %22, %23 : vector<16x256xf32>
    %cst_10 = arith.constant 5.000000e-02 : f32
    %25 = vector.broadcast %cst_10 : f32 to vector<16x256xf32>
    %26 = arith.mulf %25, %22 : vector<16x256xf32>
    %27 = arith.select %24, %22, %26 : vector<16x256xi1>, vector<16x256xf32>
    %c0_11 = arith.constant 0 : index
    %c0_12 = arith.constant 0 : index
    %28 = vector.load %arg14[%c0_11, %c0_12] : memref<256x96xf32, #tpu.memory_space<vmem>>, vector<256x96xf32>
    %cst_13 = arith.constant dense<0.000000e+00> : vector<16x96xf32>
    %29 = tpu.matmul %27, %28, %cst_13 {dimension_numbers = #tpu.dot_dimension_numbers<[1], [0], [0], [1], [0, 0, 1, 1], [], []>} : vector<16x256xf32>, vector<256x96xf32>, vector<16x96xf32> -> vector<16x96xf32>
    %c0_14 = arith.constant 0 : index
    %c0_15 = arith.constant 0 : index
    %30 = vector.load %arg4[%c0_14, %c0_15] : memref<72x16xf32, #tpu.memory_space<vmem>>, vector<72x16xf32>
    %cst_16 = arith.constant dense<0.000000e+00> : vector<72x96xf32>
    %31 = tpu.matmul %30, %29, %cst_16 {dimension_numbers = #tpu.dot_dimension_numbers<[1], [0], [0], [1], [0, 0, 1, 1], [], []>} : vector<72x16xf32>, vector<16x96xf32>, vector<72x96xf32> -> vector<72x96xf32>
    %32 = vector.extract_strided_slice %31 {offsets = [0, 0], sizes = [24, 96], strides = [1, 1]} : vector<72x96xf32> to vector<24x96xf32>
    %33 = vector.extract_strided_slice %31 {offsets = [24, 0], sizes = [24, 96], strides = [1, 1]} : vector<72x96xf32> to vector<24x96xf32>
    %34 = vector.extract_strided_slice %31 {offsets = [48, 0], sizes = [24, 96], strides = [1, 1]} : vector<72x96xf32> to vector<24x96xf32>
    %35 = tpu.iota {dimensions = array<i32: 1>} : vector<24x96xi32>
    %c0_i32_17 = arith.constant 0 : i32
    %36 = vector.broadcast %c0_i32_17 : i32 to vector<24x96xi32>
    %37 = arith.cmpi eq, %35, %36 : vector<24x96xi32>
    %c1_i32_18 = arith.constant 1 : i32
    %38 = tpu.dynamic_rotate %32 by %c1_i32_18 dim 1 : vector<24x96xf32>, i32 -> vector<24x96xf32>
    %cst_19 = arith.constant 0.000000e+00 : f32
    %39 = vector.broadcast %cst_19 : f32 to vector<24x96xf32>
    %40 = arith.select %37, %39, %38 : vector<24x96xi1>, vector<24x96xf32>
    %c95_i32 = arith.constant 95 : i32
    %41 = vector.broadcast %c95_i32 : i32 to vector<24x96xi32>
    %42 = arith.cmpi eq, %35, %41 : vector<24x96xi32>
    %c95_i32_20 = arith.constant 95 : i32
    %43 = tpu.dynamic_rotate %34 by %c95_i32_20 dim 1 : vector<24x96xf32>, i32 -> vector<24x96xf32>
    %cst_21 = arith.constant 0.000000e+00 : f32
    %44 = vector.broadcast %cst_21 : f32 to vector<24x96xf32>
    %45 = arith.select %42, %44, %43 : vector<24x96xi1>, vector<24x96xf32>
    %46 = arith.addf %40, %33 : vector<24x96xf32>
    %47 = arith.addf %46, %45 : vector<24x96xf32>
    %c0_22 = arith.constant 0 : index
    %c0_23 = arith.constant 0 : index
    %48 = vector.load %arg5[%c0_22, %c0_23] : memref<24x1xf32, #tpu.memory_space<vmem>>, vector<24x1xf32>
    %49 = vector.broadcast %48 : vector<24x1xf32> to vector<24x96xf32>
    %50 = arith.addf %47, %49 : vector<24x96xf32>
    %cst_24 = arith.constant 0.000000e+00 : f32
    %51 = vector.broadcast %cst_24 : f32 to vector<24x96xf32>
    %52 = arith.cmpf oge, %50, %51 : vector<24x96xf32>
    %cst_25 = arith.constant 5.000000e-02 : f32
    %53 = vector.broadcast %cst_25 : f32 to vector<24x96xf32>
    %54 = arith.mulf %53, %50 : vector<24x96xf32>
    %55 = arith.select %52, %50, %54 : vector<24x96xi1>, vector<24x96xf32>
    %c0_26 = arith.constant 0 : index
    %c0_27 = arith.constant 0 : index
    %56 = vector.load %arg15[%c0_26, %c0_27] : memref<96x48xf32, #tpu.memory_space<vmem>>, vector<96x48xf32>
    %cst_28 = arith.constant dense<0.000000e+00> : vector<24x48xf32>
    %57 = tpu.matmul %55, %56, %cst_28 {dimension_numbers = #tpu.dot_dimension_numbers<[1], [0], [0], [1], [0, 0, 1, 1], [], []>} : vector<24x96xf32>, vector<96x48xf32>, vector<24x48xf32> -> vector<24x48xf32>
    %c0_29 = arith.constant 0 : index
    %c0_30 = arith.constant 0 : index
    %58 = vector.load %arg6[%c0_29, %c0_30] : memref<96x24xf32, #tpu.memory_space<vmem>>, vector<96x24xf32>
    %cst_31 = arith.constant dense<0.000000e+00> : vector<96x48xf32>
    %59 = tpu.matmul %58, %57, %cst_31 {dimension_numbers = #tpu.dot_dimension_numbers<[1], [0], [0], [1], [0, 0, 1, 1], [], []>} : vector<96x24xf32>, vector<24x48xf32>, vector<96x48xf32> -> vector<96x48xf32>
    %60 = vector.extract_strided_slice %59 {offsets = [0, 0], sizes = [32, 48], strides = [1, 1]} : vector<96x48xf32> to vector<32x48xf32>
    %61 = vector.extract_strided_slice %59 {offsets = [32, 0], sizes = [32, 48], strides = [1, 1]} : vector<96x48xf32> to vector<32x48xf32>
    %62 = vector.extract_strided_slice %59 {offsets = [64, 0], sizes = [32, 48], strides = [1, 1]} : vector<96x48xf32> to vector<32x48xf32>
    %63 = tpu.iota {dimensions = array<i32: 1>} : vector<32x48xi32>
    %c0_i32_32 = arith.constant 0 : i32
    %64 = vector.broadcast %c0_i32_32 : i32 to vector<32x48xi32>
    %65 = arith.cmpi eq, %63, %64 : vector<32x48xi32>
    %c1_i32_33 = arith.constant 1 : i32
    %66 = tpu.dynamic_rotate %60 by %c1_i32_33 dim 1 : vector<32x48xf32>, i32 -> vector<32x48xf32>
    %cst_34 = arith.constant 0.000000e+00 : f32
    %67 = vector.broadcast %cst_34 : f32 to vector<32x48xf32>
    %68 = arith.select %65, %67, %66 : vector<32x48xi1>, vector<32x48xf32>
    %c47_i32 = arith.constant 47 : i32
    %69 = vector.broadcast %c47_i32 : i32 to vector<32x48xi32>
    %70 = arith.cmpi eq, %63, %69 : vector<32x48xi32>
    %c47_i32_35 = arith.constant 47 : i32
    %71 = tpu.dynamic_rotate %62 by %c47_i32_35 dim 1 : vector<32x48xf32>, i32 -> vector<32x48xf32>
    %cst_36 = arith.constant 0.000000e+00 : f32
    %72 = vector.broadcast %cst_36 : f32 to vector<32x48xf32>
    %73 = arith.select %70, %72, %71 : vector<32x48xi1>, vector<32x48xf32>
    %74 = arith.addf %68, %61 : vector<32x48xf32>
    %75 = arith.addf %74, %73 : vector<32x48xf32>
    %c0_37 = arith.constant 0 : index
    %c0_38 = arith.constant 0 : index
    %76 = vector.load %arg7[%c0_37, %c0_38] : memref<32x1xf32, #tpu.memory_space<vmem>>, vector<32x1xf32>
    %77 = vector.broadcast %76 : vector<32x1xf32> to vector<32x48xf32>
    %78 = arith.addf %75, %77 : vector<32x48xf32>
    %cst_39 = arith.constant 0.000000e+00 : f32
    %79 = vector.broadcast %cst_39 : f32 to vector<32x48xf32>
    %80 = arith.cmpf oge, %78, %79 : vector<32x48xf32>
    %cst_40 = arith.constant 5.000000e-02 : f32
    %81 = vector.broadcast %cst_40 : f32 to vector<32x48xf32>
    %82 = arith.mulf %81, %78 : vector<32x48xf32>
    %83 = arith.select %80, %78, %82 : vector<32x48xi1>, vector<32x48xf32>
    %c0_41 = arith.constant 0 : index
    %c0_42 = arith.constant 0 : index
    %84 = vector.load %arg16[%c0_41, %c0_42] : memref<48x24xf32, #tpu.memory_space<vmem>>, vector<48x24xf32>
    %cst_43 = arith.constant dense<0.000000e+00> : vector<32x24xf32>
    %85 = tpu.matmul %83, %84, %cst_43 {dimension_numbers = #tpu.dot_dimension_numbers<[1], [0], [0], [1], [0, 0, 1, 1], [], []>} : vector<32x48xf32>, vector<48x24xf32>, vector<32x24xf32> -> vector<32x24xf32>
    %c0_44 = arith.constant 0 : index
    %c0_45 = arith.constant 0 : index
    %c0_46 = arith.constant 0 : index
    %86 = vector.load %arg20[%c0_44, %c0_45, %c0_46] : memref<1x32x24xf32, #tpu.memory_space<vmem>>, vector<1x32x24xf32>
    %87 = vector.shape_cast %86 : vector<1x32x24xf32> to vector<32x24xf32>
    %88 = vector.shape_cast %85 : vector<32x24xf32> to vector<1x32x24xf32>
    tpu.vector_store %arg20[%c0_44, %c0_45, %c0_46], %88 {strides = array<i32>} : memref<1x32x24xf32, #tpu.memory_space<vmem>>, vector<1x32x24xf32>,
    %cst_47 = arith.constant 0.000000e+00 : f32
    %89 = vector.broadcast %cst_47 : f32 to vector<32x24xf32>
    %90 = arith.cmpf oge, %85, %89 : vector<32x24xf32>
    %cst_48 = arith.constant 5.000000e-02 : f32
    %91 = vector.broadcast %cst_48 : f32 to vector<32x24xf32>
    %92 = arith.mulf %91, %85 : vector<32x24xf32>
    %93 = arith.select %90, %85, %92 : vector<32x24xi1>, vector<32x24xf32>
    %c0_49 = arith.constant 0 : index
    %c0_50 = arith.constant 0 : index
    %94 = vector.load %arg17[%c0_49, %c0_50] : memref<24x48xf32, #tpu.memory_space<vmem>>, vector<24x48xf32>
    %cst_51 = arith.constant dense<0.000000e+00> : vector<32x48xf32>
    %95 = tpu.matmul %93, %94, %cst_51 {dimension_numbers = #tpu.dot_dimension_numbers<[1], [0], [0], [1], [0, 0, 1, 1], [], []>} : vector<32x24xf32>, vector<24x48xf32>, vector<32x48xf32> -> vector<32x48xf32>
    %c0_52 = arith.constant 0 : index
    %c0_53 = arith.constant 0 : index
    %96 = vector.load %arg8[%c0_52, %c0_53] : memref<72x32xf32, #tpu.memory_space<vmem>>, vector<72x32xf32>
    %cst_54 = arith.constant dense<0.000000e+00> : vector<72x48xf32>
    %97 = tpu.matmul %96, %95, %cst_54 {dimension_numbers = #tpu.dot_dimension_numbers<[1], [0], [0], [1], [0, 0, 1, 1], [], []>} : vector<72x32xf32>, vector<32x48xf32>, vector<72x48xf32> -> vector<72x48xf32>
    %98 = vector.extract_strided_slice %97 {offsets = [0, 0], sizes = [24, 48], strides = [1, 1]} : vector<72x48xf32> to vector<24x48xf32>
    %99 = vector.extract_strided_slice %97 {offsets = [24, 0], sizes = [24, 48], strides = [1, 1]} : vector<72x48xf32> to vector<24x48xf32>
    %100 = vector.extract_strided_slice %97 {offsets = [48, 0], sizes = [24, 48], strides = [1, 1]} : vector<72x48xf32> to vector<24x48xf32>
    %101 = tpu.iota {dimensions = array<i32: 1>} : vector<24x48xi32>
    %c0_i32_55 = arith.constant 0 : i32
    %102 = vector.broadcast %c0_i32_55 : i32 to vector<24x48xi32>
    %103 = arith.cmpi eq, %101, %102 : vector<24x48xi32>
    %c1_i32_56 = arith.constant 1 : i32
    %104 = tpu.dynamic_rotate %98 by %c1_i32_56 dim 1 : vector<24x48xf32>, i32 -> vector<24x48xf32>
    %cst_57 = arith.constant 0.000000e+00 : f32
    %105 = vector.broadcast %cst_57 : f32 to vector<24x48xf32>
    %106 = arith.select %103, %105, %104 : vector<24x48xi1>, vector<24x48xf32>
    %c47_i32_58 = arith.constant 47 : i32
    %107 = vector.broadcast %c47_i32_58 : i32 to vector<24x48xi32>
    %108 = arith.cmpi eq, %101, %107 : vector<24x48xi32>
    %c47_i32_59 = arith.constant 47 : i32
    %109 = tpu.dynamic_rotate %100 by %c47_i32_59 dim 1 : vector<24x48xf32>, i32 -> vector<24x48xf32>
    %cst_60 = arith.constant 0.000000e+00 : f32
    %110 = vector.broadcast %cst_60 : f32 to vector<24x48xf32>
    %111 = arith.select %108, %110, %109 : vector<24x48xi1>, vector<24x48xf32>
    %112 = arith.addf %106, %99 : vector<24x48xf32>
    %113 = arith.addf %112, %111 : vector<24x48xf32>
    %c0_61 = arith.constant 0 : index
    %c0_62 = arith.constant 0 : index
    %114 = vector.load %arg9[%c0_61, %c0_62] : memref<24x1xf32, #tpu.memory_space<vmem>>, vector<24x1xf32>
    %115 = vector.broadcast %114 : vector<24x1xf32> to vector<24x48xf32>
    %116 = arith.addf %113, %115 : vector<24x48xf32>
    %cst_63 = arith.constant 0.000000e+00 : f32
    %117 = vector.broadcast %cst_63 : f32 to vector<24x48xf32>
    %118 = arith.cmpf oge, %116, %117 : vector<24x48xf32>
    %cst_64 = arith.constant 5.000000e-02 : f32
    %119 = vector.broadcast %cst_64 : f32 to vector<24x48xf32>
    %120 = arith.mulf %119, %116 : vector<24x48xf32>
    %121 = arith.select %118, %116, %120 : vector<24x48xi1>, vector<24x48xf32>
    %c0_65 = arith.constant 0 : index
    %c0_66 = arith.constant 0 : index
    %122 = vector.load %arg18[%c0_65, %c0_66] : memref<48x96xf32, #tpu.memory_space<vmem>>, vector<48x96xf32>
    %cst_67 = arith.constant dense<0.000000e+00> : vector<24x96xf32>
    %123 = tpu.matmul %121, %122, %cst_67 {dimension_numbers = #tpu.dot_dimension_numbers<[1], [0], [0], [1], [0, 0, 1, 1], [], []>} : vector<24x48xf32>, vector<48x96xf32>, vector<24x96xf32> -> vector<24x96xf32>
    %c0_68 = arith.constant 0 : index
    %c0_69 = arith.constant 0 : index
    %124 = vector.load %arg10[%c0_68, %c0_69] : memref<48x24xf32, #tpu.memory_space<vmem>>, vector<48x24xf32>
    %cst_70 = arith.constant dense<0.000000e+00> : vector<48x96xf32>
    %125 = tpu.matmul %124, %123, %cst_70 {dimension_numbers = #tpu.dot_dimension_numbers<[1], [0], [0], [1], [0, 0, 1, 1], [], []>} : vector<48x24xf32>, vector<24x96xf32>, vector<48x96xf32> -> vector<48x96xf32>
    %126 = vector.extract_strided_slice %125 {offsets = [0, 0], sizes = [16, 96], strides = [1, 1]} : vector<48x96xf32> to vector<16x96xf32>
    %127 = vector.extract_strided_slice %125 {offsets = [16, 0], sizes = [16, 96], strides = [1, 1]} : vector<48x96xf32> to vector<16x96xf32>
    %128 = vector.extract_strided_slice %125 {offsets = [32, 0], sizes = [16, 96], strides = [1, 1]} : vector<48x96xf32> to vector<16x96xf32>
    %129 = tpu.iota {dimensions = array<i32: 1>} : vector<16x96xi32>
    %c0_i32_71 = arith.constant 0 : i32
    %130 = vector.broadcast %c0_i32_71 : i32 to vector<16x96xi32>
    %131 = arith.cmpi eq, %129, %130 : vector<16x96xi32>
    %c1_i32_72 = arith.constant 1 : i32
    %132 = tpu.dynamic_rotate %126 by %c1_i32_72 dim 1 : vector<16x96xf32>, i32 -> vector<16x96xf32>
    %cst_73 = arith.constant 0.000000e+00 : f32
    %133 = vector.broadcast %cst_73 : f32 to vector<16x96xf32>
    %134 = arith.select %131, %133, %132 : vector<16x96xi1>, vector<16x96xf32>
    %c95_i32_74 = arith.constant 95 : i32
    %135 = vector.broadcast %c95_i32_74 : i32 to vector<16x96xi32>
    %136 = arith.cmpi eq, %129, %135 : vector<16x96xi32>
    %c95_i32_75 = arith.constant 95 : i32
    %137 = tpu.dynamic_rotate %128 by %c95_i32_75 dim 1 : vector<16x96xf32>, i32 -> vector<16x96xf32>
    %cst_76 = arith.constant 0.000000e+00 : f32
    %138 = vector.broadcast %cst_76 : f32 to vector<16x96xf32>
    %139 = arith.select %136, %138, %137 : vector<16x96xi1>, vector<16x96xf32>
    %140 = arith.addf %134, %127 : vector<16x96xf32>
    %141 = arith.addf %140, %139 : vector<16x96xf32>
    %c0_77 = arith.constant 0 : index
    %c0_78 = arith.constant 0 : index
    %142 = vector.load %arg11[%c0_77, %c0_78] : memref<16x1xf32, #tpu.memory_space<vmem>>, vector<16x1xf32>
    %143 = vector.broadcast %142 : vector<16x1xf32> to vector<16x96xf32>
    %144 = arith.addf %141, %143 : vector<16x96xf32>
    %cst_79 = arith.constant 0.000000e+00 : f32
    %145 = vector.broadcast %cst_79 : f32 to vector<16x96xf32>
    %146 = arith.cmpf oge, %144, %145 : vector<16x96xf32>
    %cst_80 = arith.constant 5.000000e-02 : f32
    %147 = vector.broadcast %cst_80 : f32 to vector<16x96xf32>
    %148 = arith.mulf %147, %144 : vector<16x96xf32>
    %149 = arith.select %146, %144, %148 : vector<16x96xi1>, vector<16x96xf32>
    %c0_81 = arith.constant 0 : index
    %c0_82 = arith.constant 0 : index
    %150 = vector.load %arg19[%c0_81, %c0_82] : memref<96x192xf32, #tpu.memory_space<vmem>>, vector<96x192xf32>
    %cst_83 = arith.constant dense<0.000000e+00> : vector<16x192xf32>
    %151 = tpu.matmul %149, %150, %cst_83 {dimension_numbers = #tpu.dot_dimension_numbers<[1], [0], [0], [1], [0, 0, 1, 1], [], []>} : vector<16x96xf32>, vector<96x192xf32>, vector<16x192xf32> -> vector<16x192xf32>
    %c0_84 = arith.constant 0 : index
    %c0_85 = arith.constant 0 : index
    %152 = vector.load %arg12[%c0_84, %c0_85] : memref<12x16xf32, #tpu.memory_space<vmem>>, vector<12x16xf32>
    %cst_86 = arith.constant dense<0.000000e+00> : vector<12x192xf32>
    %153 = tpu.matmul %152, %151, %cst_86 {dimension_numbers = #tpu.dot_dimension_numbers<[1], [0], [0], [1], [0, 0, 1, 1], [], []>} : vector<12x16xf32>, vector<16x192xf32>, vector<12x192xf32> -> vector<12x192xf32>
    %154 = vector.extract_strided_slice %153 {offsets = [0, 0], sizes = [4, 192], strides = [1, 1]} : vector<12x192xf32> to vector<4x192xf32>
    %155 = vector.extract_strided_slice %153 {offsets = [4, 0], sizes = [4, 192], strides = [1, 1]} : vector<12x192xf32> to vector<4x192xf32>
    %156 = vector.extract_strided_slice %153 {offsets = [8, 0], sizes = [4, 192], strides = [1, 1]} : vector<12x192xf32> to vector<4x192xf32>
    %157 = tpu.iota {dimensions = array<i32: 1>} : vector<4x192xi32>
    %c0_i32_87 = arith.constant 0 : i32
    %158 = vector.broadcast %c0_i32_87 : i32 to vector<4x192xi32>
    %159 = arith.cmpi eq, %157, %158 : vector<4x192xi32>
    %c1_i32_88 = arith.constant 1 : i32
    %160 = tpu.dynamic_rotate %154 by %c1_i32_88 dim 1 : vector<4x192xf32>, i32 -> vector<4x192xf32>
    %cst_89 = arith.constant 0.000000e+00 : f32
    %161 = vector.broadcast %cst_89 : f32 to vector<4x192xf32>
    %162 = arith.select %159, %161, %160 : vector<4x192xi1>, vector<4x192xf32>
    %c191_i32 = arith.constant 191 : i32
    %163 = vector.broadcast %c191_i32 : i32 to vector<4x192xi32>
    %164 = arith.cmpi eq, %157, %163 : vector<4x192xi32>
    %c191_i32_90 = arith.constant 191 : i32
    %165 = tpu.dynamic_rotate %156 by %c191_i32_90 dim 1 : vector<4x192xf32>, i32 -> vector<4x192xf32>
    %cst_91 = arith.constant 0.000000e+00 : f32
    %166 = vector.broadcast %cst_91 : f32 to vector<4x192xf32>
    %167 = arith.select %164, %166, %165 : vector<4x192xi1>, vector<4x192xf32>
    %168 = arith.addf %162, %155 : vector<4x192xf32>
    %169 = arith.addf %168, %167 : vector<4x192xf32>
    %c0_92 = arith.constant 0 : index
    %c0_93 = arith.constant 0 : index
    %170 = vector.load %arg13[%c0_92, %c0_93] : memref<4x1xf32, #tpu.memory_space<vmem>>, vector<4x1xf32>
    %171 = vector.broadcast %170 : vector<4x1xf32> to vector<4x192xf32>
    %172 = arith.addf %169, %171 : vector<4x192xf32>
    %c0_94 = arith.constant 0 : index
    %c0_95 = arith.constant 0 : index
    %c0_96 = arith.constant 0 : index
    %173 = vector.load %arg21[%c0_94, %c0_95, %c0_96] : memref<1x4x192xf32, #tpu.memory_space<vmem>>, vector<1x4x192xf32>
    %174 = vector.shape_cast %173 : vector<1x4x192xf32> to vector<4x192xf32>
    %175 = vector.shape_cast %172 : vector<4x192xf32> to vector<1x4x192xf32>
    tpu.vector_store %arg21[%c0_94, %c0_95, %c0_96], %175 {strides = array<i32>} : memref<1x4x192xf32, #tpu.memory_space<vmem>>, vector<1x4x192xf32>,
    return
  }
  func.func @transform_0(%arg0: i32) -> (i32, i32, i32) {
    %c0_i32 = arith.constant 0 : i32
    %c0_i32_0 = arith.constant 0 : i32
    %c0_i32_1 = arith.constant 0 : i32
    return %arg0, %c0_i32, %c0_i32_0 : i32, i32, i32
  }
  func.func @transform_1(%arg0: i32) -> (i32, i32) {
    %c0_i32 = arith.constant 0 : i32
    %c0_i32_0 = arith.constant 0 : i32
    %c0_i32_1 = arith.constant 0 : i32
    return %c0_i32, %c0_i32_0 : i32, i32
  }
  func.func @transform_2(%arg0: i32) -> (i32, i32) {
    %c0_i32 = arith.constant 0 : i32
    %c0_i32_0 = arith.constant 0 : i32
    %c0_i32_1 = arith.constant 0 : i32
    return %c0_i32, %c0_i32_0 : i32, i32
  }
  func.func @transform_3(%arg0: i32) -> (i32, i32) {
    %c0_i32 = arith.constant 0 : i32
    %c0_i32_0 = arith.constant 0 : i32
    %c0_i32_1 = arith.constant 0 : i32
    return %c0_i32, %c0_i32_0 : i32, i32
  }
  func.func @transform_4(%arg0: i32) -> (i32, i32) {
    %c0_i32 = arith.constant 0 : i32
    %c0_i32_0 = arith.constant 0 : i32
    %c0_i32_1 = arith.constant 0 : i32
    return %c0_i32, %c0_i32_0 : i32, i32
  }
  func.func @transform_5(%arg0: i32) -> (i32, i32) {
    %c0_i32 = arith.constant 0 : i32
    %c0_i32_0 = arith.constant 0 : i32
    %c0_i32_1 = arith.constant 0 : i32
    return %c0_i32, %c0_i32_0 : i32, i32
  }
  func.func @transform_6(%arg0: i32) -> (i32, i32) {
    %c0_i32 = arith.constant 0 : i32
    %c0_i32_0 = arith.constant 0 : i32
    %c0_i32_1 = arith.constant 0 : i32
    return %c0_i32, %c0_i32_0 : i32, i32
  }
  func.func @transform_7(%arg0: i32) -> (i32, i32) {
    %c0_i32 = arith.constant 0 : i32
    %c0_i32_0 = arith.constant 0 : i32
    %c0_i32_1 = arith.constant 0 : i32
    return %c0_i32, %c0_i32_0 : i32, i32
  }
  func.func @transform_8(%arg0: i32) -> (i32, i32) {
    %c0_i32 = arith.constant 0 : i32
    %c0_i32_0 = arith.constant 0 : i32
    %c0_i32_1 = arith.constant 0 : i32
    return %c0_i32, %c0_i32_0 : i32, i32
  }
  func.func @transform_9(%arg0: i32) -> (i32, i32) {
    %c0_i32 = arith.constant 0 : i32
    %c0_i32_0 = arith.constant 0 : i32
    %c0_i32_1 = arith.constant 0 : i32
    return %c0_i32, %c0_i32_0 : i32, i32
  }
  func.func @transform_10(%arg0: i32) -> (i32, i32) {
    %c0_i32 = arith.constant 0 : i32
    %c0_i32_0 = arith.constant 0 : i32
    %c0_i32_1 = arith.constant 0 : i32
    return %c0_i32, %c0_i32_0 : i32, i32
  }
  func.func @transform_11(%arg0: i32) -> (i32, i32) {
    %c0_i32 = arith.constant 0 : i32
    %c0_i32_0 = arith.constant 0 : i32
    %c0_i32_1 = arith.constant 0 : i32
    return %c0_i32, %c0_i32_0 : i32, i32
  }
  func.func @transform_12(%arg0: i32) -> (i32, i32) {
    %c0_i32 = arith.constant 0 : i32
    %c0_i32_0 = arith.constant 0 : i32
    %c0_i32_1 = arith.constant 0 : i32
    return %c0_i32, %c0_i32_0 : i32, i32
  }
  func.func @transform_13(%arg0: i32) -> (i32, i32) {
    %c0_i32 = arith.constant 0 : i32
    %c0_i32_0 = arith.constant 0 : i32
    %c0_i32_1 = arith.constant 0 : i32
    return %c0_i32, %c0_i32_0 : i32, i32
  }
  func.func @transform_14(%arg0: i32) -> (i32, i32) {
    %c0_i32 = arith.constant 0 : i32
    %c0_i32_0 = arith.constant 0 : i32
    %c0_i32_1 = arith.constant 0 : i32
    return %c0_i32, %c0_i32_0 : i32, i32
  }
  func.func @transform_15(%arg0: i32) -> (i32, i32) {
    %c0_i32 = arith.constant 0 : i32
    %c0_i32_0 = arith.constant 0 : i32
    %c0_i32_1 = arith.constant 0 : i32
    return %c0_i32, %c0_i32_0 : i32, i32
  }
  func.func @transform_16(%arg0: i32) -> (i32, i32) {
    %c0_i32 = arith.constant 0 : i32
    %c0_i32_0 = arith.constant 0 : i32
    %c0_i32_1 = arith.constant 0 : i32
    return %c0_i32, %c0_i32_0 : i32, i32
  }
  func.func @transform_17(%arg0: i32) -> (i32, i32) {
    %c0_i32 = arith.constant 0 : i32
    %c0_i32_0 = arith.constant 0 : i32
    %c0_i32_1 = arith.constant 0 : i32
    return %c0_i32, %c0_i32_0 : i32, i32
  }
  func.func @transform_18(%arg0: i32) -> (i32, i32) {
    %c0_i32 = arith.constant 0 : i32
    %c0_i32_0 = arith.constant 0 : i32
    %c0_i32_1 = arith.constant 0 : i32
    return %c0_i32, %c0_i32_0 : i32, i32
  }
  func.func @transform_19(%arg0: i32) -> (i32, i32, i32) {
    %c0_i32 = arith.constant 0 : i32
    %c0_i32_0 = arith.constant 0 : i32
    %c0_i32_1 = arith.constant 0 : i32
    return %arg0, %c0_i32, %c0_i32_0 : i32, i32, i32
  }
  func.func @transform_20(%arg0: i32) -> (i32, i32, i32) {
    %c0_i32 = arith.constant 0 : i32
    %c0_i32_0 = arith.constant 0 : i32
    %c0_i32_1 = arith.constant 0 : i32
    return %arg0, %c0_i32, %c0_i32_0 : i32, i32, i32
  }
}

module attributes {stable_mosaic.version = 11 : i64} {
  func.func @_heads_kernel(%arg0: memref<2x768xf32, #tpu.memory_space<vmem>>, %arg1: memref<768x2048xbf16, #tpu.memory_space<vmem>>, %arg2: memref<1x2048xf32, #tpu.memory_space<vmem>>, %arg3: memref<1024x1024xbf16, #tpu.memory_space<vmem>>, %arg4: memref<1x1024xf32, #tpu.memory_space<vmem>>, %arg5: memref<386x4xbf16, #tpu.memory_space<vmem>>, %arg6: memref<1x4xf32, #tpu.memory_space<vmem>>, %arg7: memref<385x2xbf16, #tpu.memory_space<vmem>>, %arg8: memref<1x2xf32, #tpu.memory_space<vmem>>, %arg9: memref<2x1024xf32, #tpu.memory_space<vmem>>, %arg10: memref<2x4xf32, #tpu.memory_space<vmem>>, %arg11: memref<2x2xf32, #tpu.memory_space<vmem>>) attributes {dimension_semantics = [], scalar_prefetch = 0 : i64, scratch_operands = 0 : i64, tpu.core_type = #tpu.core_type<tc>} {
    %c0 = arith.constant 0 : index
    %c0_0 = arith.constant 0 : index
    %0 = vector.load %arg0[%c0, %c0_0] : memref<2x768xf32, #tpu.memory_space<vmem>>, vector<2x768xf32>
    %1 = arith.truncf %0 : vector<2x768xf32> to vector<2x768xbf16>
    %c0_1 = arith.constant 0 : index
    %c0_2 = arith.constant 0 : index
    %2 = vector.load %arg1[%c0_1, %c0_2] : memref<768x2048xbf16, #tpu.memory_space<vmem>>, vector<768x2048xbf16>
    %cst = arith.constant dense<0.000000e+00> : vector<2x2048xf32>
    %3 = tpu.matmul %1, %2, %cst {dimension_numbers = #tpu.dot_dimension_numbers<[1], [0], [0], [1], [0, 0, 1, 1], [], []>} : vector<2x768xbf16>, vector<768x2048xbf16>, vector<2x2048xf32> -> vector<2x2048xf32>
    %c0_3 = arith.constant 0 : index
    %c0_4 = arith.constant 0 : index
    %4 = vector.load %arg2[%c0_3, %c0_4] : memref<1x2048xf32, #tpu.memory_space<vmem>>, vector<1x2048xf32>
    %5 = vector.broadcast %4 : vector<1x2048xf32> to vector<2x2048xf32>
    %6 = arith.addf %3, %5 : vector<2x2048xf32>
    %cst_5 = arith.constant 0.000000e+00 : f32
    %7 = vector.broadcast %cst_5 : f32 to vector<2x2048xf32>
    %8 = arith.cmpf oge, %6, %7 : vector<2x2048xf32>
    %cst_6 = arith.constant 5.000000e-02 : f32
    %9 = vector.broadcast %cst_6 : f32 to vector<2x2048xf32>
    %10 = arith.mulf %9, %6 : vector<2x2048xf32>
    %11 = arith.select %8, %6, %10 : vector<2x2048xi1>, vector<2x2048xf32>
    %12 = arith.truncf %11 : vector<2x2048xf32> to vector<2x2048xbf16>
    %13 = vector.extract_strided_slice %12 {offsets = [0, 0], sizes = [2, 1024], strides = [1, 1]} : vector<2x2048xbf16> to vector<2x1024xbf16>
    %c0_7 = arith.constant 0 : index
    %c0_8 = arith.constant 0 : index
    %14 = vector.load %arg3[%c0_7, %c0_8] : memref<1024x1024xbf16, #tpu.memory_space<vmem>>, vector<1024x1024xbf16>
    %cst_9 = arith.constant dense<0.000000e+00> : vector<2x1024xf32>
    %15 = tpu.matmul %13, %14, %cst_9 {dimension_numbers = #tpu.dot_dimension_numbers<[1], [0], [0], [1], [0, 0, 1, 1], [], []>} : vector<2x1024xbf16>, vector<1024x1024xbf16>, vector<2x1024xf32> -> vector<2x1024xf32>
    %c0_10 = arith.constant 0 : index
    %c0_11 = arith.constant 0 : index
    %16 = vector.load %arg4[%c0_10, %c0_11] : memref<1x1024xf32, #tpu.memory_space<vmem>>, vector<1x1024xf32>
    %17 = vector.broadcast %16 : vector<1x1024xf32> to vector<2x1024xf32>
    %18 = arith.addf %15, %17 : vector<2x1024xf32>
    %c0_12 = arith.constant 0 : index
    %c0_13 = arith.constant 0 : index
    %19 = vector.load %arg9[%c0_12, %c0_13] : memref<2x1024xf32, #tpu.memory_space<vmem>>, vector<2x1024xf32>
    tpu.vector_store %arg9[%c0_12, %c0_13], %18 {strides = array<i32>} : memref<2x1024xf32, #tpu.memory_space<vmem>>, vector<2x1024xf32>,
    %20 = vector.extract_strided_slice %12 {offsets = [0, 1024], sizes = [2, 386], strides = [1, 1]} : vector<2x2048xbf16> to vector<2x386xbf16>
    %c0_14 = arith.constant 0 : index
    %c0_15 = arith.constant 0 : index
    %21 = vector.load %arg5[%c0_14, %c0_15] : memref<386x4xbf16, #tpu.memory_space<vmem>>, vector<386x4xbf16>
    %cst_16 = arith.constant dense<0.000000e+00> : vector<2x4xf32>
    %22 = tpu.matmul %20, %21, %cst_16 {dimension_numbers = #tpu.dot_dimension_numbers<[1], [0], [0], [1], [0, 0, 1, 1], [], []>} : vector<2x386xbf16>, vector<386x4xbf16>, vector<2x4xf32> -> vector<2x4xf32>
    %c0_17 = arith.constant 0 : index
    %c0_18 = arith.constant 0 : index
    %23 = vector.load %arg6[%c0_17, %c0_18] : memref<1x4xf32, #tpu.memory_space<vmem>>, vector<1x4xf32>
    %24 = vector.broadcast %23 : vector<1x4xf32> to vector<2x4xf32>
    %25 = arith.addf %22, %24 : vector<2x4xf32>
    %c0_19 = arith.constant 0 : index
    %c0_20 = arith.constant 0 : index
    %26 = vector.load %arg10[%c0_19, %c0_20] : memref<2x4xf32, #tpu.memory_space<vmem>>, vector<2x4xf32>
    tpu.vector_store %arg10[%c0_19, %c0_20], %25 {strides = array<i32>} : memref<2x4xf32, #tpu.memory_space<vmem>>, vector<2x4xf32>,
    %27 = vector.extract_strided_slice %12 {offsets = [0, 1536], sizes = [2, 385], strides = [1, 1]} : vector<2x2048xbf16> to vector<2x385xbf16>
    %c0_21 = arith.constant 0 : index
    %c0_22 = arith.constant 0 : index
    %28 = vector.load %arg7[%c0_21, %c0_22] : memref<385x2xbf16, #tpu.memory_space<vmem>>, vector<385x2xbf16>
    %cst_23 = arith.constant dense<0.000000e+00> : vector<2x2xf32>
    %29 = tpu.matmul %27, %28, %cst_23 {dimension_numbers = #tpu.dot_dimension_numbers<[1], [0], [0], [1], [0, 0, 1, 1], [], []>} : vector<2x385xbf16>, vector<385x2xbf16>, vector<2x2xf32> -> vector<2x2xf32>
    %c0_24 = arith.constant 0 : index
    %c0_25 = arith.constant 0 : index
    %30 = vector.load %arg8[%c0_24, %c0_25] : memref<1x2xf32, #tpu.memory_space<vmem>>, vector<1x2xf32>
    %31 = vector.broadcast %30 : vector<1x2xf32> to vector<2x2xf32>
    %32 = arith.addf %29, %31 : vector<2x2xf32>
    %c0_26 = arith.constant 0 : index
    %c0_27 = arith.constant 0 : index
    %33 = vector.load %arg11[%c0_26, %c0_27] : memref<2x2xf32, #tpu.memory_space<vmem>>, vector<2x2xf32>
    tpu.vector_store %arg11[%c0_26, %c0_27], %32 {strides = array<i32>} : memref<2x2xf32, #tpu.memory_space<vmem>>, vector<2x2xf32>,
    return
  }
}

</mosaic_0001>

<llo_original>
// kernel: conv_autoencoder_forward.2
$region0: #{conv_autoencoder_forward.2}
  #allocation0 [shape = 'u32[]', space=smem, size = 0x4, offset = 0x4, fixed_abs, tag = 'smem constant byte address 0x4 - core index']
  #allocation1 [shape = 'u32[144,128]{1,0:T(1,128)}', space=vmem, size = 0x12000, scoped, tag = 'internal scratch']
  %s0 = inlined_call_operand.vmem [shape: f32[2,4,256], index: 0, kind: input, shape index: {}]
  %s1 = inlined_call_operand.vmem [shape: f32[48,4], index: 1, kind: input, shape index: {}]
  %s2 = inlined_call_operand.vmem [shape: f32[16,1], index: 2, kind: input, shape index: {}]
  %s3 = inlined_call_operand.vmem [shape: f32[72,16], index: 3, kind: input, shape index: {}]
  %s4 = inlined_call_operand.vmem [shape: f32[24,1], index: 4, kind: input, shape index: {}]
  %s5 = inlined_call_operand.vmem [shape: f32[96,24], index: 5, kind: input, shape index: {}]
  %s6 = inlined_call_operand.vmem [shape: f32[32,1], index: 6, kind: input, shape index: {}]
  %s7 = inlined_call_operand.vmem [shape: f32[72,32], index: 7, kind: input, shape index: {}]
  %s8 = inlined_call_operand.vmem [shape: f32[24,1], index: 8, kind: input, shape index: {}]
  %s9 = inlined_call_operand.vmem [shape: f32[48,24], index: 9, kind: input, shape index: {}]
  %s10 = inlined_call_operand.vmem [shape: f32[16,1], index: 10, kind: input, shape index: {}]
  %s11 = inlined_call_operand.hbm [shape: f32[12,16], index: 11, kind: input, shape index: {}]
  %s12 = inlined_call_operand.vmem [shape: f32[4,1], index: 12, kind: input, shape index: {}]
  %s13 = inlined_call_operand.vmem [shape: f32[256,96], index: 13, kind: input, shape index: {}]
  %s14 = inlined_call_operand.vmem [shape: f32[96,48], index: 14, kind: input, shape index: {}]
  %s15 = inlined_call_operand.vmem [shape: f32[48,24], index: 15, kind: input, shape index: {}]
  %s16 = inlined_call_operand.hbm [shape: f32[24,48], index: 16, kind: input, shape index: {}]
  %s17 = inlined_call_operand.hbm [shape: f32[48,96], index: 17, kind: input, shape index: {}]
  %s18 = inlined_call_operand.hbm [shape: f32[96,192], index: 18, kind: input, shape index: {}]
  %s19 = inlined_call_operand.vmem [shape: f32[2,32,24], index: 19, kind: output, shape index: {0}]
  %s20 = inlined_call_operand.hbm [shape: f32[2,4,192], index: 20, kind: output, shape index: {1}]
  %21 = xla_tuple %s19, %s20
  %s22 = sld [smem:[#allocation0]]
  $region133: #{conv_autoencoder_forward.2} parent=0
    _
  %s24 = ssub.s32 1, %s22
  %s25 = scalar_select 0, %s24, %s22
  $region1: #{conv_autoencoder_forward.2} parent=0
    #allocation2 [shape = 'u8[8192]{0}', space=vmem, size = 0x2000, scoped, tag = 'input window, operand 11, single buffered']
    #allocation3 [shape = 's32[2]{0}', space=sflag, size = 0x8, scoped, tag = 'scoped memory for conv_autoencoder_forward.2']
    #allocation4 [shape = 's32[2]{0}', space=sflag, size = 0x8, scoped, tag = 'scoped memory for conv_autoencoder_forward.2']
    #allocation5 [shape = 'u8[12288]{0}', space=vmem, size = 0x3000, scoped, tag = 'input window, operand 16, single buffered']
    #allocation6 [shape = 's32[1]{0}', space=sflag, size = 0x4, scoped, tag = 'scoped memory for conv_autoencoder_forward.2']
    #allocation7 [shape = 'u8[24576]{0}', space=vmem, size = 0x6000, scoped, tag = 'input window, operand 17, single buffered']
    #allocation8 [shape = 'u8[98304]{0}', space=vmem, size = 0x18000, scoped, tag = 'input window, operand 18, single buffered']
    #allocation9 [shape = 's32[1]{0}', space=sflag, size = 0x4, scoped, tag = 'scoped memory for conv_autoencoder_forward.2']
    #allocation10 [shape = 'u8[8192]{0}', space=vmem, size = 0x2000, scoped, tag = 'output window, operand 1']
    %26 = vsyncpa [#allocation3], 0
    %27 = vsyncpa [#allocation6], 0
    %28 = vsyncpa [#allocation9], 0
    %29 = vsyncpa [#allocation4], 0
    %s30 = scalar_lea.sflag [#allocation4], 1
    %31 = vsyncpa %s30, 0
    loop: start=0, step=1, limit=4
    $region2: #{conv_autoencoder_forward.2} parent=1 // loop_pre_header
      _
    $region3: #{conv_autoencoder_forward.2} parent=1 // loop_header
      %s33 = sphi 0, %s37
      %p34 = scmp.ge.s32.totalorder %s33, 4
      %s43 = sphi 0, %s45
      %s46 = sphi 0, %s43
      %s47 = sphi 0, %s46
      %s63 = sphi 0, %s47
      %s67 = sphi 0, %s67
      %s69 = sphi 0, %s67
      %s70 = sphi 0, %s69
      %s84 = sphi 0, %s70
      %s88 = sphi 0, %s88
      %s90 = sphi 0, %s88
      %s91 = sphi 0, %s90
      %s105 = sphi 0, %s91
      %s109 = sphi 0, %s109
      %s111 = sphi 0, %s109
      %s112 = sphi 0, %s111
      %s126 = sphi 0, %s112
      %s130 = sphi 0, %s130
      %s132 = sphi 0, %s130
      %s133 = sphi 0, %s132
      %s147 = sphi 0, %s133
      %s151 = sphi 0, %s151
      %s153 = sphi 0, %s151
      %s154 = sphi 0, %s153
      %s168 = sphi 0, %s154
      %s172 = sphi 0, %s172
      %s174 = sphi 0, %s172
      %s175 = sphi 0, %s174
      %s189 = sphi 0, %s175
      %s193 = sphi 0, %s193
      %s195 = sphi 0, %s193
      %s196 = sphi 0, %s195
      %s210 = sphi 0, %s196
      %s214 = sphi 0, %s214
      %s216 = sphi 0, %s214
      %s217 = sphi 0, %s216
      %s231 = sphi 0, %s217
      %s235 = sphi 0, %s235
      %s237 = sphi 0, %s235
      %s238 = sphi 0, %s237
      %s252 = sphi 0, %s238
      %s256 = sphi 0, %s256
      %s258 = sphi 0, %s256
      %s259 = sphi 0, %s258
      %s273 = sphi 0, %s259
      %s277 = sphi 0, %s277
      %s279 = sphi 0, %s277
      %s280 = sphi 0, %s279
      %s294 = sphi 0, %s280
      %s298 = sphi 0, %s298
      %s300 = sphi 0, %s298
      %s301 = sphi 0, %s300
      %s315 = sphi 0, %s301
      %s319 = sphi 0, %s319
      %s321 = sphi 0, %s319
      %s322 = sphi 0, %s321
      %s336 = sphi 0, %s322
      %s340 = sphi 0, %s340
      %s342 = sphi 0, %s340
      %s343 = sphi 0, %s342
      %s357 = sphi 0, %s343
      %s361 = sphi 0, %s361
      %s363 = sphi 0, %s361
      %s364 = sphi 0, %s363
      %s378 = sphi 0, %s364
      %s382 = sphi 0, %s382
      %s384 = sphi 0, %s382
      %s385 = sphi 0, %s384
      %s399 = sphi 0, %s385
      %s403 = sphi 0, %s403
      %s405 = sphi 0, %s403
      %s406 = sphi 0, %s405
      %s420 = sphi 0, %s406
      %s424 = sphi 0, %s424
      %s426 = sphi 0, %s424
      %s427 = sphi 0, %s426
      %s441 = sphi 0, %s427
      %s447 = sphi 0, %s449
      %s450 = sphi 0, %s447
      %s451 = sphi 0, %s450
      %s467 = sphi 0, %s451
      %s473 = sphi 0, %s475
      %s476 = sphi 0, %s473
      %s477 = sphi 0, %s476
      %s493 = sphi 0, %s477
    $region4: #{conv_autoencoder_forward.2} parent=1 // loop_header_branch
      %36 = sbr.rel (%p34) target = $region8
    $region5: #{conv_autoencoder_forward.2} parent=1 // loop_body
      %s38 = ssub.s32 %s33, 1
      %s39 = ssub.s32 %s33, 2
      %s40 = sadd.s32 %s33, 1
      %s41 = ssub.s32 %s33, %s40
      %p42 = scmp.eq.s32.totalorder %s41, 0
      %s44 = sadd.s32 %s43, 1
      %s45 = scalar_select %p42, %s43, %s44
      %p48 = pneg %p42
      %p49 = scmp.eq.s32.totalorder %s33, 1
      %p50 = por %p48, %p49
      %p51 = scmp.ne.s32.totalorder %s43, %s46
      %p52 = scmp.eq.s32.totalorder %s33, 0
      %p53 = por %p51, %p52
      %p54 = scmp.ne.s32.totalorder %s43, %s46
      %p55 = scmp.eq.s32.totalorder %s38, 1
      %p56 = por %p54, %p55
      %p57 = scmp.ne.s32.totalorder %s46, %s47
      %p58 = scmp.eq.s32.totalorder %s38, 0
      %p59 = por %p57, %p58
      %p60 = scmp.ne.s32.totalorder %s46, %s47
      %p61 = scmp.eq.s32.totalorder %s39, 1
      %p62 = por %p60, %p61
      %p64 = scmp.ne.s32.totalorder %s47, %s63
      %p65 = scmp.eq.s32.totalorder %s39, 0
      %p66 = por %p64, %p65
      %s68 = sadd.s32 %s67, 1
      %p71 = scmp.eq.s32.totalorder %s33, 1
      %p72 = scmp.ne.s32.totalorder %s67, %s69
      %p73 = scmp.eq.s32.totalorder %s33, 0
      %p74 = por %p72, %p73
      %p75 = scmp.ne.s32.totalorder %s67, %s69
      %p76 = scmp.eq.s32.totalorder %s38, 1
      %p77 = por %p75, %p76
      %p78 = scmp.ne.s32.totalorder %s69, %s70
      %p79 = scmp.eq.s32.totalorder %s38, 0
      %p80 = por %p78, %p79
      %p81 = scmp.ne.s32.totalorder %s69, %s70
      %p82 = scmp.eq.s32.totalorder %s39, 1
      %p83 = por %p81, %p82
      %p85 = scmp.ne.s32.totalorder %s70, %s84
      %p86 = scmp.eq.s32.totalorder %s39, 0
      %p87 = por %p85, %p86
      %s89 = sadd.s32 %s88, 1
      %p92 = scmp.eq.s32.totalorder %s33, 1
      %p93 = scmp.ne.s32.totalorder %s88, %s90
      %p94 = scmp.eq.s32.totalorder %s33, 0
      %p95 = por %p93, %p94
      %p96 = scmp.ne.s32.totalorder %s88, %s90
      %p97 = scmp.eq.s32.totalorder %s38, 1
      %p98 = por %p96, %p97
      %p99 = scmp.ne.s32.totalorder %s90, %s91
      %p100 = scmp.eq.s32.totalorder %s38, 0
      %p101 = por %p99, %p100
      %p102 = scmp.ne.s32.totalorder %s90, %s91
      %p103 = scmp.eq.s32.totalorder %s39, 1
      %p104 = por %p102, %p103
      %p106 = scmp.ne.s32.totalorder %s91, %s105
      %p107 = scmp.eq.s32.totalorder %s39, 0
      %p108 = por %p106, %p107
      %s110 = sadd.s32 %s109, 1
      %p113 = scmp.eq.s32.totalorder %s33, 1
      %p114 = scmp.ne.s32.totalorder %s109, %s111
      %p115 = scmp.eq.s32.totalorder %s33, 0
      %p116 = por %p114, %p115
      %p117 = scmp.ne.s32.totalorder %s109, %s111
      %p118 = scmp.eq.s32.totalorder %s38, 1
      %p119 = por %p117, %p118
      %p120 = scmp.ne.s32.totalorder %s111, %s112
      %p121 = scmp.eq.s32.totalorder %s38, 0
      %p122 = por %p120, %p121
      %p123 = scmp.ne.s32.totalorder %s111, %s112
      %p124 = scmp.eq.s32.totalorder %s39, 1
      %p125 = por %p123, %p124
      %p127 = scmp.ne.s32.totalorder %s112, %s126
      %p128 = scmp.eq.s32.totalorder %s39, 0
      %p129 = por %p127, %p128
      %s131 = sadd.s32 %s130, 1
      %p134 = scmp.eq.s32.totalorder %s33, 1
      %p135 = scmp.ne.s32.totalorder %s130, %s132
      %p136 = scmp.eq.s32.totalorder %s33, 0
      %p137 = por %p135, %p136
      %p138 = scmp.ne.s32.totalorder %s130, %s132
      %p139 = scmp.eq.s32.totalorder %s38, 1
      %p140 = por %p138, %p139
      %p141 = scmp.ne.s32.totalorder %s132, %s133
      %p142 = scmp.eq.s32.totalorder %s38, 0
      %p143 = por %p141, %p142
      %p144 = scmp.ne.s32.totalorder %s132, %s133
      %p145 = scmp.eq.s32.totalorder %s39, 1
      %p146 = por %p144, %p145
      %p148 = scmp.ne.s32.totalorder %s133, %s147
      %p149 = scmp.eq.s32.totalorder %s39, 0
      %p150 = por %p148, %p149
      %s152 = sadd.s32 %s151, 1
      %p155 = scmp.eq.s32.totalorder %s33, 1
      %p156 = scmp.ne.s32.totalorder %s151, %s153
      %p157 = scmp.eq.s32.totalorder %s33, 0
      %p158 = por %p156, %p157
      %p159 = scmp.ne.s32.totalorder %s151, %s153
      %p160 = scmp.eq.s32.totalorder %s38, 1
      %p161 = por %p159, %p160
      %p162 = scmp.ne.s32.totalorder %s153, %s154
      %p163 = scmp.eq.s32.totalorder %s38, 0
      %p164 = por %p162, %p163
      %p165 = scmp.ne.s32.totalorder %s153, %s154
      %p166 = scmp.eq.s32.totalorder %s39, 1
      %p167 = por %p165, %p166
      %p169 = scmp.ne.s32.totalorder %s154, %s168
      %p170 = scmp.eq.s32.totalorder %s39, 0
      %p171 = por %p169, %p170
      %s173 = sadd.s32 %s172, 1
      %p176 = scmp.eq.s32.totalorder %s33, 1
      %p177 = scmp.ne.s32.totalorder %s172, %s174
      %p178 = scmp.eq.s32.totalorder %s33, 0
      %p179 = por %p177, %p178
      %p180 = scmp.ne.s32.totalorder %s172, %s174
      %p181 = scmp.eq.s32.totalorder %s38, 1
      %p182 = por %p180, %p181
      %p183 = scmp.ne.s32.totalorder %s174, %s175
      %p184 = scmp.eq.s32.totalorder %s38, 0
      %p185 = por %p183, %p184
      %p186 = scmp.ne.s32.totalorder %s174, %s175
      %p187 = scmp.eq.s32.totalorder %s39, 1
      %p188 = por %p186, %p187
      %p190 = scmp.ne.s32.totalorder %s175, %s189
      %p191 = scmp.eq.s32.totalorder %s39, 0
      %p192 = por %p190, %p191
      %s194 = sadd.s32 %s193, 1
      %p197 = scmp.eq.s32.totalorder %s33, 1
      %p198 = scmp.ne.s32.totalorder %s193, %s195
      %p199 = scmp.eq.s32.totalorder %s33, 0
      %p200 = por %p198, %p199
      %p201 = scmp.ne.s32.totalorder %s193, %s195
      %p202 = scmp.eq.s32.totalorder %s38, 1
      %p203 = por %p201, %p202
      %p204 = scmp.ne.s32.totalorder %s195, %s196
      %p205 = scmp.eq.s32.totalorder %s38, 0
      %p206 = por %p204, %p205
      %p207 = scmp.ne.s32.totalorder %s195, %s196
      %p208 = scmp.eq.s32.totalorder %s39, 1
      %p209 = por %p207, %p208
      %p211 = scmp.ne.s32.totalorder %s196, %s210
      %p212 = scmp.eq.s32.totalorder %s39, 0
      %p213 = por %p211, %p212
      %s215 = sadd.s32 %s214, 1
      %p218 = scmp.eq.s32.totalorder %s33, 1
      %p219 = scmp.ne.s32.totalorder %s214, %s216
      %p220 = scmp.eq.s32.totalorder %s33, 0
      %p221 = por %p219, %p220
      %p222 = scmp.ne.s32.totalorder %s214, %s216
      %p223 = scmp.eq.s32.totalorder %s38, 1
      %p224 = por %p222, %p223
      %p225 = scmp.ne.s32.totalorder %s216, %s217
      %p226 = scmp.eq.s32.totalorder %s38, 0
      %p227 = por %p225, %p226
      %p228 = scmp.ne.s32.totalorder %s216, %s217
      %p229 = scmp.eq.s32.totalorder %s39, 1
      %p230 = por %p228, %p229
      %p232 = scmp.ne.s32.totalorder %s217, %s231
      %p233 = scmp.eq.s32.totalorder %s39, 0
      %p234 = por %p232, %p233
      %s236 = sadd.s32 %s235, 1
      %p239 = scmp.eq.s32.totalorder %s33, 1
      %p240 = scmp.ne.s32.totalorder %s235, %s237
      %p241 = scmp.eq.s32.totalorder %s33, 0
      %p242 = por %p240, %p241
      %p243 = scmp.ne.s32.totalorder %s235, %s237
      %p244 = scmp.eq.s32.totalorder %s38, 1
      %p245 = por %p243, %p244
      %p246 = scmp.ne.s32.totalorder %s237, %s238
      %p247 = scmp.eq.s32.totalorder %s38, 0
      %p248 = por %p246, %p247
      %p249 = scmp.ne.s32.totalorder %s237, %s238
      %p250 = scmp.eq.s32.totalorder %s39, 1
      %p251 = por %p249, %p250
      %p253 = scmp.ne.s32.totalorder %s238, %s252
      %p254 = scmp.eq.s32.totalorder %s39, 0
      %p255 = por %p253, %p254
      %s257 = sadd.s32 %s256, 1
      %p260 = scmp.eq.s32.totalorder %s33, 1
      %p261 = scmp.ne.s32.totalorder %s256, %s258
      %p262 = scmp.eq.s32.totalorder %s33, 0
      %p263 = por %p261, %p262
      %p264 = scmp.ne.s32.totalorder %s256, %s258
      %p265 = scmp.eq.s32.totalorder %s38, 1
      %p266 = por %p264, %p265
      %p267 = scmp.ne.s32.totalorder %s258, %s259
      %p268 = scmp.eq.s32.totalorder %s38, 0
      %p269 = por %p267, %p268
      %p270 = scmp.ne.s32.totalorder %s258, %s259
      %p271 = scmp.eq.s32.totalorder %s39, 1
      %p272 = por %p270, %p271
      %p274 = scmp.ne.s32.totalorder %s259, %s273
      %p275 = scmp.eq.s32.totalorder %s39, 0
      %p276 = por %p274, %p275
      %s278 = sadd.s32 %s277, 1
      %p281 = scmp.eq.s32.totalorder %s33, 1
      %p282 = scmp.ne.s32.totalorder %s277, %s279
      %p283 = scmp.eq.s32.totalorder %s33, 0
      %p284 = por %p282, %p283
      %p285 = scmp.ne.s32.totalorder %s277, %s279
      %p286 = scmp.eq.s32.totalorder %s38, 1
      %p287 = por %p285, %p286
      %p288 = scmp.ne.s32.totalorder %s279, %s280
      %p289 = scmp.eq.s32.totalorder %s38, 0
      %p290 = por %p288, %p289
      %p291 = scmp.ne.s32.totalorder %s279, %s280
      %p292 = scmp.eq.s32.totalorder %s39, 1
      %p293 = por %p291, %p292
      %p295 = scmp.ne.s32.totalorder %s280, %s294
      %p296 = scmp.eq.s32.totalorder %s39, 0
      %p297 = por %p295, %p296
      %s299 = sadd.s32 %s298, 1
      %p302 = scmp.eq.s32.totalorder %s33, 1
      %p303 = scmp.ne.s32.totalorder %s298, %s300
      %p304 = scmp.eq.s32.totalorder %s33, 0
      %p305 = por %p303, %p304
      %p306 = scmp.ne.s32.totalorder %s298, %s300
      %p307 = scmp.eq.s32.totalorder %s38, 1
      %p308 = por %p306, %p307
      %p309 = scmp.ne.s32.totalorder %s300, %s301
      %p310 = scmp.eq.s32.totalorder %s38, 0
      %p311 = por %p309, %p310
      %p312 = scmp.ne.s32.totalorder %s300, %s301
      %p313 = scmp.eq.s32.totalorder %s39, 1
      %p314 = por %p312, %p313
      %p316 = scmp.ne.s32.totalorder %s301, %s315
      %p317 = scmp.eq.s32.totalorder %s39, 0
      %p318 = por %p316, %p317
      %s320 = sadd.s32 %s319, 1
      %p323 = scmp.eq.s32.totalorder %s33, 1
      %p324 = scmp.ne.s32.totalorder %s319, %s321
      %p325 = scmp.eq.s32.totalorder %s33, 0
      %p326 = por %p324, %p325
      %p327 = scmp.ne.s32.totalorder %s319, %s321
      %p328 = scmp.eq.s32.totalorder %s38, 1
      %p329 = por %p327, %p328
      %p330 = scmp.ne.s32.totalorder %s321, %s322
      %p331 = scmp.eq.s32.totalorder %s38, 0
      %p332 = por %p330, %p331
      %p333 = scmp.ne.s32.totalorder %s321, %s322
      %p334 = scmp.eq.s32.totalorder %s39, 1
      %p335 = por %p333, %p334
      %p337 = scmp.ne.s32.totalorder %s322, %s336
      %p338 = scmp.eq.s32.totalorder %s39, 0
      %p339 = por %p337, %p338
      %s341 = sadd.s32 %s340, 1
      %p344 = scmp.eq.s32.totalorder %s33, 1
      %p345 = scmp.ne.s32.totalorder %s340, %s342
      %p346 = scmp.eq.s32.totalorder %s33, 0
      %p347 = por %p345, %p346
      %p348 = scmp.ne.s32.totalorder %s340, %s342
      %p349 = scmp.eq.s32.totalorder %s38, 1
      %p350 = por %p348, %p349
      %p351 = scmp.ne.s32.totalorder %s342, %s343
      %p352 = scmp.eq.s32.totalorder %s38, 0
      %p353 = por %p351, %p352
      %p354 = scmp.ne.s32.totalorder %s342, %s343
      %p355 = scmp.eq.s32.totalorder %s39, 1
      %p356 = por %p354, %p355
      %p358 = scmp.ne.s32.totalorder %s343, %s357
      %p359 = scmp.eq.s32.totalorder %s39, 0
      %p360 = por %p358, %p359
      %s362 = sadd.s32 %s361, 1
      %p365 = scmp.eq.s32.totalorder %s33, 1
      %p366 = scmp.ne.s32.totalorder %s361, %s363
      %p367 = scmp.eq.s32.totalorder %s33, 0
      %p368 = por %p366, %p367
      %p369 = scmp.ne.s32.totalorder %s361, %s363
      %p370 = scmp.eq.s32.totalorder %s38, 1
      %p371 = por %p369, %p370
      %p372 = scmp.ne.s32.totalorder %s363, %s364
      %p373 = scmp.eq.s32.totalorder %s38, 0
      %p374 = por %p372, %p373
      %p375 = scmp.ne.s32.totalorder %s363, %s364
      %p376 = scmp.eq.s32.totalorder %s39, 1
      %p377 = por %p375, %p376
      %p379 = scmp.ne.s32.totalorder %s364, %s378
      %p380 = scmp.eq.s32.totalorder %s39, 0
      %p381 = por %p379, %p380
      %s383 = sadd.s32 %s382, 1
      %p386 = scmp.eq.s32.totalorder %s33, 1
      %p387 = scmp.ne.s32.totalorder %s382, %s384
      %p388 = scmp.eq.s32.totalorder %s33, 0
      %p389 = por %p387, %p388
      %p390 = scmp.ne.s32.totalorder %s382, %s384
      %p391 = scmp.eq.s32.totalorder %s38, 1
      %p392 = por %p390, %p391
      %p393 = scmp.ne.s32.totalorder %s384, %s385
      %p394 = scmp.eq.s32.totalorder %s38, 0
      %p395 = por %p393, %p394
      %p396 = scmp.ne.s32.totalorder %s384, %s385
      %p397 = scmp.eq.s32.totalorder %s39, 1
      %p398 = por %p396, %p397
      %p400 = scmp.ne.s32.totalorder %s385, %s399
      %p401 = scmp.eq.s32.totalorder %s39, 0
      %p402 = por %p400, %p401
      %s404 = sadd.s32 %s403, 1
      %p407 = scmp.eq.s32.totalorder %s33, 1
      %p408 = scmp.ne.s32.totalorder %s403, %s405
      %p409 = scmp.eq.s32.totalorder %s33, 0
      %p410 = por %p408, %p409
      %p411 = scmp.ne.s32.totalorder %s403, %s405
      %p412 = scmp.eq.s32.totalorder %s38, 1
      %p413 = por %p411, %p412
      %p414 = scmp.ne.s32.totalorder %s405, %s406
      %p415 = scmp.eq.s32.totalorder %s38, 0
      %p416 = por %p414, %p415
      %p417 = scmp.ne.s32.totalorder %s405, %s406
      %p418 = scmp.eq.s32.totalorder %s39, 1
      %p419 = por %p417, %p418
      %p421 = scmp.ne.s32.totalorder %s406, %s420
      %p422 = scmp.eq.s32.totalorder %s39, 0
      %p423 = por %p421, %p422
      %s425 = sadd.s32 %s424, 1
      %p428 = scmp.eq.s32.totalorder %s33, 1
      %p429 = scmp.ne.s32.totalorder %s424, %s426
      %p430 = scmp.eq.s32.totalorder %s33, 0
      %p431 = por %p429, %p430
      %p432 = scmp.ne.s32.totalorder %s424, %s426
      %p433 = scmp.eq.s32.totalorder %s38, 1
      %p434 = por %p432, %p433
      %p435 = scmp.ne.s32.totalorder %s426, %s427
      %p436 = scmp.eq.s32.totalorder %s38, 0
      %p437 = por %p435, %p436
      %p438 = scmp.ne.s32.totalorder %s426, %s427
      %p439 = scmp.eq.s32.totalorder %s39, 1
      %p440 = por %p438, %p439
      %p442 = scmp.ne.s32.totalorder %s427, %s441
      %p443 = scmp.eq.s32.totalorder %s39, 0
      %p444 = por %p442, %p443
      %s445 = ssub.s32 %s33, %s40
      %p446 = scmp.eq.s32.totalorder %s445, 0
      %s448 = sadd.s32 %s447, 1
      %s449 = scalar_select %p446, %s447, %s448
      %p452 = pneg %p446
      %p453 = scmp.eq.s32.totalorder %s33, 1
      %p454 = por %p452, %p453
      %p455 = scmp.ne.s32.totalorder %s447, %s450
      %p456 = scmp.eq.s32.totalorder %s33, 0
      %p457 = por %p455, %p456
      %p458 = scmp.ne.s32.totalorder %s447, %s450
      %p459 = scmp.eq.s32.totalorder %s38, 1
      %p460 = por %p458, %p459
      %p461 = scmp.ne.s32.totalorder %s450, %s451
      %p462 = scmp.eq.s32.totalorder %s38, 0
      %p463 = por %p461, %p462
      %p464 = scmp.ne.s32.totalorder %s450, %s451
      %p465 = scmp.eq.s32.totalorder %s39, 1
      %p466 = por %p464, %p465
      %p468 = scmp.ne.s32.totalorder %s451, %s467
      %p469 = scmp.eq.s32.totalorder %s39, 0
      %p470 = por %p468, %p469
      %s471 = ssub.s32 %s33, %s40
      %p472 = scmp.eq.s32.totalorder %s471, 0
      %s474 = sadd.s32 %s473, 1
      %s475 = scalar_select %p472, %s473, %s474
      %p478 = pneg %p472
      %p479 = scmp.eq.s32.totalorder %s33, 1
      %p480 = por %p478, %p479
      %p481 = scmp.ne.s32.totalorder %s473, %s476
      %p482 = scmp.eq.s32.totalorder %s33, 0
      %p483 = por %p481, %p482
      %p484 = scmp.ne.s32.totalorder %s473, %s476
      %p485 = scmp.eq.s32.totalorder %s38, 1
      %p486 = por %p484, %p485
      %p487 = scmp.ne.s32.totalorder %s476, %s477
      %p488 = scmp.eq.s32.totalorder %s38, 0
      %p489 = por %p487, %p488
      %p490 = scmp.ne.s32.totalorder %s476, %s477
      %p491 = scmp.eq.s32.totalorder %s39, 1
      %p492 = por %p490, %p491
      %p494 = scmp.ne.s32.totalorder %s477, %s493
      %p495 = scmp.eq.s32.totalorder %s39, 0
      %p496 = por %p494, %p495
      %p497 = scmp.le.s32.totalorder 1, %s33
      %p498 = scmp.lt.s32.totalorder %s33, 3
      %p499 = pnand %p497, %p498
      %p500 = pneg %p499
      // Predicated region
      $region9: #{conv_autoencoder_forward.2} parent=5 // pred_check
        _
      $region10: #{conv_autoencoder_forward.2} parent=5 // pred_check_branch
        %502 = sbr.rel (%p499) target = $region12
      $region11: #{conv_autoencoder_forward.2} parent=5 // pred_region
        %s503 = ssub.s32 %s33, 1
        // Predicated region
        $region13: #{conv_autoencoder_forward.2} parent=11 // pred_check
          %p504 = pneg %p80
        $region14: #{conv_autoencoder_forward.2} parent=11 // pred_check_branch
          %506 = sbr.rel (%p504) target = $region16
        $region15: #{conv_autoencoder_forward.2} parent=11 // pred_region
          _
        $region16: #{conv_autoencoder_forward.2} parent=11 // pred_fallthru
          _
        // Predicated region
        $region17: #{conv_autoencoder_forward.2} parent=11 // pred_check
          %p507 = pneg %p101
        $region18: #{conv_autoencoder_forward.2} parent=11 // pred_check_branch
          %509 = sbr.rel (%p507) target = $region20
        $region19: #{conv_autoencoder_forward.2} parent=11 // pred_region
          _
        $region20: #{conv_autoencoder_forward.2} parent=11 // pred_fallthru
          _
        // Predicated region
        $region21: #{conv_autoencoder_forward.2} parent=11 // pred_check
          %p510 = pneg %p122
        $region22: #{conv_autoencoder_forward.2} parent=11 // pred_check_branch
          %512 = sbr.rel (%p510) target = $region24
        $region23: #{conv_autoencoder_forward.2} parent=11 // pred_region
          _
        $region24: #{conv_autoencoder_forward.2} parent=11 // pred_fallthru
          _
        // Predicated region
        $region25: #{conv_autoencoder_forward.2} parent=11 // pred_check
          %p513 = pneg %p143
        $region26: #{conv_autoencoder_forward.2} parent=11 // pred_check_branch
          %515 = sbr.rel (%p513) target = $region28
        $region27: #{conv_autoencoder_forward.2} parent=11 // pred_region
          _
        $region28: #{conv_autoencoder_forward.2} parent=11 // pred_fallthru
          _
        // Predicated region
        $region29: #{conv_autoencoder_forward.2} parent=11 // pred_check
          %p516 = pneg %p164
        $region30: #{conv_autoencoder_forward.2} parent=11 // pred_check_branch
          %518 = sbr.rel (%p516) target = $region32
        $region31: #{conv_autoencoder_forward.2} parent=11 // pred_region
          _
        $region32: #{conv_autoencoder_forward.2} parent=11 // pred_fallthru
          _
        // Predicated region
        $region33: #{conv_autoencoder_forward.2} parent=11 // pred_check
          %p519 = pneg %p185
        $region34: #{conv_autoencoder_forward.2} parent=11 // pred_check_branch
          %521 = sbr.rel (%p519) target = $region36
        $region35: #{conv_autoencoder_forward.2} parent=11 // pred_region
          _
        $region36: #{conv_autoencoder_forward.2} parent=11 // pred_fallthru
          _
        // Predicated region
        $region37: #{conv_autoencoder_forward.2} parent=11 // pred_check
          %p522 = pneg %p206
        $region38: #{conv_autoencoder_forward.2} parent=11 // pred_check_branch
          %524 = sbr.rel (%p522) target = $region40
        $region39: #{conv_autoencoder_forward.2} parent=11 // pred_region
          _
        $region40: #{conv_autoencoder_forward.2} parent=11 // pred_fallthru
          _
        // Predicated region
        $region41: #{conv_autoencoder_forward.2} parent=11 // pred_check
          %p525 = pneg %p227
        $region42: #{conv_autoencoder_forward.2} parent=11 // pred_check_branch
          %527 = sbr.rel (%p525) target = $region44
        $region43: #{conv_autoencoder_forward.2} parent=11 // pred_region
          _
        $region44: #{conv_autoencoder_forward.2} parent=11 // pred_fallthru
          _
        // Predicated region
        $region45: #{conv_autoencoder_forward.2} parent=11 // pred_check
          %p528 = pneg %p248
        $region46: #{conv_autoencoder_forward.2} parent=11 // pred_check_branch
          %530 = sbr.rel (%p528) target = $region48
        $region47: #{conv_autoencoder_forward.2} parent=11 // pred_region
          _
        $region48: #{conv_autoencoder_forward.2} parent=11 // pred_fallthru
          _
        // Predicated region
        $region49: #{conv_autoencoder_forward.2} parent=11 // pred_check
          %p531 = pneg %p269
        $region50: #{conv_autoencoder_forward.2} parent=11 // pred_check_branch
          %533 = sbr.rel (%p531) target = $region52
        $region51: #{conv_autoencoder_forward.2} parent=11 // pred_region
          _
        $region52: #{conv_autoencoder_forward.2} parent=11 // pred_fallthru
          _
        // Predicated region
        $region53: #{conv_autoencoder_forward.2} parent=11 // pred_check
          %p534 = pneg %p290
        $region54: #{conv_autoencoder_forward.2} parent=11 // pred_check_branch
          %536 = sbr.rel (%p534) target = $region56
        $region55: #{conv_autoencoder_forward.2} parent=11 // pred_region
          %s538 = ssub.s32 256, 256
          %539 = vsyncadd [#allocation3], %s538
          %s540 = sshll.u32 [#allocation2], 4
          %s541 = int_to_ptr.vmem [resolvable:$true] %s540
          %546 = dma.hbm_to_vmem [thread:$0]  %s11, 256, %s541, [#allocation3], 128, 128, 8
        $region56: #{conv_autoencoder_forward.2} parent=11 // pred_fallthru
          _
        // Predicated region
        $region57: #{conv_autoencoder_forward.2} parent=11 // pred_check
          %p547 = pneg %p311
        $region58: #{conv_autoencoder_forward.2} parent=11 // pred_check_branch
          %549 = sbr.rel (%p547) target = $region60
        $region59: #{conv_autoencoder_forward.2} parent=11 // pred_region
          _
        $region60: #{conv_autoencoder_forward.2} parent=11 // pred_fallthru
          _
        // Predicated region
        $region61: #{conv_autoencoder_forward.2} parent=11 // pred_check
          %p550 = pneg %p332
        $region62: #{conv_autoencoder_forward.2} parent=11 // pred_check_branch
          %552 = sbr.rel (%p550) target = $region64
        $region63: #{conv_autoencoder_forward.2} parent=11 // pred_region
          _
        $region64: #{conv_autoencoder_forward.2} parent=11 // pred_fallthru
          _
        // Predicated region
        $region65: #{conv_autoencoder_forward.2} parent=11 // pred_check
          %p553 = pneg %p353
        $region66: #{conv_autoencoder_forward.2} parent=11 // pred_check_branch
          %555 = sbr.rel (%p553) target = $region68
        $region67: #{conv_autoencoder_forward.2} parent=11 // pred_region
          _
        $region68: #{conv_autoencoder_forward.2} parent=11 // pred_fallthru
          _
        // Predicated region
        $region69: #{conv_autoencoder_forward.2} parent=11 // pred_check
          %p556 = pneg %p374
        $region70: #{conv_autoencoder_forward.2} parent=11 // pred_check_branch
          %558 = sbr.rel (%p556) target = $region72
        $region71: #{conv_autoencoder_forward.2} parent=11 // pred_region
          _
        $region72: #{conv_autoencoder_forward.2} parent=11 // pred_fallthru
          _
        // Predicated region
        $region73: #{conv_autoencoder_forward.2} parent=11 // pred_check
          %p559 = pneg %p395
        $region74: #{conv_autoencoder_forward.2} parent=11 // pred_check_branch
          %561 = sbr.rel (%p559) target = $region76
        $region75: #{conv_autoencoder_forward.2} parent=11 // pred_region
          %s563 = ssub.s32 384, 384
          %564 = vsyncadd [#allocation6], %s563
          %s565 = sshll.u32 [#allocation5], 4
          %s566 = int_to_ptr.vmem [resolvable:$true] %s565
          %571 = dma.hbm_to_vmem [thread:$0]  %s16, 384, %s566, [#allocation6], 128, 128, 8
        $region76: #{conv_autoencoder_forward.2} parent=11 // pred_fallthru
          _
        // Predicated region
        $region77: #{conv_autoencoder_forward.2} parent=11 // pred_check
          %p572 = pneg %p416
        $region78: #{conv_autoencoder_forward.2} parent=11 // pred_check_branch
          %574 = sbr.rel (%p572) target = $region80
        $region79: #{conv_autoencoder_forward.2} parent=11 // pred_region
          %s576 = ssub.s32 768, 768
          %577 = vsyncadd [#allocation6], %s576
          %s578 = sshll.u32 [#allocation7], 4
          %s579 = int_to_ptr.vmem [resolvable:$true] %s578
          %584 = dma.hbm_to_vmem [thread:$0]  %s17, 768, %s579, [#allocation6], 128, 128, 8
        $region80: #{conv_autoencoder_forward.2} parent=11 // pred_fallthru
          _
        // Predicated region
        $region81: #{conv_autoencoder_forward.2} parent=11 // pred_check
          %p585 = pneg %p437
        $region82: #{conv_autoencoder_forward.2} parent=11 // pred_check_branch
          %587 = sbr.rel (%p585) target = $region84
        $region83: #{conv_autoencoder_forward.2} parent=11 // pred_region
          %s589 = ssub.s32 3072, 3072
          %590 = vsyncadd [#allocation9], %s589
          %s591 = sshll.u32 [#allocation8], 4
          %s592 = int_to_ptr.vmem [resolvable:$true] %s591
          %597 = dma.hbm_to_vmem [thread:$0]  %s18, 3072, %s592, [#allocation9], 256, 256, 16
        $region84: #{conv_autoencoder_forward.2} parent=11 // pred_fallthru
          _
      $region12: #{conv_autoencoder_forward.2} parent=5 // pred_fallthru
        _
      %p598 = scmp.lt.s32.totalorder %s33, 2
      // Predicated region
      $region85: #{conv_autoencoder_forward.2} parent=5 // pred_check
        %p599 = pneg %p598
      $region86: #{conv_autoencoder_forward.2} parent=5 // pred_check_branch
        %601 = sbr.rel (%p599) target = $region88
      $region87: #{conv_autoencoder_forward.2} parent=5 // pred_region
        // Predicated region
        $region89: #{conv_autoencoder_forward.2} parent=87 // pred_check
          %p602 = pneg %p53
        $region90: #{conv_autoencoder_forward.2} parent=87 // pred_check_branch
          %604 = sbr.rel (%p602) target = $region92
        $region91: #{conv_autoencoder_forward.2} parent=87 // pred_region
          %p605 = scmp.lt.s32.totalorder %s33, 1
          %s606 = scalar_select %p605, %s33, 1
          %s607 = smul.addr %s606, 2
          %s608 = smul.addr %s607, 4
          %s609 = scalar_lea.vmem %s0, %s608
        $region92: #{conv_autoencoder_forward.2} parent=87 // pred_fallthru
          _
      $region88: #{conv_autoencoder_forward.2} parent=5 // pred_fallthru
        _
      %p610 = scmp.le.s32.totalorder 1, %s33
      %p611 = scmp.lt.s32.totalorder %s33, 3
      %p612 = pnand %p610, %p611
      %p613 = pneg %p612
      // Predicated region
      $region93: #{conv_autoencoder_forward.2} parent=5 // pred_check
        _
      $region94: #{conv_autoencoder_forward.2} parent=5 // pred_check_branch
        %615 = sbr.rel (%p612) target = $region96
      $region95: #{conv_autoencoder_forward.2} parent=5 // pred_region
        %s616 = ssub.s32 %s33, 1
        // Predicated region
        $region97: #{conv_autoencoder_forward.2} parent=95 // pred_check
          %p617 = pneg %p290
        $region98: #{conv_autoencoder_forward.2} parent=95 // pred_check_branch
          %619 = sbr.rel (%p617) target = $region100
        $region99: #{conv_autoencoder_forward.2} parent=95 // pred_region
          %620 = dma.done [#allocation3], 256
        $region100: #{conv_autoencoder_forward.2} parent=95 // pred_fallthru
          _
        // Predicated region
        $region101: #{conv_autoencoder_forward.2} parent=95 // pred_check
          %p621 = pneg %p395
        $region102: #{conv_autoencoder_forward.2} parent=95 // pred_check_branch
          %623 = sbr.rel (%p621) target = $region104
        $region103: #{conv_autoencoder_forward.2} parent=95 // pred_region
          %624 = dma.done [#allocation6], 384
        $region104: #{conv_autoencoder_forward.2} parent=95 // pred_fallthru
          _
        // Predicated region
        $region105: #{conv_autoencoder_forward.2} parent=95 // pred_check
          %p625 = pneg %p416
        $region106: #{conv_autoencoder_forward.2} parent=95 // pred_check_branch
          %627 = sbr.rel (%p625) target = $region108
        $region107: #{conv_autoencoder_forward.2} parent=95 // pred_region
          %628 = dma.done [#allocation6], 768
        $region108: #{conv_autoencoder_forward.2} parent=95 // pred_fallthru
          _
        // Predicated region
        $region109: #{conv_autoencoder_forward.2} parent=95 // pred_check
          %p629 = pneg %p437
        $region110: #{conv_autoencoder_forward.2} parent=95 // pred_check_branch
          %631 = sbr.rel (%p629) target = $region112
        $region111: #{conv_autoencoder_forward.2} parent=95 // pred_region
          %632 = dma.done [#allocation9], 3072
        $region112: #{conv_autoencoder_forward.2} parent=95 // pred_fallthru
          _
        %p633 = scmp.lt.s32.totalorder %s38, 1
        %s634 = scalar_select %p633, %s38, 1
        %s635 = smul.addr %s634, 2
        %s636 = smul.addr %s635, 4
        %s637 = scalar_lea.vmem %s0, %s636
        %p638 = pneg %p59
        %p639 = pneg %p56
        %p640 = pneg %p80
        %p641 = pneg %p77
        %p642 = pneg %p101
        %p643 = pneg %p98
        %p644 = pneg %p122
        %p645 = pneg %p119
        %p646 = pneg %p143
        %p647 = pneg %p140
        %p648 = pneg %p164
        %p649 = pneg %p161
        %p650 = pneg %p185
        %p651 = pneg %p182
        %p652 = pneg %p206
        %p653 = pneg %p203
        %p654 = pneg %p227
        %p655 = pneg %p224
        %p656 = pneg %p248
        %p657 = pneg %p245
        %p658 = pneg %p269
        %p659 = pneg %p266
        %p660 = pneg %p290
        %p661 = pneg %p287
        %p662 = pneg %p311
        %p663 = pneg %p308
        %p664 = pneg %p332
        %p665 = pneg %p329
        %p666 = pneg %p353
        %p667 = pneg %p350
        %p668 = pneg %p374
        %p669 = pneg %p371
        %p670 = pneg %p395
        %p671 = pneg %p392
        %p672 = pneg %p416
        %p673 = pneg %p413
        %p674 = pneg %p437
        %p675 = pneg %p434
        %p676 = pneg %p463
        %p677 = pneg %p460
        %p678 = scmp.lt.s32.totalorder %s38, 1
        %s679 = scalar_select %p678, %s38, 1
        %s680 = smul.addr %s679, 4
        %s681 = smul.addr %s680, 8
        %s682 = scalar_lea.vmem %s19, %s681
        %p683 = pneg %p489
        %p684 = pneg %p486
        %s685 = sand.u32 %s476, 1
        %s686 = scalar_lea.sflag [#allocation4], %s685
        %s687 = sand.u32 %s476, 1
        %s688 = smul.addr %s687, 8
        %s689 = scalar_lea.vmem [#allocation10], %s688
        %p690 = scmp.lt.s32.totalorder %s38, 1
        %s691 = scalar_select %p690, %s38, 1
        %s692 = smul.addr %s691, 2
        %s693 = smul.addr %s692, 4
        %s694 = scalar_lea.vmem %s0, %s693
        %p695 = scmp.lt.s32.totalorder %s38, 1
        %s696 = scalar_select %p695, %s38, 1
        %s697 = smul.addr %s696, 4
        %s698 = smul.addr %s697, 8
        %s699 = scalar_lea.vmem %s19, %s698
        %v700 = vld [vmem:[%s694] sm:$0xff]
        %v701 = vld [vmem:[%s1] sm:$0xff]
        %v702 = vld [vmem:[%s1 + $0x8] sm:$0xff]
        %v703 = vld [vmem:[%s1 + $0x10] sm:$0xff]
        %v704 = vld [vmem:[%s1 + $0x18] sm:$0xff]
        %v705 = vld [vmem:[%s1 + $0x20] sm:$0xff]
        %v706 = vld [vmem:[%s1 + $0x28] sm:$0xff]
        %v708 = vcombine.high %v700, %v700
        %vm709 = vcmask 31744
        %v711 = vsel %vm709, %v701, 0
        %v714 = vsel %vm709, %v702, 0
        %v717 = vsel %vm709, %v703, 0
        %v720 = vsel %vm709, %v704, 0
        %v723 = vsel %vm709, %v705, 0
        %v726 = vsel %vm709, %v706, 0
        %vm728 = vcmask 1043456
        %v729 = vsel %vm728, %v700, 0
        %v731 = vsel %vm728, %v708, 0
        %733 = vmatprep.subr.mxu0 %v731
        %734 = vmatpush1.msra.mxu0 %v729
        %735 = vmatprep.subr.mxu0 0.0
        %736 = vmatpush1.msra.mxu0 0.0
        %737 = vmatprep.subr.mxu0 0.0
        %738 = vmatpush1.msra.mxu0 0.0
        %739 = vmatprep.subr.mxu0 0.0
        %740 = vmatpush1.msra.mxu0 0.0
        %741 = vmatprep.subr.mxu0 0.0
        %742 = vmatpush1.msra.mxu0 0.0
        %743 = vmatprep.subr.mxu0 0.0
        %744 = vmatpush1.msra.mxu0 0.0
        %745 = vmatprep.subr.mxu0 0.0
        %746 = vmatpush1.msra.mxu0 0.0
        %747 = vmatprep.subr.mxu0 0.0
        %748 = vmatpush1.msra.mxu0 0.0
        %749 = vmatprep.subr.mxu0 0.0
        %750 = vmatpush1.msra.mxu0 0.0
        %751 = vmatprep.subr.mxu0 0.0
        %752 = vmatpush1.msra.mxu0 0.0
        %753 = vmatprep.subr.mxu0 0.0
        %754 = vmatpush1.msra.mxu0 0.0
        %755 = vmatprep.subr.mxu0 0.0
        %756 = vmatpush1.msra.mxu0 0.0
        %757 = vmatprep.subr.mxu0 0.0
        %758 = vmatpush1.msra.mxu0 0.0
        %759 = vmatprep.subr.mxu0 0.0
        %760 = vmatpush1.msra.mxu0 0.0
        %761 = vmatprep.subr.mxu0 0.0
        %762 = vmatpush1.msra.mxu0 0.0
        %763 = vmatprep.subr.mxu0 0.0
        %764 = vmatpush1.msra.mxu0 0.0
        %765 = vmatprep.subr.mxu0 0.0
        %766 = vmatpush1.msra.mxu0 0.0
        %767 = vmatprep.subr.mxu0 0.0
        %768 = vmatpush1.msra.mxu0 0.0
        %769 = vmatprep.subr.mxu0 0.0
        %770 = vmatpush1.msra.mxu0 0.0
        %771 = vmatprep.subr.mxu0 0.0
        %772 = vmatpush1.msra.mxu0 0.0
        %773 = vmatprep.subr.mxu0 0.0
        %774 = vmatpush1.msra.mxu0 0.0
        %775 = vmatprep.subr.mxu0 0.0
        %776 = vmatpush1.msra.mxu0 0.0
        %777 = vmatprep.subr.mxu0 0.0
        %778 = vmatpush1.msra.mxu0 0.0
        %779 = vmatprep.subr.mxu0 0.0
        %780 = vmatpush1.msra.mxu0 0.0
        %781 = vmatprep.subr.mxu0 0.0
        %782 = vmatpush1.msra.mxu0 0.0
        %783 = vmatprep.subr.mxu0 0.0
        %784 = vmatpush1.msra.mxu0 0.0
        %785 = vmatprep.subr.mxu0 0.0
        %786 = vmatpush1.msra.mxu0 0.0
        %787 = vmatprep.subr.mxu0 0.0
        %788 = vmatpush1.msra.mxu0 0.0
        %789 = vmatprep.subr.mxu0 0.0
        %790 = vmatpush1.msra.mxu0 0.0
        %791 = vmatprep.subr.mxu0 0.0
        %792 = vmatpush1.msra.mxu0 0.0
        %793 = vmatprep.subr.mxu0 0.0
        %794 = vmatpush1.msra.mxu0 0.0
        %795 = vmatprep.subr.mxu0 0.0
        %796 = vmatpush1.msra.mxu0 0.0
        %797 = vmatprep.mubr.f32.mxu0 0.0
        %798 = vmatmul.mubr.f32.gmra.mrb[0].mxu0 %v711
        %v799 = vpop.f32.mrb[0].mxu0
        %v800 = vadd.f32 0.0, %v799
        %v801 = vpop.f32.mrb[0].mxu0
        %v802 = vadd.f32 0.0, %v801
        %803 = vmatprep.mubr.f32.mxu0 0.0
        %804 = vmatmul.mubr.f32.gmra.mrb[0].mxu0 %v714
        %v805 = vpop.f32.mrb[0].mxu0
        %v806 = vadd.f32 0.0, %v805
        %v807 = vpop.f32.mrb[0].mxu0
        %v808 = vadd.f32 0.0, %v807
        %809 = vmatprep.mubr.f32.mxu0 0.0
        %810 = vmatmul.mubr.f32.gmra.mrb[0].mxu0 %v717
        %v811 = vpop.f32.mrb[0].mxu0
        %v812 = vadd.f32 0.0, %v811
        %v813 = vpop.f32.mrb[0].mxu0
        %v814 = vadd.f32 0.0, %v813
        %815 = vmatprep.mubr.f32.mxu0 0.0
        %816 = vmatmul.mubr.f32.gmra.mrb[0].mxu0 %v720
        %v817 = vpop.f32.mrb[0].mxu0
        %v818 = vadd.f32 0.0, %v817
        %v819 = vpop.f32.mrb[0].mxu0
        %v820 = vadd.f32 0.0, %v819
        %821 = vmatprep.mubr.f32.mxu0 0.0
        %822 = vmatmul.mubr.f32.gmra.mrb[0].mxu0 %v723
        %v823 = vpop.f32.mrb[0].mxu0
        %v824 = vadd.f32 0.0, %v823
        %v825 = vpop.f32.mrb[0].mxu0
        %v826 = vadd.f32 0.0, %v825
        %827 = vmatprep.mubr.f32.mxu0 0.0
        %828 = vmatmul.mubr.f32.gmra.mrb[0].mxu0 %v726
        %v829 = vpop.f32.mrb[0].mxu0
        %v830 = vadd.f32 0.0, %v829
        %v831 = vpop.f32.mrb[0].mxu0
        %v832 = vadd.f32 0.0, %v831
        %833 = vdwg.mxu0
        %v834 = vlaneseq
        %v835 = vand.u32 %v834, 127
        %v836 = vadd.s32 %v835, 128
        %vm837 = vcmp.eq.s32.totalorder %v835, 0
        %vm838 = vcmp.eq.s32.totalorder %v836, 0
        %839 = vrot.lane.b32.xlu0 %v800, 1
        %v840 = vpop.permute.xlu0 %839
        %841 = vrot.lane.b32.xlu0 %v806, 1
        %v842 = vpop.permute.xlu0 %841
        %843 = vrot.lane.b32.xlu0 %v802, 1
        %v844 = vpop.permute.xlu0 %843
        %845 = vrot.lane.b32.xlu0 %v808, 1
        %v846 = vpop.permute.xlu0 %845
        %vm847 = vcmp.lt.s32.totalorder %v835, 1
        %v848 = vsel %vm847, %v840, %v844
        %v849 = vsel %vm847, %v842, %v846
        %v850 = vsel %vm847, %v844, %v840
        %v851 = vsel %vm847, %v846, %v842
        %v852 = vsel %vm837, 0.0, %v850
        %v853 = vsel %vm838, 0.0, %v848
        %v854 = vsel %vm837, 0.0, %v851
        %v855 = vsel %vm838, 0.0, %v849
        %vm856 = vcmp.eq.s32.totalorder %v835, 255
        %vm857 = vcmp.eq.s32.totalorder %v836, 255
        %858 = vrot.lane.b32.xlu0 %v824, 127
        %v859 = vpop.permute.xlu0 %858
        %860 = vrot.lane.b32.xlu0 %v830, 127
        %v861 = vpop.permute.xlu0 %860
        %862 = vrot.lane.b32.xlu0 %v826, 127
        %v863 = vpop.permute.xlu0 %862
        %864 = vrot.lane.b32.xlu0 %v832, 127
        %v865 = vpop.permute.xlu0 %864
        %vm866 = vcmp.lt.s32.totalorder %v835, 127
        %v867 = vsel %vm866, %v859, %v863
        %v868 = vsel %vm866, %v861, %v865
        %v869 = vsel %vm866, %v863, %v859
        %v870 = vsel %vm866, %v865, %v861
        %v871 = vsel %vm856, 0.0, %v867
        %v872 = vsel %vm857, 0.0, %v869
        %v873 = vsel %vm856, 0.0, %v868
        %v874 = vsel %vm857, 0.0, %v870
        %v875 = vadd.f32 %v852, %v812
        %v876 = vadd.f32 %v853, %v814
        %v877 = vadd.f32 %v854, %v818
        %v878 = vadd.f32 %v855, %v820
        %v879 = vadd.f32 %v875, %v871
        %v880 = vadd.f32 %v876, %v872
        %v881 = vadd.f32 %v877, %v873
        %v882 = vadd.f32 %v878, %v874
        %v883 = vld [vmem:[%s2] sm:$0xff]
        %v884 = vld [vmem:[%s2 + $0x8] sm:$0xff]
        %886 = vset.pattern.permute.xlu0 0
        %887 = vperm.xlu0 %886, %v883
        %v888 = vpop.permute.xlu0 %887
        %891 = vset.pattern.permute.xlu0 0
        %892 = vperm.xlu0 %891, %v884
        %v893 = vpop.permute.xlu0 %892
        %v895 = vadd.f32 %v879, %v888
        %v896 = vadd.f32 %v880, %v888
        %v897 = vadd.f32 %v881, %v893
        %v898 = vadd.f32 %v882, %v893
        %vm899 = vcmp.ge.f32.partialorder %v895, 0.0
        %vm900 = vcmp.ge.f32.partialorder %v896, 0.0
        %vm901 = vcmp.ge.f32.partialorder %v897, 0.0
        %vm902 = vcmp.ge.f32.partialorder %v898, 0.0
        %v903 = vmul.f32 %v895, 0.05
        %v904 = vmul.f32 %v896, 0.05
        %v905 = vmul.f32 %v897, 0.05
        %v906 = vmul.f32 %v898, 0.05
        %v907 = vsel %vm899, %v895, %v903
        %v908 = vsel %vm900, %v896, %v904
        %v909 = vsel %vm901, %v897, %v905
        %v910 = vsel %vm902, %v898, %v906
        %v911 = vld [vmem:[%s13] sm:$0xff]
        %v912 = vld [vmem:[%s13 + $0x8] sm:$0xff]
        %v913 = vld [vmem:[%s13 + $0x10] sm:$0xff]
        %v914 = vld [vmem:[%s13 + $0x18] sm:$0xff]
        %v915 = vld [vmem:[%s13 + $0x20] sm:$0xff]
        %v916 = vld [vmem:[%s13 + $0x28] sm:$0xff]
        %v917 = vld [vmem:[%s13 + $0x30] sm:$0xff]
        %v918 = vld [vmem:[%s13 + $0x38] sm:$0xff]
        %v919 = vld [vmem:[%s13 + $0x40] sm:$0xff]
        %v920 = vld [vmem:[%s13 + $0x48] sm:$0xff]
        %v921 = vld [vmem:[%s13 + $0x50] sm:$0xff]
        %v922 = vld [vmem:[%s13 + $0x58] sm:$0xff]
        %v923 = vld [vmem:[%s13 + $0x60] sm:$0xff]
        %v924 = vld [vmem:[%s13 + $0x68] sm:$0xff]
        %v925 = vld [vmem:[%s13 + $0x70] sm:$0xff]
        %v926 = vld [vmem:[%s13 + $0x78] sm:$0xff]
        %v927 = vld [vmem:[%s13 + $0x80] sm:$0xff]
        %v928 = vld [vmem:[%s13 + $0x88] sm:$0xff]
        %v929 = vld [vmem:[%s13 + $0x90] sm:$0xff]
        %v930 = vld [vmem:[%s13 + $0x98] sm:$0xff]
        %v931 = vld [vmem:[%s13 + $0xa0] sm:$0xff]
        %v932 = vld [vmem:[%s13 + $0xa8] sm:$0xff]
        %v933 = vld [vmem:[%s13 + $0xb0] sm:$0xff]
        %v934 = vld [vmem:[%s13 + $0xb8] sm:$0xff]
        %v935 = vld [vmem:[%s13 + $0xc0] sm:$0xff]
        %v936 = vld [vmem:[%s13 + $0xc8] sm:$0xff]
        %v937 = vld [vmem:[%s13 + $0xd0] sm:$0xff]
        %v938 = vld [vmem:[%s13 + $0xd8] sm:$0xff]
        %v939 = vld [vmem:[%s13 + $0xe0] sm:$0xff]
        %v940 = vld [vmem:[%s13 + $0xe8] sm:$0xff]
        %v941 = vld [vmem:[%s13 + $0xf0] sm:$0xff]
        %v942 = vld [vmem:[%s13 + $0xf8] sm:$0xff]
        %943 = vmatprep.subr.mxu0 0.0
        %944 = vmatpush1.msra.mxu0 %v911
        %945 = vmatprep.subr.mxu0 0.0
        %946 = vmatpush1.msra.mxu0 %v912
        %947 = vmatprep.subr.mxu0 0.0
        %948 = vmatpush1.msra.mxu0 %v913
        %949 = vmatprep.subr.mxu0 0.0
        %950 = vmatpush1.msra.mxu0 %v914
        %951 = vmatprep.subr.mxu0 0.0
        %952 = vmatpush1.msra.mxu0 %v915
        %953 = vmatprep.subr.mxu0 0.0
        %954 = vmatpush1.msra.mxu0 %v916
        %955 = vmatprep.subr.mxu0 0.0
        %956 = vmatpush1.msra.mxu0 %v917
        %957 = vmatprep.subr.mxu0 0.0
        %958 = vmatpush1.msra.mxu0 %v918
        %959 = vmatprep.subr.mxu0 0.0
        %960 = vmatpush1.msra.mxu0 %v919
        %961 = vmatprep.subr.mxu0 0.0
        %962 = vmatpush1.msra.mxu0 %v920
        %963 = vmatprep.subr.mxu0 0.0
        %964 = vmatpush1.msra.mxu0 %v921
        %965 = vmatprep.subr.mxu0 0.0
        %966 = vmatpush1.msra.mxu0 %v922
        %967 = vmatprep.subr.mxu0 0.0
        %968 = vmatpush1.msra.mxu0 %v923
        %969 = vmatprep.subr.mxu0 0.0
        %970 = vmatpush1.msra.mxu0 %v924
        %971 = vmatprep.subr.mxu0 0.0
        %972 = vmatpush1.msra.mxu0 %v925
        %973 = vmatprep.subr.mxu0 0.0
        %974 = vmatpush1.msra.mxu0 %v926
        %975 = vmatprep.subr.mxu0 0.0
        %976 = vmatpush1.msra.mxu0 %v927
        %977 = vmatprep.subr.mxu0 0.0
        %978 = vmatpush1.msra.mxu0 %v928
        %979 = vmatprep.subr.mxu0 0.0
        %980 = vmatpush1.msra.mxu0 %v929
        %981 = vmatprep.subr.mxu0 0.0
        %982 = vmatpush1.msra.mxu0 %v930
        %983 = vmatprep.subr.mxu0 0.0
        %984 = vmatpush1.msra.mxu0 %v931
        %985 = vmatprep.subr.mxu0 0.0
        %986 = vmatpush1.msra.mxu0 %v932
        %987 = vmatprep.subr.mxu0 0.0
        %988 = vmatpush1.msra.mxu0 %v933
        %989 = vmatprep.subr.mxu0 0.0
        %990 = vmatpush1.msra.mxu0 %v934
        %991 = vmatprep.subr.mxu0 0.0
        %992 = vmatpush1.msra.mxu0 %v935
        %993 = vmatprep.subr.mxu0 0.0
        %994 = vmatpush1.msra.mxu0 %v936
        %995 = vmatprep.subr.mxu0 0.0
        %996 = vmatpush1.msra.mxu0 %v937
        %997 = vmatprep.subr.mxu0 0.0
        %998 = vmatpush1.msra.mxu0 %v938
        %999 = vmatprep.subr.mxu0 0.0
        %1000 = vmatpush1.msra.mxu0 %v939
        %1001 = vmatprep.subr.mxu0 0.0
        %1002 = vmatpush1.msra.mxu0 %v940
        %1003 = vmatprep.subr.mxu0 0.0
        %1004 = vmatpush1.msra.mxu0 %v941
        %1005 = vmatprep.subr.mxu0 0.0
        %1006 = vmatpush1.msra.mxu0 %v942
        %1007 = vmatprep.mubr.f32.mxu0 %v908
        %1008 = vmatmul.mubr.f32.gmra.mrb[0].mxu0 %v907
        %v1009 = vpop.f32.mrb[0].mxu0
        %v1010 = vadd.f32 0.0, %v1009
        %v1011 = vpop.f32.mrb[0].mxu0
        %1012 = vmatprep.mubr.f32.mxu0 %v910
        %1013 = vmatmul.mubr.f32.gmra.mrb[0].mxu0 %v909
        %v1014 = vpop.f32.mrb[0].mxu0
        %v1015 = vadd.f32 0.0, %v1014
        %v1016 = vpop.f32.mrb[0].mxu0
        %1017 = vdwg.mxu0
        %v1018 = vld [vmem:[%s3] sm:$0xff]
        %v1019 = vld [vmem:[%s3 + $0x8] sm:$0xff]
        %v1020 = vld [vmem:[%s3 + $0x10] sm:$0xff]
        %v1021 = vld [vmem:[%s3 + $0x18] sm:$0xff]
        %v1022 = vld [vmem:[%s3 + $0x20] sm:$0xff]
        %v1023 = vld [vmem:[%s3 + $0x28] sm:$0xff]
        %v1024 = vld [vmem:[%s3 + $0x30] sm:$0xff]
        %v1025 = vld [vmem:[%s3 + $0x38] sm:$0xff]
        %v1026 = vld [vmem:[%s3 + $0x40] sm:$0xff]
        %vm1027 = vcmask 130048
        %v1029 = vsel %vm1027, %v1018, 0
        %v1032 = vsel %vm1027, %v1019, 0
        %v1035 = vsel %vm1027, %v1020, 0
        %v1038 = vsel %vm1027, %v1021, 0
        %v1041 = vsel %vm1027, %v1022, 0
        %v1044 = vsel %vm1027, %v1023, 0
        %v1047 = vsel %vm1027, %v1024, 0
        %v1050 = vsel %vm1027, %v1025, 0
        %v1053 = vsel %vm1027, %v1026, 0
        %1055 = vmatprep.subr.mxu0 0.0
        %1056 = vmatpush1.msra.mxu0 %v1010
        %1057 = vmatprep.subr.mxu0 0.0
        %1058 = vmatpush1.msra.mxu0 %v1015
        %1059 = vmatprep.subr.mxu0 0.0
        %1060 = vmatpush1.msra.mxu0 0.0
        %1061 = vmatprep.subr.mxu0 0.0
        %1062 = vmatpush1.msra.mxu0 0.0
        %1063 = vmatprep.subr.mxu0 0.0
        %1064 = vmatpush1.msra.mxu0 0.0
        %1065 = vmatprep.subr.mxu0 0.0
        %1066 = vmatpush1.msra.mxu0 0.0
        %1067 = vmatprep.subr.mxu0 0.0
        %1068 = vmatpush1.msra.mxu0 0.0
        %1069 = vmatprep.subr.mxu0 0.0
        %1070 = vmatpush1.msra.mxu0 0.0
        %1071 = vmatprep.subr.mxu0 0.0
        %1072 = vmatpush1.msra.mxu0 0.0
        %1073 = vmatprep.subr.mxu0 0.0
        %1074 = vmatpush1.msra.mxu0 0.0
        %1075 = vmatprep.subr.mxu0 0.0
        %1076 = vmatpush1.msra.mxu0 0.0
        %1077 = vmatprep.subr.mxu0 0.0
        %1078 = vmatpush1.msra.mxu0 0.0
        %1079 = vmatprep.subr.mxu0 0.0
        %1080 = vmatpush1.msra.mxu0 0.0
        %1081 = vmatprep.subr.mxu0 0.0
        %1082 = vmatpush1.msra.mxu0 0.0
        %1083 = vmatprep.subr.mxu0 0.0
        %1084 = vmatpush1.msra.mxu0 0.0
        %1085 = vmatprep.subr.mxu0 0.0
        %1086 = vmatpush1.msra.mxu0 0.0
        %1087 = vmatprep.subr.mxu0 0.0
        %1088 = vmatpush1.msra.mxu0 0.0
        %1089 = vmatprep.subr.mxu0 0.0
        %1090 = vmatpush1.msra.mxu0 0.0
        %1091 = vmatprep.subr.mxu0 0.0
        %1092 = vmatpush1.msra.mxu0 0.0
        %1093 = vmatprep.subr.mxu0 0.0
        %1094 = vmatpush1.msra.mxu0 0.0
        %1095 = vmatprep.subr.mxu0 0.0
        %1096 = vmatpush1.msra.mxu0 0.0
        %1097 = vmatprep.subr.mxu0 0.0
        %1098 = vmatpush1.msra.mxu0 0.0
        %1099 = vmatprep.subr.mxu0 0.0
        %1100 = vmatpush1.msra.mxu0 0.0
        %1101 = vmatprep.subr.mxu0 0.0
        %1102 = vmatpush1.msra.mxu0 0.0
        %1103 = vmatprep.subr.mxu0 0.0
        %1104 = vmatpush1.msra.mxu0 0.0
        %1105 = vmatprep.subr.mxu0 0.0
        %1106 = vmatpush1.msra.mxu0 0.0
        %1107 = vmatprep.subr.mxu0 0.0
        %1108 = vmatpush1.msra.mxu0 0.0
        %1109 = vmatprep.subr.mxu0 0.0
        %1110 = vmatpush1.msra.mxu0 0.0
        %1111 = vmatprep.subr.mxu0 0.0
        %1112 = vmatpush1.msra.mxu0 0.0
        %1113 = vmatprep.subr.mxu0 0.0
        %1114 = vmatpush1.msra.mxu0 0.0
        %1115 = vmatprep.subr.mxu0 0.0
        %1116 = vmatpush1.msra.mxu0 0.0
        %1117 = vmatprep.subr.mxu0 0.0
        %1118 = vmatpush1.msra.mxu0 0.0
        %1119 = vmatprep.mubr.f32.mxu0 0.0
        %1120 = vmatmul.mubr.f32.gmra.mrb[0].mxu0 %v1029
        %v1121 = vpop.f32.mrb[0].mxu0
        %v1122 = vadd.f32 0.0, %v1121
        %v1123 = vpop.f32.mrb[0].mxu0
        %1124 = vmatprep.mubr.f32.mxu0 0.0
        %1125 = vmatmul.mubr.f32.gmra.mrb[0].mxu0 %v1032
        %v1126 = vpop.f32.mrb[0].mxu0
        %v1127 = vadd.f32 0.0, %v1126
        %v1128 = vpop.f32.mrb[0].mxu0
        %1129 = vmatprep.mubr.f32.mxu0 0.0
        %1130 = vmatmul.mubr.f32.gmra.mrb[0].mxu0 %v1035
        %v1131 = vpop.f32.mrb[0].mxu0
        %v1132 = vadd.f32 0.0, %v1131
        %v1133 = vpop.f32.mrb[0].mxu0
        %1134 = vmatprep.mubr.f32.mxu0 0.0
        %1135 = vmatmul.mubr.f32.gmra.mrb[0].mxu0 %v1038
        %v1136 = vpop.f32.mrb[0].mxu0
        %v1137 = vadd.f32 0.0, %v1136
        %v1138 = vpop.f32.mrb[0].mxu0
        %1139 = vmatprep.mubr.f32.mxu0 0.0
        %1140 = vmatmul.mubr.f32.gmra.mrb[0].mxu0 %v1041
        %v1141 = vpop.f32.mrb[0].mxu0
        %v1142 = vadd.f32 0.0, %v1141
        %v1143 = vpop.f32.mrb[0].mxu0
        %1144 = vmatprep.mubr.f32.mxu0 0.0
        %1145 = vmatmul.mubr.f32.gmra.mrb[0].mxu0 %v1044
        %v1146 = vpop.f32.mrb[0].mxu0
        %v1147 = vadd.f32 0.0, %v1146
        %v1148 = vpop.f32.mrb[0].mxu0
        %1149 = vmatprep.mubr.f32.mxu0 0.0
        %1150 = vmatmul.mubr.f32.gmra.mrb[0].mxu0 %v1047
        %v1151 = vpop.f32.mrb[0].mxu0
        %v1152 = vadd.f32 0.0, %v1151
        %v1153 = vpop.f32.mrb[0].mxu0
        %1154 = vmatprep.mubr.f32.mxu0 0.0
        %1155 = vmatmul.mubr.f32.gmra.mrb[0].mxu0 %v1050
        %v1156 = vpop.f32.mrb[0].mxu0
        %v1157 = vadd.f32 0.0, %v1156
        %v1158 = vpop.f32.mrb[0].mxu0
        %1159 = vmatprep.mubr.f32.mxu0 0.0
        %1160 = vmatmul.mubr.f32.gmra.mrb[0].mxu0 %v1053
        %v1161 = vpop.f32.mrb[0].mxu0
        %v1162 = vadd.f32 0.0, %v1161
        %v1163 = vpop.f32.mrb[0].mxu0
        %1164 = vdwg.mxu0
        %vm1165 = vcmask 1048320
        %1166 = vrot.lane.b32.xlu0 %v1122, 96
        %v1167 = vpop.permute.xlu0 %1166
        %v1168 = vsel %vm1165, %v1167, %v1122
        %1169 = vrot.lane.b32.xlu0 %v1127, 96
        %v1170 = vpop.permute.xlu0 %1169
        %v1171 = vsel %vm1165, %v1170, %v1127
        %1172 = vrot.lane.b32.xlu0 %v1132, 96
        %v1173 = vpop.permute.xlu0 %1172
        %v1174 = vsel %vm1165, %v1173, %v1132
        %1175 = vrot.lane.b32.xlu0 %v1168, 96
        %v1176 = vpop.permute.xlu0 %1175
        %1177 = vrot.lane.b32.xlu0 %v1171, 96
        %v1178 = vpop.permute.xlu0 %1177
        %1179 = vrot.lane.b32.xlu0 %v1174, 96
        %v1180 = vpop.permute.xlu0 %1179
        %v1181 = vsel %vm1165, %v1176, %v1122
        %v1182 = vsel %vm1165, %v1178, %v1127
        %v1183 = vsel %vm1165, %v1180, %v1132
        %1190 = vrot.lane.b32.xlu0 %v1181, 33
        %v1191 = vpop.permute.xlu0 %1190
        %1192 = vrot.lane.b32.xlu0 %v1176, 33
        %v1193 = vpop.permute.xlu0 %1192
        %1194 = vrot.lane.b32.xlu0 %v1182, 33
        %v1195 = vpop.permute.xlu0 %1194
        %1196 = vrot.lane.b32.xlu0 %v1178, 33
        %v1197 = vpop.permute.xlu0 %1196
        %1198 = vrot.lane.b32.xlu0 %v1183, 33
        %v1199 = vpop.permute.xlu0 %1198
        %1200 = vrot.lane.b32.xlu0 %v1180, 33
        %v1201 = vpop.permute.xlu0 %1200
        %vm1202 = vcmask 269312
        %v1203 = vsel %vm1202, %v1191, %v1193
        %v1204 = vsel %vm1202, %v1195, %v1197
        %v1205 = vsel %vm1202, %v1199, %v1201
        %v1209 = vsel %vm837, 0.0, %v1203
        %v1210 = vsel %vm837, 0.0, %v1204
        %v1211 = vsel %vm837, 0.0, %v1205
        %vm1212 = vcmp.eq.s32.totalorder %v835, 95
        %1213 = vrot.lane.b32.xlu0 %v1152, 96
        %v1214 = vpop.permute.xlu0 %1213
        %v1215 = vsel %vm1165, %v1214, %v1152
        %1216 = vrot.lane.b32.xlu0 %v1157, 96
        %v1217 = vpop.permute.xlu0 %1216
        %v1218 = vsel %vm1165, %v1217, %v1157
        %1219 = vrot.lane.b32.xlu0 %v1162, 96
        %v1220 = vpop.permute.xlu0 %1219
        %v1221 = vsel %vm1165, %v1220, %v1162
        %1222 = vrot.lane.b32.xlu0 %v1215, 96
        %v1223 = vpop.permute.xlu0 %1222
        %1224 = vrot.lane.b32.xlu0 %v1218, 96
        %v1225 = vpop.permute.xlu0 %1224
        %1226 = vrot.lane.b32.xlu0 %v1221, 96
        %v1227 = vpop.permute.xlu0 %1226
        %v1228 = vsel %vm1165, %v1223, %v1152
        %v1229 = vsel %vm1165, %v1225, %v1157
        %v1230 = vsel %vm1165, %v1227, %v1162
        %1234 = vrot.lane.b32.xlu0 %v1228, 127
        %v1235 = vpop.permute.xlu0 %1234
        %1236 = vrot.lane.b32.xlu0 %v1229, 127
        %v1237 = vpop.permute.xlu0 %1236
        %1238 = vrot.lane.b32.xlu0 %v1230, 127
        %v1239 = vpop.permute.xlu0 %1238
        %v1243 = vsel %vm1212, 0.0, %v1235
        %v1244 = vsel %vm1212, 0.0, %v1237
        %v1245 = vsel %vm1212, 0.0, %v1239
        %v1246 = vadd.f32 %v1209, %v1137
        %v1247 = vadd.f32 %v1210, %v1142
        %v1248 = vadd.f32 %v1211, %v1147
        %v1249 = vadd.f32 %v1246, %v1243
        %v1250 = vadd.f32 %v1247, %v1244
        %v1251 = vadd.f32 %v1248, %v1245
        %v1252 = vld [vmem:[%s4] sm:$0xff]
        %v1253 = vld [vmem:[%s4 + $0x8] sm:$0xff]
        %v1254 = vld [vmem:[%s4 + $0x10] sm:$0xff]
        %1256 = vset.pattern.permute.xlu0 0
        %1257 = vperm.xlu0 %1256, %v1252
        %v1258 = vpop.permute.xlu0 %1257
        %1261 = vset.pattern.permute.xlu0 0
        %1262 = vperm.xlu0 %1261, %v1253
        %v1263 = vpop.permute.xlu0 %1262
        %1266 = vset.pattern.permute.xlu0 0
        %1267 = vperm.xlu0 %1266, %v1254
        %v1268 = vpop.permute.xlu0 %1267
        %v1270 = vadd.f32 %v1249, %v1258
        %v1271 = vadd.f32 %v1250, %v1263
        %v1272 = vadd.f32 %v1251, %v1268
        %vm1273 = vcmp.ge.f32.partialorder %v1270, 0.0
        %vm1274 = vcmp.ge.f32.partialorder %v1271, 0.0
        %vm1275 = vcmp.ge.f32.partialorder %v1272, 0.0
        %v1276 = vmul.f32 %v1270, 0.05
        %v1277 = vmul.f32 %v1271, 0.05
        %v1278 = vmul.f32 %v1272, 0.05
        %v1279 = vsel %vm1273, %v1270, %v1276
        %v1280 = vsel %vm1274, %v1271, %v1277
        %v1281 = vsel %vm1275, %v1272, %v1278
        %v1282 = vld [vmem:[%s14] sm:$0xff]
        %v1283 = vld [vmem:[%s14 + $0x8] sm:$0xff]
        %v1284 = vld [vmem:[%s14 + $0x10] sm:$0xff]
        %v1285 = vld [vmem:[%s14 + $0x18] sm:$0xff]
        %v1286 = vld [vmem:[%s14 + $0x20] sm:$0xff]
        %v1287 = vld [vmem:[%s14 + $0x28] sm:$0xff]
        %v1288 = vld [vmem:[%s14 + $0x30] sm:$0xff]
        %v1289 = vld [vmem:[%s14 + $0x38] sm:$0xff]
        %v1290 = vld [vmem:[%s14 + $0x40] sm:$0xff]
        %v1291 = vld [vmem:[%s14 + $0x48] sm:$0xff]
        %v1292 = vld [vmem:[%s14 + $0x50] sm:$0xff]
        %v1293 = vld [vmem:[%s14 + $0x58] sm:$0xff]
        %vm1294 = vcmask 785408
        %v1296 = vsel %vm1294, %v1279, 0
        %v1299 = vsel %vm1294, %v1280, 0
        %v1302 = vsel %vm1294, %v1281, 0
        %1304 = vmatprep.subr.mxu0 0.0
        %1305 = vmatpush1.msra.mxu0 %v1282
        %1306 = vmatprep.subr.mxu0 0.0
        %1307 = vmatpush1.msra.mxu0 %v1283
        %1308 = vmatprep.subr.mxu0 0.0
        %1309 = vmatpush1.msra.mxu0 %v1284
        %1310 = vmatprep.subr.mxu0 0.0
        %1311 = vmatpush1.msra.mxu0 %v1285
        %1312 = vmatprep.subr.mxu0 0.0
        %1313 = vmatpush1.msra.mxu0 %v1286
        %1314 = vmatprep.subr.mxu0 0.0
        %1315 = vmatpush1.msra.mxu0 %v1287
        %1316 = vmatprep.subr.mxu0 0.0
        %1317 = vmatpush1.msra.mxu0 %v1288
        %1318 = vmatprep.subr.mxu0 0.0
        %1319 = vmatpush1.msra.mxu0 %v1289
        %1320 = vmatprep.subr.mxu0 0.0
        %1321 = vmatpush1.msra.mxu0 %v1290
        %1322 = vmatprep.subr.mxu0 0.0
        %1323 = vmatpush1.msra.mxu0 %v1291
        %1324 = vmatprep.subr.mxu0 0.0
        %1325 = vmatpush1.msra.mxu0 %v1292
        %1326 = vmatprep.subr.mxu0 0.0
        %1327 = vmatpush1.msra.mxu0 %v1293
        %1328 = vmatprep.subr.mxu0 0.0
        %1329 = vmatpush1.msra.mxu0 0.0
        %1330 = vmatprep.subr.mxu0 0.0
        %1331 = vmatpush1.msra.mxu0 0.0
        %1332 = vmatprep.subr.mxu0 0.0
        %1333 = vmatpush1.msra.mxu0 0.0
        %1334 = vmatprep.subr.mxu0 0.0
        %1335 = vmatpush1.msra.mxu0 0.0
        %1336 = vmatprep.subr.mxu0 0.0
        %1337 = vmatpush1.msra.mxu0 0.0
        %1338 = vmatprep.subr.mxu0 0.0
        %1339 = vmatpush1.msra.mxu0 0.0
        %1340 = vmatprep.subr.mxu0 0.0
        %1341 = vmatpush1.msra.mxu0 0.0
        %1342 = vmatprep.subr.mxu0 0.0
        %1343 = vmatpush1.msra.mxu0 0.0
        %1344 = vmatprep.subr.mxu0 0.0
        %1345 = vmatpush1.msra.mxu0 0.0
        %1346 = vmatprep.subr.mxu0 0.0
        %1347 = vmatpush1.msra.mxu0 0.0
        %1348 = vmatprep.subr.mxu0 0.0
        %1349 = vmatpush1.msra.mxu0 0.0
        %1350 = vmatprep.subr.mxu0 0.0
        %1351 = vmatpush1.msra.mxu0 0.0
        %1352 = vmatprep.subr.mxu0 0.0
        %1353 = vmatpush1.msra.mxu0 0.0
        %1354 = vmatprep.subr.mxu0 0.0
        %1355 = vmatpush1.msra.mxu0 0.0
        %1356 = vmatprep.subr.mxu0 0.0
        %1357 = vmatpush1.msra.mxu0 0.0
        %1358 = vmatprep.subr.mxu0 0.0
        %1359 = vmatpush1.msra.mxu0 0.0
        %1360 = vmatprep.subr.mxu0 0.0
        %1361 = vmatpush1.msra.mxu0 0.0
        %1362 = vmatprep.subr.mxu0 0.0
        %1363 = vmatpush1.msra.mxu0 0.0
        %1364 = vmatprep.subr.mxu0 0.0
        %1365 = vmatpush1.msra.mxu0 0.0
        %1366 = vmatprep.subr.mxu0 0.0
        %1367 = vmatpush1.msra.mxu0 0.0
        %1368 = vmatprep.mubr.f32.mxu0 0.0
        %1369 = vmatmul.mubr.f32.gmra.mrb[0].mxu0 %v1296
        %v1370 = vpop.f32.mrb[0].mxu0
        %v1371 = vadd.f32 0.0, %v1370
        %v1372 = vpop.f32.mrb[0].mxu0
        %1373 = vmatprep.mubr.f32.mxu0 0.0
        %1374 = vmatmul.mubr.f32.gmra.mrb[0].mxu0 %v1299
        %v1375 = vpop.f32.mrb[0].mxu0
        %v1376 = vadd.f32 0.0, %v1375
        %v1377 = vpop.f32.mrb[0].mxu0
        %1378 = vmatprep.mubr.f32.mxu0 0.0
        %1379 = vmatmul.mubr.f32.gmra.mrb[0].mxu0 %v1302
        %v1380 = vpop.f32.mrb[0].mxu0
        %v1381 = vadd.f32 0.0, %v1380
        %v1382 = vpop.f32.mrb[0].mxu0
        %1383 = vdwg.mxu0
        %v1384 = vld [vmem:[%s5] sm:$0xff]
        %v1385 = vld [vmem:[%s5 + $0x8] sm:$0xff]
        %v1386 = vld [vmem:[%s5 + $0x10] sm:$0xff]
        %v1387 = vld [vmem:[%s5 + $0x18] sm:$0xff]
        %v1388 = vld [vmem:[%s5 + $0x20] sm:$0xff]
        %v1389 = vld [vmem:[%s5 + $0x28] sm:$0xff]
        %v1390 = vld [vmem:[%s5 + $0x30] sm:$0xff]
        %v1391 = vld [vmem:[%s5 + $0x38] sm:$0xff]
        %v1392 = vld [vmem:[%s5 + $0x40] sm:$0xff]
        %v1393 = vld [vmem:[%s5 + $0x48] sm:$0xff]
        %v1394 = vld [vmem:[%s5 + $0x50] sm:$0xff]
        %v1395 = vld [vmem:[%s5 + $0x58] sm:$0xff]
        %vm1396 = vcmask 195584
        %v1398 = vsel %vm1396, %v1384, 0
        %v1401 = vsel %vm1396, %v1385, 0
        %v1404 = vsel %vm1396, %v1386, 0
        %v1407 = vsel %vm1396, %v1387, 0
        %v1410 = vsel %vm1396, %v1388, 0
        %v1413 = vsel %vm1396, %v1389, 0
        %v1416 = vsel %vm1396, %v1390, 0
        %v1419 = vsel %vm1396, %v1391, 0
        %v1422 = vsel %vm1396, %v1392, 0
        %v1425 = vsel %vm1396, %v1393, 0
        %v1428 = vsel %vm1396, %v1394, 0
        %v1431 = vsel %vm1396, %v1395, 0
        %1433 = vmatprep.subr.mxu0 0.0
        %1434 = vmatpush1.msra.mxu0 %v1371
        %1435 = vmatprep.subr.mxu0 0.0
        %1436 = vmatpush1.msra.mxu0 %v1376
        %1437 = vmatprep.subr.mxu0 0.0
        %1438 = vmatpush1.msra.mxu0 %v1381
        %1439 = vmatprep.subr.mxu0 0.0
        %1440 = vmatpush1.msra.mxu0 0.0
        %1441 = vmatprep.subr.mxu0 0.0
        %1442 = vmatpush1.msra.mxu0 0.0
        %1443 = vmatprep.subr.mxu0 0.0
        %1444 = vmatpush1.msra.mxu0 0.0
        %1445 = vmatprep.subr.mxu0 0.0
        %1446 = vmatpush1.msra.mxu0 0.0
        %1447 = vmatprep.subr.mxu0 0.0
        %1448 = vmatpush1.msra.mxu0 0.0
        %1449 = vmatprep.subr.mxu0 0.0
        %1450 = vmatpush1.msra.mxu0 0.0
        %1451 = vmatprep.subr.mxu0 0.0
        %1452 = vmatpush1.msra.mxu0 0.0
        %1453 = vmatprep.subr.mxu0 0.0
        %1454 = vmatpush1.msra.mxu0 0.0
        %1455 = vmatprep.subr.mxu0 0.0
        %1456 = vmatpush1.msra.mxu0 0.0
        %1457 = vmatprep.subr.mxu0 0.0
        %1458 = vmatpush1.msra.mxu0 0.0
        %1459 = vmatprep.subr.mxu0 0.0
        %1460 = vmatpush1.msra.mxu0 0.0
        %1461 = vmatprep.subr.mxu0 0.0
        %1462 = vmatpush1.msra.mxu0 0.0
        %1463 = vmatprep.subr.mxu0 0.0
        %1464 = vmatpush1.msra.mxu0 0.0
        %1465 = vmatprep.subr.mxu0 0.0
        %1466 = vmatpush1.msra.mxu0 0.0
        %1467 = vmatprep.subr.mxu0 0.0
        %1468 = vmatpush1.msra.mxu0 0.0
        %1469 = vmatprep.subr.mxu0 0.0
        %1470 = vmatpush1.msra.mxu0 0.0
        %1471 = vmatprep.subr.mxu0 0.0
        %1472 = vmatpush1.msra.mxu0 0.0
        %1473 = vmatprep.subr.mxu0 0.0
        %1474 = vmatpush1.msra.mxu0 0.0
        %1475 = vmatprep.subr.mxu0 0.0
        %1476 = vmatpush1.msra.mxu0 0.0
        %1477 = vmatprep.subr.mxu0 0.0
        %1478 = vmatpush1.msra.mxu0 0.0
        %1479 = vmatprep.subr.mxu0 0.0
        %1480 = vmatpush1.msra.mxu0 0.0
        %1481 = vmatprep.subr.mxu0 0.0
        %1482 = vmatpush1.msra.mxu0 0.0
        %1483 = vmatprep.subr.mxu0 0.0
        %1484 = vmatpush1.msra.mxu0 0.0
        %1485 = vmatprep.subr.mxu0 0.0
        %1486 = vmatpush1.msra.mxu0 0.0
        %1487 = vmatprep.subr.mxu0 0.0
        %1488 = vmatpush1.msra.mxu0 0.0
        %1489 = vmatprep.subr.mxu0 0.0
        %1490 = vmatpush1.msra.mxu0 0.0
        %1491 = vmatprep.subr.mxu0 0.0
        %1492 = vmatpush1.msra.mxu0 0.0
        %1493 = vmatprep.subr.mxu0 0.0
        %1494 = vmatpush1.msra.mxu0 0.0
        %1495 = vmatprep.subr.mxu0 0.0
        %1496 = vmatpush1.msra.mxu0 0.0
        %1497 = vmatprep.mubr.f32.mxu0 0.0
        %1498 = vmatmul.mubr.f32.gmra.mrb[0].mxu0 %v1398
        %v1499 = vpop.f32.mrb[0].mxu0
        %v1500 = vadd.f32 0.0, %v1499
        %v1501 = vpop.f32.mrb[0].mxu0
        %1502 = vmatprep.mubr.f32.mxu0 0.0
        %1503 = vmatmul.mubr.f32.gmra.mrb[0].mxu0 %v1401
        %v1504 = vpop.f32.mrb[0].mxu0
        %v1505 = vadd.f32 0.0, %v1504
        %v1506 = vpop.f32.mrb[0].mxu0
        %1507 = vmatprep.mubr.f32.mxu0 0.0
        %1508 = vmatmul.mubr.f32.gmra.mrb[0].mxu0 %v1404
        %v1509 = vpop.f32.mrb[0].mxu0
        %v1510 = vadd.f32 0.0, %v1509
        %v1511 = vpop.f32.mrb[0].mxu0
        %1512 = vmatprep.mubr.f32.mxu0 0.0
        %1513 = vmatmul.mubr.f32.gmra.mrb[0].mxu0 %v1407
        %v1514 = vpop.f32.mrb[0].mxu0
        %v1515 = vadd.f32 0.0, %v1514
        %v1516 = vpop.f32.mrb[0].mxu0
        %1517 = vmatprep.mubr.f32.mxu0 0.0
        %1518 = vmatmul.mubr.f32.gmra.mrb[0].mxu0 %v1410
        %v1519 = vpop.f32.mrb[0].mxu0
        %v1520 = vadd.f32 0.0, %v1519
        %v1521 = vpop.f32.mrb[0].mxu0
        %1522 = vmatprep.mubr.f32.mxu0 0.0
        %1523 = vmatmul.mubr.f32.gmra.mrb[0].mxu0 %v1413
        %v1524 = vpop.f32.mrb[0].mxu0
        %v1525 = vadd.f32 0.0, %v1524
        %v1526 = vpop.f32.mrb[0].mxu0
        %1527 = vmatprep.mubr.f32.mxu0 0.0
        %1528 = vmatmul.mubr.f32.gmra.mrb[0].mxu0 %v1416
        %v1529 = vpop.f32.mrb[0].mxu0
        %v1530 = vadd.f32 0.0, %v1529
        %v1531 = vpop.f32.mrb[0].mxu0
        %1532 = vmatprep.mubr.f32.mxu0 0.0
        %1533 = vmatmul.mubr.f32.gmra.mrb[0].mxu0 %v1419
        %v1534 = vpop.f32.mrb[0].mxu0
        %v1535 = vadd.f32 0.0, %v1534
        %v1536 = vpop.f32.mrb[0].mxu0
        %1537 = vmatprep.mubr.f32.mxu0 0.0
        %1538 = vmatmul.mubr.f32.gmra.mrb[0].mxu0 %v1422
        %v1539 = vpop.f32.mrb[0].mxu0
        %v1540 = vadd.f32 0.0, %v1539
        %v1541 = vpop.f32.mrb[0].mxu0
        %1542 = vmatprep.mubr.f32.mxu0 0.0
        %1543 = vmatmul.mubr.f32.gmra.mrb[0].mxu0 %v1425
        %v1544 = vpop.f32.mrb[0].mxu0
        %v1545 = vadd.f32 0.0, %v1544
        %v1546 = vpop.f32.mrb[0].mxu0
        %1547 = vmatprep.mubr.f32.mxu0 0.0
        %1548 = vmatmul.mubr.f32.gmra.mrb[0].mxu0 %v1428
        %v1549 = vpop.f32.mrb[0].mxu0
        %v1550 = vadd.f32 0.0, %v1549
        %v1551 = vpop.f32.mrb[0].mxu0
        %1552 = vmatprep.mubr.f32.mxu0 0.0
        %1553 = vmatmul.mubr.f32.gmra.mrb[0].mxu0 %v1431
        %v1554 = vpop.f32.mrb[0].mxu0
        %v1555 = vadd.f32 0.0, %v1554
        %v1556 = vpop.f32.mrb[0].mxu0
        %1557 = vdwg.mxu0
        %vm1558 = vcmask 1047936
        %1559 = vrot.lane.b32.xlu0 %v1500, 48
        %v1560 = vpop.permute.xlu0 %1559
        %v1561 = vsel %vm1558, %v1560, %v1500
        %1562 = vrot.lane.b32.xlu0 %v1505, 48
        %v1563 = vpop.permute.xlu0 %1562
        %v1564 = vsel %vm1558, %v1563, %v1505
        %1565 = vrot.lane.b32.xlu0 %v1510, 48
        %v1566 = vpop.permute.xlu0 %1565
        %v1567 = vsel %vm1558, %v1566, %v1510
        %1568 = vrot.lane.b32.xlu0 %v1515, 48
        %v1569 = vpop.permute.xlu0 %1568
        %v1570 = vsel %vm1558, %v1569, %v1515
        %1571 = vrot.lane.b32.xlu0 %v1561, 48
        %v1572 = vpop.permute.xlu0 %1571
        %1573 = vrot.lane.b32.xlu0 %v1564, 48
        %v1574 = vpop.permute.xlu0 %1573
        %1575 = vrot.lane.b32.xlu0 %v1567, 48
        %v1576 = vpop.permute.xlu0 %1575
        %1577 = vrot.lane.b32.xlu0 %v1570, 48
        %v1578 = vpop.permute.xlu0 %1577
        %v1579 = vsel %vm1558, %v1572, %v1500
        %v1580 = vsel %vm1558, %v1574, %v1505
        %v1581 = vsel %vm1558, %v1576, %v1510
        %v1582 = vsel %vm1558, %v1578, %v1515
        %1587 = vrot.lane.b32.xlu0 %v1579, 81
        %v1588 = vpop.permute.xlu0 %1587
        %1589 = vrot.lane.b32.xlu0 %v1580, 81
        %v1590 = vpop.permute.xlu0 %1589
        %1591 = vrot.lane.b32.xlu0 %v1581, 81
        %v1592 = vpop.permute.xlu0 %1591
        %1593 = vrot.lane.b32.xlu0 %v1582, 81
        %v1594 = vpop.permute.xlu0 %1593
        %v1599 = vsel %vm837, 0.0, %v1588
        %v1600 = vsel %vm837, 0.0, %v1590
        %v1601 = vsel %vm837, 0.0, %v1592
        %v1602 = vsel %vm837, 0.0, %v1594
        %vm1603 = vcmp.eq.s32.totalorder %v835, 47
        %1604 = vrot.lane.b32.xlu0 %v1540, 48
        %v1605 = vpop.permute.xlu0 %1604
        %v1606 = vsel %vm1558, %v1605, %v1540
        %1607 = vrot.lane.b32.xlu0 %v1545, 48
        %v1608 = vpop.permute.xlu0 %1607
        %v1609 = vsel %vm1558, %v1608, %v1545
        %1610 = vrot.lane.b32.xlu0 %v1550, 48
        %v1611 = vpop.permute.xlu0 %1610
        %v1612 = vsel %vm1558, %v1611, %v1550
        %1613 = vrot.lane.b32.xlu0 %v1555, 48
        %v1614 = vpop.permute.xlu0 %1613
        %v1615 = vsel %vm1558, %v1614, %v1555
        %1616 = vrot.lane.b32.xlu0 %v1606, 48
        %v1617 = vpop.permute.xlu0 %1616
        %1618 = vrot.lane.b32.xlu0 %v1609, 48
        %v1619 = vpop.permute.xlu0 %1618
        %1620 = vrot.lane.b32.xlu0 %v1612, 48
        %v1621 = vpop.permute.xlu0 %1620
        %1622 = vrot.lane.b32.xlu0 %v1615, 48
        %v1623 = vpop.permute.xlu0 %1622
        %v1624 = vsel %vm1558, %v1617, %v1540
        %v1625 = vsel %vm1558, %v1619, %v1545
        %v1626 = vsel %vm1558, %v1621, %v1550
        %v1627 = vsel %vm1558, %v1623, %v1555
        %1632 = vrot.lane.b32.xlu0 %v1624, 127
        %v1633 = vpop.permute.xlu0 %1632
        %1634 = vrot.lane.b32.xlu0 %v1625, 127
        %v1635 = vpop.permute.xlu0 %1634
        %1636 = vrot.lane.b32.xlu0 %v1626, 127
        %v1637 = vpop.permute.xlu0 %1636
        %1638 = vrot.lane.b32.xlu0 %v1627, 127
        %v1639 = vpop.permute.xlu0 %1638
        %v1644 = vsel %vm1603, 0.0, %v1633
        %v1645 = vsel %vm1603, 0.0, %v1635
        %v1646 = vsel %vm1603, 0.0, %v1637
        %v1647 = vsel %vm1603, 0.0, %v1639
        %v1648 = vadd.f32 %v1599, %v1520
        %v1649 = vadd.f32 %v1600, %v1525
        %v1650 = vadd.f32 %v1601, %v1530
        %v1651 = vadd.f32 %v1602, %v1535
        %v1652 = vadd.f32 %v1648, %v1644
        %v1653 = vadd.f32 %v1649, %v1645
        %v1654 = vadd.f32 %v1650, %v1646
        %v1655 = vadd.f32 %v1651, %v1647
        %v1656 = vld [vmem:[%s6] sm:$0xff]
        %v1657 = vld [vmem:[%s6 + $0x8] sm:$0xff]
        %v1658 = vld [vmem:[%s6 + $0x10] sm:$0xff]
        %v1659 = vld [vmem:[%s6 + $0x18] sm:$0xff]
        %1661 = vset.pattern.permute.xlu0 0
        %1662 = vperm.xlu0 %1661, %v1656
        %v1663 = vpop.permute.xlu0 %1662
        %1666 = vset.pattern.permute.xlu0 0
        %1667 = vperm.xlu0 %1666, %v1657
        %v1668 = vpop.permute.xlu0 %1667
        %1671 = vset.pattern.permute.xlu0 0
        %1672 = vperm.xlu0 %1671, %v1658
        %v1673 = vpop.permute.xlu0 %1672
        %1676 = vset.pattern.permute.xlu0 0
        %1677 = vperm.xlu0 %1676, %v1659
        %v1678 = vpop.permute.xlu0 %1677
        %v1680 = vadd.f32 %v1652, %v1663
        %v1681 = vadd.f32 %v1653, %v1668
        %v1682 = vadd.f32 %v1654, %v1673
        %v1683 = vadd.f32 %v1655, %v1678
        %vm1684 = vcmp.ge.f32.partialorder %v1680, 0.0
        %vm1685 = vcmp.ge.f32.partialorder %v1681, 0.0
        %vm1686 = vcmp.ge.f32.partialorder %v1682, 0.0
        %vm1687 = vcmp.ge.f32.partialorder %v1683, 0.0
        %v1688 = vmul.f32 %v1680, 0.05
        %v1689 = vmul.f32 %v1681, 0.05
        %v1690 = vmul.f32 %v1682, 0.05
        %v1691 = vmul.f32 %v1683, 0.05
        %v1692 = vsel %vm1684, %v1680, %v1688
        %v1693 = vsel %vm1685, %v1681, %v1689
        %v1694 = vsel %vm1686, %v1682, %v1690
        %v1695 = vsel %vm1687, %v1683, %v1691
        %v1696 = vld [vmem:[%s15] sm:$0xff]
        %v1697 = vld [vmem:[%s15 + $0x8] sm:$0xff]
        %v1698 = vld [vmem:[%s15 + $0x10] sm:$0xff]
        %v1699 = vld [vmem:[%s15 + $0x18] sm:$0xff]
        %v1700 = vld [vmem:[%s15 + $0x20] sm:$0xff]
        %v1701 = vld [vmem:[%s15 + $0x28] sm:$0xff]
        %vm1702 = vcmask 392192
        %v1704 = vsel %vm1702, %v1692, 0
        %v1707 = vsel %vm1702, %v1693, 0
        %v1710 = vsel %vm1702, %v1694, 0
        %v1713 = vsel %vm1702, %v1695, 0
        %1715 = vmatprep.subr.mxu0 0.0
        %1716 = vmatpush1.msra.mxu0 %v1696
        %1717 = vmatprep.subr.mxu0 0.0
        %1718 = vmatpush1.msra.mxu0 %v1697
        %1719 = vmatprep.subr.mxu0 0.0
        %1720 = vmatpush1.msra.mxu0 %v1698
        %1721 = vmatprep.subr.mxu0 0.0
        %1722 = vmatpush1.msra.mxu0 %v1699
        %1723 = vmatprep.subr.mxu0 0.0
        %1724 = vmatpush1.msra.mxu0 %v1700
        %1725 = vmatprep.subr.mxu0 0.0
        %1726 = vmatpush1.msra.mxu0 %v1701
        %1727 = vmatprep.subr.mxu0 0.0
        %1728 = vmatpush1.msra.mxu0 0.0
        %1729 = vmatprep.subr.mxu0 0.0
        %1730 = vmatpush1.msra.mxu0 0.0
        %1731 = vmatprep.subr.mxu0 0.0
        %1732 = vmatpush1.msra.mxu0 0.0
        %1733 = vmatprep.subr.mxu0 0.0
        %1734 = vmatpush1.msra.mxu0 0.0
        %1735 = vmatprep.subr.mxu0 0.0
        %1736 = vmatpush1.msra.mxu0 0.0
        %1737 = vmatprep.subr.mxu0 0.0
        %1738 = vmatpush1.msra.mxu0 0.0
        %1739 = vmatprep.subr.mxu0 0.0
        %1740 = vmatpush1.msra.mxu0 0.0
        %1741 = vmatprep.subr.mxu0 0.0
        %1742 = vmatpush1.msra.mxu0 0.0
        %1743 = vmatprep.subr.mxu0 0.0
        %1744 = vmatpush1.msra.mxu0 0.0
        %1745 = vmatprep.subr.mxu0 0.0
        %1746 = vmatpush1.msra.mxu0 0.0
        %1747 = vmatprep.subr.mxu0 0.0
        %1748 = vmatpush1.msra.mxu0 0.0
        %1749 = vmatprep.subr.mxu0 0.0
        %1750 = vmatpush1.msra.mxu0 0.0
        %1751 = vmatprep.subr.mxu0 0.0
        %1752 = vmatpush1.msra.mxu0 0.0
        %1753 = vmatprep.subr.mxu0 0.0
        %1754 = vmatpush1.msra.mxu0 0.0
        %1755 = vmatprep.subr.mxu0 0.0
        %1756 = vmatpush1.msra.mxu0 0.0
        %1757 = vmatprep.subr.mxu0 0.0
        %1758 = vmatpush1.msra.mxu0 0.0
        %1759 = vmatprep.subr.mxu0 0.0
        %1760 = vmatpush1.msra.mxu0 0.0
        %1761 = vmatprep.subr.mxu0 0.0
        %1762 = vmatpush1.msra.mxu0 0.0
        %1763 = vmatprep.subr.mxu0 0.0
        %1764 = vmatpush1.msra.mxu0 0.0
        %1765 = vmatprep.subr.mxu0 0.0
        %1766 = vmatpush1.msra.mxu0 0.0
        %1767 = vmatprep.subr.mxu0 0.0
        %1768 = vmatpush1.msra.mxu0 0.0
        %1769 = vmatprep.subr.mxu0 0.0
        %1770 = vmatpush1.msra.mxu0 0.0
        %1771 = vmatprep.subr.mxu0 0.0
        %1772 = vmatpush1.msra.mxu0 0.0
        %1773 = vmatprep.subr.mxu0 0.0
        %1774 = vmatpush1.msra.mxu0 0.0
        %1775 = vmatprep.subr.mxu0 0.0
        %1776 = vmatpush1.msra.mxu0 0.0
        %1777 = vmatprep.subr.mxu0 0.0
        %1778 = vmatpush1.msra.mxu0 0.0
        %1779 = vmatprep.mubr.f32.mxu0 0.0
        %1780 = vmatmul.mubr.f32.gmra.mrb[0].mxu0 %v1704
        %v1781 = vpop.f32.mrb[0].mxu0
        %v1782 = vadd.f32 0.0, %v1781
        %v1783 = vpop.f32.mrb[0].mxu0
        %1784 = vmatprep.mubr.f32.mxu0 0.0
        %1785 = vmatmul.mubr.f32.gmra.mrb[0].mxu0 %v1707
        %v1786 = vpop.f32.mrb[0].mxu0
        %v1787 = vadd.f32 0.0, %v1786
        %v1788 = vpop.f32.mrb[0].mxu0
        %1789 = vmatprep.mubr.f32.mxu0 0.0
        %1790 = vmatmul.mubr.f32.gmra.mrb[0].mxu0 %v1710
        %v1791 = vpop.f32.mrb[0].mxu0
        %v1792 = vadd.f32 0.0, %v1791
        %v1793 = vpop.f32.mrb[0].mxu0
        %1794 = vmatprep.mubr.f32.mxu0 0.0
        %1795 = vmatmul.mubr.f32.gmra.mrb[0].mxu0 %v1713
        %v1796 = vpop.f32.mrb[0].mxu0
        %v1797 = vadd.f32 0.0, %v1796
        %v1798 = vpop.f32.mrb[0].mxu0
        %1799 = vdwg.mxu0
        %1800 = vst.msk [vmem:[%s699] sm:$0xff] %vm1396, %v1782
        %1801 = vst.msk [vmem:[%s699 + $0x8] sm:$0xff] %vm1396, %v1787
        %1802 = vst.msk [vmem:[%s699 + $0x10] sm:$0xff] %vm1396, %v1792
        %1803 = vst.msk [vmem:[%s699 + $0x18] sm:$0xff] %vm1396, %v1797
        %vm1804 = vcmp.ge.f32.partialorder %v1782, 0.0
        %vm1805 = vcmp.ge.f32.partialorder %v1787, 0.0
        %vm1806 = vcmp.ge.f32.partialorder %v1792, 0.0
        %vm1807 = vcmp.ge.f32.partialorder %v1797, 0.0
        %v1808 = vmul.f32 %v1782, 0.05
        %v1809 = vmul.f32 %v1787, 0.05
        %v1810 = vmul.f32 %v1792, 0.05
        %v1811 = vmul.f32 %v1797, 0.05
        %v1812 = vsel %vm1804, %v1782, %v1808
        %v1813 = vsel %vm1805, %v1787, %v1809
        %v1814 = vsel %vm1806, %v1792, %v1810
        %v1815 = vsel %vm1807, %v1797, %v1811
        %v1816 = vld [vmem:[#allocation5] sm:$0xff]
        %v1817 = vld [vmem:[#allocation5 + $0x8] sm:$0xff]
        %v1818 = vld [vmem:[#allocation5 + $0x10] sm:$0xff]
        %v1820 = vsel %vm1396, %v1812, 0
        %v1823 = vsel %vm1396, %v1813, 0
        %v1826 = vsel %vm1396, %v1814, 0
        %v1829 = vsel %vm1396, %v1815, 0
        %1831 = vmatprep.subr.mxu0 0.0
        %1832 = vmatpush1.msra.mxu0 %v1816
        %1833 = vmatprep.subr.mxu0 0.0
        %1834 = vmatpush1.msra.mxu0 %v1817
        %1835 = vmatprep.subr.mxu0 0.0
        %1836 = vmatpush1.msra.mxu0 %v1818
        %1837 = vmatprep.subr.mxu0 0.0
        %1838 = vmatpush1.msra.mxu0 0.0
        %1839 = vmatprep.subr.mxu0 0.0
        %1840 = vmatpush1.msra.mxu0 0.0
        %1841 = vmatprep.subr.mxu0 0.0
        %1842 = vmatpush1.msra.mxu0 0.0
        %1843 = vmatprep.subr.mxu0 0.0
        %1844 = vmatpush1.msra.mxu0 0.0
        %1845 = vmatprep.subr.mxu0 0.0
        %1846 = vmatpush1.msra.mxu0 0.0
        %1847 = vmatprep.subr.mxu0 0.0
        %1848 = vmatpush1.msra.mxu0 0.0
        %1849 = vmatprep.subr.mxu0 0.0
        %1850 = vmatpush1.msra.mxu0 0.0
        %1851 = vmatprep.subr.mxu0 0.0
        %1852 = vmatpush1.msra.mxu0 0.0
        %1853 = vmatprep.subr.mxu0 0.0
        %1854 = vmatpush1.msra.mxu0 0.0
        %1855 = vmatprep.subr.mxu0 0.0
        %1856 = vmatpush1.msra.mxu0 0.0
        %1857 = vmatprep.subr.mxu0 0.0
        %1858 = vmatpush1.msra.mxu0 0.0
        %1859 = vmatprep.subr.mxu0 0.0
        %1860 = vmatpush1.msra.mxu0 0.0
        %1861 = vmatprep.subr.mxu0 0.0
        %1862 = vmatpush1.msra.mxu0 0.0
        %1863 = vmatprep.subr.mxu0 0.0
        %1864 = vmatpush1.msra.mxu0 0.0
        %1865 = vmatprep.subr.mxu0 0.0
        %1866 = vmatpush1.msra.mxu0 0.0
        %1867 = vmatprep.subr.mxu0 0.0
        %1868 = vmatpush1.msra.mxu0 0.0
        %1869 = vmatprep.subr.mxu0 0.0
        %1870 = vmatpush1.msra.mxu0 0.0
        %1871 = vmatprep.subr.mxu0 0.0
        %1872 = vmatpush1.msra.mxu0 0.0
        %1873 = vmatprep.subr.mxu0 0.0
        %1874 = vmatpush1.msra.mxu0 0.0
        %1875 = vmatprep.subr.mxu0 0.0
        %1876 = vmatpush1.msra.mxu0 0.0
        %1877 = vmatprep.subr.mxu0 0.0
        %1878 = vmatpush1.msra.mxu0 0.0
        %1879 = vmatprep.subr.mxu0 0.0
        %1880 = vmatpush1.msra.mxu0 0.0
        %1881 = vmatprep.subr.mxu0 0.0
        %1882 = vmatpush1.msra.mxu0 0.0
        %1883 = vmatprep.subr.mxu0 0.0
        %1884 = vmatpush1.msra.mxu0 0.0
        %1885 = vmatprep.subr.mxu0 0.0
        %1886 = vmatpush1.msra.mxu0 0.0
        %1887 = vmatprep.subr.mxu0 0.0
        %1888 = vmatpush1.msra.mxu0 0.0
        %1889 = vmatprep.subr.mxu0 0.0
        %1890 = vmatpush1.msra.mxu0 0.0
        %1891 = vmatprep.subr.mxu0 0.0
        %1892 = vmatpush1.msra.mxu0 0.0
        %1893 = vmatprep.subr.mxu0 0.0
        %1894 = vmatpush1.msra.mxu0 0.0
        %1895 = vmatprep.mubr.f32.mxu0 0.0
        %1896 = vmatmul.mubr.f32.gmra.mrb[0].mxu0 %v1820
        %v1897 = vpop.f32.mrb[0].mxu0
        %v1898 = vadd.f32 0.0, %v1897
        %v1899 = vpop.f32.mrb[0].mxu0
        %1900 = vmatprep.mubr.f32.mxu0 0.0
        %1901 = vmatmul.mubr.f32.gmra.mrb[0].mxu0 %v1823
        %v1902 = vpop.f32.mrb[0].mxu0
        %v1903 = vadd.f32 0.0, %v1902
        %v1904 = vpop.f32.mrb[0].mxu0
        %1905 = vmatprep.mubr.f32.mxu0 0.0
        %1906 = vmatmul.mubr.f32.gmra.mrb[0].mxu0 %v1826
        %v1907 = vpop.f32.mrb[0].mxu0
        %v1908 = vadd.f32 0.0, %v1907
        %v1909 = vpop.f32.mrb[0].mxu0
        %1910 = vmatprep.mubr.f32.mxu0 0.0
        %1911 = vmatmul.mubr.f32.gmra.mrb[0].mxu0 %v1829
        %v1912 = vpop.f32.mrb[0].mxu0
        %v1913 = vadd.f32 0.0, %v1912
        %v1914 = vpop.f32.mrb[0].mxu0
        %1915 = vdwg.mxu0
        %v1916 = vld [vmem:[%s7] sm:$0xff]
        %v1917 = vld [vmem:[%s7 + $0x8] sm:$0xff]
        %v1918 = vld [vmem:[%s7 + $0x10] sm:$0xff]
        %v1919 = vld [vmem:[%s7 + $0x18] sm:$0xff]
        %v1920 = vld [vmem:[%s7 + $0x20] sm:$0xff]
        %v1921 = vld [vmem:[%s7 + $0x28] sm:$0xff]
        %v1922 = vld [vmem:[%s7 + $0x30] sm:$0xff]
        %v1923 = vld [vmem:[%s7 + $0x38] sm:$0xff]
        %v1924 = vld [vmem:[%s7 + $0x40] sm:$0xff]
        %vm1925 = vcmask 261120
        %v1927 = vsel %vm1925, %v1916, 0
        %v1930 = vsel %vm1925, %v1917, 0
        %v1933 = vsel %vm1925, %v1918, 0
        %v1936 = vsel %vm1925, %v1919, 0
        %v1939 = vsel %vm1925, %v1920, 0
        %v1942 = vsel %vm1925, %v1921, 0
        %v1945 = vsel %vm1925, %v1922, 0
        %v1948 = vsel %vm1925, %v1923, 0
        %v1951 = vsel %vm1925, %v1924, 0
        %1953 = vmatprep.subr.mxu0 0.0
        %1954 = vmatpush1.msra.mxu0 %v1898
        %1955 = vmatprep.subr.mxu0 0.0
        %1956 = vmatpush1.msra.mxu0 %v1903
        %1957 = vmatprep.subr.mxu0 0.0
        %1958 = vmatpush1.msra.mxu0 %v1908
        %1959 = vmatprep.subr.mxu0 0.0
        %1960 = vmatpush1.msra.mxu0 %v1913
        %1961 = vmatprep.subr.mxu0 0.0
        %1962 = vmatpush1.msra.mxu0 0.0
        %1963 = vmatprep.subr.mxu0 0.0
        %1964 = vmatpush1.msra.mxu0 0.0
        %1965 = vmatprep.subr.mxu0 0.0
        %1966 = vmatpush1.msra.mxu0 0.0
        %1967 = vmatprep.subr.mxu0 0.0
        %1968 = vmatpush1.msra.mxu0 0.0
        %1969 = vmatprep.subr.mxu0 0.0
        %1970 = vmatpush1.msra.mxu0 0.0
        %1971 = vmatprep.subr.mxu0 0.0
        %1972 = vmatpush1.msra.mxu0 0.0
        %1973 = vmatprep.subr.mxu0 0.0
        %1974 = vmatpush1.msra.mxu0 0.0
        %1975 = vmatprep.subr.mxu0 0.0
        %1976 = vmatpush1.msra.mxu0 0.0
        %1977 = vmatprep.subr.mxu0 0.0
        %1978 = vmatpush1.msra.mxu0 0.0
        %1979 = vmatprep.subr.mxu0 0.0
        %1980 = vmatpush1.msra.mxu0 0.0
        %1981 = vmatprep.subr.mxu0 0.0
        %1982 = vmatpush1.msra.mxu0 0.0
        %1983 = vmatprep.subr.mxu0 0.0
        %1984 = vmatpush1.msra.mxu0 0.0
        %1985 = vmatprep.subr.mxu0 0.0
        %1986 = vmatpush1.msra.mxu0 0.0
        %1987 = vmatprep.subr.mxu0 0.0
        %1988 = vmatpush1.msra.mxu0 0.0
        %1989 = vmatprep.subr.mxu0 0.0
        %1990 = vmatpush1.msra.mxu0 0.0
        %1991 = vmatprep.subr.mxu0 0.0
        %1992 = vmatpush1.msra.mxu0 0.0
        %1993 = vmatprep.subr.mxu0 0.0
        %1994 = vmatpush1.msra.mxu0 0.0
        %1995 = vmatprep.subr.mxu0 0.0
        %1996 = vmatpush1.msra.mxu0 0.0
        %1997 = vmatprep.subr.mxu0 0.0
        %1998 = vmatpush1.msra.mxu0 0.0
        %1999 = vmatprep.subr.mxu0 0.0
        %2000 = vmatpush1.msra.mxu0 0.0
        %2001 = vmatprep.subr.mxu0 0.0
        %2002 = vmatpush1.msra.mxu0 0.0
        %2003 = vmatprep.subr.mxu0 0.0
        %2004 = vmatpush1.msra.mxu0 0.0
        %2005 = vmatprep.subr.mxu0 0.0
        %2006 = vmatpush1.msra.mxu0 0.0
        %2007 = vmatprep.subr.mxu0 0.0
        %2008 = vmatpush1.msra.mxu0 0.0
        %2009 = vmatprep.subr.mxu0 0.0
        %2010 = vmatpush1.msra.mxu0 0.0
        %2011 = vmatprep.subr.mxu0 0.0
        %2012 = vmatpush1.msra.mxu0 0.0
        %2013 = vmatprep.subr.mxu0 0.0
        %2014 = vmatpush1.msra.mxu0 0.0
        %2015 = vmatprep.subr.mxu0 0.0
        %2016 = vmatpush1.msra.mxu0 0.0
        %2017 = vmatprep.mubr.f32.mxu0 0.0
        %2018 = vmatmul.mubr.f32.gmra.mrb[0].mxu0 %v1927
        %v2019 = vpop.f32.mrb[0].mxu0
        %v2020 = vadd.f32 0.0, %v2019
        %v2021 = vpop.f32.mrb[0].mxu0
        %2022 = vmatprep.mubr.f32.mxu0 0.0
        %2023 = vmatmul.mubr.f32.gmra.mrb[0].mxu0 %v1930
        %v2024 = vpop.f32.mrb[0].mxu0
        %v2025 = vadd.f32 0.0, %v2024
        %v2026 = vpop.f32.mrb[0].mxu0
        %2027 = vmatprep.mubr.f32.mxu0 0.0
        %2028 = vmatmul.mubr.f32.gmra.mrb[0].mxu0 %v1933
        %v2029 = vpop.f32.mrb[0].mxu0
        %v2030 = vadd.f32 0.0, %v2029
        %v2031 = vpop.f32.mrb[0].mxu0
        %2032 = vmatprep.mubr.f32.mxu0 0.0
        %2033 = vmatmul.mubr.f32.gmra.mrb[0].mxu0 %v1936
        %v2034 = vpop.f32.mrb[0].mxu0
        %v2035 = vadd.f32 0.0, %v2034
        %v2036 = vpop.f32.mrb[0].mxu0
        %2037 = vmatprep.mubr.f32.mxu0 0.0
        %2038 = vmatmul.mubr.f32.gmra.mrb[0].mxu0 %v1939
        %v2039 = vpop.f32.mrb[0].mxu0
        %v2040 = vadd.f32 0.0, %v2039
        %v2041 = vpop.f32.mrb[0].mxu0
        %2042 = vmatprep.mubr.f32.mxu0 0.0
        %2043 = vmatmul.mubr.f32.gmra.mrb[0].mxu0 %v1942
        %v2044 = vpop.f32.mrb[0].mxu0
        %v2045 = vadd.f32 0.0, %v2044
        %v2046 = vpop.f32.mrb[0].mxu0
        %2047 = vmatprep.mubr.f32.mxu0 0.0
        %2048 = vmatmul.mubr.f32.gmra.mrb[0].mxu0 %v1945
        %v2049 = vpop.f32.mrb[0].mxu0
        %v2050 = vadd.f32 0.0, %v2049
        %v2051 = vpop.f32.mrb[0].mxu0
        %2052 = vmatprep.mubr.f32.mxu0 0.0
        %2053 = vmatmul.mubr.f32.gmra.mrb[0].mxu0 %v1948
        %v2054 = vpop.f32.mrb[0].mxu0
        %v2055 = vadd.f32 0.0, %v2054
        %v2056 = vpop.f32.mrb[0].mxu0
        %2057 = vmatprep.mubr.f32.mxu0 0.0
        %2058 = vmatmul.mubr.f32.gmra.mrb[0].mxu0 %v1951
        %v2059 = vpop.f32.mrb[0].mxu0
        %v2060 = vadd.f32 0.0, %v2059
        %v2061 = vpop.f32.mrb[0].mxu0
        %2062 = vdwg.mxu0
        %2063 = vrot.lane.b32.xlu0 %v2020, 48
        %v2064 = vpop.permute.xlu0 %2063
        %v2065 = vsel %vm1558, %v2064, %v2020
        %2066 = vrot.lane.b32.xlu0 %v2025, 48
        %v2067 = vpop.permute.xlu0 %2066
        %v2068 = vsel %vm1558, %v2067, %v2025
        %2069 = vrot.lane.b32.xlu0 %v2030, 48
        %v2070 = vpop.permute.xlu0 %2069
        %v2071 = vsel %vm1558, %v2070, %v2030
        %2072 = vrot.lane.b32.xlu0 %v2065, 48
        %v2073 = vpop.permute.xlu0 %2072
        %2074 = vrot.lane.b32.xlu0 %v2068, 48
        %v2075 = vpop.permute.xlu0 %2074
        %2076 = vrot.lane.b32.xlu0 %v2071, 48
        %v2077 = vpop.permute.xlu0 %2076
        %v2078 = vsel %vm1558, %v2073, %v2020
        %v2079 = vsel %vm1558, %v2075, %v2025
        %v2080 = vsel %vm1558, %v2077, %v2030
        %2084 = vrot.lane.b32.xlu0 %v2078, 81
        %v2085 = vpop.permute.xlu0 %2084
        %2086 = vrot.lane.b32.xlu0 %v2079, 81
        %v2087 = vpop.permute.xlu0 %2086
        %2088 = vrot.lane.b32.xlu0 %v2080, 81
        %v2089 = vpop.permute.xlu0 %2088
        %v2093 = vsel %vm837, 0.0, %v2085
        %v2094 = vsel %vm837, 0.0, %v2087
        %v2095 = vsel %vm837, 0.0, %v2089
        %2096 = vrot.lane.b32.xlu0 %v2050, 48
        %v2097 = vpop.permute.xlu0 %2096
        %v2098 = vsel %vm1558, %v2097, %v2050
        %2099 = vrot.lane.b32.xlu0 %v2055, 48
        %v2100 = vpop.permute.xlu0 %2099
        %v2101 = vsel %vm1558, %v2100, %v2055
        %2102 = vrot.lane.b32.xlu0 %v2060, 48
        %v2103 = vpop.permute.xlu0 %2102
        %v2104 = vsel %vm1558, %v2103, %v2060
        %2105 = vrot.lane.b32.xlu0 %v2098, 48
        %v2106 = vpop.permute.xlu0 %2105
        %2107 = vrot.lane.b32.xlu0 %v2101, 48
        %v2108 = vpop.permute.xlu0 %2107
        %2109 = vrot.lane.b32.xlu0 %v2104, 48
        %v2110 = vpop.permute.xlu0 %2109
        %v2111 = vsel %vm1558, %v2106, %v2050
        %v2112 = vsel %vm1558, %v2108, %v2055
        %v2113 = vsel %vm1558, %v2110, %v2060
        %2117 = vrot.lane.b32.xlu0 %v2111, 127
        %v2118 = vpop.permute.xlu0 %2117
        %2119 = vrot.lane.b32.xlu0 %v2112, 127
        %v2120 = vpop.permute.xlu0 %2119
        %2121 = vrot.lane.b32.xlu0 %v2113, 127
        %v2122 = vpop.permute.xlu0 %2121
        %v2126 = vsel %vm1603, 0.0, %v2118
        %v2127 = vsel %vm1603, 0.0, %v2120
        %v2128 = vsel %vm1603, 0.0, %v2122
        %v2129 = vadd.f32 %v2093, %v2035
        %v2130 = vadd.f32 %v2094, %v2040
        %v2131 = vadd.f32 %v2095, %v2045
        %v2132 = vadd.f32 %v2129, %v2126
        %v2133 = vadd.f32 %v2130, %v2127
        %v2134 = vadd.f32 %v2131, %v2128
        %v2135 = vld [vmem:[%s8] sm:$0xff]
        %v2136 = vld [vmem:[%s8 + $0x8] sm:$0xff]
        %v2137 = vld [vmem:[%s8 + $0x10] sm:$0xff]
        %2139 = vset.pattern.permute.xlu0 0
        %2140 = vperm.xlu0 %2139, %v2135
        %v2141 = vpop.permute.xlu0 %2140
        %2144 = vset.pattern.permute.xlu0 0
        %2145 = vperm.xlu0 %2144, %v2136
        %v2146 = vpop.permute.xlu0 %2145
        %2149 = vset.pattern.permute.xlu0 0
        %2150 = vperm.xlu0 %2149, %v2137
        %v2151 = vpop.permute.xlu0 %2150
        %v2153 = vadd.f32 %v2132, %v2141
        %v2154 = vadd.f32 %v2133, %v2146
        %v2155 = vadd.f32 %v2134, %v2151
        %vm2156 = vcmp.ge.f32.partialorder %v2153, 0.0
        %vm2157 = vcmp.ge.f32.partialorder %v2154, 0.0
        %vm2158 = vcmp.ge.f32.partialorder %v2155, 0.0
        %v2159 = vmul.f32 %v2153, 0.05
        %v2160 = vmul.f32 %v2154, 0.05
        %v2161 = vmul.f32 %v2155, 0.05
        %v2162 = vsel %vm2156, %v2153, %v2159
        %v2163 = vsel %vm2157, %v2154, %v2160
        %v2164 = vsel %vm2158, %v2155, %v2161
        %v2165 = vld [vmem:[#allocation7] sm:$0xff]
        %v2166 = vld [vmem:[#allocation7 + $0x8] sm:$0xff]
        %v2167 = vld [vmem:[#allocation7 + $0x10] sm:$0xff]
        %v2168 = vld [vmem:[#allocation7 + $0x18] sm:$0xff]
        %v2169 = vld [vmem:[#allocation7 + $0x20] sm:$0xff]
        %v2170 = vld [vmem:[#allocation7 + $0x28] sm:$0xff]
        %v2172 = vsel %vm1702, %v2162, 0
        %v2175 = vsel %vm1702, %v2163, 0
        %v2178 = vsel %vm1702, %v2164, 0
        %2180 = vmatprep.subr.mxu0 0.0
        %2181 = vmatpush1.msra.mxu0 %v2165
        %2182 = vmatprep.subr.mxu0 0.0
        %2183 = vmatpush1.msra.mxu0 %v2166
        %2184 = vmatprep.subr.mxu0 0.0
        %2185 = vmatpush1.msra.mxu0 %v2167
        %2186 = vmatprep.subr.mxu0 0.0
        %2187 = vmatpush1.msra.mxu0 %v2168
        %2188 = vmatprep.subr.mxu0 0.0
        %2189 = vmatpush1.msra.mxu0 %v2169
        %2190 = vmatprep.subr.mxu0 0.0
        %2191 = vmatpush1.msra.mxu0 %v2170
        %2192 = vmatprep.subr.mxu0 0.0
        %2193 = vmatpush1.msra.mxu0 0.0
        %2194 = vmatprep.subr.mxu0 0.0
        %2195 = vmatpush1.msra.mxu0 0.0
        %2196 = vmatprep.subr.mxu0 0.0
        %2197 = vmatpush1.msra.mxu0 0.0
        %2198 = vmatprep.subr.mxu0 0.0
        %2199 = vmatpush1.msra.mxu0 0.0
        %2200 = vmatprep.subr.mxu0 0.0
        %2201 = vmatpush1.msra.mxu0 0.0
        %2202 = vmatprep.subr.mxu0 0.0
        %2203 = vmatpush1.msra.mxu0 0.0
        %2204 = vmatprep.subr.mxu0 0.0
        %2205 = vmatpush1.msra.mxu0 0.0
        %2206 = vmatprep.subr.mxu0 0.0
        %2207 = vmatpush1.msra.mxu0 0.0
        %2208 = vmatprep.subr.mxu0 0.0
        %2209 = vmatpush1.msra.mxu0 0.0
        %2210 = vmatprep.subr.mxu0 0.0
        %2211 = vmatpush1.msra.mxu0 0.0
        %2212 = vmatprep.subr.mxu0 0.0
        %2213 = vmatpush1.msra.mxu0 0.0
        %2214 = vmatprep.subr.mxu0 0.0
        %2215 = vmatpush1.msra.mxu0 0.0
        %2216 = vmatprep.subr.mxu0 0.0
        %2217 = vmatpush1.msra.mxu0 0.0
        %2218 = vmatprep.subr.mxu0 0.0
        %2219 = vmatpush1.msra.mxu0 0.0
        %2220 = vmatprep.subr.mxu0 0.0
        %2221 = vmatpush1.msra.mxu0 0.0
        %2222 = vmatprep.subr.mxu0 0.0
        %2223 = vmatpush1.msra.mxu0 0.0
        %2224 = vmatprep.subr.mxu0 0.0
        %2225 = vmatpush1.msra.mxu0 0.0
        %2226 = vmatprep.subr.mxu0 0.0
        %2227 = vmatpush1.msra.mxu0 0.0
        %2228 = vmatprep.subr.mxu0 0.0
        %2229 = vmatpush1.msra.mxu0 0.0
        %2230 = vmatprep.subr.mxu0 0.0
        %2231 = vmatpush1.msra.mxu0 0.0
        %2232 = vmatprep.subr.mxu0 0.0
        %2233 = vmatpush1.msra.mxu0 0.0
        %2234 = vmatprep.subr.mxu0 0.0
        %2235 = vmatpush1.msra.mxu0 0.0
        %2236 = vmatprep.subr.mxu0 0.0
        %2237 = vmatpush1.msra.mxu0 0.0
        %2238 = vmatprep.subr.mxu0 0.0
        %2239 = vmatpush1.msra.mxu0 0.0
        %2240 = vmatprep.subr.mxu0 0.0
        %2241 = vmatpush1.msra.mxu0 0.0
        %2242 = vmatprep.subr.mxu0 0.0
        %2243 = vmatpush1.msra.mxu0 0.0
        %2244 = vmatprep.mubr.f32.mxu0 0.0
        %2245 = vmatmul.mubr.f32.gmra.mrb[0].mxu0 %v2172
        %v2246 = vpop.f32.mrb[0].mxu0
        %v2247 = vadd.f32 0.0, %v2246
        %v2248 = vpop.f32.mrb[0].mxu0
        %2249 = vmatprep.mubr.f32.mxu0 0.0
        %2250 = vmatmul.mubr.f32.gmra.mrb[0].mxu0 %v2175
        %v2251 = vpop.f32.mrb[0].mxu0
        %v2252 = vadd.f32 0.0, %v2251
        %v2253 = vpop.f32.mrb[0].mxu0
        %2254 = vmatprep.mubr.f32.mxu0 0.0
        %2255 = vmatmul.mubr.f32.gmra.mrb[0].mxu0 %v2178
        %v2256 = vpop.f32.mrb[0].mxu0
        %v2257 = vadd.f32 0.0, %v2256
        %v2258 = vpop.f32.mrb[0].mxu0
        %2259 = vdwg.mxu0
        %v2260 = vld [vmem:[%s9] sm:$0xff]
        %v2261 = vld [vmem:[%s9 + $0x8] sm:$0xff]
        %v2262 = vld [vmem:[%s9 + $0x10] sm:$0xff]
        %v2263 = vld [vmem:[%s9 + $0x18] sm:$0xff]
        %v2264 = vld [vmem:[%s9 + $0x20] sm:$0xff]
        %v2265 = vld [vmem:[%s9 + $0x28] sm:$0xff]
        %v2267 = vsel %vm1396, %v2260, 0
        %v2270 = vsel %vm1396, %v2261, 0
        %v2273 = vsel %vm1396, %v2262, 0
        %v2276 = vsel %vm1396, %v2263, 0
        %v2279 = vsel %vm1396, %v2264, 0
        %v2282 = vsel %vm1396, %v2265, 0
        %2284 = vmatprep.subr.mxu0 0.0
        %2285 = vmatpush1.msra.mxu0 %v2247
        %2286 = vmatprep.subr.mxu0 0.0
        %2287 = vmatpush1.msra.mxu0 %v2252
        %2288 = vmatprep.subr.mxu0 0.0
        %2289 = vmatpush1.msra.mxu0 %v2257
        %2290 = vmatprep.subr.mxu0 0.0
        %2291 = vmatpush1.msra.mxu0 0.0
        %2292 = vmatprep.subr.mxu0 0.0
        %2293 = vmatpush1.msra.mxu0 0.0
        %2294 = vmatprep.subr.mxu0 0.0
        %2295 = vmatpush1.msra.mxu0 0.0
        %2296 = vmatprep.subr.mxu0 0.0
        %2297 = vmatpush1.msra.mxu0 0.0
        %2298 = vmatprep.subr.mxu0 0.0
        %2299 = vmatpush1.msra.mxu0 0.0
        %2300 = vmatprep.subr.mxu0 0.0
        %2301 = vmatpush1.msra.mxu0 0.0
        %2302 = vmatprep.subr.mxu0 0.0
        %2303 = vmatpush1.msra.mxu0 0.0
        %2304 = vmatprep.subr.mxu0 0.0
        %2305 = vmatpush1.msra.mxu0 0.0
        %2306 = vmatprep.subr.mxu0 0.0
        %2307 = vmatpush1.msra.mxu0 0.0
        %2308 = vmatprep.subr.mxu0 0.0
        %2309 = vmatpush1.msra.mxu0 0.0
        %2310 = vmatprep.subr.mxu0 0.0
        %2311 = vmatpush1.msra.mxu0 0.0
        %2312 = vmatprep.subr.mxu0 0.0
        %2313 = vmatpush1.msra.mxu0 0.0
        %2314 = vmatprep.subr.mxu0 0.0
        %2315 = vmatpush1.msra.mxu0 0.0
        %2316 = vmatprep.subr.mxu0 0.0
        %2317 = vmatpush1.msra.mxu0 0.0
        %2318 = vmatprep.subr.mxu0 0.0
        %2319 = vmatpush1.msra.mxu0 0.0
        %2320 = vmatprep.subr.mxu0 0.0
        %2321 = vmatpush1.msra.mxu0 0.0
        %2322 = vmatprep.subr.mxu0 0.0
        %2323 = vmatpush1.msra.mxu0 0.0
        %2324 = vmatprep.subr.mxu0 0.0
        %2325 = vmatpush1.msra.mxu0 0.0
        %2326 = vmatprep.subr.mxu0 0.0
        %2327 = vmatpush1.msra.mxu0 0.0
        %2328 = vmatprep.subr.mxu0 0.0
        %2329 = vmatpush1.msra.mxu0 0.0
        %2330 = vmatprep.subr.mxu0 0.0
        %2331 = vmatpush1.msra.mxu0 0.0
        %2332 = vmatprep.subr.mxu0 0.0
        %2333 = vmatpush1.msra.mxu0 0.0
        %2334 = vmatprep.subr.mxu0 0.0
        %2335 = vmatpush1.msra.mxu0 0.0
        %2336 = vmatprep.subr.mxu0 0.0
        %2337 = vmatpush1.msra.mxu0 0.0
        %2338 = vmatprep.subr.mxu0 0.0
        %2339 = vmatpush1.msra.mxu0 0.0
        %2340 = vmatprep.subr.mxu0 0.0
        %2341 = vmatpush1.msra.mxu0 0.0
        %2342 = vmatprep.subr.mxu0 0.0
        %2343 = vmatpush1.msra.mxu0 0.0
        %2344 = vmatprep.subr.mxu0 0.0
        %2345 = vmatpush1.msra.mxu0 0.0
        %2346 = vmatprep.subr.mxu0 0.0
        %2347 = vmatpush1.msra.mxu0 0.0
        %2348 = vmatprep.mubr.f32.mxu0 0.0
        %2349 = vmatmul.mubr.f32.gmra.mrb[0].mxu0 %v2267
        %v2350 = vpop.f32.mrb[0].mxu0
        %v2351 = vadd.f32 0.0, %v2350
        %v2352 = vpop.f32.mrb[0].mxu0
        %2353 = vmatprep.mubr.f32.mxu0 0.0
        %2354 = vmatmul.mubr.f32.gmra.mrb[0].mxu0 %v2270
        %v2355 = vpop.f32.mrb[0].mxu0
        %v2356 = vadd.f32 0.0, %v2355
        %v2357 = vpop.f32.mrb[0].mxu0
        %2358 = vmatprep.mubr.f32.mxu0 0.0
        %2359 = vmatmul.mubr.f32.gmra.mrb[0].mxu0 %v2273
        %v2360 = vpop.f32.mrb[0].mxu0
        %v2361 = vadd.f32 0.0, %v2360
        %v2362 = vpop.f32.mrb[0].mxu0
        %2363 = vmatprep.mubr.f32.mxu0 0.0
        %2364 = vmatmul.mubr.f32.gmra.mrb[0].mxu0 %v2276
        %v2365 = vpop.f32.mrb[0].mxu0
        %v2366 = vadd.f32 0.0, %v2365
        %v2367 = vpop.f32.mrb[0].mxu0
        %2368 = vmatprep.mubr.f32.mxu0 0.0
        %2369 = vmatmul.mubr.f32.gmra.mrb[0].mxu0 %v2279
        %v2370 = vpop.f32.mrb[0].mxu0
        %v2371 = vadd.f32 0.0, %v2370
        %v2372 = vpop.f32.mrb[0].mxu0
        %2373 = vmatprep.mubr.f32.mxu0 0.0
        %2374 = vmatmul.mubr.f32.gmra.mrb[0].mxu0 %v2282
        %v2375 = vpop.f32.mrb[0].mxu0
        %v2376 = vadd.f32 0.0, %v2375
        %v2377 = vpop.f32.mrb[0].mxu0
        %2378 = vdwg.mxu0
        %2379 = vrot.lane.b32.xlu0 %v2351, 96
        %v2380 = vpop.permute.xlu0 %2379
        %v2381 = vsel %vm1165, %v2380, %v2351
        %2382 = vrot.lane.b32.xlu0 %v2356, 96
        %v2383 = vpop.permute.xlu0 %2382
        %v2384 = vsel %vm1165, %v2383, %v2356
        %2385 = vrot.lane.b32.xlu0 %v2381, 96
        %v2386 = vpop.permute.xlu0 %2385
        %2387 = vrot.lane.b32.xlu0 %v2384, 96
        %v2388 = vpop.permute.xlu0 %2387
        %v2389 = vsel %vm1165, %v2386, %v2351
        %v2390 = vsel %vm1165, %v2388, %v2356
        %2395 = vrot.lane.b32.xlu0 %v2389, 33
        %v2396 = vpop.permute.xlu0 %2395
        %2397 = vrot.lane.b32.xlu0 %v2386, 33
        %v2398 = vpop.permute.xlu0 %2397
        %2399 = vrot.lane.b32.xlu0 %v2390, 33
        %v2400 = vpop.permute.xlu0 %2399
        %2401 = vrot.lane.b32.xlu0 %v2388, 33
        %v2402 = vpop.permute.xlu0 %2401
        %v2403 = vsel %vm1202, %v2396, %v2398
        %v2404 = vsel %vm1202, %v2400, %v2402
        %v2407 = vsel %vm837, 0.0, %v2403
        %v2408 = vsel %vm837, 0.0, %v2404
        %2409 = vrot.lane.b32.xlu0 %v2371, 96
        %v2410 = vpop.permute.xlu0 %2409
        %v2411 = vsel %vm1165, %v2410, %v2371
        %2412 = vrot.lane.b32.xlu0 %v2376, 96
        %v2413 = vpop.permute.xlu0 %2412
        %v2414 = vsel %vm1165, %v2413, %v2376
        %2415 = vrot.lane.b32.xlu0 %v2411, 96
        %v2416 = vpop.permute.xlu0 %2415
        %2417 = vrot.lane.b32.xlu0 %v2414, 96
        %v2418 = vpop.permute.xlu0 %2417
        %v2419 = vsel %vm1165, %v2416, %v2371
        %v2420 = vsel %vm1165, %v2418, %v2376
        %2423 = vrot.lane.b32.xlu0 %v2419, 127
        %v2424 = vpop.permute.xlu0 %2423
        %2425 = vrot.lane.b32.xlu0 %v2420, 127
        %v2426 = vpop.permute.xlu0 %2425
        %v2429 = vsel %vm1212, 0.0, %v2424
        %v2430 = vsel %vm1212, 0.0, %v2426
        %v2431 = vadd.f32 %v2407, %v2361
        %v2432 = vadd.f32 %v2408, %v2366
        %v2433 = vadd.f32 %v2431, %v2429
        %v2434 = vadd.f32 %v2432, %v2430
        %v2435 = vld [vmem:[%s10] sm:$0xff]
        %v2436 = vld [vmem:[%s10 + $0x8] sm:$0xff]
        %2438 = vset.pattern.permute.xlu0 0
        %2439 = vperm.xlu0 %2438, %v2435
        %v2440 = vpop.permute.xlu0 %2439
        %2443 = vset.pattern.permute.xlu0 0
        %2444 = vperm.xlu0 %2443, %v2436
        %v2445 = vpop.permute.xlu0 %2444
        %v2447 = vadd.f32 %v2433, %v2440
        %v2448 = vadd.f32 %v2434, %v2445
        %vm2449 = vcmp.ge.f32.partialorder %v2447, 0.0
        %vm2450 = vcmp.ge.f32.partialorder %v2448, 0.0
        %v2451 = vmul.f32 %v2447, 0.05
        %v2452 = vmul.f32 %v2448, 0.05
        %v2453 = vsel %vm2449, %v2447, %v2451
        %v2454 = vsel %vm2450, %v2448, %v2452
        %v2455 = vld [vmem:[#allocation8] sm:$0xff]
        %v2456 = vld [vmem:[#allocation8 + $0x8] sm:$0xff]
        %v2457 = vld [vmem:[#allocation8 + $0x10] sm:$0xff]
        %v2458 = vld [vmem:[#allocation8 + $0x18] sm:$0xff]
        %v2459 = vld [vmem:[#allocation8 + $0x20] sm:$0xff]
        %v2460 = vld [vmem:[#allocation8 + $0x28] sm:$0xff]
        %v2461 = vld [vmem:[#allocation8 + $0x30] sm:$0xff]
        %v2462 = vld [vmem:[#allocation8 + $0x38] sm:$0xff]
        %v2463 = vld [vmem:[#allocation8 + $0x40] sm:$0xff]
        %v2464 = vld [vmem:[#allocation8 + $0x48] sm:$0xff]
        %v2465 = vld [vmem:[#allocation8 + $0x50] sm:$0xff]
        %v2466 = vld [vmem:[#allocation8 + $0x58] sm:$0xff]
        %v2467 = vld [vmem:[#allocation8 + $0x60] sm:$0xff]
        %v2468 = vld [vmem:[#allocation8 + $0x68] sm:$0xff]
        %v2469 = vld [vmem:[#allocation8 + $0x70] sm:$0xff]
        %v2470 = vld [vmem:[#allocation8 + $0x78] sm:$0xff]
        %v2471 = vld [vmem:[#allocation8 + $0x80] sm:$0xff]
        %v2472 = vld [vmem:[#allocation8 + $0x88] sm:$0xff]
        %v2473 = vld [vmem:[#allocation8 + $0x90] sm:$0xff]
        %v2474 = vld [vmem:[#allocation8 + $0x98] sm:$0xff]
        %v2475 = vld [vmem:[#allocation8 + $0xa0] sm:$0xff]
        %v2476 = vld [vmem:[#allocation8 + $0xa8] sm:$0xff]
        %v2477 = vld [vmem:[#allocation8 + $0xb0] sm:$0xff]
        %v2478 = vld [vmem:[#allocation8 + $0xb8] sm:$0xff]
        %v2480 = vsel %vm1294, %v2453, 0
        %v2483 = vsel %vm1294, %v2454, 0
        %2485 = vmatprep.subr.mxu0 %v2456
        %2486 = vmatpush1.msra.mxu0 %v2455
        %2487 = vmatprep.subr.mxu0 %v2458
        %2488 = vmatpush1.msra.mxu0 %v2457
        %2489 = vmatprep.subr.mxu0 %v2460
        %2490 = vmatpush1.msra.mxu0 %v2459
        %2491 = vmatprep.subr.mxu0 %v2462
        %2492 = vmatpush1.msra.mxu0 %v2461
        %2493 = vmatprep.subr.mxu0 %v2464
        %2494 = vmatpush1.msra.mxu0 %v2463
        %2495 = vmatprep.subr.mxu0 %v2466
        %2496 = vmatpush1.msra.mxu0 %v2465
        %2497 = vmatprep.subr.mxu0 %v2468
        %2498 = vmatpush1.msra.mxu0 %v2467
        %2499 = vmatprep.subr.mxu0 %v2470
        %2500 = vmatpush1.msra.mxu0 %v2469
        %2501 = vmatprep.subr.mxu0 %v2472
        %2502 = vmatpush1.msra.mxu0 %v2471
        %2503 = vmatprep.subr.mxu0 %v2474
        %2504 = vmatpush1.msra.mxu0 %v2473
        %2505 = vmatprep.subr.mxu0 %v2476
        %2506 = vmatpush1.msra.mxu0 %v2475
        %2507 = vmatprep.subr.mxu0 %v2478
        %2508 = vmatpush1.msra.mxu0 %v2477
        %2509 = vmatprep.subr.mxu0 0.0
        %2510 = vmatpush1.msra.mxu0 0.0
        %2511 = vmatprep.subr.mxu0 0.0
        %2512 = vmatpush1.msra.mxu0 0.0
        %2513 = vmatprep.subr.mxu0 0.0
        %2514 = vmatpush1.msra.mxu0 0.0
        %2515 = vmatprep.subr.mxu0 0.0
        %2516 = vmatpush1.msra.mxu0 0.0
        %2517 = vmatprep.subr.mxu0 0.0
        %2518 = vmatpush1.msra.mxu0 0.0
        %2519 = vmatprep.subr.mxu0 0.0
        %2520 = vmatpush1.msra.mxu0 0.0
        %2521 = vmatprep.subr.mxu0 0.0
        %2522 = vmatpush1.msra.mxu0 0.0
        %2523 = vmatprep.subr.mxu0 0.0
        %2524 = vmatpush1.msra.mxu0 0.0
        %2525 = vmatprep.subr.mxu0 0.0
        %2526 = vmatpush1.msra.mxu0 0.0
        %2527 = vmatprep.subr.mxu0 0.0
        %2528 = vmatpush1.msra.mxu0 0.0
        %2529 = vmatprep.subr.mxu0 0.0
        %2530 = vmatpush1.msra.mxu0 0.0
        %2531 = vmatprep.subr.mxu0 0.0
        %2532 = vmatpush1.msra.mxu0 0.0
        %2533 = vmatprep.subr.mxu0 0.0
        %2534 = vmatpush1.msra.mxu0 0.0
        %2535 = vmatprep.subr.mxu0 0.0
        %2536 = vmatpush1.msra.mxu0 0.0
        %2537 = vmatprep.subr.mxu0 0.0
        %2538 = vmatpush1.msra.mxu0 0.0
        %2539 = vmatprep.subr.mxu0 0.0
        %2540 = vmatpush1.msra.mxu0 0.0
        %2541 = vmatprep.subr.mxu0 0.0
        %2542 = vmatpush1.msra.mxu0 0.0
        %2543 = vmatprep.subr.mxu0 0.0
        %2544 = vmatpush1.msra.mxu0 0.0
        %2545 = vmatprep.subr.mxu0 0.0
        %2546 = vmatpush1.msra.mxu0 0.0
        %2547 = vmatprep.subr.mxu0 0.0
        %2548 = vmatpush1.msra.mxu0 0.0
        %2549 = vmatprep.mubr.f32.mxu0 0.0
        %2550 = vmatmul.mubr.f32.gmra.mrb[0].mxu0 %v2480
        %v2551 = vpop.f32.mrb[0].mxu0
        %v2552 = vadd.f32 0.0, %v2551
        %v2553 = vpop.f32.mrb[0].mxu0
        %v2554 = vadd.f32 0.0, %v2553
        %2555 = vmatprep.mubr.f32.mxu0 0.0
        %2556 = vmatmul.mubr.f32.gmra.mrb[0].mxu0 %v2483
        %v2557 = vpop.f32.mrb[0].mxu0
        %v2558 = vadd.f32 0.0, %v2557
        %v2559 = vpop.f32.mrb[0].mxu0
        %v2560 = vadd.f32 0.0, %v2559
        %2561 = vdwg.mxu0
        %v2562 = vld [vmem:[#allocation2] sm:$0xff]
        %v2563 = vld [vmem:[#allocation2 + $0x8] sm:$0xf]
        %v2565 = vsel %vm1027, %v2562, 0
        %v2568 = vsel %vm1027, %v2563, 0
        %2570 = vmatprep.subr.mxu0 %v2554
        %2571 = vmatpush1.msra.mxu0 %v2552
        %2572 = vmatprep.subr.mxu0 %v2560
        %2573 = vmatpush1.msra.mxu0 %v2558
        %2574 = vmatprep.subr.mxu0 0.0
        %2575 = vmatpush1.msra.mxu0 0.0
        %2576 = vmatprep.subr.mxu0 0.0
        %2577 = vmatpush1.msra.mxu0 0.0
        %2578 = vmatprep.subr.mxu0 0.0
        %2579 = vmatpush1.msra.mxu0 0.0
        %2580 = vmatprep.subr.mxu0 0.0
        %2581 = vmatpush1.msra.mxu0 0.0
        %2582 = vmatprep.subr.mxu0 0.0
        %2583 = vmatpush1.msra.mxu0 0.0
        %2584 = vmatprep.subr.mxu0 0.0
        %2585 = vmatpush1.msra.mxu0 0.0
        %2586 = vmatprep.subr.mxu0 0.0
        %2587 = vmatpush1.msra.mxu0 0.0
        %2588 = vmatprep.subr.mxu0 0.0
        %2589 = vmatpush1.msra.mxu0 0.0
        %2590 = vmatprep.subr.mxu0 0.0
        %2591 = vmatpush1.msra.mxu0 0.0
        %2592 = vmatprep.subr.mxu0 0.0
        %2593 = vmatpush1.msra.mxu0 0.0
        %2594 = vmatprep.subr.mxu0 0.0
        %2595 = vmatpush1.msra.mxu0 0.0
        %2596 = vmatprep.subr.mxu0 0.0
        %2597 = vmatpush1.msra.mxu0 0.0
        %2598 = vmatprep.subr.mxu0 0.0
        %2599 = vmatpush1.msra.mxu0 0.0
        %2600 = vmatprep.subr.mxu0 0.0
        %2601 = vmatpush1.msra.mxu0 0.0
        %2602 = vmatprep.subr.mxu0 0.0
        %2603 = vmatpush1.msra.mxu0 0.0
        %2604 = vmatprep.subr.mxu0 0.0
        %2605 = vmatpush1.msra.mxu0 0.0
        %2606 = vmatprep.subr.mxu0 0.0
        %2607 = vmatpush1.msra.mxu0 0.0
        %2608 = vmatprep.subr.mxu0 0.0
        %2609 = vmatpush1.msra.mxu0 0.0
        %2610 = vmatprep.subr.mxu0 0.0
        %2611 = vmatpush1.msra.mxu0 0.0
        %2612 = vmatprep.subr.mxu0 0.0
        %2613 = vmatpush1.msra.mxu0 0.0
        %2614 = vmatprep.subr.mxu0 0.0
        %2615 = vmatpush1.msra.mxu0 0.0
        %2616 = vmatprep.subr.mxu0 0.0
        %2617 = vmatpush1.msra.mxu0 0.0
        %2618 = vmatprep.subr.mxu0 0.0
        %2619 = vmatpush1.msra.mxu0 0.0
        %2620 = vmatprep.subr.mxu0 0.0
        %2621 = vmatpush1.msra.mxu0 0.0
        %2622 = vmatprep.subr.mxu0 0.0
        %2623 = vmatpush1.msra.mxu0 0.0
        %2624 = vmatprep.subr.mxu0 0.0
        %2625 = vmatpush1.msra.mxu0 0.0
        %2626 = vmatprep.subr.mxu0 0.0
        %2627 = vmatpush1.msra.mxu0 0.0
        %2628 = vmatprep.subr.mxu0 0.0
        %2629 = vmatpush1.msra.mxu0 0.0
        %2630 = vmatprep.subr.mxu0 0.0
        %2631 = vmatpush1.msra.mxu0 0.0
        %2632 = vmatprep.subr.mxu0 0.0
        %2633 = vmatpush1.msra.mxu0 0.0
        %2634 = vmatprep.mubr.f32.mxu0 0.0
        %2635 = vmatmul.mubr.f32.gmra.mrb[0].mxu0 %v2565
        %v2636 = vpop.f32.mrb[0].mxu0
        %v2637 = vadd.f32 0.0, %v2636
        %v2638 = vpop.f32.mrb[0].mxu0
        %v2639 = vadd.f32 0.0, %v2638
        %2640 = vmatprep.mubr.f32.mxu0 0.0
        %2641 = vmatmul.mubr.f32.gmra.mrb[0].mxu0 %v2568
        %v2642 = vpop.f32.mrb[0].mxu0
        %v2643 = vadd.f32 0.0, %v2642
        %v2644 = vpop.f32.mrb[0].mxu0
        %v2645 = vadd.f32 0.0, %v2644
        %2646 = vdwg.mxu0
        %vm2647 = vcmask 1048064
        %2648 = vrot.lane.b32.xlu0 %v2637, 64
        %v2649 = vpop.permute.xlu0 %2648
        %v2650 = vsel %vm2647, %v2649, %v2639
        %2651 = vrot.lane.b32.xlu0 %v2650, 64
        %v2652 = vpop.permute.xlu0 %2651
        %v2653 = vsel %vm2647, %v2652, %v2649
        %2656 = vrot.lane.b32.xlu0 %v2650, 65
        %v2657 = vpop.permute.xlu0 %2656
        %2658 = vrot.lane.b32.xlu0 %v2653, 65
        %v2659 = vpop.permute.xlu0 %2658
        %vm2660 = vcmask 531456
        %v2661 = vsel %vm2660, %v2657, %v2659
        %v2664 = vsel %vm837, 0.0, %v2661
        %v2665 = vsel %vm838, 0.0, %v2659
        %vm2666 = vcmp.eq.s32.totalorder %v835, 191
        %vm2667 = vcmp.eq.s32.totalorder %v836, 191
        %2668 = vrot.lane.b32.xlu0 %v2643, 64
        %v2669 = vpop.permute.xlu0 %2668
        %v2670 = vsel %vm2647, %v2669, %v2645
        %2673 = vrot.lane.b32.xlu0 %v2643, 127
        %v2674 = vpop.permute.xlu0 %2673
        %2675 = vrot.lane.b32.xlu0 %v2670, 127
        %v2676 = vpop.permute.xlu0 %2675
        %vm2677 = vcmask 1039360
        %v2678 = vsel %vm2677, %v2674, %v2676
        %v2681 = vsel %vm2666, 0.0, %v2678
        %v2682 = vsel %vm2667, 0.0, %v2676
        %v2685 = vrot.slane %v2637, 4
        %v2686 = vrot.slane %v2639, 4
        %v2689 = vadd.f32 %v2664, %v2685
        %v2690 = vadd.f32 %v2665, %v2686
        %v2691 = vadd.f32 %v2689, %v2681
        %v2692 = vadd.f32 %v2690, %v2682
        %v2693 = vld [vmem:[%s12] sm:$0xf]
        %2695 = vset.pattern.permute.xlu0 0
        %2696 = vperm.xlu0 %2695, %v2693
        %v2697 = vpop.permute.xlu0 %2696
        %v2699 = vadd.f32 %v2691, %v2697
        %v2700 = vadd.f32 %v2692, %v2697
        %v2703 = vcombine.low %v2699, %v2700
        %vm2705 = vcmask 523268
        %vm2706 = vmor %vm2705, %vm728
        %2707 = vst.msk [vmem:[%s689] sm:$0xff] %vm2706, %v2703
        %p2708 = scmp.lt.s32.totalorder %s38, 1
        %s2709 = scalar_select %p2708, %s38, 1
        %s2710 = smul.addr %s2709, 4
        %s2711 = smul.addr %s2710, 8
        %s2712 = scalar_lea.vmem %s19, %s2711
        %s2713 = sand.u32 %s476, 1
        %s2714 = scalar_lea.sflag [#allocation4], %s2713
        %s2715 = sand.u32 %s476, 1
        %s2716 = smul.addr %s2715, 8
        %s2717 = scalar_lea.vmem [#allocation10], %s2716
        // Predicated region
        $region113: #{conv_autoencoder_forward.2} parent=95 // pred_check
          %p2718 = pneg %p460
        $region114: #{conv_autoencoder_forward.2} parent=95 // pred_check_branch
          %2720 = sbr.rel (%p2718) target = $region116
        $region115: #{conv_autoencoder_forward.2} parent=95 // pred_region
          _
        $region116: #{conv_autoencoder_forward.2} parent=95 // pred_fallthru
          _
        // Predicated region
        $region117: #{conv_autoencoder_forward.2} parent=95 // pred_check
          %p2721 = pneg %p486
        $region118: #{conv_autoencoder_forward.2} parent=95 // pred_check_branch
          %2723 = sbr.rel (%p2721) target = $region120
        $region119: #{conv_autoencoder_forward.2} parent=95 // pred_region
          %s2725 = ssub.s32 128, 128
          %2726 = vsyncadd %s2714, %s2725
          %s2727 = smul.addr %s38, 2
          %s2728 = smul.addr %s2727, 64
          %s2729 = scalar_lea.hbm %s20, %s2728
          %s2731 = sshll.u32 %s2717, 4
          %s2732 = int_to_ptr.vmem [resolvable:$true] %s2731
          %2734 = dma.vmem_to_hbm [thread:$0]  %s2732, 128, %s2729, %s2714
        $region120: #{conv_autoencoder_forward.2} parent=95 // pred_fallthru
          _
      $region96: #{conv_autoencoder_forward.2} parent=5 // pred_fallthru
        _
      %p2735 = scmp.le.s32.totalorder 2, %s33
      // Predicated region
      $region121: #{conv_autoencoder_forward.2} parent=5 // pred_check
        %p2736 = pneg %p2735
      $region122: #{conv_autoencoder_forward.2} parent=5 // pred_check_branch
        %2738 = sbr.rel (%p2736) target = $region124
      $region123: #{conv_autoencoder_forward.2} parent=5 // pred_region
        %s2739 = ssub.s32 %s33, 2
        // Predicated region
        $region125: #{conv_autoencoder_forward.2} parent=123 // pred_check
          %p2740 = pneg %p466
        $region126: #{conv_autoencoder_forward.2} parent=123 // pred_check_branch
          %2742 = sbr.rel (%p2740) target = $region128
        $region127: #{conv_autoencoder_forward.2} parent=123 // pred_region
          %p2743 = scmp.lt.s32.totalorder %s39, 1
          %s2744 = scalar_select %p2743, %s39, 1
          %s2745 = smul.addr %s2744, 4
          %s2746 = smul.addr %s2745, 8
          %s2747 = scalar_lea.vmem %s19, %s2746
        $region128: #{conv_autoencoder_forward.2} parent=123 // pred_fallthru
          _
        // Predicated region
        $region129: #{conv_autoencoder_forward.2} parent=123 // pred_check
          %p2748 = pneg %p492
        $region130: #{conv_autoencoder_forward.2} parent=123 // pred_check_branch
          %2750 = sbr.rel (%p2748) target = $region132
        $region131: #{conv_autoencoder_forward.2} parent=123 // pred_region
          %s2751 = sand.u32 %s477, 1
          %s2752 = scalar_lea.sflag [#allocation4], %s2751
          %s2753 = sand.u32 %s477, 1
          %s2754 = smul.addr %s2753, 8
          %s2755 = scalar_lea.vmem [#allocation10], %s2754
          %2756 = dma.done %s2752, 128
        $region132: #{conv_autoencoder_forward.2} parent=123 // pred_fallthru
          _
      $region124: #{conv_autoencoder_forward.2} parent=5 // pred_fallthru
        _
    $region6: #{conv_autoencoder_forward.2} parent=1 // loop_footer
      %s37 = sadd.s32 1, %s33
    $region7: #{conv_autoencoder_forward.2} parent=1 // loop_footer_branch
      %32 = sbr.rel target = $region3
    $region8: #{conv_autoencoder_forward.2} parent=1 // loop_exit
      _
    %2757 = vsyncpa [#allocation3], 1
    %s2758 = scalar_lea.sflag [#allocation3], 1
    %2759 = vsyncpa %s2758, 1
    %2760 = vsyncpa [#allocation6], 1
    %2761 = vsyncpa [#allocation9], 1
    %2762 = vsyncpa [#allocation4], 1
    %s2763 = scalar_lea.sflag [#allocation4], 1
    %2764 = vsyncpa %s2763, 1

// kernel: conv_autoencoder_forward.3
$region0: #{conv_autoencoder_forward.3}
  #allocation0 [shape = 'u32[]', space=smem, size = 0x4, offset = 0x4, fixed_abs, tag = 'smem constant byte address 0x4 - core index']
  #allocation1 [shape = 'u32[144,128]{1,0:T(1,128)}', space=vmem, size = 0x12000, scoped, tag = 'internal scratch']
  %s0 = inlined_call_operand.vmem [shape: f32[2,768], index: 0, kind: input, shape index: {}]
  %s1 = inlined_call_operand.hbm [shape: bf16[768,2048], index: 1, kind: input, shape index: {}]
  %s2 = inlined_call_operand.hbm [shape: f32[1,2048], index: 2, kind: input, shape index: {}]
  %s3 = inlined_call_operand.hbm [shape: bf16[1024,1024], index: 3, kind: input, shape index: {}]
  %s4 = inlined_call_operand.hbm [shape: f32[1,1024], index: 4, kind: input, shape index: {}]
  %s5 = inlined_call_operand.vmem [shape: bf16[386,4], index: 5, kind: input, shape index: {}]
  %s6 = inlined_call_operand.hbm [shape: f32[1,4], index: 6, kind: input, shape index: {}]
  %s7 = inlined_call_operand.vmem [shape: bf16[385,2], index: 7, kind: input, shape index: {}]
  %s8 = inlined_call_operand.hbm [shape: f32[1,2], index: 8, kind: input, shape index: {}]
  %s9 = inlined_call_operand.hbm [shape: f32[2,1024], index: 9, kind: output, shape index: {0}]
  %s10 = inlined_call_operand.hbm [shape: f32[2,4], index: 10, kind: output, shape index: {1}]
  %s11 = inlined_call_operand.hbm [shape: f32[2,2], index: 11, kind: output, shape index: {2}]
  %12 = xla_tuple %s9, %s10, %s11
  %s13 = sld [smem:[#allocation0]]
  $region86: #{conv_autoencoder_forward.3} parent=0
    _
  %s15 = ssub.s32 1, %s13
  %s16 = scalar_select 0, %s15, %s13
  $region1: #{conv_autoencoder_forward.3} parent=0
    #allocation2 [shape = 'u8[3145728]{0}', space=vmem, size = 0x300000, scoped, tag = 'input window, operand 1, single buffered']
    #allocation3 [shape = 's32[1]{0}', space=sflag, size = 0x4, scoped, tag = 'scoped memory for conv_autoencoder_forward.3']
    #allocation4 [shape = 's32[1]{0}', space=sflag, size = 0x4, scoped, tag = 'scoped memory for conv_autoencoder_forward.3']
    #allocation5 [shape = 'u8[8192]{0}', space=vmem, size = 0x2000, scoped, tag = 'input window, operand 2, single buffered']
    #allocation6 [shape = 's32[1]{0}', space=sflag, size = 0x4, scoped, tag = 'scoped memory for conv_autoencoder_forward.3']
    #allocation7 [shape = 'u8[2097152]{0}', space=vmem, size = 0x200000, scoped, tag = 'input window, operand 3, single buffered']
    #allocation8 [shape = 'u8[4096]{0}', space=vmem, size = 0x1000, scoped, tag = 'input window, operand 4, single buffered']
    #allocation9 [shape = 's32[1]{0}', space=sflag, size = 0x4, scoped, tag = 'scoped memory for conv_autoencoder_forward.3']
    #allocation10 [shape = 'u8[512]{0}', space=vmem, size = 0x400, scoped, tag = 'input window, operand 6, single buffered']
    #allocation11 [shape = 'u8[512]{0}', space=vmem, size = 0x400, scoped, tag = 'input window, operand 8, single buffered']
    #allocation12 [shape = 's32[1]{0}', space=sflag, size = 0x4, scoped, tag = 'scoped memory for conv_autoencoder_forward.3']
    #allocation13 [shape = 'u8[8192]{0}', space=vmem, size = 0x2000, scoped, tag = 'output window, operand 0, single buffered']
    #allocation14 [shape = 'u8[1024]{0}', space=vmem, size = 0x400, scoped, tag = 'output window, operand 1, single buffered']
    #allocation15 [shape = 's32[1]{0}', space=sflag, size = 0x4, scoped, tag = 'scoped memory for conv_autoencoder_forward.3']
    #allocation16 [shape = 'u8[1024]{0}', space=vmem, size = 0x400, scoped, tag = 'output window, operand 2, single buffered']
    %17 = vsyncpa [#allocation3], 0
    %18 = vsyncpa [#allocation6], 0
    %19 = vsyncpa [#allocation9], 0
    %20 = vsyncpa [#allocation12], 0
    %21 = vsyncpa [#allocation4], 0
    %22 = vsyncpa [#allocation15], 0
    // Predicated region
    $region2: #{conv_autoencoder_forward.3} parent=1 // pred_check
      _
    $region3: #{conv_autoencoder_forward.3} parent=1 // pred_check_branch
      %24 = sbr.rel (0) target = $region5
    $region4: #{conv_autoencoder_forward.3} parent=1 // pred_region
      _
    $region5: #{conv_autoencoder_forward.3} parent=1 // pred_fallthru
      _
    // Predicated region
    $region6: #{conv_autoencoder_forward.3} parent=1 // pred_check
      _
    $region7: #{conv_autoencoder_forward.3} parent=1 // pred_check_branch
      %26 = sbr.rel (0) target = $region9
    $region8: #{conv_autoencoder_forward.3} parent=1 // pred_region
      %s28 = ssub.s32 98304, 98304
      %29 = vsyncadd [#allocation3], %s28
      %s30 = sshll.u32 [#allocation2], 4
      %s31 = int_to_ptr.vmem [resolvable:$true] %s30
      %36 = dma.hbm_to_vmem [thread:$0]  %s1, 98304, %s31, [#allocation3], 1024, 1024, 64
    $region9: #{conv_autoencoder_forward.3} parent=1 // pred_fallthru
      _
    // Predicated region
    $region10: #{conv_autoencoder_forward.3} parent=1 // pred_check
      _
    $region11: #{conv_autoencoder_forward.3} parent=1 // pred_check_branch
      %38 = sbr.rel (0) target = $region13
    $region12: #{conv_autoencoder_forward.3} parent=1 // pred_region
      %s40 = ssub.s32 256, 256
      %41 = vsyncadd [#allocation6], %s40
      %s43 = sshll.u32 [#allocation5], 4
      %s44 = int_to_ptr.vmem [resolvable:$true] %s43
      %46 = dma.hbm_to_vmem [thread:$0]  %s2, 256, %s44, [#allocation6]
    $region13: #{conv_autoencoder_forward.3} parent=1 // pred_fallthru
      _
    // Predicated region
    $region14: #{conv_autoencoder_forward.3} parent=1 // pred_check
      _
    $region15: #{conv_autoencoder_forward.3} parent=1 // pred_check_branch
      %48 = sbr.rel (0) target = $region17
    $region16: #{conv_autoencoder_forward.3} parent=1 // pred_region
      %s50 = ssub.s32 65536, 65536
      %51 = vsyncadd [#allocation6], %s50
      %s52 = sshll.u32 [#allocation7], 4
      %s53 = int_to_ptr.vmem [resolvable:$true] %s52
      %58 = dma.hbm_to_vmem [thread:$0]  %s3, 65536, %s53, [#allocation6], 512, 512, 32
    $region17: #{conv_autoencoder_forward.3} parent=1 // pred_fallthru
      _
    // Predicated region
    $region18: #{conv_autoencoder_forward.3} parent=1 // pred_check
      _
    $region19: #{conv_autoencoder_forward.3} parent=1 // pred_check_branch
      %60 = sbr.rel (0) target = $region21
    $region20: #{conv_autoencoder_forward.3} parent=1 // pred_region
      %s62 = ssub.s32 128, 128
      %63 = vsyncadd [#allocation9], %s62
      %s65 = sshll.u32 [#allocation8], 4
      %s66 = int_to_ptr.vmem [resolvable:$true] %s65
      %68 = dma.hbm_to_vmem [thread:$0]  %s4, 128, %s66, [#allocation9]
    $region21: #{conv_autoencoder_forward.3} parent=1 // pred_fallthru
      _
    // Predicated region
    $region22: #{conv_autoencoder_forward.3} parent=1 // pred_check
      _
    $region23: #{conv_autoencoder_forward.3} parent=1 // pred_check_branch
      %70 = sbr.rel (0) target = $region25
    $region24: #{conv_autoencoder_forward.3} parent=1 // pred_region
      _
    $region25: #{conv_autoencoder_forward.3} parent=1 // pred_fallthru
      _
    // Predicated region
    $region26: #{conv_autoencoder_forward.3} parent=1 // pred_check
      _
    $region27: #{conv_autoencoder_forward.3} parent=1 // pred_check_branch
      %72 = sbr.rel (0) target = $region29
    $region28: #{conv_autoencoder_forward.3} parent=1 // pred_region
      %s74 = ssub.s32 16, 16
      %75 = vsyncadd [#allocation9], %s74
      %s77 = sshll.u32 [#allocation10], 4
      %s78 = int_to_ptr.vmem [resolvable:$true] %s77
      %80 = dma.hbm_to_vmem [thread:$0]  %s6, 16, %s78, [#allocation9]
    $region29: #{conv_autoencoder_forward.3} parent=1 // pred_fallthru
      _
    // Predicated region
    $region30: #{conv_autoencoder_forward.3} parent=1 // pred_check
      _
    $region31: #{conv_autoencoder_forward.3} parent=1 // pred_check_branch
      %82 = sbr.rel (0) target = $region33
    $region32: #{conv_autoencoder_forward.3} parent=1 // pred_region
      _
    $region33: #{conv_autoencoder_forward.3} parent=1 // pred_fallthru
      _
    // Predicated region
    $region34: #{conv_autoencoder_forward.3} parent=1 // pred_check
      _
    $region35: #{conv_autoencoder_forward.3} parent=1 // pred_check_branch
      %84 = sbr.rel (0) target = $region37
    $region36: #{conv_autoencoder_forward.3} parent=1 // pred_region
      %s86 = ssub.s32 16, 16
      %87 = vsyncadd [#allocation12], %s86
      %s89 = sshll.u32 [#allocation11], 4
      %s90 = int_to_ptr.vmem [resolvable:$true] %s89
      %92 = dma.hbm_to_vmem [thread:$0]  %s8, 16, %s90, [#allocation12]
    $region37: #{conv_autoencoder_forward.3} parent=1 // pred_fallthru
      _
    // Predicated region
    $region38: #{conv_autoencoder_forward.3} parent=1 // pred_check
      _
    $region39: #{conv_autoencoder_forward.3} parent=1 // pred_check_branch
      %94 = sbr.rel (0) target = $region41
    $region40: #{conv_autoencoder_forward.3} parent=1 // pred_region
      %95 = dma.done [#allocation3], 98304
    $region41: #{conv_autoencoder_forward.3} parent=1 // pred_fallthru
      _
    // Predicated region
    $region42: #{conv_autoencoder_forward.3} parent=1 // pred_check
      _
    $region43: #{conv_autoencoder_forward.3} parent=1 // pred_check_branch
      %97 = sbr.rel (0) target = $region45
    $region44: #{conv_autoencoder_forward.3} parent=1 // pred_region
      %98 = dma.done [#allocation6], 256
    $region45: #{conv_autoencoder_forward.3} parent=1 // pred_fallthru
      _
    // Predicated region
    $region46: #{conv_autoencoder_forward.3} parent=1 // pred_check
      _
    $region47: #{conv_autoencoder_forward.3} parent=1 // pred_check_branch
      %100 = sbr.rel (0) target = $region49
    $region48: #{conv_autoencoder_forward.3} parent=1 // pred_region
      %101 = dma.done [#allocation6], 65536
    $region49: #{conv_autoencoder_forward.3} parent=1 // pred_fallthru
      _
    // Predicated region
    $region50: #{conv_autoencoder_forward.3} parent=1 // pred_check
      _
    $region51: #{conv_autoencoder_forward.3} parent=1 // pred_check_branch
      %103 = sbr.rel (0) target = $region53
    $region52: #{conv_autoencoder_forward.3} parent=1 // pred_region
      %104 = dma.done [#allocation9], 128
    $region53: #{conv_autoencoder_forward.3} parent=1 // pred_fallthru
      _
    // Predicated region
    $region54: #{conv_autoencoder_forward.3} parent=1 // pred_check
      _
    $region55: #{conv_autoencoder_forward.3} parent=1 // pred_check_branch
      %106 = sbr.rel (0) target = $region57
    $region56: #{conv_autoencoder_forward.3} parent=1 // pred_region
      %107 = dma.done [#allocation9], 16
    $region57: #{conv_autoencoder_forward.3} parent=1 // pred_fallthru
      _
    // Predicated region
    $region58: #{conv_autoencoder_forward.3} parent=1 // pred_check
      _
    $region59: #{conv_autoencoder_forward.3} parent=1 // pred_check_branch
      %109 = sbr.rel (0) target = $region61
    $region60: #{conv_autoencoder_forward.3} parent=1 // pred_region
      %110 = dma.done [#allocation12], 16
    $region61: #{conv_autoencoder_forward.3} parent=1 // pred_fallthru
      _
    %v112 = vld [vmem:[%s0] sm:$0xff]
    %v113 = vld [vmem:[%s0 + $0x8] sm:$0xf]
    %v116 = vcombine.high %v112, %v112
    %v118 = vunpack.c.l.s4 1983009808
    %v119 = vunpack.c.0.s8 %v118
    %v120 = vlaneseq
    %v121 = vshrl.u32 %v120, 7
    %v122 = vsub.s32 %v119, %v121
    %v123 = vrot.slane %v112, %v122
    %v125 = vunpack.c.l.s4 1983009808
    %v126 = vunpack.c.0.s8 %v125
    %v127 = vlaneseq
    %v128 = vshrl.u32 %v127, 7
    %v129 = vsub.s32 %v126, %v128
    %v130 = vrot.slane %v116, %v129
    %v131 = vcombine.high %v123, %v123
    %v132 = vcombine.high %v130, %v130
    %v134 = vunpack.c.l.s4 1983009808
    %v135 = vunpack.c.0.s8 %v134
    %v136 = vlaneseq
    %v137 = vshrl.u32 %v136, 7
    %v138 = vsub.s32 %v135, %v137
    %v139 = vrot.slane %v113, %v138
    %v140 = vcombine.high %v139, %v139
    %v147 = vpack.c.bf16 %v123, %v123
    %v148 = vpack.c.bf16 %v131, %v131
    %v149 = vpack.c.bf16 %v130, %v130
    %v150 = vpack.c.bf16 %v132, %v132
    %v151 = vpack.c.bf16 %v139, %v139
    %v152 = vpack.c.bf16 %v140, %v140
    %v153 = vld [vmem:[#allocation2] sm:$0xff]
    %v154 = vld [vmem:[#allocation2 + $0x8] sm:$0xff]
    %v155 = vld [vmem:[#allocation2 + $0x10] sm:$0xff]
    %v156 = vld [vmem:[#allocation2 + $0x18] sm:$0xff]
    %v157 = vld [vmem:[#allocation2 + $0x20] sm:$0xff]
    %v158 = vld [vmem:[#allocation2 + $0x28] sm:$0xff]
    %v159 = vld [vmem:[#allocation2 + $0x30] sm:$0xff]
    %v160 = vld [vmem:[#allocation2 + $0x38] sm:$0xff]
    %v161 = vld [vmem:[#allocation2 + $0x40] sm:$0xff]
    %v162 = vld [vmem:[#allocation2 + $0x48] sm:$0xff]
    %v163 = vld [vmem:[#allocation2 + $0x50] sm:$0xff]
    %v164 = vld [vmem:[#allocation2 + $0x58] sm:$0xff]
    %v165 = vld [vmem:[#allocation2 + $0x60] sm:$0xff]
    %v166 = vld [vmem:[#allocation2 + $0x68] sm:$0xff]
    %v167 = vld [vmem:[#allocation2 + $0x70] sm:$0xff]
    %v168 = vld [vmem:[#allocation2 + $0x78] sm:$0xff]
    %v169 = vld [vmem:[#allocation2 + $0x80] sm:$0xff]
    %v170 = vld [vmem:[#allocation2 + $0x88] sm:$0xff]
    %v171 = vld [vmem:[#allocation2 + $0x90] sm:$0xff]
    %v172 = vld [vmem:[#allocation2 + $0x98] sm:$0xff]
    %v173 = vld [vmem:[#allocation2 + $0xa0] sm:$0xff]
    %v174 = vld [vmem:[#allocation2 + $0xa8] sm:$0xff]
    %v175 = vld [vmem:[#allocation2 + $0xb0] sm:$0xff]
    %v176 = vld [vmem:[#allocation2 + $0xb8] sm:$0xff]
    %v177 = vld [vmem:[#allocation2 + $0xc0] sm:$0xff]
    %v178 = vld [vmem:[#allocation2 + $0xc8] sm:$0xff]
    %v179 = vld [vmem:[#allocation2 + $0xd0] sm:$0xff]
    %v180 = vld [vmem:[#allocation2 + $0xd8] sm:$0xff]
    %v181 = vld [vmem:[#allocation2 + $0xe0] sm:$0xff]
    %v182 = vld [vmem:[#allocation2 + $0xe8] sm:$0xff]
    %v183 = vld [vmem:[#allocation2 + $0xf0] sm:$0xff]
    %v184 = vld [vmem:[#allocation2 + $0xf8] sm:$0xff]
    %v185 = vld [vmem:[#allocation2 + $0x100] sm:$0xff]
    %v186 = vld [vmem:[#allocation2 + $0x108] sm:$0xff]
    %v187 = vld [vmem:[#allocation2 + $0x110] sm:$0xff]
    %v188 = vld [vmem:[#allocation2 + $0x118] sm:$0xff]
    %v189 = vld [vmem:[#allocation2 + $0x120] sm:$0xff]
    %v190 = vld [vmem:[#allocation2 + $0x128] sm:$0xff]
    %v191 = vld [vmem:[#allocation2 + $0x130] sm:$0xff]
    %v192 = vld [vmem:[#allocation2 + $0x138] sm:$0xff]
    %v193 = vld [vmem:[#allocation2 + $0x140] sm:$0xff]
    %v194 = vld [vmem:[#allocation2 + $0x148] sm:$0xff]
    %v195 = vld [vmem:[#allocation2 + $0x150] sm:$0xff]
    %v196 = vld [vmem:[#allocation2 + $0x158] sm:$0xff]
    %v197 = vld [vmem:[#allocation2 + $0x160] sm:$0xff]
    %v198 = vld [vmem:[#allocation2 + $0x168] sm:$0xff]
    %v199 = vld [vmem:[#allocation2 + $0x170] sm:$0xff]
    %v200 = vld [vmem:[#allocation2 + $0x178] sm:$0xff]
    %v201 = vld [vmem:[#allocation2 + $0x180] sm:$0xff]
    %v202 = vld [vmem:[#allocation2 + $0x188] sm:$0xff]
    %v203 = vld [vmem:[#allocation2 + $0x190] sm:$0xff]
    %v204 = vld [vmem:[#allocation2 + $0x198] sm:$0xff]
    %v205 = vld [vmem:[#allocation2 + $0x1a0] sm:$0xff]
    %v206 = vld [vmem:[#allocation2 + $0x1a8] sm:$0xff]
    %v207 = vld [vmem:[#allocation2 + $0x1b0] sm:$0xff]
    %v208 = vld [vmem:[#allocation2 + $0x1b8] sm:$0xff]
    %v209 = vld [vmem:[#allocation2 + $0x1c0] sm:$0xff]
    %v210 = vld [vmem:[#allocation2 + $0x1c8] sm:$0xff]
    %v211 = vld [vmem:[#allocation2 + $0x1d0] sm:$0xff]
    %v212 = vld [vmem:[#allocation2 + $0x1d8] sm:$0xff]
    %v213 = vld [vmem:[#allocation2 + $0x1e0] sm:$0xff]
    %v214 = vld [vmem:[#allocation2 + $0x1e8] sm:$0xff]
    %v215 = vld [vmem:[#allocation2 + $0x1f0] sm:$0xff]
    %v216 = vld [vmem:[#allocation2 + $0x1f8] sm:$0xff]
    %v217 = vld [vmem:[#allocation2 + $0x200] sm:$0xff]
    %v218 = vld [vmem:[#allocation2 + $0x208] sm:$0xff]
    %v219 = vld [vmem:[#allocation2 + $0x210] sm:$0xff]
    %v220 = vld [vmem:[#allocation2 + $0x218] sm:$0xff]
    %v221 = vld [vmem:[#allocation2 + $0x220] sm:$0xff]
    %v222 = vld [vmem:[#allocation2 + $0x228] sm:$0xff]
    %v223 = vld [vmem:[#allocation2 + $0x230] sm:$0xff]
    %v224 = vld [vmem:[#allocation2 + $0x238] sm:$0xff]
    %v225 = vld [vmem:[#allocation2 + $0x240] sm:$0xff]
    %v226 = vld [vmem:[#allocation2 + $0x248] sm:$0xff]
    %v227 = vld [vmem:[#allocation2 + $0x250] sm:$0xff]
    %v228 = vld [vmem:[#allocation2 + $0x258] sm:$0xff]
    %v229 = vld [vmem:[#allocation2 + $0x260] sm:$0xff]
    %v230 = vld [vmem:[#allocation2 + $0x268] sm:$0xff]
    %v231 = vld [vmem:[#allocation2 + $0x270] sm:$0xff]
    %v232 = vld [vmem:[#allocation2 + $0x278] sm:$0xff]
    %v233 = vld [vmem:[#allocation2 + $0x280] sm:$0xff]
    %v234 = vld [vmem:[#allocation2 + $0x288] sm:$0xff]
    %v235 = vld [vmem:[#allocation2 + $0x290] sm:$0xff]
    %v236 = vld [vmem:[#allocation2 + $0x298] sm:$0xff]
    %v237 = vld [vmem:[#allocation2 + $0x2a0] sm:$0xff]
    %v238 = vld [vmem:[#allocation2 + $0x2a8] sm:$0xff]
    %v239 = vld [vmem:[#allocation2 + $0x2b0] sm:$0xff]
    %v240 = vld [vmem:[#allocation2 + $0x2b8] sm:$0xff]
    %v241 = vld [vmem:[#allocation2 + $0x2c0] sm:$0xff]
    %v242 = vld [vmem:[#allocation2 + $0x2c8] sm:$0xff]
    %v243 = vld [vmem:[#allocation2 + $0x2d0] sm:$0xff]
    %v244 = vld [vmem:[#allocation2 + $0x2d8] sm:$0xff]
    %v245 = vld [vmem:[#allocation2 + $0x2e0] sm:$0xff]
    %v246 = vld [vmem:[#allocation2 + $0x2e8] sm:$0xff]
    %v247 = vld [vmem:[#allocation2 + $0x2f0] sm:$0xff]
    %v248 = vld [vmem:[#allocation2 + $0x2f8] sm:$0xff]
    %v249 = vld [vmem:[#allocation2 + $0x300] sm:$0xff]
    %v250 = vld [vmem:[#allocation2 + $0x308] sm:$0xff]
    %v251 = vld [vmem:[#allocation2 + $0x310] sm:$0xff]
    %v252 = vld [vmem:[#allocation2 + $0x318] sm:$0xff]
    %v253 = vld [vmem:[#allocation2 + $0x320] sm:$0xff]
    %v254 = vld [vmem:[#allocation2 + $0x328] sm:$0xff]
    %v255 = vld [vmem:[#allocation2 + $0x330] sm:$0xff]
    %v256 = vld [vmem:[#allocation2 + $0x338] sm:$0xff]
    %v257 = vld [vmem:[#allocation2 + $0x340] sm:$0xff]
    %v258 = vld [vmem:[#allocation2 + $0x348] sm:$0xff]
    %v259 = vld [vmem:[#allocation2 + $0x350] sm:$0xff]
    %v260 = vld [vmem:[#allocation2 + $0x358] sm:$0xff]
    %v261 = vld [vmem:[#allocation2 + $0x360] sm:$0xff]
    %v262 = vld [vmem:[#allocation2 + $0x368] sm:$0xff]
    %v263 = vld [vmem:[#allocation2 + $0x370] sm:$0xff]
    %v264 = vld [vmem:[#allocation2 + $0x378] sm:$0xff]
    %v265 = vld [vmem:[#allocation2 + $0x380] sm:$0xff]
    %v266 = vld [vmem:[#allocation2 + $0x388] sm:$0xff]
    %v267 = vld [vmem:[#allocation2 + $0x390] sm:$0xff]
    %v268 = vld [vmem:[#allocation2 + $0x398] sm:$0xff]
    %v269 = vld [vmem:[#allocation2 + $0x3a0] sm:$0xff]
    %v270 = vld [vmem:[#allocation2 + $0x3a8] sm:$0xff]
    %v271 = vld [vmem:[#allocation2 + $0x3b0] sm:$0xff]
    %v272 = vld [vmem:[#allocation2 + $0x3b8] sm:$0xff]
    %v273 = vld [vmem:[#allocation2 + $0x3c0] sm:$0xff]
    %v274 = vld [vmem:[#allocation2 + $0x3c8] sm:$0xff]
    %v275 = vld [vmem:[#allocation2 + $0x3d0] sm:$0xff]
    %v276 = vld [vmem:[#allocation2 + $0x3d8] sm:$0xff]
    %v277 = vld [vmem:[#allocation2 + $0x3e0] sm:$0xff]
    %v278 = vld [vmem:[#allocation2 + $0x3e8] sm:$0xff]
    %v279 = vld [vmem:[#allocation2 + $0x3f0] sm:$0xff]
    %v280 = vld [vmem:[#allocation2 + $0x3f8] sm:$0xff]
    %v281 = vld [vmem:[#allocation2 + $0x400] sm:$0xff]
    %v282 = vld [vmem:[#allocation2 + $0x408] sm:$0xff]
    %v283 = vld [vmem:[#allocation2 + $0x410] sm:$0xff]
    %v284 = vld [vmem:[#allocation2 + $0x418] sm:$0xff]
    %v285 = vld [vmem:[#allocation2 + $0x420] sm:$0xff]
    %v286 = vld [vmem:[#allocation2 + $0x428] sm:$0xff]
    %v287 = vld [vmem:[#allocation2 + $0x430] sm:$0xff]
    %v288 = vld [vmem:[#allocation2 + $0x438] sm:$0xff]
    %v289 = vld [vmem:[#allocation2 + $0x440] sm:$0xff]
    %v290 = vld [vmem:[#allocation2 + $0x448] sm:$0xff]
    %v291 = vld [vmem:[#allocation2 + $0x450] sm:$0xff]
    %v292 = vld [vmem:[#allocation2 + $0x458] sm:$0xff]
    %v293 = vld [vmem:[#allocation2 + $0x460] sm:$0xff]
    %v294 = vld [vmem:[#allocation2 + $0x468] sm:$0xff]
    %v295 = vld [vmem:[#allocation2 + $0x470] sm:$0xff]
    %v296 = vld [vmem:[#allocation2 + $0x478] sm:$0xff]
    %v297 = vld [vmem:[#allocation2 + $0x480] sm:$0xff]
    %v298 = vld [vmem:[#allocation2 + $0x488] sm:$0xff]
    %v299 = vld [vmem:[#allocation2 + $0x490] sm:$0xff]
    %v300 = vld [vmem:[#allocation2 + $0x498] sm:$0xff]
    %v301 = vld [vmem:[#allocation2 + $0x4a0] sm:$0xff]
    %v302 = vld [vmem:[#allocation2 + $0x4a8] sm:$0xff]
    %v303 = vld [vmem:[#allocation2 + $0x4b0] sm:$0xff]
    %v304 = vld [vmem:[#allocation2 + $0x4b8] sm:$0xff]
    %v305 = vld [vmem:[#allocation2 + $0x4c0] sm:$0xff]
    %v306 = vld [vmem:[#allocation2 + $0x4c8] sm:$0xff]
    %v307 = vld [vmem:[#allocation2 + $0x4d0] sm:$0xff]
    %v308 = vld [vmem:[#allocation2 + $0x4d8] sm:$0xff]
    %v309 = vld [vmem:[#allocation2 + $0x4e0] sm:$0xff]
    %v310 = vld [vmem:[#allocation2 + $0x4e8] sm:$0xff]
    %v311 = vld [vmem:[#allocation2 + $0x4f0] sm:$0xff]
    %v312 = vld [vmem:[#allocation2 + $0x4f8] sm:$0xff]
    %v313 = vld [vmem:[#allocation2 + $0x500] sm:$0xff]
    %v314 = vld [vmem:[#allocation2 + $0x508] sm:$0xff]
    %v315 = vld [vmem:[#allocation2 + $0x510] sm:$0xff]
    %v316 = vld [vmem:[#allocation2 + $0x518] sm:$0xff]
    %v317 = vld [vmem:[#allocation2 + $0x520] sm:$0xff]
    %v318 = vld [vmem:[#allocation2 + $0x528] sm:$0xff]
    %v319 = vld [vmem:[#allocation2 + $0x530] sm:$0xff]
    %v320 = vld [vmem:[#allocation2 + $0x538] sm:$0xff]
    %v321 = vld [vmem:[#allocation2 + $0x540] sm:$0xff]
    %v322 = vld [vmem:[#allocation2 + $0x548] sm:$0xff]
    %v323 = vld [vmem:[#allocation2 + $0x550] sm:$0xff]
    %v324 = vld [vmem:[#allocation2 + $0x558] sm:$0xff]
    %v325 = vld [vmem:[#allocation2 + $0x560] sm:$0xff]
    %v326 = vld [vmem:[#allocation2 + $0x568] sm:$0xff]
    %v327 = vld [vmem:[#allocation2 + $0x570] sm:$0xff]
    %v328 = vld [vmem:[#allocation2 + $0x578] sm:$0xff]
    %v329 = vld [vmem:[#allocation2 + $0x580] sm:$0xff]
    %v330 = vld [vmem:[#allocation2 + $0x588] sm:$0xff]
    %v331 = vld [vmem:[#allocation2 + $0x590] sm:$0xff]
    %v332 = vld [vmem:[#allocation2 + $0x598] sm:$0xff]
    %v333 = vld [vmem:[#allocation2 + $0x5a0] sm:$0xff]
    %v334 = vld [vmem:[#allocation2 + $0x5a8] sm:$0xff]
    %v335 = vld [vmem:[#allocation2 + $0x5b0] sm:$0xff]
    %v336 = vld [vmem:[#allocation2 + $0x5b8] sm:$0xff]
    %v337 = vld [vmem:[#allocation2 + $0x5c0] sm:$0xff]
    %v338 = vld [vmem:[#allocation2 + $0x5c8] sm:$0xff]
    %v339 = vld [vmem:[#allocation2 + $0x5d0] sm:$0xff]
    %v340 = vld [vmem:[#allocation2 + $0x5d8] sm:$0xff]
    %v341 = vld [vmem:[#allocation2 + $0x5e0] sm:$0xff]
    %v342 = vld [vmem:[#allocation2 + $0x5e8] sm:$0xff]
    %v343 = vld [vmem:[#allocation2 + $0x5f0] sm:$0xff]
    %v344 = vld [vmem:[#allocation2 + $0x5f8] sm:$0xff]
    %v345 = vld [vmem:[#allocation2 + $0x600] sm:$0xff]
    %v346 = vld [vmem:[#allocation2 + $0x608] sm:$0xff]
    %v347 = vld [vmem:[#allocation2 + $0x610] sm:$0xff]
    %v348 = vld [vmem:[#allocation2 + $0x618] sm:$0xff]
    %v349 = vld [vmem:[#allocation2 + $0x620] sm:$0xff]
    %v350 = vld [vmem:[#allocation2 + $0x628] sm:$0xff]
    %v351 = vld [vmem:[#allocation2 + $0x630] sm:$0xff]
    %v352 = vld [vmem:[#allocation2 + $0x638] sm:$0xff]
    %v353 = vld [vmem:[#allocation2 + $0x640] sm:$0xff]
    %v354 = vld [vmem:[#allocation2 + $0x648] sm:$0xff]
    %v355 = vld [vmem:[#allocation2 + $0x650] sm:$0xff]
    %v356 = vld [vmem:[#allocation2 + $0x658] sm:$0xff]
    %v357 = vld [vmem:[#allocation2 + $0x660] sm:$0xff]
    %v358 = vld [vmem:[#allocation2 + $0x668] sm:$0xff]
    %v359 = vld [vmem:[#allocation2 + $0x670] sm:$0xff]
    %v360 = vld [vmem:[#allocation2 + $0x678] sm:$0xff]
    %v361 = vld [vmem:[#allocation2 + $0x680] sm:$0xff]
    %v362 = vld [vmem:[#allocation2 + $0x688] sm:$0xff]
    %v363 = vld [vmem:[#allocation2 + $0x690] sm:$0xff]
    %v364 = vld [vmem:[#allocation2 + $0x698] sm:$0xff]
    %v365 = vld [vmem:[#allocation2 + $0x6a0] sm:$0xff]
    %v366 = vld [vmem:[#allocation2 + $0x6a8] sm:$0xff]
    %v367 = vld [vmem:[#allocation2 + $0x6b0] sm:$0xff]
    %v368 = vld [vmem:[#allocation2 + $0x6b8] sm:$0xff]
    %v369 = vld [vmem:[#allocation2 + $0x6c0] sm:$0xff]
    %v370 = vld [vmem:[#allocation2 + $0x6c8] sm:$0xff]
    %v371 = vld [vmem:[#allocation2 + $0x6d0] sm:$0xff]
    %v372 = vld [vmem:[#allocation2 + $0x6d8] sm:$0xff]
    %v373 = vld [vmem:[#allocation2 + $0x6e0] sm:$0xff]
    %v374 = vld [vmem:[#allocation2 + $0x6e8] sm:$0xff]
    %v375 = vld [vmem:[#allocation2 + $0x6f0] sm:$0xff]
    %v376 = vld [vmem:[#allocation2 + $0x6f8] sm:$0xff]
    %v377 = vld [vmem:[#allocation2 + $0x700] sm:$0xff]
    %v378 = vld [vmem:[#allocation2 + $0x708] sm:$0xff]
    %v379 = vld [vmem:[#allocation2 + $0x710] sm:$0xff]
    %v380 = vld [vmem:[#allocation2 + $0x718] sm:$0xff]
    %v381 = vld [vmem:[#allocation2 + $0x720] sm:$0xff]
    %v382 = vld [vmem:[#allocation2 + $0x728] sm:$0xff]
    %v383 = vld [vmem:[#allocation2 + $0x730] sm:$0xff]
    %v384 = vld [vmem:[#allocation2 + $0x738] sm:$0xff]
    %v385 = vld [vmem:[#allocation2 + $0x740] sm:$0xff]
    %v386 = vld [vmem:[#allocation2 + $0x748] sm:$0xff]
    %v387 = vld [vmem:[#allocation2 + $0x750] sm:$0xff]
    %v388 = vld [vmem:[#allocation2 + $0x758] sm:$0xff]
    %v389 = vld [vmem:[#allocation2 + $0x760] sm:$0xff]
    %v390 = vld [vmem:[#allocation2 + $0x768] sm:$0xff]
    %v391 = vld [vmem:[#allocation2 + $0x770] sm:$0xff]
    %v392 = vld [vmem:[#allocation2 + $0x778] sm:$0xff]
    %v393 = vld [vmem:[#allocation2 + $0x780] sm:$0xff]
    %v394 = vld [vmem:[#allocation2 + $0x788] sm:$0xff]
    %v395 = vld [vmem:[#allocation2 + $0x790] sm:$0xff]
    %v396 = vld [vmem:[#allocation2 + $0x798] sm:$0xff]
    %v397 = vld [vmem:[#allocation2 + $0x7a0] sm:$0xff]
    %v398 = vld [vmem:[#allocation2 + $0x7a8] sm:$0xff]
    %v399 = vld [vmem:[#allocation2 + $0x7b0] sm:$0xff]
    %v400 = vld [vmem:[#allocation2 + $0x7b8] sm:$0xff]
    %v401 = vld [vmem:[#allocation2 + $0x7c0] sm:$0xff]
    %v402 = vld [vmem:[#allocation2 + $0x7c8] sm:$0xff]
    %v403 = vld [vmem:[#allocation2 + $0x7d0] sm:$0xff]
    %v404 = vld [vmem:[#allocation2 + $0x7d8] sm:$0xff]
    %v405 = vld [vmem:[#allocation2 + $0x7e0] sm:$0xff]
    %v406 = vld [vmem:[#allocation2 + $0x7e8] sm:$0xff]
    %v407 = vld [vmem:[#allocation2 + $0x7f0] sm:$0xff]
    %v408 = vld [vmem:[#allocation2 + $0x7f8] sm:$0xff]
    %v409 = vld [vmem:[#allocation2 + $0x800] sm:$0xff]
    %v410 = vld [vmem:[#allocation2 + $0x808] sm:$0xff]
    %v411 = vld [vmem:[#allocation2 + $0x810] sm:$0xff]
    %v412 = vld [vmem:[#allocation2 + $0x818] sm:$0xff]
    %v413 = vld [vmem:[#allocation2 + $0x820] sm:$0xff]
    %v414 = vld [vmem:[#allocation2 + $0x828] sm:$0xff]
    %v415 = vld [vmem:[#allocation2 + $0x830] sm:$0xff]
    %v416 = vld [vmem:[#allocation2 + $0x838] sm:$0xff]
    %v417 = vld [vmem:[#allocation2 + $0x840] sm:$0xff]
    %v418 = vld [vmem:[#allocation2 + $0x848] sm:$0xff]
    %v419 = vld [vmem:[#allocation2 + $0x850] sm:$0xff]
    %v420 = vld [vmem:[#allocation2 + $0x858] sm:$0xff]
    %v421 = vld [vmem:[#allocation2 + $0x860] sm:$0xff]
    %v422 = vld [vmem:[#allocation2 + $0x868] sm:$0xff]
    %v423 = vld [vmem:[#allocation2 + $0x870] sm:$0xff]
    %v424 = vld [vmem:[#allocation2 + $0x878] sm:$0xff]
    %v425 = vld [vmem:[#allocation2 + $0x880] sm:$0xff]
    %v426 = vld [vmem:[#allocation2 + $0x888] sm:$0xff]
    %v427 = vld [vmem:[#allocation2 + $0x890] sm:$0xff]
    %v428 = vld [vmem:[#allocation2 + $0x898] sm:$0xff]
    %v429 = vld [vmem:[#allocation2 + $0x8a0] sm:$0xff]
    %v430 = vld [vmem:[#allocation2 + $0x8a8] sm:$0xff]
    %v431 = vld [vmem:[#allocation2 + $0x8b0] sm:$0xff]
    %v432 = vld [vmem:[#allocation2 + $0x8b8] sm:$0xff]
    %v433 = vld [vmem:[#allocation2 + $0x8c0] sm:$0xff]
    %v434 = vld [vmem:[#allocation2 + $0x8c8] sm:$0xff]
    %v435 = vld [vmem:[#allocation2 + $0x8d0] sm:$0xff]
    %v436 = vld [vmem:[#allocation2 + $0x8d8] sm:$0xff]
    %v437 = vld [vmem:[#allocation2 + $0x8e0] sm:$0xff]
    %v438 = vld [vmem:[#allocation2 + $0x8e8] sm:$0xff]
    %v439 = vld [vmem:[#allocation2 + $0x8f0] sm:$0xff]
    %v440 = vld [vmem:[#allocation2 + $0x8f8] sm:$0xff]
    %v441 = vld [vmem:[#allocation2 + $0x900] sm:$0xff]
    %v442 = vld [vmem:[#allocation2 + $0x908] sm:$0xff]
    %v443 = vld [vmem:[#allocation2 + $0x910] sm:$0xff]
    %v444 = vld [vmem:[#allocation2 + $0x918] sm:$0xff]
    %v445 = vld [vmem:[#allocation2 + $0x920] sm:$0xff]
    %v446 = vld [vmem:[#allocation2 + $0x928] sm:$0xff]
    %v447 = vld [vmem:[#allocation2 + $0x930] sm:$0xff]
    %v448 = vld [vmem:[#allocation2 + $0x938] sm:$0xff]
    %v449 = vld [vmem:[#allocation2 + $0x940] sm:$0xff]
    %v450 = vld [vmem:[#allocation2 + $0x948] sm:$0xff]
    %v451 = vld [vmem:[#allocation2 + $0x950] sm:$0xff]
    %v452 = vld [vmem:[#allocation2 + $0x958] sm:$0xff]
    %v453 = vld [vmem:[#allocation2 + $0x960] sm:$0xff]
    %v454 = vld [vmem:[#allocation2 + $0x968] sm:$0xff]
    %v455 = vld [vmem:[#allocation2 + $0x970] sm:$0xff]
    %v456 = vld [vmem:[#allocation2 + $0x978] sm:$0xff]
    %v457 = vld [vmem:[#allocation2 + $0x980] sm:$0xff]
    %v458 = vld [vmem:[#allocation2 + $0x988] sm:$0xff]
    %v459 = vld [vmem:[#allocation2 + $0x990] sm:$0xff]
    %v460 = vld [vmem:[#allocation2 + $0x998] sm:$0xff]
    %v461 = vld [vmem:[#allocation2 + $0x9a0] sm:$0xff]
    %v462 = vld [vmem:[#allocation2 + $0x9a8] sm:$0xff]
    %v463 = vld [vmem:[#allocation2 + $0x9b0] sm:$0xff]
    %v464 = vld [vmem:[#allocation2 + $0x9b8] sm:$0xff]
    %v465 = vld [vmem:[#allocation2 + $0x9c0] sm:$0xff]
    %v466 = vld [vmem:[#allocation2 + $0x9c8] sm:$0xff]
    %v467 = vld [vmem:[#allocation2 + $0x9d0] sm:$0xff]
    %v468 = vld [vmem:[#allocation2 + $0x9d8] sm:$0xff]
    %v469 = vld [vmem:[#allocation2 + $0x9e0] sm:$0xff]
    %v470 = vld [vmem:[#allocation2 + $0x9e8] sm:$0xff]
    %v471 = vld [vmem:[#allocation2 + $0x9f0] sm:$0xff]
    %v472 = vld [vmem:[#allocation2 + $0x9f8] sm:$0xff]
    %v473 = vld [vmem:[#allocation2 + $0xa00] sm:$0xff]
    %v474 = vld [vmem:[#allocation2 + $0xa08] sm:$0xff]
    %v475 = vld [vmem:[#allocation2 + $0xa10] sm:$0xff]
    %v476 = vld [vmem:[#allocation2 + $0xa18] sm:$0xff]
    %v477 = vld [vmem:[#allocation2 + $0xa20] sm:$0xff]
    %v478 = vld [vmem:[#allocation2 + $0xa28] sm:$0xff]
    %v479 = vld [vmem:[#allocation2 + $0xa30] sm:$0xff]
    %v480 = vld [vmem:[#allocation2 + $0xa38] sm:$0xff]
    %v481 = vld [vmem:[#allocation2 + $0xa40] sm:$0xff]
    %v482 = vld [vmem:[#allocation2 + $0xa48] sm:$0xff]
    %v483 = vld [vmem:[#allocation2 + $0xa50] sm:$0xff]
    %v484 = vld [vmem:[#allocation2 + $0xa58] sm:$0xff]
    %v485 = vld [vmem:[#allocation2 + $0xa60] sm:$0xff]
    %v486 = vld [vmem:[#allocation2 + $0xa68] sm:$0xff]
    %v487 = vld [vmem:[#allocation2 + $0xa70] sm:$0xff]
    %v488 = vld [vmem:[#allocation2 + $0xa78] sm:$0xff]
    %v489 = vld [vmem:[#allocation2 + $0xa80] sm:$0xff]
    %v490 = vld [vmem:[#allocation2 + $0xa88] sm:$0xff]
    %v491 = vld [vmem:[#allocation2 + $0xa90] sm:$0xff]
    %v492 = vld [vmem:[#allocation2 + $0xa98] sm:$0xff]
    %v493 = vld [vmem:[#allocation2 + $0xaa0] sm:$0xff]
    %v494 = vld [vmem:[#allocation2 + $0xaa8] sm:$0xff]
    %v495 = vld [vmem:[#allocation2 + $0xab0] sm:$0xff]
    %v496 = vld [vmem:[#allocation2 + $0xab8] sm:$0xff]
    %v497 = vld [vmem:[#allocation2 + $0xac0] sm:$0xff]
    %v498 = vld [vmem:[#allocation2 + $0xac8] sm:$0xff]
    %v499 = vld [vmem:[#allocation2 + $0xad0] sm:$0xff]
    %v500 = vld [vmem:[#allocation2 + $0xad8] sm:$0xff]
    %v501 = vld [vmem:[#allocation2 + $0xae0] sm:$0xff]
    %v502 = vld [vmem:[#allocation2 + $0xae8] sm:$0xff]
    %v503 = vld [vmem:[#allocation2 + $0xaf0] sm:$0xff]
    %v504 = vld [vmem:[#allocation2 + $0xaf8] sm:$0xff]
    %v505 = vld [vmem:[#allocation2 + $0xb00] sm:$0xff]
    %v506 = vld [vmem:[#allocation2 + $0xb08] sm:$0xff]
    %v507 = vld [vmem:[#allocation2 + $0xb10] sm:$0xff]
    %v508 = vld [vmem:[#allocation2 + $0xb18] sm:$0xff]
    %v509 = vld [vmem:[#allocation2 + $0xb20] sm:$0xff]
    %v510 = vld [vmem:[#allocation2 + $0xb28] sm:$0xff]
    %v511 = vld [vmem:[#allocation2 + $0xb30] sm:$0xff]
    %v512 = vld [vmem:[#allocation2 + $0xb38] sm:$0xff]
    %v513 = vld [vmem:[#allocation2 + $0xb40] sm:$0xff]
    %v514 = vld [vmem:[#allocation2 + $0xb48] sm:$0xff]
    %v515 = vld [vmem:[#allocation2 + $0xb50] sm:$0xff]
    %v516 = vld [vmem:[#allocation2 + $0xb58] sm:$0xff]
    %v517 = vld [vmem:[#allocation2 + $0xb60] sm:$0xff]
    %v518 = vld [vmem:[#allocation2 + $0xb68] sm:$0xff]
    %v519 = vld [vmem:[#allocation2 + $0xb70] sm:$0xff]
    %v520 = vld [vmem:[#allocation2 + $0xb78] sm:$0xff]
    %v521 = vld [vmem:[#allocation2 + $0xb80] sm:$0xff]
    %v522 = vld [vmem:[#allocation2 + $0xb88] sm:$0xff]
    %v523 = vld [vmem:[#allocation2 + $0xb90] sm:$0xff]
    %v524 = vld [vmem:[#allocation2 + $0xb98] sm:$0xff]
    %v525 = vld [vmem:[#allocation2 + $0xba0] sm:$0xff]
    %v526 = vld [vmem:[#allocation2 + $0xba8] sm:$0xff]
    %v527 = vld [vmem:[#allocation2 + $0xbb0] sm:$0xff]
    %v528 = vld [vmem:[#allocation2 + $0xbb8] sm:$0xff]
    %v529 = vld [vmem:[#allocation2 + $0xbc0] sm:$0xff]
    %v530 = vld [vmem:[#allocation2 + $0xbc8] sm:$0xff]
    %v531 = vld [vmem:[#allocation2 + $0xbd0] sm:$0xff]
    %v532 = vld [vmem:[#allocation2 + $0xbd8] sm:$0xff]
    %v533 = vld [vmem:[#allocation2 + $0xbe0] sm:$0xff]
    %v534 = vld [vmem:[#allocation2 + $0xbe8] sm:$0xff]
    %v535 = vld [vmem:[#allocation2 + $0xbf0] sm:$0xff]
    %v536 = vld [vmem:[#allocation2 + $0xbf8] sm:$0xff]
    %v537 = vld [vmem:[#allocation2 + $0xc00] sm:$0xff]
    %v538 = vld [vmem:[#allocation2 + $0xc08] sm:$0xff]
    %v539 = vld [vmem:[#allocation2 + $0xc10] sm:$0xff]
    %v540 = vld [vmem:[#allocation2 + $0xc18] sm:$0xff]
    %v541 = vld [vmem:[#allocation2 + $0xc20] sm:$0xff]
    %v542 = vld [vmem:[#allocation2 + $0xc28] sm:$0xff]
    %v543 = vld [vmem:[#allocation2 + $0xc30] sm:$0xff]
    %v544 = vld [vmem:[#allocation2 + $0xc38] sm:$0xff]
    %v545 = vld [vmem:[#allocation2 + $0xc40] sm:$0xff]
    %v546 = vld [vmem:[#allocation2 + $0xc48] sm:$0xff]
    %v547 = vld [vmem:[#allocation2 + $0xc50] sm:$0xff]
    %v548 = vld [vmem:[#allocation2 + $0xc58] sm:$0xff]
    %v549 = vld [vmem:[#allocation2 + $0xc60] sm:$0xff]
    %v550 = vld [vmem:[#allocation2 + $0xc68] sm:$0xff]
    %v551 = vld [vmem:[#allocation2 + $0xc70] sm:$0xff]
    %v552 = vld [vmem:[#allocation2 + $0xc78] sm:$0xff]
    %v553 = vld [vmem:[#allocation2 + $0xc80] sm:$0xff]
    %v554 = vld [vmem:[#allocation2 + $0xc88] sm:$0xff]
    %v555 = vld [vmem:[#allocation2 + $0xc90] sm:$0xff]
    %v556 = vld [vmem:[#allocation2 + $0xc98] sm:$0xff]
    %v557 = vld [vmem:[#allocation2 + $0xca0] sm:$0xff]
    %v558 = vld [vmem:[#allocation2 + $0xca8] sm:$0xff]
    %v559 = vld [vmem:[#allocation2 + $0xcb0] sm:$0xff]
    %v560 = vld [vmem:[#allocation2 + $0xcb8] sm:$0xff]
    %v561 = vld [vmem:[#allocation2 + $0xcc0] sm:$0xff]
    %v562 = vld [vmem:[#allocation2 + $0xcc8] sm:$0xff]
    %v563 = vld [vmem:[#allocation2 + $0xcd0] sm:$0xff]
    %v564 = vld [vmem:[#allocation2 + $0xcd8] sm:$0xff]
    %v565 = vld [vmem:[#allocation2 + $0xce0] sm:$0xff]
    %v566 = vld [vmem:[#allocation2 + $0xce8] sm:$0xff]
    %v567 = vld [vmem:[#allocation2 + $0xcf0] sm:$0xff]
    %v568 = vld [vmem:[#allocation2 + $0xcf8] sm:$0xff]
    %v569 = vld [vmem:[#allocation2 + $0xd00] sm:$0xff]
    %v570 = vld [vmem:[#allocation2 + $0xd08] sm:$0xff]
    %v571 = vld [vmem:[#allocation2 + $0xd10] sm:$0xff]
    %v572 = vld [vmem:[#allocation2 + $0xd18] sm:$0xff]
    %v573 = vld [vmem:[#allocation2 + $0xd20] sm:$0xff]
    %v574 = vld [vmem:[#allocation2 + $0xd28] sm:$0xff]
    %v575 = vld [vmem:[#allocation2 + $0xd30] sm:$0xff]
    %v576 = vld [vmem:[#allocation2 + $0xd38] sm:$0xff]
    %v577 = vld [vmem:[#allocation2 + $0xd40] sm:$0xff]
    %v578 = vld [vmem:[#allocation2 + $0xd48] sm:$0xff]
    %v579 = vld [vmem:[#allocation2 + $0xd50] sm:$0xff]
    %v580 = vld [vmem:[#allocation2 + $0xd58] sm:$0xff]
    %v581 = vld [vmem:[#allocation2 + $0xd60] sm:$0xff]
    %v582 = vld [vmem:[#allocation2 + $0xd68] sm:$0xff]
    %v583 = vld [vmem:[#allocation2 + $0xd70] sm:$0xff]
    %v584 = vld [vmem:[#allocation2 + $0xd78] sm:$0xff]
    %v585 = vld [vmem:[#allocation2 + $0xd80] sm:$0xff]
    %v586 = vld [vmem:[#allocation2 + $0xd88] sm:$0xff]
    %v587 = vld [vmem:[#allocation2 + $0xd90] sm:$0xff]
    %v588 = vld [vmem:[#allocation2 + $0xd98] sm:$0xff]
    %v589 = vld [vmem:[#allocation2 + $0xda0] sm:$0xff]
    %v590 = vld [vmem:[#allocation2 + $0xda8] sm:$0xff]
    %v591 = vld [vmem:[#allocation2 + $0xdb0] sm:$0xff]
    %v592 = vld [vmem:[#allocation2 + $0xdb8] sm:$0xff]
    %v593 = vld [vmem:[#allocation2 + $0xdc0] sm:$0xff]
    %v594 = vld [vmem:[#allocation2 + $0xdc8] sm:$0xff]
    %v595 = vld [vmem:[#allocation2 + $0xdd0] sm:$0xff]
    %v596 = vld [vmem:[#allocation2 + $0xdd8] sm:$0xff]
    %v597 = vld [vmem:[#allocation2 + $0xde0] sm:$0xff]
    %v598 = vld [vmem:[#allocation2 + $0xde8] sm:$0xff]
    %v599 = vld [vmem:[#allocation2 + $0xdf0] sm:$0xff]
    %v600 = vld [vmem:[#allocation2 + $0xdf8] sm:$0xff]
    %v601 = vld [vmem:[#allocation2 + $0xe00] sm:$0xff]
    %v602 = vld [vmem:[#allocation2 + $0xe08] sm:$0xff]
    %v603 = vld [vmem:[#allocation2 + $0xe10] sm:$0xff]
    %v604 = vld [vmem:[#allocation2 + $0xe18] sm:$0xff]
    %v605 = vld [vmem:[#allocation2 + $0xe20] sm:$0xff]
    %v606 = vld [vmem:[#allocation2 + $0xe28] sm:$0xff]
    %v607 = vld [vmem:[#allocation2 + $0xe30] sm:$0xff]
    %v608 = vld [vmem:[#allocation2 + $0xe38] sm:$0xff]
    %v609 = vld [vmem:[#allocation2 + $0xe40] sm:$0xff]
    %v610 = vld [vmem:[#allocation2 + $0xe48] sm:$0xff]
    %v611 = vld [vmem:[#allocation2 + $0xe50] sm:$0xff]
    %v612 = vld [vmem:[#allocation2 + $0xe58] sm:$0xff]
    %v613 = vld [vmem:[#allocation2 + $0xe60] sm:$0xff]
    %v614 = vld [vmem:[#allocation2 + $0xe68] sm:$0xff]
    %v615 = vld [vmem:[#allocation2 + $0xe70] sm:$0xff]
    %v616 = vld [vmem:[#allocation2 + $0xe78] sm:$0xff]
    %v617 = vld [vmem:[#allocation2 + $0xe80] sm:$0xff]
    %v618 = vld [vmem:[#allocation2 + $0xe88] sm:$0xff]
    %v619 = vld [vmem:[#allocation2 + $0xe90] sm:$0xff]
    %v620 = vld [vmem:[#allocation2 + $0xe98] sm:$0xff]
    %v621 = vld [vmem:[#allocation2 + $0xea0] sm:$0xff]
    %v622 = vld [vmem:[#allocation2 + $0xea8] sm:$0xff]
    %v623 = vld [vmem:[#allocation2 + $0xeb0] sm:$0xff]
    %v624 = vld [vmem:[#allocation2 + $0xeb8] sm:$0xff]
    %v625 = vld [vmem:[#allocation2 + $0xec0] sm:$0xff]
    %v626 = vld [vmem:[#allocation2 + $0xec8] sm:$0xff]
    %v627 = vld [vmem:[#allocation2 + $0xed0] sm:$0xff]
    %v628 = vld [vmem:[#allocation2 + $0xed8] sm:$0xff]
    %v629 = vld [vmem:[#allocation2 + $0xee0] sm:$0xff]
    %v630 = vld [vmem:[#allocation2 + $0xee8] sm:$0xff]
    %v631 = vld [vmem:[#allocation2 + $0xef0] sm:$0xff]
    %v632 = vld [vmem:[#allocation2 + $0xef8] sm:$0xff]
    %v633 = vld [vmem:[#allocation2 + $0xf00] sm:$0xff]
    %v634 = vld [vmem:[#allocation2 + $0xf08] sm:$0xff]
    %v635 = vld [vmem:[#allocation2 + $0xf10] sm:$0xff]
    %v636 = vld [vmem:[#allocation2 + $0xf18] sm:$0xff]
    %v637 = vld [vmem:[#allocation2 + $0xf20] sm:$0xff]
    %v638 = vld [vmem:[#allocation2 + $0xf28] sm:$0xff]
    %v639 = vld [vmem:[#allocation2 + $0xf30] sm:$0xff]
    %v640 = vld [vmem:[#allocation2 + $0xf38] sm:$0xff]
    %v641 = vld [vmem:[#allocation2 + $0xf40] sm:$0xff]
    %v642 = vld [vmem:[#allocation2 + $0xf48] sm:$0xff]
    %v643 = vld [vmem:[#allocation2 + $0xf50] sm:$0xff]
    %v644 = vld [vmem:[#allocation2 + $0xf58] sm:$0xff]
    %v645 = vld [vmem:[#allocation2 + $0xf60] sm:$0xff]
    %v646 = vld [vmem:[#allocation2 + $0xf68] sm:$0xff]
    %v647 = vld [vmem:[#allocation2 + $0xf70] sm:$0xff]
    %v648 = vld [vmem:[#allocation2 + $0xf78] sm:$0xff]
    %v649 = vld [vmem:[#allocation2 + $0xf80] sm:$0xff]
    %v650 = vld [vmem:[#allocation2 + $0xf88] sm:$0xff]
    %v651 = vld [vmem:[#allocation2 + $0xf90] sm:$0xff]
    %v652 = vld [vmem:[#allocation2 + $0xf98] sm:$0xff]
    %v653 = vld [vmem:[#allocation2 + $0xfa0] sm:$0xff]
    %v654 = vld [vmem:[#allocation2 + $0xfa8] sm:$0xff]
    %v655 = vld [vmem:[#allocation2 + $0xfb0] sm:$0xff]
    %v656 = vld [vmem:[#allocation2 + $0xfb8] sm:$0xff]
    %v657 = vld [vmem:[#allocation2 + $0xfc0] sm:$0xff]
    %v658 = vld [vmem:[#allocation2 + $0xfc8] sm:$0xff]
    %v659 = vld [vmem:[#allocation2 + $0xfd0] sm:$0xff]
    %v660 = vld [vmem:[#allocation2 + $0xfd8] sm:$0xff]
    %v661 = vld [vmem:[#allocation2 + $0xfe0] sm:$0xff]
    %v662 = vld [vmem:[#allocation2 + $0xfe8] sm:$0xff]
    %v663 = vld [vmem:[#allocation2 + $0xff0] sm:$0xff]
    %v664 = vld [vmem:[#allocation2 + $0xff8] sm:$0xff]
    %v665 = vld [vmem:[#allocation2 + $0x1000] sm:$0xff]
    %v666 = vld [vmem:[#allocation2 + $0x1008] sm:$0xff]
    %v667 = vld [vmem:[#allocation2 + $0x1010] sm:$0xff]
    %v668 = vld [vmem:[#allocation2 + $0x1018] sm:$0xff]
    %v669 = vld [vmem:[#allocation2 + $0x1020] sm:$0xff]
    %v670 = vld [vmem:[#allocation2 + $0x1028] sm:$0xff]
    %v671 = vld [vmem:[#allocation2 + $0x1030] sm:$0xff]
    %v672 = vld [vmem:[#allocation2 + $0x1038] sm:$0xff]
    %v673 = vld [vmem:[#allocation2 + $0x1040] sm:$0xff]
    %v674 = vld [vmem:[#allocation2 + $0x1048] sm:$0xff]
    %v675 = vld [vmem:[#allocation2 + $0x1050] sm:$0xff]
    %v676 = vld [vmem:[#allocation2 + $0x1058] sm:$0xff]
    %v677 = vld [vmem:[#allocation2 + $0x1060] sm:$0xff]
    %v678 = vld [vmem:[#allocation2 + $0x1068] sm:$0xff]
    %v679 = vld [vmem:[#allocation2 + $0x1070] sm:$0xff]
    %v680 = vld [vmem:[#allocation2 + $0x1078] sm:$0xff]
    %v681 = vld [vmem:[#allocation2 + $0x1080] sm:$0xff]
    %v682 = vld [vmem:[#allocation2 + $0x1088] sm:$0xff]
    %v683 = vld [vmem:[#allocation2 + $0x1090] sm:$0xff]
    %v684 = vld [vmem:[#allocation2 + $0x1098] sm:$0xff]
    %v685 = vld [vmem:[#allocation2 + $0x10a0] sm:$0xff]
    %v686 = vld [vmem:[#allocation2 + $0x10a8] sm:$0xff]
    %v687 = vld [vmem:[#allocation2 + $0x10b0] sm:$0xff]
    %v688 = vld [vmem:[#allocation2 + $0x10b8] sm:$0xff]
    %v689 = vld [vmem:[#allocation2 + $0x10c0] sm:$0xff]
    %v690 = vld [vmem:[#allocation2 + $0x10c8] sm:$0xff]
    %v691 = vld [vmem:[#allocation2 + $0x10d0] sm:$0xff]
    %v692 = vld [vmem:[#allocation2 + $0x10d8] sm:$0xff]
    %v693 = vld [vmem:[#allocation2 + $0x10e0] sm:$0xff]
    %v694 = vld [vmem:[#allocation2 + $0x10e8] sm:$0xff]
    %v695 = vld [vmem:[#allocation2 + $0x10f0] sm:$0xff]
    %v696 = vld [vmem:[#allocation2 + $0x10f8] sm:$0xff]
    %v697 = vld [vmem:[#allocation2 + $0x1100] sm:$0xff]
    %v698 = vld [vmem:[#allocation2 + $0x1108] sm:$0xff]
    %v699 = vld [vmem:[#allocation2 + $0x1110] sm:$0xff]
    %v700 = vld [vmem:[#allocation2 + $0x1118] sm:$0xff]
    %v701 = vld [vmem:[#allocation2 + $0x1120] sm:$0xff]
    %v702 = vld [vmem:[#allocation2 + $0x1128] sm:$0xff]
    %v703 = vld [vmem:[#allocation2 + $0x1130] sm:$0xff]
    %v704 = vld [vmem:[#allocation2 + $0x1138] sm:$0xff]
    %v705 = vld [vmem:[#allocation2 + $0x1140] sm:$0xff]
    %v706 = vld [vmem:[#allocation2 + $0x1148] sm:$0xff]
    %v707 = vld [vmem:[#allocation2 + $0x1150] sm:$0xff]
    %v708 = vld [vmem:[#allocation2 + $0x1158] sm:$0xff]
    %v709 = vld [vmem:[#allocation2 + $0x1160] sm:$0xff]
    %v710 = vld [vmem:[#allocation2 + $0x1168] sm:$0xff]
    %v711 = vld [vmem:[#allocation2 + $0x1170] sm:$0xff]
    %v712 = vld [vmem:[#allocation2 + $0x1178] sm:$0xff]
    %v713 = vld [vmem:[#allocation2 + $0x1180] sm:$0xff]
    %v714 = vld [vmem:[#allocation2 + $0x1188] sm:$0xff]
    %v715 = vld [vmem:[#allocation2 + $0x1190] sm:$0xff]
    %v716 = vld [vmem:[#allocation2 + $0x1198] sm:$0xff]
    %v717 = vld [vmem:[#allocation2 + $0x11a0] sm:$0xff]
    %v718 = vld [vmem:[#allocation2 + $0x11a8] sm:$0xff]
    %v719 = vld [vmem:[#allocation2 + $0x11b0] sm:$0xff]
    %v720 = vld [vmem:[#allocation2 + $0x11b8] sm:$0xff]
    %v721 = vld [vmem:[#allocation2 + $0x11c0] sm:$0xff]
    %v722 = vld [vmem:[#allocation2 + $0x11c8] sm:$0xff]
    %v723 = vld [vmem:[#allocation2 + $0x11d0] sm:$0xff]
    %v724 = vld [vmem:[#allocation2 + $0x11d8] sm:$0xff]
    %v725 = vld [vmem:[#allocation2 + $0x11e0] sm:$0xff]
    %v726 = vld [vmem:[#allocation2 + $0x11e8] sm:$0xff]
    %v727 = vld [vmem:[#allocation2 + $0x11f0] sm:$0xff]
    %v728 = vld [vmem:[#allocation2 + $0x11f8] sm:$0xff]
    %v729 = vld [vmem:[#allocation2 + $0x1200] sm:$0xff]
    %v730 = vld [vmem:[#allocation2 + $0x1208] sm:$0xff]
    %v731 = vld [vmem:[#allocation2 + $0x1210] sm:$0xff]
    %v732 = vld [vmem:[#allocation2 + $0x1218] sm:$0xff]
    %v733 = vld [vmem:[#allocation2 + $0x1220] sm:$0xff]
    %v734 = vld [vmem:[#allocation2 + $0x1228] sm:$0xff]
    %v735 = vld [vmem:[#allocation2 + $0x1230] sm:$0xff]
    %v736 = vld [vmem:[#allocation2 + $0x1238] sm:$0xff]
    %v737 = vld [vmem:[#allocation2 + $0x1240] sm:$0xff]
    %v738 = vld [vmem:[#allocation2 + $0x1248] sm:$0xff]
    %v739 = vld [vmem:[#allocation2 + $0x1250] sm:$0xff]
    %v740 = vld [vmem:[#allocation2 + $0x1258] sm:$0xff]
    %v741 = vld [vmem:[#allocation2 + $0x1260] sm:$0xff]
    %v742 = vld [vmem:[#allocation2 + $0x1268] sm:$0xff]
    %v743 = vld [vmem:[#allocation2 + $0x1270] sm:$0xff]
    %v744 = vld [vmem:[#allocation2 + $0x1278] sm:$0xff]
    %v745 = vld [vmem:[#allocation2 + $0x1280] sm:$0xff]
    %v746 = vld [vmem:[#allocation2 + $0x1288] sm:$0xff]
    %v747 = vld [vmem:[#allocation2 + $0x1290] sm:$0xff]
    %v748 = vld [vmem:[#allocation2 + $0x1298] sm:$0xff]
    %v749 = vld [vmem:[#allocation2 + $0x12a0] sm:$0xff]
    %v750 = vld [vmem:[#allocation2 + $0x12a8] sm:$0xff]
    %v751 = vld [vmem:[#allocation2 + $0x12b0] sm:$0xff]
    %v752 = vld [vmem:[#allocation2 + $0x12b8] sm:$0xff]
    %v753 = vld [vmem:[#allocation2 + $0x12c0] sm:$0xff]
    %v754 = vld [vmem:[#allocation2 + $0x12c8] sm:$0xff]
    %v755 = vld [vmem:[#allocation2 + $0x12d0] sm:$0xff]
    %v756 = vld [vmem:[#allocation2 + $0x12d8] sm:$0xff]
    %v757 = vld [vmem:[#allocation2 + $0x12e0] sm:$0xff]
    %v758 = vld [vmem:[#allocation2 + $0x12e8] sm:$0xff]
    %v759 = vld [vmem:[#allocation2 + $0x12f0] sm:$0xff]
    %v760 = vld [vmem:[#allocation2 + $0x12f8] sm:$0xff]
    %v761 = vld [vmem:[#allocation2 + $0x1300] sm:$0xff]
    %v762 = vld [vmem:[#allocation2 + $0x1308] sm:$0xff]
    %v763 = vld [vmem:[#allocation2 + $0x1310] sm:$0xff]
    %v764 = vld [vmem:[#allocation2 + $0x1318] sm:$0xff]
    %v765 = vld [vmem:[#allocation2 + $0x1320] sm:$0xff]
    %v766 = vld [vmem:[#allocation2 + $0x1328] sm:$0xff]
    %v767 = vld [vmem:[#allocation2 + $0x1330] sm:$0xff]
    %v768 = vld [vmem:[#allocation2 + $0x1338] sm:$0xff]
    %v769 = vld [vmem:[#allocation2 + $0x1340] sm:$0xff]
    %v770 = vld [vmem:[#allocation2 + $0x1348] sm:$0xff]
    %v771 = vld [vmem:[#allocation2 + $0x1350] sm:$0xff]
    %v772 = vld [vmem:[#allocation2 + $0x1358] sm:$0xff]
    %v773 = vld [vmem:[#allocation2 + $0x1360] sm:$0xff]
    %v774 = vld [vmem:[#allocation2 + $0x1368] sm:$0xff]
    %v775 = vld [vmem:[#allocation2 + $0x1370] sm:$0xff]
    %v776 = vld [vmem:[#allocation2 + $0x1378] sm:$0xff]
    %v777 = vld [vmem:[#allocation2 + $0x1380] sm:$0xff]
    %v778 = vld [vmem:[#allocation2 + $0x1388] sm:$0xff]
    %v779 = vld [vmem:[#allocation2 + $0x1390] sm:$0xff]
    %v780 = vld [vmem:[#allocation2 + $0x1398] sm:$0xff]
    %v781 = vld [vmem:[#allocation2 + $0x13a0] sm:$0xff]
    %v782 = vld [vmem:[#allocation2 + $0x13a8] sm:$0xff]
    %v783 = vld [vmem:[#allocation2 + $0x13b0] sm:$0xff]
    %v784 = vld [vmem:[#allocation2 + $0x13b8] sm:$0xff]
    %v785 = vld [vmem:[#allocation2 + $0x13c0] sm:$0xff]
    %v786 = vld [vmem:[#allocation2 + $0x13c8] sm:$0xff]
    %v787 = vld [vmem:[#allocation2 + $0x13d0] sm:$0xff]
    %v788 = vld [vmem:[#allocation2 + $0x13d8] sm:$0xff]
    %v789 = vld [vmem:[#allocation2 + $0x13e0] sm:$0xff]
    %v790 = vld [vmem:[#allocation2 + $0x13e8] sm:$0xff]
    %v791 = vld [vmem:[#allocation2 + $0x13f0] sm:$0xff]
    %v792 = vld [vmem:[#allocation2 + $0x13f8] sm:$0xff]
    %v793 = vld [vmem:[#allocation2 + $0x1400] sm:$0xff]
    %v794 = vld [vmem:[#allocation2 + $0x1408] sm:$0xff]
    %v795 = vld [vmem:[#allocation2 + $0x1410] sm:$0xff]
    %v796 = vld [vmem:[#allocation2 + $0x1418] sm:$0xff]
    %v797 = vld [vmem:[#allocation2 + $0x1420] sm:$0xff]
    %v798 = vld [vmem:[#allocation2 + $0x1428] sm:$0xff]
    %v799 = vld [vmem:[#allocation2 + $0x1430] sm:$0xff]
    %v800 = vld [vmem:[#allocation2 + $0x1438] sm:$0xff]
    %v801 = vld [vmem:[#allocation2 + $0x1440] sm:$0xff]
    %v802 = vld [vmem:[#allocation2 + $0x1448] sm:$0xff]
    %v803 = vld [vmem:[#allocation2 + $0x1450] sm:$0xff]
    %v804 = vld [vmem:[#allocation2 + $0x1458] sm:$0xff]
    %v805 = vld [vmem:[#allocation2 + $0x1460] sm:$0xff]
    %v806 = vld [vmem:[#allocation2 + $0x1468] sm:$0xff]
    %v807 = vld [vmem:[#allocation2 + $0x1470] sm:$0xff]
    %v808 = vld [vmem:[#allocation2 + $0x1478] sm:$0xff]
    %v809 = vld [vmem:[#allocation2 + $0x1480] sm:$0xff]
    %v810 = vld [vmem:[#allocation2 + $0x1488] sm:$0xff]
    %v811 = vld [vmem:[#allocation2 + $0x1490] sm:$0xff]
    %v812 = vld [vmem:[#allocation2 + $0x1498] sm:$0xff]
    %v813 = vld [vmem:[#allocation2 + $0x14a0] sm:$0xff]
    %v814 = vld [vmem:[#allocation2 + $0x14a8] sm:$0xff]
    %v815 = vld [vmem:[#allocation2 + $0x14b0] sm:$0xff]
    %v816 = vld [vmem:[#allocation2 + $0x14b8] sm:$0xff]
    %v817 = vld [vmem:[#allocation2 + $0x14c0] sm:$0xff]
    %v818 = vld [vmem:[#allocation2 + $0x14c8] sm:$0xff]
    %v819 = vld [vmem:[#allocation2 + $0x14d0] sm:$0xff]
    %v820 = vld [vmem:[#allocation2 + $0x14d8] sm:$0xff]
    %v821 = vld [vmem:[#allocation2 + $0x14e0] sm:$0xff]
    %v822 = vld [vmem:[#allocation2 + $0x14e8] sm:$0xff]
    %v823 = vld [vmem:[#allocation2 + $0x14f0] sm:$0xff]
    %v824 = vld [vmem:[#allocation2 + $0x14f8] sm:$0xff]
    %v825 = vld [vmem:[#allocation2 + $0x1500] sm:$0xff]
    %v826 = vld [vmem:[#allocation2 + $0x1508] sm:$0xff]
    %v827 = vld [vmem:[#allocation2 + $0x1510] sm:$0xff]
    %v828 = vld [vmem:[#allocation2 + $0x1518] sm:$0xff]
    %v829 = vld [vmem:[#allocation2 + $0x1520] sm:$0xff]
    %v830 = vld [vmem:[#allocation2 + $0x1528] sm:$0xff]
    %v831 = vld [vmem:[#allocation2 + $0x1530] sm:$0xff]
    %v832 = vld [vmem:[#allocation2 + $0x1538] sm:$0xff]
    %v833 = vld [vmem:[#allocation2 + $0x1540] sm:$0xff]
    %v834 = vld [vmem:[#allocation2 + $0x1548] sm:$0xff]
    %v835 = vld [vmem:[#allocation2 + $0x1550] sm:$0xff]
    %v836 = vld [vmem:[#allocation2 + $0x1558] sm:$0xff]
    %v837 = vld [vmem:[#allocation2 + $0x1560] sm:$0xff]
    %v838 = vld [vmem:[#allocation2 + $0x1568] sm:$0xff]
    %v839 = vld [vmem:[#allocation2 + $0x1570] sm:$0xff]
    %v840 = vld [vmem:[#allocation2 + $0x1578] sm:$0xff]
    %v841 = vld [vmem:[#allocation2 + $0x1580] sm:$0xff]
    %v842 = vld [vmem:[#allocation2 + $0x1588] sm:$0xff]
    %v843 = vld [vmem:[#allocation2 + $0x1590] sm:$0xff]
    %v844 = vld [vmem:[#allocation2 + $0x1598] sm:$0xff]
    %v845 = vld [vmem:[#allocation2 + $0x15a0] sm:$0xff]
    %v846 = vld [vmem:[#allocation2 + $0x15a8] sm:$0xff]
    %v847 = vld [vmem:[#allocation2 + $0x15b0] sm:$0xff]
    %v848 = vld [vmem:[#allocation2 + $0x15b8] sm:$0xff]
    %v849 = vld [vmem:[#allocation2 + $0x15c0] sm:$0xff]
    %v850 = vld [vmem:[#allocation2 + $0x15c8] sm:$0xff]
    %v851 = vld [vmem:[#allocation2 + $0x15d0] sm:$0xff]
    %v852 = vld [vmem:[#allocation2 + $0x15d8] sm:$0xff]
    %v853 = vld [vmem:[#allocation2 + $0x15e0] sm:$0xff]
    %v854 = vld [vmem:[#allocation2 + $0x15e8] sm:$0xff]
    %v855 = vld [vmem:[#allocation2 + $0x15f0] sm:$0xff]
    %v856 = vld [vmem:[#allocation2 + $0x15f8] sm:$0xff]
    %v857 = vld [vmem:[#allocation2 + $0x1600] sm:$0xff]
    %v858 = vld [vmem:[#allocation2 + $0x1608] sm:$0xff]
    %v859 = vld [vmem:[#allocation2 + $0x1610] sm:$0xff]
    %v860 = vld [vmem:[#allocation2 + $0x1618] sm:$0xff]
    %v861 = vld [vmem:[#allocation2 + $0x1620] sm:$0xff]
    %v862 = vld [vmem:[#allocation2 + $0x1628] sm:$0xff]
    %v863 = vld [vmem:[#allocation2 + $0x1630] sm:$0xff]
    %v864 = vld [vmem:[#allocation2 + $0x1638] sm:$0xff]
    %v865 = vld [vmem:[#allocation2 + $0x1640] sm:$0xff]
    %v866 = vld [vmem:[#allocation2 + $0x1648] sm:$0xff]
    %v867 = vld [vmem:[#allocation2 + $0x1650] sm:$0xff]
    %v868 = vld [vmem:[#allocation2 + $0x1658] sm:$0xff]
    %v869 = vld [vmem:[#allocation2 + $0x1660] sm:$0xff]
    %v870 = vld [vmem:[#allocation2 + $0x1668] sm:$0xff]
    %v871 = vld [vmem:[#allocation2 + $0x1670] sm:$0xff]
    %v872 = vld [vmem:[#allocation2 + $0x1678] sm:$0xff]
    %v873 = vld [vmem:[#allocation2 + $0x1680] sm:$0xff]
    %v874 = vld [vmem:[#allocation2 + $0x1688] sm:$0xff]
    %v875 = vld [vmem:[#allocation2 + $0x1690] sm:$0xff]
    %v876 = vld [vmem:[#allocation2 + $0x1698] sm:$0xff]
    %v877 = vld [vmem:[#allocation2 + $0x16a0] sm:$0xff]
    %v878 = vld [vmem:[#allocation2 + $0x16a8] sm:$0xff]
    %v879 = vld [vmem:[#allocation2 + $0x16b0] sm:$0xff]
    %v880 = vld [vmem:[#allocation2 + $0x16b8] sm:$0xff]
    %v881 = vld [vmem:[#allocation2 + $0x16c0] sm:$0xff]
    %v882 = vld [vmem:[#allocation2 + $0x16c8] sm:$0xff]
    %v883 = vld [vmem:[#allocation2 + $0x16d0] sm:$0xff]
    %v884 = vld [vmem:[#allocation2 + $0x16d8] sm:$0xff]
    %v885 = vld [vmem:[#allocation2 + $0x16e0] sm:$0xff]
    %v886 = vld [vmem:[#allocation2 + $0x16e8] sm:$0xff]
    %v887 = vld [vmem:[#allocation2 + $0x16f0] sm:$0xff]
    %v888 = vld [vmem:[#allocation2 + $0x16f8] sm:$0xff]
    %v889 = vld [vmem:[#allocation2 + $0x1700] sm:$0xff]
    %v890 = vld [vmem:[#allocation2 + $0x1708] sm:$0xff]
    %v891 = vld [vmem:[#allocation2 + $0x1710] sm:$0xff]
    %v892 = vld [vmem:[#allocation2 + $0x1718] sm:$0xff]
    %v893 = vld [vmem:[#allocation2 + $0x1720] sm:$0xff]
    %v894 = vld [vmem:[#allocation2 + $0x1728] sm:$0xff]
    %v895 = vld [vmem:[#allocation2 + $0x1730] sm:$0xff]
    %v896 = vld [vmem:[#allocation2 + $0x1738] sm:$0xff]
    %v897 = vld [vmem:[#allocation2 + $0x1740] sm:$0xff]
    %v898 = vld [vmem:[#allocation2 + $0x1748] sm:$0xff]
    %v899 = vld [vmem:[#allocation2 + $0x1750] sm:$0xff]
    %v900 = vld [vmem:[#allocation2 + $0x1758] sm:$0xff]
    %v901 = vld [vmem:[#allocation2 + $0x1760] sm:$0xff]
    %v902 = vld [vmem:[#allocation2 + $0x1768] sm:$0xff]
    %v903 = vld [vmem:[#allocation2 + $0x1770] sm:$0xff]
    %v904 = vld [vmem:[#allocation2 + $0x1778] sm:$0xff]
    %v905 = vld [vmem:[#allocation2 + $0x1780] sm:$0xff]
    %v906 = vld [vmem:[#allocation2 + $0x1788] sm:$0xff]
    %v907 = vld [vmem:[#allocation2 + $0x1790] sm:$0xff]
    %v908 = vld [vmem:[#allocation2 + $0x1798] sm:$0xff]
    %v909 = vld [vmem:[#allocation2 + $0x17a0] sm:$0xff]
    %v910 = vld [vmem:[#allocation2 + $0x17a8] sm:$0xff]
    %v911 = vld [vmem:[#allocation2 + $0x17b0] sm:$0xff]
    %v912 = vld [vmem:[#allocation2 + $0x17b8] sm:$0xff]
    %v913 = vld [vmem:[#allocation2 + $0x17c0] sm:$0xff]
    %v914 = vld [vmem:[#allocation2 + $0x17c8] sm:$0xff]
    %v915 = vld [vmem:[#allocation2 + $0x17d0] sm:$0xff]
    %v916 = vld [vmem:[#allocation2 + $0x17d8] sm:$0xff]
    %v917 = vld [vmem:[#allocation2 + $0x17e0] sm:$0xff]
    %v918 = vld [vmem:[#allocation2 + $0x17e8] sm:$0xff]
    %v919 = vld [vmem:[#allocation2 + $0x17f0] sm:$0xff]
    %v920 = vld [vmem:[#allocation2 + $0x17f8] sm:$0xff]
    %v921 = vld [vmem:[#allocation5] sm:$0xff]
    %v922 = vld [vmem:[#allocation5 + $0x8] sm:$0xff]
    %v925 = vlaneseq
    %v926 = vshrl.u32 %v925, 7
    %v927 = vsub.s32 0, %v926
    %v928 = vrot.slane %v921, %v927
    %v929 = vlaneseq
    %v930 = vshrl.u32 %v929, 7
    %v931 = vsub.s32 1, %v930
    %v932 = vrot.slane %v921, %v931
    %v933 = vlaneseq
    %v934 = vshrl.u32 %v933, 7
    %v935 = vsub.s32 2, %v934
    %v936 = vrot.slane %v921, %v935
    %v937 = vlaneseq
    %v938 = vshrl.u32 %v937, 7
    %v939 = vsub.s32 3, %v938
    %v940 = vrot.slane %v921, %v939
    %v941 = vlaneseq
    %v942 = vshrl.u32 %v941, 7
    %v943 = vsub.s32 4, %v942
    %v944 = vrot.slane %v921, %v943
    %v945 = vlaneseq
    %v946 = vshrl.u32 %v945, 7
    %v947 = vsub.s32 5, %v946
    %v948 = vrot.slane %v921, %v947
    %v949 = vlaneseq
    %v950 = vshrl.u32 %v949, 7
    %v951 = vsub.s32 6, %v950
    %v952 = vrot.slane %v921, %v951
    %v953 = vlaneseq
    %v954 = vshrl.u32 %v953, 7
    %v955 = vsub.s32 7, %v954
    %v956 = vrot.slane %v921, %v955
    %v957 = vlaneseq
    %v958 = vshrl.u32 %v957, 7
    %v959 = vsub.s32 0, %v958
    %v960 = vrot.slane %v922, %v959
    %v961 = vlaneseq
    %v962 = vshrl.u32 %v961, 7
    %v963 = vsub.s32 1, %v962
    %v964 = vrot.slane %v922, %v963
    %v965 = vlaneseq
    %v966 = vshrl.u32 %v965, 7
    %v967 = vsub.s32 2, %v966
    %v968 = vrot.slane %v922, %v967
    %v969 = vlaneseq
    %v970 = vshrl.u32 %v969, 7
    %v971 = vsub.s32 3, %v970
    %v972 = vrot.slane %v922, %v971
    %v973 = vlaneseq
    %v974 = vshrl.u32 %v973, 7
    %v975 = vsub.s32 4, %v974
    %v976 = vrot.slane %v922, %v975
    %v977 = vlaneseq
    %v978 = vshrl.u32 %v977, 7
    %v979 = vsub.s32 5, %v978
    %v980 = vrot.slane %v922, %v979
    %v981 = vlaneseq
    %v982 = vshrl.u32 %v981, 7
    %v983 = vsub.s32 6, %v982
    %v984 = vrot.slane %v922, %v983
    %v985 = vlaneseq
    %v986 = vshrl.u32 %v985, 7
    %v987 = vsub.s32 7, %v986
    %v988 = vrot.slane %v922, %v987
    %v1773 = vunpack.c.l.b16 %v153
    %v1774 = vunpack.c.h.b16 %v153
    %v1775 = vunpack.c.l.b16 %v154
    %v1776 = vunpack.c.h.b16 %v154
    %v1777 = vunpack.c.l.b16 %v155
    %v1778 = vunpack.c.h.b16 %v155
    %v1779 = vunpack.c.l.b16 %v156
    %v1780 = vunpack.c.h.b16 %v156
    %v1781 = vunpack.c.l.b16 %v157
    %v1782 = vunpack.c.h.b16 %v157
    %v1783 = vunpack.c.l.b16 %v158
    %v1784 = vunpack.c.h.b16 %v158
    %v1785 = vunpack.c.l.b16 %v159
    %v1786 = vunpack.c.h.b16 %v159
    %v1787 = vunpack.c.l.b16 %v160
    %v1788 = vunpack.c.h.b16 %v160
    %v1789 = vunpack.c.l.b16 %v161
    %v1790 = vunpack.c.h.b16 %v161
    %v1791 = vunpack.c.l.b16 %v162
    %v1792 = vunpack.c.h.b16 %v162
    %v1793 = vunpack.c.l.b16 %v163
    %v1794 = vunpack.c.h.b16 %v163
    %v1795 = vunpack.c.l.b16 %v164
    %v1796 = vunpack.c.h.b16 %v164
    %v1797 = vunpack.c.l.b16 %v165
    %v1798 = vunpack.c.h.b16 %v165
    %v1799 = vunpack.c.l.b16 %v166
    %v1800 = vunpack.c.h.b16 %v166
    %v1801 = vunpack.c.l.b16 %v167
    %v1802 = vunpack.c.h.b16 %v167
    %v1803 = vunpack.c.l.b16 %v168
    %v1804 = vunpack.c.h.b16 %v168
    %v1805 = vunpack.c.l.b16 %v169
    %v1806 = vunpack.c.h.b16 %v169
    %v1807 = vunpack.c.l.b16 %v170
    %v1808 = vunpack.c.h.b16 %v170
    %v1809 = vunpack.c.l.b16 %v171
    %v1810 = vunpack.c.h.b16 %v171
    %v1811 = vunpack.c.l.b16 %v172
    %v1812 = vunpack.c.h.b16 %v172
    %v1813 = vunpack.c.l.b16 %v173
    %v1814 = vunpack.c.h.b16 %v173
    %v1815 = vunpack.c.l.b16 %v174
    %v1816 = vunpack.c.h.b16 %v174
    %v1817 = vunpack.c.l.b16 %v175
    %v1818 = vunpack.c.h.b16 %v175
    %v1819 = vunpack.c.l.b16 %v176
    %v1820 = vunpack.c.h.b16 %v176
    %v1821 = vunpack.c.l.b16 %v177
    %v1822 = vunpack.c.h.b16 %v177
    %v1823 = vunpack.c.l.b16 %v178
    %v1824 = vunpack.c.h.b16 %v178
    %v1825 = vunpack.c.l.b16 %v179
    %v1826 = vunpack.c.h.b16 %v179
    %v1827 = vunpack.c.l.b16 %v180
    %v1828 = vunpack.c.h.b16 %v180
    %v1829 = vunpack.c.l.b16 %v181
    %v1830 = vunpack.c.h.b16 %v181
    %v1831 = vunpack.c.l.b16 %v182
    %v1832 = vunpack.c.h.b16 %v182
    %v1833 = vunpack.c.l.b16 %v183
    %v1834 = vunpack.c.h.b16 %v183
    %v1835 = vunpack.c.l.b16 %v184
    %v1836 = vunpack.c.h.b16 %v184
    %v1837 = vunpack.c.l.b16 %v185
    %v1838 = vunpack.c.h.b16 %v185
    %v1839 = vunpack.c.l.b16 %v186
    %v1840 = vunpack.c.h.b16 %v186
    %v1841 = vunpack.c.l.b16 %v187
    %v1842 = vunpack.c.h.b16 %v187
    %v1843 = vunpack.c.l.b16 %v188
    %v1844 = vunpack.c.h.b16 %v188
    %v1845 = vunpack.c.l.b16 %v189
    %v1846 = vunpack.c.h.b16 %v189
    %v1847 = vunpack.c.l.b16 %v190
    %v1848 = vunpack.c.h.b16 %v190
    %v1849 = vunpack.c.l.b16 %v191
    %v1850 = vunpack.c.h.b16 %v191
    %v1851 = vunpack.c.l.b16 %v192
    %v1852 = vunpack.c.h.b16 %v192
    %v1853 = vunpack.c.l.b16 %v193
    %v1854 = vunpack.c.h.b16 %v193
    %v1855 = vunpack.c.l.b16 %v194
    %v1856 = vunpack.c.h.b16 %v194
    %v1857 = vunpack.c.l.b16 %v195
    %v1858 = vunpack.c.h.b16 %v195
    %v1859 = vunpack.c.l.b16 %v196
    %v1860 = vunpack.c.h.b16 %v196
    %v1861 = vunpack.c.l.b16 %v197
    %v1862 = vunpack.c.h.b16 %v197
    %v1863 = vunpack.c.l.b16 %v198
    %v1864 = vunpack.c.h.b16 %v198
    %v1865 = vunpack.c.l.b16 %v199
    %v1866 = vunpack.c.h.b16 %v199
    %v1867 = vunpack.c.l.b16 %v200
    %v1868 = vunpack.c.h.b16 %v200
    %v1869 = vunpack.c.l.b16 %v201
    %v1870 = vunpack.c.h.b16 %v201
    %v1871 = vunpack.c.l.b16 %v202
    %v1872 = vunpack.c.h.b16 %v202
    %v1873 = vunpack.c.l.b16 %v203
    %v1874 = vunpack.c.h.b16 %v203
    %v1875 = vunpack.c.l.b16 %v204
    %v1876 = vunpack.c.h.b16 %v204
    %v1877 = vunpack.c.l.b16 %v205
    %v1878 = vunpack.c.h.b16 %v205
    %v1879 = vunpack.c.l.b16 %v206
    %v1880 = vunpack.c.h.b16 %v206
    %v1881 = vunpack.c.l.b16 %v207
    %v1882 = vunpack.c.h.b16 %v207
    %v1883 = vunpack.c.l.b16 %v208
    %v1884 = vunpack.c.h.b16 %v208
    %v1885 = vunpack.c.l.b16 %v209
    %v1886 = vunpack.c.h.b16 %v209
    %v1887 = vunpack.c.l.b16 %v210
    %v1888 = vunpack.c.h.b16 %v210
    %v1889 = vunpack.c.l.b16 %v211
    %v1890 = vunpack.c.h.b16 %v211
    %v1891 = vunpack.c.l.b16 %v212
    %v1892 = vunpack.c.h.b16 %v212
    %v1893 = vunpack.c.l.b16 %v213
    %v1894 = vunpack.c.h.b16 %v213
    %v1895 = vunpack.c.l.b16 %v214
    %v1896 = vunpack.c.h.b16 %v214
    %v1897 = vunpack.c.l.b16 %v215
    %v1898 = vunpack.c.h.b16 %v215
    %v1899 = vunpack.c.l.b16 %v216
    %v1900 = vunpack.c.h.b16 %v216
    %v1901 = vunpack.c.l.b16 %v217
    %v1902 = vunpack.c.h.b16 %v217
    %v1903 = vunpack.c.l.b16 %v218
    %v1904 = vunpack.c.h.b16 %v218
    %v1905 = vunpack.c.l.b16 %v219
    %v1906 = vunpack.c.h.b16 %v219
    %v1907 = vunpack.c.l.b16 %v220
    %v1908 = vunpack.c.h.b16 %v220
    %v1909 = vunpack.c.l.b16 %v221
    %v1910 = vunpack.c.h.b16 %v221
    %v1911 = vunpack.c.l.b16 %v222
    %v1912 = vunpack.c.h.b16 %v222
    %v1913 = vunpack.c.l.b16 %v223
    %v1914 = vunpack.c.h.b16 %v223
    %v1915 = vunpack.c.l.b16 %v224
    %v1916 = vunpack.c.h.b16 %v224
    %v1917 = vunpack.c.l.b16 %v225
    %v1918 = vunpack.c.h.b16 %v225
    %v1919 = vunpack.c.l.b16 %v226
    %v1920 = vunpack.c.h.b16 %v226
    %v1921 = vunpack.c.l.b16 %v227
    %v1922 = vunpack.c.h.b16 %v227
    %v1923 = vunpack.c.l.b16 %v228
    %v1924 = vunpack.c.h.b16 %v228
    %v1925 = vunpack.c.l.b16 %v229
    %v1926 = vunpack.c.h.b16 %v229
    %v1927 = vunpack.c.l.b16 %v230
    %v1928 = vunpack.c.h.b16 %v230
    %v1929 = vunpack.c.l.b16 %v231
    %v1930 = vunpack.c.h.b16 %v231
    %v1931 = vunpack.c.l.b16 %v232
    %v1932 = vunpack.c.h.b16 %v232
    %v1933 = vunpack.c.l.b16 %v233
    %v1934 = vunpack.c.h.b16 %v233
    %v1935 = vunpack.c.l.b16 %v234
    %v1936 = vunpack.c.h.b16 %v234
    %v1937 = vunpack.c.l.b16 %v235
    %v1938 = vunpack.c.h.b16 %v235
    %v1939 = vunpack.c.l.b16 %v236
    %v1940 = vunpack.c.h.b16 %v236
    %v1941 = vunpack.c.l.b16 %v237
    %v1942 = vunpack.c.h.b16 %v237
    %v1943 = vunpack.c.l.b16 %v238
    %v1944 = vunpack.c.h.b16 %v238
    %v1945 = vunpack.c.l.b16 %v239
    %v1946 = vunpack.c.h.b16 %v239
    %v1947 = vunpack.c.l.b16 %v240
    %v1948 = vunpack.c.h.b16 %v240
    %v1949 = vunpack.c.l.b16 %v241
    %v1950 = vunpack.c.h.b16 %v241
    %v1951 = vunpack.c.l.b16 %v242
    %v1952 = vunpack.c.h.b16 %v242
    %v1953 = vunpack.c.l.b16 %v243
    %v1954 = vunpack.c.h.b16 %v243
    %v1955 = vunpack.c.l.b16 %v244
    %v1956 = vunpack.c.h.b16 %v244
    %v1957 = vunpack.c.l.b16 %v245
    %v1958 = vunpack.c.h.b16 %v245
    %v1959 = vunpack.c.l.b16 %v246
    %v1960 = vunpack.c.h.b16 %v246
    %v1961 = vunpack.c.l.b16 %v247
    %v1962 = vunpack.c.h.b16 %v247
    %v1963 = vunpack.c.l.b16 %v248
    %v1964 = vunpack.c.h.b16 %v248
    %v1965 = vunpack.c.l.b16 %v249
    %v1966 = vunpack.c.h.b16 %v249
    %v1967 = vunpack.c.l.b16 %v250
    %v1968 = vunpack.c.h.b16 %v250
    %v1969 = vunpack.c.l.b16 %v251
    %v1970 = vunpack.c.h.b16 %v251
    %v1971 = vunpack.c.l.b16 %v252
    %v1972 = vunpack.c.h.b16 %v252
    %v1973 = vunpack.c.l.b16 %v253
    %v1974 = vunpack.c.h.b16 %v253
    %v1975 = vunpack.c.l.b16 %v254
    %v1976 = vunpack.c.h.b16 %v254
    %v1977 = vunpack.c.l.b16 %v255
    %v1978 = vunpack.c.h.b16 %v255
    %v1979 = vunpack.c.l.b16 %v256
    %v1980 = vunpack.c.h.b16 %v256
    %v1981 = vunpack.c.l.b16 %v257
    %v1982 = vunpack.c.h.b16 %v257
    %v1983 = vunpack.c.l.b16 %v258
    %v1984 = vunpack.c.h.b16 %v258
    %v1985 = vunpack.c.l.b16 %v259
    %v1986 = vunpack.c.h.b16 %v259
    %v1987 = vunpack.c.l.b16 %v260
    %v1988 = vunpack.c.h.b16 %v260
    %v1989 = vunpack.c.l.b16 %v261
    %v1990 = vunpack.c.h.b16 %v261
    %v1991 = vunpack.c.l.b16 %v262
    %v1992 = vunpack.c.h.b16 %v262
    %v1993 = vunpack.c.l.b16 %v263
    %v1994 = vunpack.c.h.b16 %v263
    %v1995 = vunpack.c.l.b16 %v264
    %v1996 = vunpack.c.h.b16 %v264
    %v1997 = vunpack.c.l.b16 %v265
    %v1998 = vunpack.c.h.b16 %v265
    %v1999 = vunpack.c.l.b16 %v266
    %v2000 = vunpack.c.h.b16 %v266
    %v2001 = vunpack.c.l.b16 %v267
    %v2002 = vunpack.c.h.b16 %v267
    %v2003 = vunpack.c.l.b16 %v268
    %v2004 = vunpack.c.h.b16 %v268
    %v2005 = vunpack.c.l.b16 %v269
    %v2006 = vunpack.c.h.b16 %v269
    %v2007 = vunpack.c.l.b16 %v270
    %v2008 = vunpack.c.h.b16 %v270
    %v2009 = vunpack.c.l.b16 %v271
    %v2010 = vunpack.c.h.b16 %v271
    %v2011 = vunpack.c.l.b16 %v272
    %v2012 = vunpack.c.h.b16 %v272
    %v2013 = vunpack.c.l.b16 %v273
    %v2014 = vunpack.c.h.b16 %v273
    %v2015 = vunpack.c.l.b16 %v274
    %v2016 = vunpack.c.h.b16 %v274
    %v2017 = vunpack.c.l.b16 %v275
    %v2018 = vunpack.c.h.b16 %v275
    %v2019 = vunpack.c.l.b16 %v276
    %v2020 = vunpack.c.h.b16 %v276
    %v2021 = vunpack.c.l.b16 %v277
    %v2022 = vunpack.c.h.b16 %v277
    %v2023 = vunpack.c.l.b16 %v278
    %v2024 = vunpack.c.h.b16 %v278
    %v2025 = vunpack.c.l.b16 %v279
    %v2026 = vunpack.c.h.b16 %v279
    %v2027 = vunpack.c.l.b16 %v280
    %v2028 = vunpack.c.h.b16 %v280
    %v2029 = vunpack.c.l.b16 %v281
    %v2030 = vunpack.c.h.b16 %v281
    %v2031 = vunpack.c.l.b16 %v282
    %v2032 = vunpack.c.h.b16 %v282
    %v2033 = vunpack.c.l.b16 %v283
    %v2034 = vunpack.c.h.b16 %v283
    %v2035 = vunpack.c.l.b16 %v284
    %v2036 = vunpack.c.h.b16 %v284
    %v2037 = vunpack.c.l.b16 %v285
    %v2038 = vunpack.c.h.b16 %v285
    %v2039 = vunpack.c.l.b16 %v286
    %v2040 = vunpack.c.h.b16 %v286
    %v2041 = vunpack.c.l.b16 %v287
    %v2042 = vunpack.c.h.b16 %v287
    %v2043 = vunpack.c.l.b16 %v288
    %v2044 = vunpack.c.h.b16 %v288
    %v2045 = vunpack.c.l.b16 %v289
    %v2046 = vunpack.c.h.b16 %v289
    %v2047 = vunpack.c.l.b16 %v290
    %v2048 = vunpack.c.h.b16 %v290
    %v2049 = vunpack.c.l.b16 %v291
    %v2050 = vunpack.c.h.b16 %v291
    %v2051 = vunpack.c.l.b16 %v292
    %v2052 = vunpack.c.h.b16 %v292
    %v2053 = vunpack.c.l.b16 %v293
    %v2054 = vunpack.c.h.b16 %v293
    %v2055 = vunpack.c.l.b16 %v294
    %v2056 = vunpack.c.h.b16 %v294
    %v2057 = vunpack.c.l.b16 %v295
    %v2058 = vunpack.c.h.b16 %v295
    %v2059 = vunpack.c.l.b16 %v296
    %v2060 = vunpack.c.h.b16 %v296
    %v2061 = vunpack.c.l.b16 %v297
    %v2062 = vunpack.c.h.b16 %v297
    %v2063 = vunpack.c.l.b16 %v298
    %v2064 = vunpack.c.h.b16 %v298
    %v2065 = vunpack.c.l.b16 %v299
    %v2066 = vunpack.c.h.b16 %v299
    %v2067 = vunpack.c.l.b16 %v300
    %v2068 = vunpack.c.h.b16 %v300
    %v2069 = vunpack.c.l.b16 %v301
    %v2070 = vunpack.c.h.b16 %v301
    %v2071 = vunpack.c.l.b16 %v302
    %v2072 = vunpack.c.h.b16 %v302
    %v2073 = vunpack.c.l.b16 %v303
    %v2074 = vunpack.c.h.b16 %v303
    %v2075 = vunpack.c.l.b16 %v304
    %v2076 = vunpack.c.h.b16 %v304
    %v2077 = vunpack.c.l.b16 %v305
    %v2078 = vunpack.c.h.b16 %v305
    %v2079 = vunpack.c.l.b16 %v306
    %v2080 = vunpack.c.h.b16 %v306
    %v2081 = vunpack.c.l.b16 %v307
    %v2082 = vunpack.c.h.b16 %v307
    %v2083 = vunpack.c.l.b16 %v308
    %v2084 = vunpack.c.h.b16 %v308
    %v2085 = vunpack.c.l.b16 %v309
    %v2086 = vunpack.c.h.b16 %v309
    %v2087 = vunpack.c.l.b16 %v310
    %v2088 = vunpack.c.h.b16 %v310
    %v2089 = vunpack.c.l.b16 %v311
    %v2090 = vunpack.c.h.b16 %v311
    %v2091 = vunpack.c.l.b16 %v312
    %v2092 = vunpack.c.h.b16 %v312
    %v2093 = vunpack.c.l.b16 %v313
    %v2094 = vunpack.c.h.b16 %v313
    %v2095 = vunpack.c.l.b16 %v314
    %v2096 = vunpack.c.h.b16 %v314
    %v2097 = vunpack.c.l.b16 %v315
    %v2098 = vunpack.c.h.b16 %v315
    %v2099 = vunpack.c.l.b16 %v316
    %v2100 = vunpack.c.h.b16 %v316
    %v2101 = vunpack.c.l.b16 %v317
    %v2102 = vunpack.c.h.b16 %v317
    %v2103 = vunpack.c.l.b16 %v318
    %v2104 = vunpack.c.h.b16 %v318
    %v2105 = vunpack.c.l.b16 %v319
    %v2106 = vunpack.c.h.b16 %v319
    %v2107 = vunpack.c.l.b16 %v320
    %v2108 = vunpack.c.h.b16 %v320
    %v2109 = vunpack.c.l.b16 %v321
    %v2110 = vunpack.c.h.b16 %v321
    %v2111 = vunpack.c.l.b16 %v322
    %v2112 = vunpack.c.h.b16 %v322
    %v2113 = vunpack.c.l.b16 %v323
    %v2114 = vunpack.c.h.b16 %v323
    %v2115 = vunpack.c.l.b16 %v324
    %v2116 = vunpack.c.h.b16 %v324
    %v2117 = vunpack.c.l.b16 %v325
    %v2118 = vunpack.c.h.b16 %v325
    %v2119 = vunpack.c.l.b16 %v326
    %v2120 = vunpack.c.h.b16 %v326
    %v2121 = vunpack.c.l.b16 %v327
    %v2122 = vunpack.c.h.b16 %v327
    %v2123 = vunpack.c.l.b16 %v328
    %v2124 = vunpack.c.h.b16 %v328
    %v2125 = vunpack.c.l.b16 %v329
    %v2126 = vunpack.c.h.b16 %v329
    %v2127 = vunpack.c.l.b16 %v330
    %v2128 = vunpack.c.h.b16 %v330
    %v2129 = vunpack.c.l.b16 %v331
    %v2130 = vunpack.c.h.b16 %v331
    %v2131 = vunpack.c.l.b16 %v332
    %v2132 = vunpack.c.h.b16 %v332
    %v2133 = vunpack.c.l.b16 %v333
    %v2134 = vunpack.c.h.b16 %v333
    %v2135 = vunpack.c.l.b16 %v334
    %v2136 = vunpack.c.h.b16 %v334
    %v2137 = vunpack.c.l.b16 %v335
    %v2138 = vunpack.c.h.b16 %v335
    %v2139 = vunpack.c.l.b16 %v336
    %v2140 = vunpack.c.h.b16 %v336
    %v2141 = vunpack.c.l.b16 %v337
    %v2142 = vunpack.c.h.b16 %v337
    %v2143 = vunpack.c.l.b16 %v338
    %v2144 = vunpack.c.h.b16 %v338
    %v2145 = vunpack.c.l.b16 %v339
    %v2146 = vunpack.c.h.b16 %v339
    %v2147 = vunpack.c.l.b16 %v340
    %v2148 = vunpack.c.h.b16 %v340
    %v2149 = vunpack.c.l.b16 %v341
    %v2150 = vunpack.c.h.b16 %v341
    %v2151 = vunpack.c.l.b16 %v342
    %v2152 = vunpack.c.h.b16 %v342
    %v2153 = vunpack.c.l.b16 %v343
    %v2154 = vunpack.c.h.b16 %v343
    %v2155 = vunpack.c.l.b16 %v344
    %v2156 = vunpack.c.h.b16 %v344
    %v2157 = vunpack.c.l.b16 %v345
    %v2158 = vunpack.c.h.b16 %v345
    %v2159 = vunpack.c.l.b16 %v346
    %v2160 = vunpack.c.h.b16 %v346
    %v2161 = vunpack.c.l.b16 %v347
    %v2162 = vunpack.c.h.b16 %v347
    %v2163 = vunpack.c.l.b16 %v348
    %v2164 = vunpack.c.h.b16 %v348
    %v2165 = vunpack.c.l.b16 %v349
    %v2166 = vunpack.c.h.b16 %v349
    %v2167 = vunpack.c.l.b16 %v350
    %v2168 = vunpack.c.h.b16 %v350
    %v2169 = vunpack.c.l.b16 %v351
    %v2170 = vunpack.c.h.b16 %v351
    %v2171 = vunpack.c.l.b16 %v352
    %v2172 = vunpack.c.h.b16 %v352
    %v2173 = vunpack.c.l.b16 %v353
    %v2174 = vunpack.c.h.b16 %v353
    %v2175 = vunpack.c.l.b16 %v354
    %v2176 = vunpack.c.h.b16 %v354
    %v2177 = vunpack.c.l.b16 %v355
    %v2178 = vunpack.c.h.b16 %v355
    %v2179 = vunpack.c.l.b16 %v356
    %v2180 = vunpack.c.h.b16 %v356
    %v2181 = vunpack.c.l.b16 %v357
    %v2182 = vunpack.c.h.b16 %v357
    %v2183 = vunpack.c.l.b16 %v358
    %v2184 = vunpack.c.h.b16 %v358
    %v2185 = vunpack.c.l.b16 %v359
    %v2186 = vunpack.c.h.b16 %v359
    %v2187 = vunpack.c.l.b16 %v360
    %v2188 = vunpack.c.h.b16 %v360
    %v2189 = vunpack.c.l.b16 %v361
    %v2190 = vunpack.c.h.b16 %v361
    %v2191 = vunpack.c.l.b16 %v362
    %v2192 = vunpack.c.h.b16 %v362
    %v2193 = vunpack.c.l.b16 %v363
    %v2194 = vunpack.c.h.b16 %v363
    %v2195 = vunpack.c.l.b16 %v364
    %v2196 = vunpack.c.h.b16 %v364
    %v2197 = vunpack.c.l.b16 %v365
    %v2198 = vunpack.c.h.b16 %v365
    %v2199 = vunpack.c.l.b16 %v366
    %v2200 = vunpack.c.h.b16 %v366
    %v2201 = vunpack.c.l.b16 %v367
    %v2202 = vunpack.c.h.b16 %v367
    %v2203 = vunpack.c.l.b16 %v368
    %v2204 = vunpack.c.h.b16 %v368
    %v2205 = vunpack.c.l.b16 %v369
    %v2206 = vunpack.c.h.b16 %v369
    %v2207 = vunpack.c.l.b16 %v370
    %v2208 = vunpack.c.h.b16 %v370
    %v2209 = vunpack.c.l.b16 %v371
    %v2210 = vunpack.c.h.b16 %v371
    %v2211 = vunpack.c.l.b16 %v372
    %v2212 = vunpack.c.h.b16 %v372
    %v2213 = vunpack.c.l.b16 %v373
    %v2214 = vunpack.c.h.b16 %v373
    %v2215 = vunpack.c.l.b16 %v374
    %v2216 = vunpack.c.h.b16 %v374
    %v2217 = vunpack.c.l.b16 %v375
    %v2218 = vunpack.c.h.b16 %v375
    %v2219 = vunpack.c.l.b16 %v376
    %v2220 = vunpack.c.h.b16 %v376
    %v2221 = vunpack.c.l.b16 %v377
    %v2222 = vunpack.c.h.b16 %v377
    %v2223 = vunpack.c.l.b16 %v378
    %v2224 = vunpack.c.h.b16 %v378
    %v2225 = vunpack.c.l.b16 %v379
    %v2226 = vunpack.c.h.b16 %v379
    %v2227 = vunpack.c.l.b16 %v380
    %v2228 = vunpack.c.h.b16 %v380
    %v2229 = vunpack.c.l.b16 %v381
    %v2230 = vunpack.c.h.b16 %v381
    %v2231 = vunpack.c.l.b16 %v382
    %v2232 = vunpack.c.h.b16 %v382
    %v2233 = vunpack.c.l.b16 %v383
    %v2234 = vunpack.c.h.b16 %v383
    %v2235 = vunpack.c.l.b16 %v384
    %v2236 = vunpack.c.h.b16 %v384
    %v2237 = vunpack.c.l.b16 %v385
    %v2238 = vunpack.c.h.b16 %v385
    %v2239 = vunpack.c.l.b16 %v386
    %v2240 = vunpack.c.h.b16 %v386
    %v2241 = vunpack.c.l.b16 %v387
    %v2242 = vunpack.c.h.b16 %v387
    %v2243 = vunpack.c.l.b16 %v388
    %v2244 = vunpack.c.h.b16 %v388
    %v2245 = vunpack.c.l.b16 %v389
    %v2246 = vunpack.c.h.b16 %v389
    %v2247 = vunpack.c.l.b16 %v390
    %v2248 = vunpack.c.h.b16 %v390
    %v2249 = vunpack.c.l.b16 %v391
    %v2250 = vunpack.c.h.b16 %v391
    %v2251 = vunpack.c.l.b16 %v392
    %v2252 = vunpack.c.h.b16 %v392
    %v2253 = vunpack.c.l.b16 %v393
    %v2254 = vunpack.c.h.b16 %v393
    %v2255 = vunpack.c.l.b16 %v394
    %v2256 = vunpack.c.h.b16 %v394
    %v2257 = vunpack.c.l.b16 %v395
    %v2258 = vunpack.c.h.b16 %v395
    %v2259 = vunpack.c.l.b16 %v396
    %v2260 = vunpack.c.h.b16 %v396
    %v2261 = vunpack.c.l.b16 %v397
    %v2262 = vunpack.c.h.b16 %v397
    %v2263 = vunpack.c.l.b16 %v398
    %v2264 = vunpack.c.h.b16 %v398
    %v2265 = vunpack.c.l.b16 %v399
    %v2266 = vunpack.c.h.b16 %v399
    %v2267 = vunpack.c.l.b16 %v400
    %v2268 = vunpack.c.h.b16 %v400
    %v2269 = vunpack.c.l.b16 %v401
    %v2270 = vunpack.c.h.b16 %v401
    %v2271 = vunpack.c.l.b16 %v402
    %v2272 = vunpack.c.h.b16 %v402
    %v2273 = vunpack.c.l.b16 %v403
    %v2274 = vunpack.c.h.b16 %v403
    %v2275 = vunpack.c.l.b16 %v404
    %v2276 = vunpack.c.h.b16 %v404
    %v2277 = vunpack.c.l.b16 %v405
    %v2278 = vunpack.c.h.b16 %v405
    %v2279 = vunpack.c.l.b16 %v406
    %v2280 = vunpack.c.h.b16 %v406
    %v2281 = vunpack.c.l.b16 %v407
    %v2282 = vunpack.c.h.b16 %v407
    %v2283 = vunpack.c.l.b16 %v408
    %v2284 = vunpack.c.h.b16 %v408
    %v2285 = vunpack.c.l.b16 %v409
    %v2286 = vunpack.c.h.b16 %v409
    %v2287 = vunpack.c.l.b16 %v410
    %v2288 = vunpack.c.h.b16 %v410
    %v2289 = vunpack.c.l.b16 %v411
    %v2290 = vunpack.c.h.b16 %v411
    %v2291 = vunpack.c.l.b16 %v412
    %v2292 = vunpack.c.h.b16 %v412
    %v2293 = vunpack.c.l.b16 %v413
    %v2294 = vunpack.c.h.b16 %v413
    %v2295 = vunpack.c.l.b16 %v414
    %v2296 = vunpack.c.h.b16 %v414
    %v2297 = vunpack.c.l.b16 %v415
    %v2298 = vunpack.c.h.b16 %v415
    %v2299 = vunpack.c.l.b16 %v416
    %v2300 = vunpack.c.h.b16 %v416
    %v2301 = vunpack.c.l.b16 %v417
    %v2302 = vunpack.c.h.b16 %v417
    %v2303 = vunpack.c.l.b16 %v418
    %v2304 = vunpack.c.h.b16 %v418
    %v2305 = vunpack.c.l.b16 %v419
    %v2306 = vunpack.c.h.b16 %v419
    %v2307 = vunpack.c.l.b16 %v420
    %v2308 = vunpack.c.h.b16 %v420
    %v2309 = vunpack.c.l.b16 %v421
    %v2310 = vunpack.c.h.b16 %v421
    %v2311 = vunpack.c.l.b16 %v422
    %v2312 = vunpack.c.h.b16 %v422
    %v2313 = vunpack.c.l.b16 %v423
    %v2314 = vunpack.c.h.b16 %v423
    %v2315 = vunpack.c.l.b16 %v424
    %v2316 = vunpack.c.h.b16 %v424
    %v2317 = vunpack.c.l.b16 %v425
    %v2318 = vunpack.c.h.b16 %v425
    %v2319 = vunpack.c.l.b16 %v426
    %v2320 = vunpack.c.h.b16 %v426
    %v2321 = vunpack.c.l.b16 %v427
    %v2322 = vunpack.c.h.b16 %v427
    %v2323 = vunpack.c.l.b16 %v428
    %v2324 = vunpack.c.h.b16 %v428
    %v2325 = vunpack.c.l.b16 %v429
    %v2326 = vunpack.c.h.b16 %v429
    %v2327 = vunpack.c.l.b16 %v430
    %v2328 = vunpack.c.h.b16 %v430
    %v2329 = vunpack.c.l.b16 %v431
    %v2330 = vunpack.c.h.b16 %v431
    %v2331 = vunpack.c.l.b16 %v432
    %v2332 = vunpack.c.h.b16 %v432
    %v2333 = vunpack.c.l.b16 %v433
    %v2334 = vunpack.c.h.b16 %v433
    %v2335 = vunpack.c.l.b16 %v434
    %v2336 = vunpack.c.h.b16 %v434
    %v2337 = vunpack.c.l.b16 %v435
    %v2338 = vunpack.c.h.b16 %v435
    %v2339 = vunpack.c.l.b16 %v436
    %v2340 = vunpack.c.h.b16 %v436
    %v2341 = vunpack.c.l.b16 %v437
    %v2342 = vunpack.c.h.b16 %v437
    %v2343 = vunpack.c.l.b16 %v438
    %v2344 = vunpack.c.h.b16 %v438
    %v2345 = vunpack.c.l.b16 %v439
    %v2346 = vunpack.c.h.b16 %v439
    %v2347 = vunpack.c.l.b16 %v440
    %v2348 = vunpack.c.h.b16 %v440
    %v2349 = vunpack.c.l.b16 %v441
    %v2350 = vunpack.c.h.b16 %v441
    %v2351 = vunpack.c.l.b16 %v442
    %v2352 = vunpack.c.h.b16 %v442
    %v2353 = vunpack.c.l.b16 %v443
    %v2354 = vunpack.c.h.b16 %v443
    %v2355 = vunpack.c.l.b16 %v444
    %v2356 = vunpack.c.h.b16 %v444
    %v2357 = vunpack.c.l.b16 %v445
    %v2358 = vunpack.c.h.b16 %v445
    %v2359 = vunpack.c.l.b16 %v446
    %v2360 = vunpack.c.h.b16 %v446
    %v2361 = vunpack.c.l.b16 %v447
    %v2362 = vunpack.c.h.b16 %v447
    %v2363 = vunpack.c.l.b16 %v448
    %v2364 = vunpack.c.h.b16 %v448
    %v2365 = vunpack.c.l.b16 %v449
    %v2366 = vunpack.c.h.b16 %v449
    %v2367 = vunpack.c.l.b16 %v450
    %v2368 = vunpack.c.h.b16 %v450
    %v2369 = vunpack.c.l.b16 %v451
    %v2370 = vunpack.c.h.b16 %v451
    %v2371 = vunpack.c.l.b16 %v452
    %v2372 = vunpack.c.h.b16 %v452
    %v2373 = vunpack.c.l.b16 %v453
    %v2374 = vunpack.c.h.b16 %v453
    %v2375 = vunpack.c.l.b16 %v454
    %v2376 = vunpack.c.h.b16 %v454
    %v2377 = vunpack.c.l.b16 %v455
    %v2378 = vunpack.c.h.b16 %v455
    %v2379 = vunpack.c.l.b16 %v456
    %v2380 = vunpack.c.h.b16 %v456
    %v2381 = vunpack.c.l.b16 %v457
    %v2382 = vunpack.c.h.b16 %v457
    %v2383 = vunpack.c.l.b16 %v458
    %v2384 = vunpack.c.h.b16 %v458
    %v2385 = vunpack.c.l.b16 %v459
    %v2386 = vunpack.c.h.b16 %v459
    %v2387 = vunpack.c.l.b16 %v460
    %v2388 = vunpack.c.h.b16 %v460
    %v2389 = vunpack.c.l.b16 %v461
    %v2390 = vunpack.c.h.b16 %v461
    %v2391 = vunpack.c.l.b16 %v462
    %v2392 = vunpack.c.h.b16 %v462
    %v2393 = vunpack.c.l.b16 %v463
    %v2394 = vunpack.c.h.b16 %v463
    %v2395 = vunpack.c.l.b16 %v464
    %v2396 = vunpack.c.h.b16 %v464
    %v2397 = vunpack.c.l.b16 %v465
    %v2398 = vunpack.c.h.b16 %v465
    %v2399 = vunpack.c.l.b16 %v466
    %v2400 = vunpack.c.h.b16 %v466
    %v2401 = vunpack.c.l.b16 %v467
    %v2402 = vunpack.c.h.b16 %v467
    %v2403 = vunpack.c.l.b16 %v468
    %v2404 = vunpack.c.h.b16 %v468
    %v2405 = vunpack.c.l.b16 %v469
    %v2406 = vunpack.c.h.b16 %v469
    %v2407 = vunpack.c.l.b16 %v470
    %v2408 = vunpack.c.h.b16 %v470
    %v2409 = vunpack.c.l.b16 %v471
    %v2410 = vunpack.c.h.b16 %v471
    %v2411 = vunpack.c.l.b16 %v472
    %v2412 = vunpack.c.h.b16 %v472
    %v2413 = vunpack.c.l.b16 %v473
    %v2414 = vunpack.c.h.b16 %v473
    %v2415 = vunpack.c.l.b16 %v474
    %v2416 = vunpack.c.h.b16 %v474
    %v2417 = vunpack.c.l.b16 %v475
    %v2418 = vunpack.c.h.b16 %v475
    %v2419 = vunpack.c.l.b16 %v476
    %v2420 = vunpack.c.h.b16 %v476
    %v2421 = vunpack.c.l.b16 %v477
    %v2422 = vunpack.c.h.b16 %v477
    %v2423 = vunpack.c.l.b16 %v478
    %v2424 = vunpack.c.h.b16 %v478
    %v2425 = vunpack.c.l.b16 %v479
    %v2426 = vunpack.c.h.b16 %v479
    %v2427 = vunpack.c.l.b16 %v480
    %v2428 = vunpack.c.h.b16 %v480
    %v2429 = vunpack.c.l.b16 %v481
    %v2430 = vunpack.c.h.b16 %v481
    %v2431 = vunpack.c.l.b16 %v482
    %v2432 = vunpack.c.h.b16 %v482
    %v2433 = vunpack.c.l.b16 %v483
    %v2434 = vunpack.c.h.b16 %v483
    %v2435 = vunpack.c.l.b16 %v484
    %v2436 = vunpack.c.h.b16 %v484
    %v2437 = vunpack.c.l.b16 %v485
    %v2438 = vunpack.c.h.b16 %v485
    %v2439 = vunpack.c.l.b16 %v486
    %v2440 = vunpack.c.h.b16 %v486
    %v2441 = vunpack.c.l.b16 %v487
    %v2442 = vunpack.c.h.b16 %v487
    %v2443 = vunpack.c.l.b16 %v488
    %v2444 = vunpack.c.h.b16 %v488
    %v2445 = vunpack.c.l.b16 %v489
    %v2446 = vunpack.c.h.b16 %v489
    %v2447 = vunpack.c.l.b16 %v490
    %v2448 = vunpack.c.h.b16 %v490
    %v2449 = vunpack.c.l.b16 %v491
    %v2450 = vunpack.c.h.b16 %v491
    %v2451 = vunpack.c.l.b16 %v492
    %v2452 = vunpack.c.h.b16 %v492
    %v2453 = vunpack.c.l.b16 %v493
    %v2454 = vunpack.c.h.b16 %v493
    %v2455 = vunpack.c.l.b16 %v494
    %v2456 = vunpack.c.h.b16 %v494
    %v2457 = vunpack.c.l.b16 %v495
    %v2458 = vunpack.c.h.b16 %v495
    %v2459 = vunpack.c.l.b16 %v496
    %v2460 = vunpack.c.h.b16 %v496
    %v2461 = vunpack.c.l.b16 %v497
    %v2462 = vunpack.c.h.b16 %v497
    %v2463 = vunpack.c.l.b16 %v498
    %v2464 = vunpack.c.h.b16 %v498
    %v2465 = vunpack.c.l.b16 %v499
    %v2466 = vunpack.c.h.b16 %v499
    %v2467 = vunpack.c.l.b16 %v500
    %v2468 = vunpack.c.h.b16 %v500
    %v2469 = vunpack.c.l.b16 %v501
    %v2470 = vunpack.c.h.b16 %v501
    %v2471 = vunpack.c.l.b16 %v502
    %v2472 = vunpack.c.h.b16 %v502
    %v2473 = vunpack.c.l.b16 %v503
    %v2474 = vunpack.c.h.b16 %v503
    %v2475 = vunpack.c.l.b16 %v504
    %v2476 = vunpack.c.h.b16 %v504
    %v2477 = vunpack.c.l.b16 %v505
    %v2478 = vunpack.c.h.b16 %v505
    %v2479 = vunpack.c.l.b16 %v506
    %v2480 = vunpack.c.h.b16 %v506
    %v2481 = vunpack.c.l.b16 %v507
    %v2482 = vunpack.c.h.b16 %v507
    %v2483 = vunpack.c.l.b16 %v508
    %v2484 = vunpack.c.h.b16 %v508
    %v2485 = vunpack.c.l.b16 %v509
    %v2486 = vunpack.c.h.b16 %v509
    %v2487 = vunpack.c.l.b16 %v510
    %v2488 = vunpack.c.h.b16 %v510
    %v2489 = vunpack.c.l.b16 %v511
    %v2490 = vunpack.c.h.b16 %v511
    %v2491 = vunpack.c.l.b16 %v512
    %v2492 = vunpack.c.h.b16 %v512
    %v2493 = vunpack.c.l.b16 %v513
    %v2494 = vunpack.c.h.b16 %v513
    %v2495 = vunpack.c.l.b16 %v514
    %v2496 = vunpack.c.h.b16 %v514
    %v2497 = vunpack.c.l.b16 %v515
    %v2498 = vunpack.c.h.b16 %v515
    %v2499 = vunpack.c.l.b16 %v516
    %v2500 = vunpack.c.h.b16 %v516
    %v2501 = vunpack.c.l.b16 %v517
    %v2502 = vunpack.c.h.b16 %v517
    %v2503 = vunpack.c.l.b16 %v518
    %v2504 = vunpack.c.h.b16 %v518
    %v2505 = vunpack.c.l.b16 %v519
    %v2506 = vunpack.c.h.b16 %v519
    %v2507 = vunpack.c.l.b16 %v520
    %v2508 = vunpack.c.h.b16 %v520
    %v2509 = vunpack.c.l.b16 %v521
    %v2510 = vunpack.c.h.b16 %v521
    %v2511 = vunpack.c.l.b16 %v522
    %v2512 = vunpack.c.h.b16 %v522
    %v2513 = vunpack.c.l.b16 %v523
    %v2514 = vunpack.c.h.b16 %v523
    %v2515 = vunpack.c.l.b16 %v524
    %v2516 = vunpack.c.h.b16 %v524
    %v2517 = vunpack.c.l.b16 %v525
    %v2518 = vunpack.c.h.b16 %v525
    %v2519 = vunpack.c.l.b16 %v526
    %v2520 = vunpack.c.h.b16 %v526
    %v2521 = vunpack.c.l.b16 %v527
    %v2522 = vunpack.c.h.b16 %v527
    %v2523 = vunpack.c.l.b16 %v528
    %v2524 = vunpack.c.h.b16 %v528
    %v2525 = vunpack.c.l.b16 %v529
    %v2526 = vunpack.c.h.b16 %v529
    %v2527 = vunpack.c.l.b16 %v530
    %v2528 = vunpack.c.h.b16 %v530
    %v2529 = vunpack.c.l.b16 %v531
    %v2530 = vunpack.c.h.b16 %v531
    %v2531 = vunpack.c.l.b16 %v532
    %v2532 = vunpack.c.h.b16 %v532
    %v2533 = vunpack.c.l.b16 %v533
    %v2534 = vunpack.c.h.b16 %v533
    %v2535 = vunpack.c.l.b16 %v534
    %v2536 = vunpack.c.h.b16 %v534
    %v2537 = vunpack.c.l.b16 %v535
    %v2538 = vunpack.c.h.b16 %v535
    %v2539 = vunpack.c.l.b16 %v536
    %v2540 = vunpack.c.h.b16 %v536
    %v2541 = vunpack.c.l.b16 %v537
    %v2542 = vunpack.c.h.b16 %v537
    %v2543 = vunpack.c.l.b16 %v538
    %v2544 = vunpack.c.h.b16 %v538
    %v2545 = vunpack.c.l.b16 %v539
    %v2546 = vunpack.c.h.b16 %v539
    %v2547 = vunpack.c.l.b16 %v540
    %v2548 = vunpack.c.h.b16 %v540
    %v2549 = vunpack.c.l.b16 %v541
    %v2550 = vunpack.c.h.b16 %v541
    %v2551 = vunpack.c.l.b16 %v542
    %v2552 = vunpack.c.h.b16 %v542
    %v2553 = vunpack.c.l.b16 %v543
    %v2554 = vunpack.c.h.b16 %v543
    %v2555 = vunpack.c.l.b16 %v544
    %v2556 = vunpack.c.h.b16 %v544
    %v2557 = vunpack.c.l.b16 %v545
    %v2558 = vunpack.c.h.b16 %v545
    %v2559 = vunpack.c.l.b16 %v546
    %v2560 = vunpack.c.h.b16 %v546
    %v2561 = vunpack.c.l.b16 %v547
    %v2562 = vunpack.c.h.b16 %v547
    %v2563 = vunpack.c.l.b16 %v548
    %v2564 = vunpack.c.h.b16 %v548
    %v2565 = vunpack.c.l.b16 %v549
    %v2566 = vunpack.c.h.b16 %v549
    %v2567 = vunpack.c.l.b16 %v550
    %v2568 = vunpack.c.h.b16 %v550
    %v2569 = vunpack.c.l.b16 %v551
    %v2570 = vunpack.c.h.b16 %v551
    %v2571 = vunpack.c.l.b16 %v552
    %v2572 = vunpack.c.h.b16 %v552
    %v2573 = vunpack.c.l.b16 %v553
    %v2574 = vunpack.c.h.b16 %v553
    %v2575 = vunpack.c.l.b16 %v554
    %v2576 = vunpack.c.h.b16 %v554
    %v2577 = vunpack.c.l.b16 %v555
    %v2578 = vunpack.c.h.b16 %v555
    %v2579 = vunpack.c.l.b16 %v556
    %v2580 = vunpack.c.h.b16 %v556
    %v2581 = vunpack.c.l.b16 %v557
    %v2582 = vunpack.c.h.b16 %v557
    %v2583 = vunpack.c.l.b16 %v558
    %v2584 = vunpack.c.h.b16 %v558
    %v2585 = vunpack.c.l.b16 %v559
    %v2586 = vunpack.c.h.b16 %v559
    %v2587 = vunpack.c.l.b16 %v560
    %v2588 = vunpack.c.h.b16 %v560
    %v2589 = vunpack.c.l.b16 %v561
    %v2590 = vunpack.c.h.b16 %v561
    %v2591 = vunpack.c.l.b16 %v562
    %v2592 = vunpack.c.h.b16 %v562
    %v2593 = vunpack.c.l.b16 %v563
    %v2594 = vunpack.c.h.b16 %v563
    %v2595 = vunpack.c.l.b16 %v564
    %v2596 = vunpack.c.h.b16 %v564
    %v2597 = vunpack.c.l.b16 %v565
    %v2598 = vunpack.c.h.b16 %v565
    %v2599 = vunpack.c.l.b16 %v566
    %v2600 = vunpack.c.h.b16 %v566
    %v2601 = vunpack.c.l.b16 %v567
    %v2602 = vunpack.c.h.b16 %v567
    %v2603 = vunpack.c.l.b16 %v568
    %v2604 = vunpack.c.h.b16 %v568
    %v2605 = vunpack.c.l.b16 %v569
    %v2606 = vunpack.c.h.b16 %v569
    %v2607 = vunpack.c.l.b16 %v570
    %v2608 = vunpack.c.h.b16 %v570
    %v2609 = vunpack.c.l.b16 %v571
    %v2610 = vunpack.c.h.b16 %v571
    %v2611 = vunpack.c.l.b16 %v572
    %v2612 = vunpack.c.h.b16 %v572
    %v2613 = vunpack.c.l.b16 %v573
    %v2614 = vunpack.c.h.b16 %v573
    %v2615 = vunpack.c.l.b16 %v574
    %v2616 = vunpack.c.h.b16 %v574
    %v2617 = vunpack.c.l.b16 %v575
    %v2618 = vunpack.c.h.b16 %v575
    %v2619 = vunpack.c.l.b16 %v576
    %v2620 = vunpack.c.h.b16 %v576
    %v2621 = vunpack.c.l.b16 %v577
    %v2622 = vunpack.c.h.b16 %v577
    %v2623 = vunpack.c.l.b16 %v578
    %v2624 = vunpack.c.h.b16 %v578
    %v2625 = vunpack.c.l.b16 %v579
    %v2626 = vunpack.c.h.b16 %v579
    %v2627 = vunpack.c.l.b16 %v580
    %v2628 = vunpack.c.h.b16 %v580
    %v2629 = vunpack.c.l.b16 %v581
    %v2630 = vunpack.c.h.b16 %v581
    %v2631 = vunpack.c.l.b16 %v582
    %v2632 = vunpack.c.h.b16 %v582
    %v2633 = vunpack.c.l.b16 %v583
    %v2634 = vunpack.c.h.b16 %v583
    %v2635 = vunpack.c.l.b16 %v584
    %v2636 = vunpack.c.h.b16 %v584
    %v2637 = vunpack.c.l.b16 %v585
    %v2638 = vunpack.c.h.b16 %v585
    %v2639 = vunpack.c.l.b16 %v586
    %v2640 = vunpack.c.h.b16 %v586
    %v2641 = vunpack.c.l.b16 %v587
    %v2642 = vunpack.c.h.b16 %v587
    %v2643 = vunpack.c.l.b16 %v588
    %v2644 = vunpack.c.h.b16 %v588
    %v2645 = vunpack.c.l.b16 %v589
    %v2646 = vunpack.c.h.b16 %v589
    %v2647 = vunpack.c.l.b16 %v590
    %v2648 = vunpack.c.h.b16 %v590
    %v2649 = vunpack.c.l.b16 %v591
    %v2650 = vunpack.c.h.b16 %v591
    %v2651 = vunpack.c.l.b16 %v592
    %v2652 = vunpack.c.h.b16 %v592
    %v2653 = vunpack.c.l.b16 %v593
    %v2654 = vunpack.c.h.b16 %v593
    %v2655 = vunpack.c.l.b16 %v594
    %v2656 = vunpack.c.h.b16 %v594
    %v2657 = vunpack.c.l.b16 %v595
    %v2658 = vunpack.c.h.b16 %v595
    %v2659 = vunpack.c.l.b16 %v596
    %v2660 = vunpack.c.h.b16 %v596
    %v2661 = vunpack.c.l.b16 %v597
    %v2662 = vunpack.c.h.b16 %v597
    %v2663 = vunpack.c.l.b16 %v598
    %v2664 = vunpack.c.h.b16 %v598
    %v2665 = vunpack.c.l.b16 %v599
    %v2666 = vunpack.c.h.b16 %v599
    %v2667 = vunpack.c.l.b16 %v600
    %v2668 = vunpack.c.h.b16 %v600
    %v2669 = vunpack.c.l.b16 %v601
    %v2670 = vunpack.c.h.b16 %v601
    %v2671 = vunpack.c.l.b16 %v602
    %v2672 = vunpack.c.h.b16 %v602
    %v2673 = vunpack.c.l.b16 %v603
    %v2674 = vunpack.c.h.b16 %v603
    %v2675 = vunpack.c.l.b16 %v604
    %v2676 = vunpack.c.h.b16 %v604
    %v2677 = vunpack.c.l.b16 %v605
    %v2678 = vunpack.c.h.b16 %v605
    %v2679 = vunpack.c.l.b16 %v606
    %v2680 = vunpack.c.h.b16 %v606
    %v2681 = vunpack.c.l.b16 %v607
    %v2682 = vunpack.c.h.b16 %v607
    %v2683 = vunpack.c.l.b16 %v608
    %v2684 = vunpack.c.h.b16 %v608
    %v2685 = vunpack.c.l.b16 %v609
    %v2686 = vunpack.c.h.b16 %v609
    %v2687 = vunpack.c.l.b16 %v610
    %v2688 = vunpack.c.h.b16 %v610
    %v2689 = vunpack.c.l.b16 %v611
    %v2690 = vunpack.c.h.b16 %v611
    %v2691 = vunpack.c.l.b16 %v612
    %v2692 = vunpack.c.h.b16 %v612
    %v2693 = vunpack.c.l.b16 %v613
    %v2694 = vunpack.c.h.b16 %v613
    %v2695 = vunpack.c.l.b16 %v614
    %v2696 = vunpack.c.h.b16 %v614
    %v2697 = vunpack.c.l.b16 %v615
    %v2698 = vunpack.c.h.b16 %v615
    %v2699 = vunpack.c.l.b16 %v616
    %v2700 = vunpack.c.h.b16 %v616
    %v2701 = vunpack.c.l.b16 %v617
    %v2702 = vunpack.c.h.b16 %v617
    %v2703 = vunpack.c.l.b16 %v618
    %v2704 = vunpack.c.h.b16 %v618
    %v2705 = vunpack.c.l.b16 %v619
    %v2706 = vunpack.c.h.b16 %v619
    %v2707 = vunpack.c.l.b16 %v620
    %v2708 = vunpack.c.h.b16 %v620
    %v2709 = vunpack.c.l.b16 %v621
    %v2710 = vunpack.c.h.b16 %v621
    %v2711 = vunpack.c.l.b16 %v622
    %v2712 = vunpack.c.h.b16 %v622
    %v2713 = vunpack.c.l.b16 %v623
    %v2714 = vunpack.c.h.b16 %v623
    %v2715 = vunpack.c.l.b16 %v624
    %v2716 = vunpack.c.h.b16 %v624
    %v2717 = vunpack.c.l.b16 %v625
    %v2718 = vunpack.c.h.b16 %v625
    %v2719 = vunpack.c.l.b16 %v626
    %v2720 = vunpack.c.h.b16 %v626
    %v2721 = vunpack.c.l.b16 %v627
    %v2722 = vunpack.c.h.b16 %v627
    %v2723 = vunpack.c.l.b16 %v628
    %v2724 = vunpack.c.h.b16 %v628
    %v2725 = vunpack.c.l.b16 %v629
    %v2726 = vunpack.c.h.b16 %v629
    %v2727 = vunpack.c.l.b16 %v630
    %v2728 = vunpack.c.h.b16 %v630
    %v2729 = vunpack.c.l.b16 %v631
    %v2730 = vunpack.c.h.b16 %v631
    %v2731 = vunpack.c.l.b16 %v632
    %v2732 = vunpack.c.h.b16 %v632
    %v2733 = vunpack.c.l.b16 %v633
    %v2734 = vunpack.c.h.b16 %v633
    %v2735 = vunpack.c.l.b16 %v634
    %v2736 = vunpack.c.h.b16 %v634
    %v2737 = vunpack.c.l.b16 %v635
    %v2738 = vunpack.c.h.b16 %v635
    %v2739 = vunpack.c.l.b16 %v636
    %v2740 = vunpack.c.h.b16 %v636
    %v2741 = vunpack.c.l.b16 %v637
    %v2742 = vunpack.c.h.b16 %v637
    %v2743 = vunpack.c.l.b16 %v638
    %v2744 = vunpack.c.h.b16 %v638
    %v2745 = vunpack.c.l.b16 %v639
    %v2746 = vunpack.c.h.b16 %v639
    %v2747 = vunpack.c.l.b16 %v640
    %v2748 = vunpack.c.h.b16 %v640
    %v2749 = vunpack.c.l.b16 %v641
    %v2750 = vunpack.c.h.b16 %v641
    %v2751 = vunpack.c.l.b16 %v642
    %v2752 = vunpack.c.h.b16 %v642
    %v2753 = vunpack.c.l.b16 %v643
    %v2754 = vunpack.c.h.b16 %v643
    %v2755 = vunpack.c.l.b16 %v644
    %v2756 = vunpack.c.h.b16 %v644
    %v2757 = vunpack.c.l.b16 %v645
    %v2758 = vunpack.c.h.b16 %v645
    %v2759 = vunpack.c.l.b16 %v646
    %v2760 = vunpack.c.h.b16 %v646
    %v2761 = vunpack.c.l.b16 %v647
    %v2762 = vunpack.c.h.b16 %v647
    %v2763 = vunpack.c.l.b16 %v648
    %v2764 = vunpack.c.h.b16 %v648
    %v2765 = vunpack.c.l.b16 %v649
    %v2766 = vunpack.c.h.b16 %v649
    %v2767 = vunpack.c.l.b16 %v650
    %v2768 = vunpack.c.h.b16 %v650
    %v2769 = vunpack.c.l.b16 %v651
    %v2770 = vunpack.c.h.b16 %v651
    %v2771 = vunpack.c.l.b16 %v652
    %v2772 = vunpack.c.h.b16 %v652
    %v2773 = vunpack.c.l.b16 %v653
    %v2774 = vunpack.c.h.b16 %v653
    %v2775 = vunpack.c.l.b16 %v654
    %v2776 = vunpack.c.h.b16 %v654
    %v2777 = vunpack.c.l.b16 %v655
    %v2778 = vunpack.c.h.b16 %v655
    %v2779 = vunpack.c.l.b16 %v656
    %v2780 = vunpack.c.h.b16 %v656
    %v2781 = vunpack.c.l.b16 %v657
    %v2782 = vunpack.c.h.b16 %v657
    %v2783 = vunpack.c.l.b16 %v658
    %v2784 = vunpack.c.h.b16 %v658
    %v2785 = vunpack.c.l.b16 %v659
    %v2786 = vunpack.c.h.b16 %v659
    %v2787 = vunpack.c.l.b16 %v660
    %v2788 = vunpack.c.h.b16 %v660
    %v2789 = vunpack.c.l.b16 %v661
    %v2790 = vunpack.c.h.b16 %v661
    %v2791 = vunpack.c.l.b16 %v662
    %v2792 = vunpack.c.h.b16 %v662
    %v2793 = vunpack.c.l.b16 %v663
    %v2794 = vunpack.c.h.b16 %v663
    %v2795 = vunpack.c.l.b16 %v664
    %v2796 = vunpack.c.h.b16 %v664
    %v2797 = vunpack.c.l.b16 %v665
    %v2798 = vunpack.c.h.b16 %v665
    %v2799 = vunpack.c.l.b16 %v666
    %v2800 = vunpack.c.h.b16 %v666
    %v2801 = vunpack.c.l.b16 %v667
    %v2802 = vunpack.c.h.b16 %v667
    %v2803 = vunpack.c.l.b16 %v668
    %v2804 = vunpack.c.h.b16 %v668
    %v2805 = vunpack.c.l.b16 %v669
    %v2806 = vunpack.c.h.b16 %v669
    %v2807 = vunpack.c.l.b16 %v670
    %v2808 = vunpack.c.h.b16 %v670
    %v2809 = vunpack.c.l.b16 %v671
    %v2810 = vunpack.c.h.b16 %v671
    %v2811 = vunpack.c.l.b16 %v672
    %v2812 = vunpack.c.h.b16 %v672
    %v2813 = vunpack.c.l.b16 %v673
    %v2814 = vunpack.c.h.b16 %v673
    %v2815 = vunpack.c.l.b16 %v674
    %v2816 = vunpack.c.h.b16 %v674
    %v2817 = vunpack.c.l.b16 %v675
    %v2818 = vunpack.c.h.b16 %v675
    %v2819 = vunpack.c.l.b16 %v676
    %v2820 = vunpack.c.h.b16 %v676
    %v2821 = vunpack.c.l.b16 %v677
    %v2822 = vunpack.c.h.b16 %v677
    %v2823 = vunpack.c.l.b16 %v678
    %v2824 = vunpack.c.h.b16 %v678
    %v2825 = vunpack.c.l.b16 %v679
    %v2826 = vunpack.c.h.b16 %v679
    %v2827 = vunpack.c.l.b16 %v680
    %v2828 = vunpack.c.h.b16 %v680
    %v2829 = vunpack.c.l.b16 %v681
    %v2830 = vunpack.c.h.b16 %v681
    %v2831 = vunpack.c.l.b16 %v682
    %v2832 = vunpack.c.h.b16 %v682
    %v2833 = vunpack.c.l.b16 %v683
    %v2834 = vunpack.c.h.b16 %v683
    %v2835 = vunpack.c.l.b16 %v684
    %v2836 = vunpack.c.h.b16 %v684
    %v2837 = vunpack.c.l.b16 %v685
    %v2838 = vunpack.c.h.b16 %v685
    %v2839 = vunpack.c.l.b16 %v686
    %v2840 = vunpack.c.h.b16 %v686
    %v2841 = vunpack.c.l.b16 %v687
    %v2842 = vunpack.c.h.b16 %v687
    %v2843 = vunpack.c.l.b16 %v688
    %v2844 = vunpack.c.h.b16 %v688
    %v2845 = vunpack.c.l.b16 %v689
    %v2846 = vunpack.c.h.b16 %v689
    %v2847 = vunpack.c.l.b16 %v690
    %v2848 = vunpack.c.h.b16 %v690
    %v2849 = vunpack.c.l.b16 %v691
    %v2850 = vunpack.c.h.b16 %v691
    %v2851 = vunpack.c.l.b16 %v692
    %v2852 = vunpack.c.h.b16 %v692
    %v2853 = vunpack.c.l.b16 %v693
    %v2854 = vunpack.c.h.b16 %v693
    %v2855 = vunpack.c.l.b16 %v694
    %v2856 = vunpack.c.h.b16 %v694
    %v2857 = vunpack.c.l.b16 %v695
    %v2858 = vunpack.c.h.b16 %v695
    %v2859 = vunpack.c.l.b16 %v696
    %v2860 = vunpack.c.h.b16 %v696
    %v2861 = vunpack.c.l.b16 %v697
    %v2862 = vunpack.c.h.b16 %v697
    %v2863 = vunpack.c.l.b16 %v698
    %v2864 = vunpack.c.h.b16 %v698
    %v2865 = vunpack.c.l.b16 %v699
    %v2866 = vunpack.c.h.b16 %v699
    %v2867 = vunpack.c.l.b16 %v700
    %v2868 = vunpack.c.h.b16 %v700
    %v2869 = vunpack.c.l.b16 %v701
    %v2870 = vunpack.c.h.b16 %v701
    %v2871 = vunpack.c.l.b16 %v702
    %v2872 = vunpack.c.h.b16 %v702
    %v2873 = vunpack.c.l.b16 %v703
    %v2874 = vunpack.c.h.b16 %v703
    %v2875 = vunpack.c.l.b16 %v704
    %v2876 = vunpack.c.h.b16 %v704
    %v2877 = vunpack.c.l.b16 %v705
    %v2878 = vunpack.c.h.b16 %v705
    %v2879 = vunpack.c.l.b16 %v706
    %v2880 = vunpack.c.h.b16 %v706
    %v2881 = vunpack.c.l.b16 %v707
    %v2882 = vunpack.c.h.b16 %v707
    %v2883 = vunpack.c.l.b16 %v708
    %v2884 = vunpack.c.h.b16 %v708
    %v2885 = vunpack.c.l.b16 %v709
    %v2886 = vunpack.c.h.b16 %v709
    %v2887 = vunpack.c.l.b16 %v710
    %v2888 = vunpack.c.h.b16 %v710
    %v2889 = vunpack.c.l.b16 %v711
    %v2890 = vunpack.c.h.b16 %v711
    %v2891 = vunpack.c.l.b16 %v712
    %v2892 = vunpack.c.h.b16 %v712
    %v2893 = vunpack.c.l.b16 %v713
    %v2894 = vunpack.c.h.b16 %v713
    %v2895 = vunpack.c.l.b16 %v714
    %v2896 = vunpack.c.h.b16 %v714
    %v2897 = vunpack.c.l.b16 %v715
    %v2898 = vunpack.c.h.b16 %v715
    %v2899 = vunpack.c.l.b16 %v716
    %v2900 = vunpack.c.h.b16 %v716
    %v2901 = vunpack.c.l.b16 %v717
    %v2902 = vunpack.c.h.b16 %v717
    %v2903 = vunpack.c.l.b16 %v718
    %v2904 = vunpack.c.h.b16 %v718
    %v2905 = vunpack.c.l.b16 %v719
    %v2906 = vunpack.c.h.b16 %v719
    %v2907 = vunpack.c.l.b16 %v720
    %v2908 = vunpack.c.h.b16 %v720
    %v2909 = vunpack.c.l.b16 %v721
    %v2910 = vunpack.c.h.b16 %v721
    %v2911 = vunpack.c.l.b16 %v722
    %v2912 = vunpack.c.h.b16 %v722
    %v2913 = vunpack.c.l.b16 %v723
    %v2914 = vunpack.c.h.b16 %v723
    %v2915 = vunpack.c.l.b16 %v724
    %v2916 = vunpack.c.h.b16 %v724
    %v2917 = vunpack.c.l.b16 %v725
    %v2918 = vunpack.c.h.b16 %v725
    %v2919 = vunpack.c.l.b16 %v726
    %v2920 = vunpack.c.h.b16 %v726
    %v2921 = vunpack.c.l.b16 %v727
    %v2922 = vunpack.c.h.b16 %v727
    %v2923 = vunpack.c.l.b16 %v728
    %v2924 = vunpack.c.h.b16 %v728
    %v2925 = vunpack.c.l.b16 %v729
    %v2926 = vunpack.c.h.b16 %v729
    %v2927 = vunpack.c.l.b16 %v730
    %v2928 = vunpack.c.h.b16 %v730
    %v2929 = vunpack.c.l.b16 %v731
    %v2930 = vunpack.c.h.b16 %v731
    %v2931 = vunpack.c.l.b16 %v732
    %v2932 = vunpack.c.h.b16 %v732
    %v2933 = vunpack.c.l.b16 %v733
    %v2934 = vunpack.c.h.b16 %v733
    %v2935 = vunpack.c.l.b16 %v734
    %v2936 = vunpack.c.h.b16 %v734
    %v2937 = vunpack.c.l.b16 %v735
    %v2938 = vunpack.c.h.b16 %v735
    %v2939 = vunpack.c.l.b16 %v736
    %v2940 = vunpack.c.h.b16 %v736
    %v2941 = vunpack.c.l.b16 %v737
    %v2942 = vunpack.c.h.b16 %v737
    %v2943 = vunpack.c.l.b16 %v738
    %v2944 = vunpack.c.h.b16 %v738
    %v2945 = vunpack.c.l.b16 %v739
    %v2946 = vunpack.c.h.b16 %v739
    %v2947 = vunpack.c.l.b16 %v740
    %v2948 = vunpack.c.h.b16 %v740
    %v2949 = vunpack.c.l.b16 %v741
    %v2950 = vunpack.c.h.b16 %v741
    %v2951 = vunpack.c.l.b16 %v742
    %v2952 = vunpack.c.h.b16 %v742
    %v2953 = vunpack.c.l.b16 %v743
    %v2954 = vunpack.c.h.b16 %v743
    %v2955 = vunpack.c.l.b16 %v744
    %v2956 = vunpack.c.h.b16 %v744
    %v2957 = vunpack.c.l.b16 %v745
    %v2958 = vunpack.c.h.b16 %v745
    %v2959 = vunpack.c.l.b16 %v746
    %v2960 = vunpack.c.h.b16 %v746
    %v2961 = vunpack.c.l.b16 %v747
    %v2962 = vunpack.c.h.b16 %v747
    %v2963 = vunpack.c.l.b16 %v748
    %v2964 = vunpack.c.h.b16 %v748
    %v2965 = vunpack.c.l.b16 %v749
    %v2966 = vunpack.c.h.b16 %v749
    %v2967 = vunpack.c.l.b16 %v750
    %v2968 = vunpack.c.h.b16 %v750
    %v2969 = vunpack.c.l.b16 %v751
    %v2970 = vunpack.c.h.b16 %v751
    %v2971 = vunpack.c.l.b16 %v752
    %v2972 = vunpack.c.h.b16 %v752
    %v2973 = vunpack.c.l.b16 %v753
    %v2974 = vunpack.c.h.b16 %v753
    %v2975 = vunpack.c.l.b16 %v754
    %v2976 = vunpack.c.h.b16 %v754
    %v2977 = vunpack.c.l.b16 %v755
    %v2978 = vunpack.c.h.b16 %v755
    %v2979 = vunpack.c.l.b16 %v756
    %v2980 = vunpack.c.h.b16 %v756
    %v2981 = vunpack.c.l.b16 %v757
    %v2982 = vunpack.c.h.b16 %v757
    %v2983 = vunpack.c.l.b16 %v758
    %v2984 = vunpack.c.h.b16 %v758
    %v2985 = vunpack.c.l.b16 %v759
    %v2986 = vunpack.c.h.b16 %v759
    %v2987 = vunpack.c.l.b16 %v760
    %v2988 = vunpack.c.h.b16 %v760
    %v2989 = vunpack.c.l.b16 %v761
    %v2990 = vunpack.c.h.b16 %v761
    %v2991 = vunpack.c.l.b16 %v762
    %v2992 = vunpack.c.h.b16 %v762
    %v2993 = vunpack.c.l.b16 %v763
    %v2994 = vunpack.c.h.b16 %v763
    %v2995 = vunpack.c.l.b16 %v764
    %v2996 = vunpack.c.h.b16 %v764
    %v2997 = vunpack.c.l.b16 %v765
    %v2998 = vunpack.c.h.b16 %v765
    %v2999 = vunpack.c.l.b16 %v766
    %v3000 = vunpack.c.h.b16 %v766
    %v3001 = vunpack.c.l.b16 %v767
    %v3002 = vunpack.c.h.b16 %v767
    %v3003 = vunpack.c.l.b16 %v768
    %v3004 = vunpack.c.h.b16 %v768
    %v3005 = vunpack.c.l.b16 %v769
    %v3006 = vunpack.c.h.b16 %v769
    %v3007 = vunpack.c.l.b16 %v770
    %v3008 = vunpack.c.h.b16 %v770
    %v3009 = vunpack.c.l.b16 %v771
    %v3010 = vunpack.c.h.b16 %v771
    %v3011 = vunpack.c.l.b16 %v772
    %v3012 = vunpack.c.h.b16 %v772
    %v3013 = vunpack.c.l.b16 %v773
    %v3014 = vunpack.c.h.b16 %v773
    %v3015 = vunpack.c.l.b16 %v774
    %v3016 = vunpack.c.h.b16 %v774
    %v3017 = vunpack.c.l.b16 %v775
    %v3018 = vunpack.c.h.b16 %v775
    %v3019 = vunpack.c.l.b16 %v776
    %v3020 = vunpack.c.h.b16 %v776
    %v3021 = vunpack.c.l.b16 %v777
    %v3022 = vunpack.c.h.b16 %v777
    %v3023 = vunpack.c.l.b16 %v778
    %v3024 = vunpack.c.h.b16 %v778
    %v3025 = vunpack.c.l.b16 %v779
    %v3026 = vunpack.c.h.b16 %v779
    %v3027 = vunpack.c.l.b16 %v780
    %v3028 = vunpack.c.h.b16 %v780
    %v3029 = vunpack.c.l.b16 %v781
    %v3030 = vunpack.c.h.b16 %v781
    %v3031 = vunpack.c.l.b16 %v782
    %v3032 = vunpack.c.h.b16 %v782
    %v3033 = vunpack.c.l.b16 %v783
    %v3034 = vunpack.c.h.b16 %v783
    %v3035 = vunpack.c.l.b16 %v784
    %v3036 = vunpack.c.h.b16 %v784
    %v3037 = vunpack.c.l.b16 %v785
    %v3038 = vunpack.c.h.b16 %v785
    %v3039 = vunpack.c.l.b16 %v786
    %v3040 = vunpack.c.h.b16 %v786
    %v3041 = vunpack.c.l.b16 %v787
    %v3042 = vunpack.c.h.b16 %v787
    %v3043 = vunpack.c.l.b16 %v788
    %v3044 = vunpack.c.h.b16 %v788
    %v3045 = vunpack.c.l.b16 %v789
    %v3046 = vunpack.c.h.b16 %v789
    %v3047 = vunpack.c.l.b16 %v790
    %v3048 = vunpack.c.h.b16 %v790
    %v3049 = vunpack.c.l.b16 %v791
    %v3050 = vunpack.c.h.b16 %v791
    %v3051 = vunpack.c.l.b16 %v792
    %v3052 = vunpack.c.h.b16 %v792
    %v3053 = vunpack.c.l.b16 %v793
    %v3054 = vunpack.c.h.b16 %v793
    %v3055 = vunpack.c.l.b16 %v794
    %v3056 = vunpack.c.h.b16 %v794
    %v3057 = vunpack.c.l.b16 %v795
    %v3058 = vunpack.c.h.b16 %v795
    %v3059 = vunpack.c.l.b16 %v796
    %v3060 = vunpack.c.h.b16 %v796
    %v3061 = vunpack.c.l.b16 %v797
    %v3062 = vunpack.c.h.b16 %v797
    %v3063 = vunpack.c.l.b16 %v798
    %v3064 = vunpack.c.h.b16 %v798
    %v3065 = vunpack.c.l.b16 %v799
    %v3066 = vunpack.c.h.b16 %v799
    %v3067 = vunpack.c.l.b16 %v800
    %v3068 = vunpack.c.h.b16 %v800
    %v3069 = vunpack.c.l.b16 %v801
    %v3070 = vunpack.c.h.b16 %v801
    %v3071 = vunpack.c.l.b16 %v802
    %v3072 = vunpack.c.h.b16 %v802
    %v3073 = vunpack.c.l.b16 %v803
    %v3074 = vunpack.c.h.b16 %v803
    %v3075 = vunpack.c.l.b16 %v804
    %v3076 = vunpack.c.h.b16 %v804
    %v3077 = vunpack.c.l.b16 %v805
    %v3078 = vunpack.c.h.b16 %v805
    %v3079 = vunpack.c.l.b16 %v806
    %v3080 = vunpack.c.h.b16 %v806
    %v3081 = vunpack.c.l.b16 %v807
    %v3082 = vunpack.c.h.b16 %v807
    %v3083 = vunpack.c.l.b16 %v808
    %v3084 = vunpack.c.h.b16 %v808
    %v3085 = vunpack.c.l.b16 %v809
    %v3086 = vunpack.c.h.b16 %v809
    %v3087 = vunpack.c.l.b16 %v810
    %v3088 = vunpack.c.h.b16 %v810
    %v3089 = vunpack.c.l.b16 %v811
    %v3090 = vunpack.c.h.b16 %v811
    %v3091 = vunpack.c.l.b16 %v812
    %v3092 = vunpack.c.h.b16 %v812
    %v3093 = vunpack.c.l.b16 %v813
    %v3094 = vunpack.c.h.b16 %v813
    %v3095 = vunpack.c.l.b16 %v814
    %v3096 = vunpack.c.h.b16 %v814
    %v3097 = vunpack.c.l.b16 %v815
    %v3098 = vunpack.c.h.b16 %v815
    %v3099 = vunpack.c.l.b16 %v816
    %v3100 = vunpack.c.h.b16 %v816
    %v3101 = vunpack.c.l.b16 %v817
    %v3102 = vunpack.c.h.b16 %v817
    %v3103 = vunpack.c.l.b16 %v818
    %v3104 = vunpack.c.h.b16 %v818
    %v3105 = vunpack.c.l.b16 %v819
    %v3106 = vunpack.c.h.b16 %v819
    %v3107 = vunpack.c.l.b16 %v820
    %v3108 = vunpack.c.h.b16 %v820
    %v3109 = vunpack.c.l.b16 %v821
    %v3110 = vunpack.c.h.b16 %v821
    %v3111 = vunpack.c.l.b16 %v822
    %v3112 = vunpack.c.h.b16 %v822
    %v3113 = vunpack.c.l.b16 %v823
    %v3114 = vunpack.c.h.b16 %v823
    %v3115 = vunpack.c.l.b16 %v824
    %v3116 = vunpack.c.h.b16 %v824
    %v3117 = vunpack.c.l.b16 %v825
    %v3118 = vunpack.c.h.b16 %v825
    %v3119 = vunpack.c.l.b16 %v826
    %v3120 = vunpack.c.h.b16 %v826
    %v3121 = vunpack.c.l.b16 %v827
    %v3122 = vunpack.c.h.b16 %v827
    %v3123 = vunpack.c.l.b16 %v828
    %v3124 = vunpack.c.h.b16 %v828
    %v3125 = vunpack.c.l.b16 %v829
    %v3126 = vunpack.c.h.b16 %v829
    %v3127 = vunpack.c.l.b16 %v830
    %v3128 = vunpack.c.h.b16 %v830
    %v3129 = vunpack.c.l.b16 %v831
    %v3130 = vunpack.c.h.b16 %v831
    %v3131 = vunpack.c.l.b16 %v832
    %v3132 = vunpack.c.h.b16 %v832
    %v3133 = vunpack.c.l.b16 %v833
    %v3134 = vunpack.c.h.b16 %v833
    %v3135 = vunpack.c.l.b16 %v834
    %v3136 = vunpack.c.h.b16 %v834
    %v3137 = vunpack.c.l.b16 %v835
    %v3138 = vunpack.c.h.b16 %v835
    %v3139 = vunpack.c.l.b16 %v836
    %v3140 = vunpack.c.h.b16 %v836
    %v3141 = vunpack.c.l.b16 %v837
    %v3142 = vunpack.c.h.b16 %v837
    %v3143 = vunpack.c.l.b16 %v838
    %v3144 = vunpack.c.h.b16 %v838
    %v3145 = vunpack.c.l.b16 %v839
    %v3146 = vunpack.c.h.b16 %v839
    %v3147 = vunpack.c.l.b16 %v840
    %v3148 = vunpack.c.h.b16 %v840
    %v3149 = vunpack.c.l.b16 %v841
    %v3150 = vunpack.c.h.b16 %v841
    %v3151 = vunpack.c.l.b16 %v842
    %v3152 = vunpack.c.h.b16 %v842
    %v3153 = vunpack.c.l.b16 %v843
    %v3154 = vunpack.c.h.b16 %v843
    %v3155 = vunpack.c.l.b16 %v844
    %v3156 = vunpack.c.h.b16 %v844
    %v3157 = vunpack.c.l.b16 %v845
    %v3158 = vunpack.c.h.b16 %v845
    %v3159 = vunpack.c.l.b16 %v846
    %v3160 = vunpack.c.h.b16 %v846
    %v3161 = vunpack.c.l.b16 %v847
    %v3162 = vunpack.c.h.b16 %v847
    %v3163 = vunpack.c.l.b16 %v848
    %v3164 = vunpack.c.h.b16 %v848
    %v3165 = vunpack.c.l.b16 %v849
    %v3166 = vunpack.c.h.b16 %v849
    %v3167 = vunpack.c.l.b16 %v850
    %v3168 = vunpack.c.h.b16 %v850
    %v3169 = vunpack.c.l.b16 %v851
    %v3170 = vunpack.c.h.b16 %v851
    %v3171 = vunpack.c.l.b16 %v852
    %v3172 = vunpack.c.h.b16 %v852
    %v3173 = vunpack.c.l.b16 %v853
    %v3174 = vunpack.c.h.b16 %v853
    %v3175 = vunpack.c.l.b16 %v854
    %v3176 = vunpack.c.h.b16 %v854
    %v3177 = vunpack.c.l.b16 %v855
    %v3178 = vunpack.c.h.b16 %v855
    %v3179 = vunpack.c.l.b16 %v856
    %v3180 = vunpack.c.h.b16 %v856
    %v3181 = vunpack.c.l.b16 %v857
    %v3182 = vunpack.c.h.b16 %v857
    %v3183 = vunpack.c.l.b16 %v858
    %v3184 = vunpack.c.h.b16 %v858
    %v3185 = vunpack.c.l.b16 %v859
    %v3186 = vunpack.c.h.b16 %v859
    %v3187 = vunpack.c.l.b16 %v860
    %v3188 = vunpack.c.h.b16 %v860
    %v3189 = vunpack.c.l.b16 %v861
    %v3190 = vunpack.c.h.b16 %v861
    %v3191 = vunpack.c.l.b16 %v862
    %v3192 = vunpack.c.h.b16 %v862
    %v3193 = vunpack.c.l.b16 %v863
    %v3194 = vunpack.c.h.b16 %v863
    %v3195 = vunpack.c.l.b16 %v864
    %v3196 = vunpack.c.h.b16 %v864
    %v3197 = vunpack.c.l.b16 %v865
    %v3198 = vunpack.c.h.b16 %v865
    %v3199 = vunpack.c.l.b16 %v866
    %v3200 = vunpack.c.h.b16 %v866
    %v3201 = vunpack.c.l.b16 %v867
    %v3202 = vunpack.c.h.b16 %v867
    %v3203 = vunpack.c.l.b16 %v868
    %v3204 = vunpack.c.h.b16 %v868
    %v3205 = vunpack.c.l.b16 %v869
    %v3206 = vunpack.c.h.b16 %v869
    %v3207 = vunpack.c.l.b16 %v870
    %v3208 = vunpack.c.h.b16 %v870
    %v3209 = vunpack.c.l.b16 %v871
    %v3210 = vunpack.c.h.b16 %v871
    %v3211 = vunpack.c.l.b16 %v872
    %v3212 = vunpack.c.h.b16 %v872
    %v3213 = vunpack.c.l.b16 %v873
    %v3214 = vunpack.c.h.b16 %v873
    %v3215 = vunpack.c.l.b16 %v874
    %v3216 = vunpack.c.h.b16 %v874
    %v3217 = vunpack.c.l.b16 %v875
    %v3218 = vunpack.c.h.b16 %v875
    %v3219 = vunpack.c.l.b16 %v876
    %v3220 = vunpack.c.h.b16 %v876
    %v3221 = vunpack.c.l.b16 %v877
    %v3222 = vunpack.c.h.b16 %v877
    %v3223 = vunpack.c.l.b16 %v878
    %v3224 = vunpack.c.h.b16 %v878
    %v3225 = vunpack.c.l.b16 %v879
    %v3226 = vunpack.c.h.b16 %v879
    %v3227 = vunpack.c.l.b16 %v880
    %v3228 = vunpack.c.h.b16 %v880
    %v3229 = vunpack.c.l.b16 %v881
    %v3230 = vunpack.c.h.b16 %v881
    %v3231 = vunpack.c.l.b16 %v882
    %v3232 = vunpack.c.h.b16 %v882
    %v3233 = vunpack.c.l.b16 %v883
    %v3234 = vunpack.c.h.b16 %v883
    %v3235 = vunpack.c.l.b16 %v884
    %v3236 = vunpack.c.h.b16 %v884
    %v3237 = vunpack.c.l.b16 %v885
    %v3238 = vunpack.c.h.b16 %v885
    %v3239 = vunpack.c.l.b16 %v886
    %v3240 = vunpack.c.h.b16 %v886
    %v3241 = vunpack.c.l.b16 %v887
    %v3242 = vunpack.c.h.b16 %v887
    %v3243 = vunpack.c.l.b16 %v888
    %v3244 = vunpack.c.h.b16 %v888
    %v3245 = vunpack.c.l.b16 %v889
    %v3246 = vunpack.c.h.b16 %v889
    %v3247 = vunpack.c.l.b16 %v890
    %v3248 = vunpack.c.h.b16 %v890
    %v3249 = vunpack.c.l.b16 %v891
    %v3250 = vunpack.c.h.b16 %v891
    %v3251 = vunpack.c.l.b16 %v892
    %v3252 = vunpack.c.h.b16 %v892
    %v3253 = vunpack.c.l.b16 %v893
    %v3254 = vunpack.c.h.b16 %v893
    %v3255 = vunpack.c.l.b16 %v894
    %v3256 = vunpack.c.h.b16 %v894
    %v3257 = vunpack.c.l.b16 %v895
    %v3258 = vunpack.c.h.b16 %v895
    %v3259 = vunpack.c.l.b16 %v896
    %v3260 = vunpack.c.h.b16 %v896
    %v3261 = vunpack.c.l.b16 %v897
    %v3262 = vunpack.c.h.b16 %v897
    %v3263 = vunpack.c.l.b16 %v898
    %v3264 = vunpack.c.h.b16 %v898
    %v3265 = vunpack.c.l.b16 %v899
    %v3266 = vunpack.c.h.b16 %v899
    %v3267 = vunpack.c.l.b16 %v900
    %v3268 = vunpack.c.h.b16 %v900
    %v3269 = vunpack.c.l.b16 %v901
    %v3270 = vunpack.c.h.b16 %v901
    %v3271 = vunpack.c.l.b16 %v902
    %v3272 = vunpack.c.h.b16 %v902
    %v3273 = vunpack.c.l.b16 %v903
    %v3274 = vunpack.c.h.b16 %v903
    %v3275 = vunpack.c.l.b16 %v904
    %v3276 = vunpack.c.h.b16 %v904
    %v3277 = vunpack.c.l.b16 %v905
    %v3278 = vunpack.c.h.b16 %v905
    %v3279 = vunpack.c.l.b16 %v906
    %v3280 = vunpack.c.h.b16 %v906
    %v3281 = vunpack.c.l.b16 %v907
    %v3282 = vunpack.c.h.b16 %v907
    %v3283 = vunpack.c.l.b16 %v908
    %v3284 = vunpack.c.h.b16 %v908
    %v3285 = vunpack.c.l.b16 %v909
    %v3286 = vunpack.c.h.b16 %v909
    %v3287 = vunpack.c.l.b16 %v910
    %v3288 = vunpack.c.h.b16 %v910
    %v3289 = vunpack.c.l.b16 %v911
    %v3290 = vunpack.c.h.b16 %v911
    %v3291 = vunpack.c.l.b16 %v912
    %v3292 = vunpack.c.h.b16 %v912
    %v3293 = vunpack.c.l.b16 %v913
    %v3294 = vunpack.c.h.b16 %v913
    %v3295 = vunpack.c.l.b16 %v914
    %v3296 = vunpack.c.h.b16 %v914
    %v3297 = vunpack.c.l.b16 %v915
    %v3298 = vunpack.c.h.b16 %v915
    %v3299 = vunpack.c.l.b16 %v916
    %v3300 = vunpack.c.h.b16 %v916
    %v3301 = vunpack.c.l.b16 %v917
    %v3302 = vunpack.c.h.b16 %v917
    %v3303 = vunpack.c.l.b16 %v918
    %v3304 = vunpack.c.h.b16 %v918
    %v3305 = vunpack.c.l.b16 %v919
    %v3306 = vunpack.c.h.b16 %v919
    %v3307 = vunpack.c.l.b16 %v920
    %v3308 = vunpack.c.h.b16 %v920
    %v3309 = vpack.c.b16 %v1789, %v1773
    %v3310 = vpack.c.b16 %v1790, %v1774
    %v3311 = vpack.c.b16 %v1791, %v1775
    %v3312 = vpack.c.b16 %v1792, %v1776
    %v3313 = vpack.c.b16 %v1793, %v1777
    %v3314 = vpack.c.b16 %v1794, %v1778
    %v3315 = vpack.c.b16 %v1795, %v1779
    %v3316 = vpack.c.b16 %v1796, %v1780
    %v3317 = vpack.c.b16 %v1797, %v1781
    %v3318 = vpack.c.b16 %v1798, %v1782
    %v3319 = vpack.c.b16 %v1799, %v1783
    %v3320 = vpack.c.b16 %v1800, %v1784
    %v3321 = vpack.c.b16 %v1801, %v1785
    %v3322 = vpack.c.b16 %v1802, %v1786
    %v3323 = vpack.c.b16 %v1803, %v1787
    %v3324 = vpack.c.b16 %v1804, %v1788
    %v3325 = vpack.c.b16 %v1821, %v1805
    %v3326 = vpack.c.b16 %v1822, %v1806
    %v3327 = vpack.c.b16 %v1823, %v1807
    %v3328 = vpack.c.b16 %v1824, %v1808
    %v3329 = vpack.c.b16 %v1825, %v1809
    %v3330 = vpack.c.b16 %v1826, %v1810
    %v3331 = vpack.c.b16 %v1827, %v1811
    %v3332 = vpack.c.b16 %v1828, %v1812
    %v3333 = vpack.c.b16 %v1829, %v1813
    %v3334 = vpack.c.b16 %v1830, %v1814
    %v3335 = vpack.c.b16 %v1831, %v1815
    %v3336 = vpack.c.b16 %v1832, %v1816
    %v3337 = vpack.c.b16 %v1833, %v1817
    %v3338 = vpack.c.b16 %v1834, %v1818
    %v3339 = vpack.c.b16 %v1835, %v1819
    %v3340 = vpack.c.b16 %v1836, %v1820
    %v3341 = vpack.c.b16 %v1853, %v1837
    %v3342 = vpack.c.b16 %v1854, %v1838
    %v3343 = vpack.c.b16 %v1855, %v1839
    %v3344 = vpack.c.b16 %v1856, %v1840
    %v3345 = vpack.c.b16 %v1857, %v1841
    %v3346 = vpack.c.b16 %v1858, %v1842
    %v3347 = vpack.c.b16 %v1859, %v1843
    %v3348 = vpack.c.b16 %v1860, %v1844
    %v3349 = vpack.c.b16 %v1861, %v1845
    %v3350 = vpack.c.b16 %v1862, %v1846
    %v3351 = vpack.c.b16 %v1863, %v1847
    %v3352 = vpack.c.b16 %v1864, %v1848
    %v3353 = vpack.c.b16 %v1865, %v1849
    %v3354 = vpack.c.b16 %v1866, %v1850
    %v3355 = vpack.c.b16 %v1867, %v1851
    %v3356 = vpack.c.b16 %v1868, %v1852
    %v3357 = vpack.c.b16 %v1885, %v1869
    %v3358 = vpack.c.b16 %v1886, %v1870
    %v3359 = vpack.c.b16 %v1887, %v1871
    %v3360 = vpack.c.b16 %v1888, %v1872
    %v3361 = vpack.c.b16 %v1889, %v1873
    %v3362 = vpack.c.b16 %v1890, %v1874
    %v3363 = vpack.c.b16 %v1891, %v1875
    %v3364 = vpack.c.b16 %v1892, %v1876
    %v3365 = vpack.c.b16 %v1893, %v1877
    %v3366 = vpack.c.b16 %v1894, %v1878
    %v3367 = vpack.c.b16 %v1895, %v1879
    %v3368 = vpack.c.b16 %v1896, %v1880
    %v3369 = vpack.c.b16 %v1897, %v1881
    %v3370 = vpack.c.b16 %v1898, %v1882
    %v3371 = vpack.c.b16 %v1899, %v1883
    %v3372 = vpack.c.b16 %v1900, %v1884
    %v3373 = vpack.c.b16 %v1917, %v1901
    %v3374 = vpack.c.b16 %v1918, %v1902
    %v3375 = vpack.c.b16 %v1919, %v1903
    %v3376 = vpack.c.b16 %v1920, %v1904
    %v3377 = vpack.c.b16 %v1921, %v1905
    %v3378 = vpack.c.b16 %v1922, %v1906
    %v3379 = vpack.c.b16 %v1923, %v1907
    %v3380 = vpack.c.b16 %v1924, %v1908
    %v3381 = vpack.c.b16 %v1925, %v1909
    %v3382 = vpack.c.b16 %v1926, %v1910
    %v3383 = vpack.c.b16 %v1927, %v1911
    %v3384 = vpack.c.b16 %v1928, %v1912
    %v3385 = vpack.c.b16 %v1929, %v1913
    %v3386 = vpack.c.b16 %v1930, %v1914
    %v3387 = vpack.c.b16 %v1931, %v1915
    %v3388 = vpack.c.b16 %v1932, %v1916
    %v3389 = vpack.c.b16 %v1949, %v1933
    %v3390 = vpack.c.b16 %v1950, %v1934
    %v3391 = vpack.c.b16 %v1951, %v1935
    %v3392 = vpack.c.b16 %v1952, %v1936
    %v3393 = vpack.c.b16 %v1953, %v1937
    %v3394 = vpack.c.b16 %v1954, %v1938
    %v3395 = vpack.c.b16 %v1955, %v1939
    %v3396 = vpack.c.b16 %v1956, %v1940
    %v3397 = vpack.c.b16 %v1957, %v1941
    %v3398 = vpack.c.b16 %v1958, %v1942
    %v3399 = vpack.c.b16 %v1959, %v1943
    %v3400 = vpack.c.b16 %v1960, %v1944
    %v3401 = vpack.c.b16 %v1961, %v1945
    %v3402 = vpack.c.b16 %v1962, %v1946
    %v3403 = vpack.c.b16 %v1963, %v1947
    %v3404 = vpack.c.b16 %v1964, %v1948
    %v3405 = vpack.c.b16 %v1981, %v1965
    %v3406 = vpack.c.b16 %v1982, %v1966
    %v3407 = vpack.c.b16 %v1983, %v1967
    %v3408 = vpack.c.b16 %v1984, %v1968
    %v3409 = vpack.c.b16 %v1985, %v1969
    %v3410 = vpack.c.b16 %v1986, %v1970
    %v3411 = vpack.c.b16 %v1987, %v1971
    %v3412 = vpack.c.b16 %v1988, %v1972
    %v3413 = vpack.c.b16 %v1989, %v1973
    %v3414 = vpack.c.b16 %v1990, %v1974
    %v3415 = vpack.c.b16 %v1991, %v1975
    %v3416 = vpack.c.b16 %v1992, %v1976
    %v3417 = vpack.c.b16 %v1993, %v1977
    %v3418 = vpack.c.b16 %v1994, %v1978
    %v3419 = vpack.c.b16 %v1995, %v1979
    %v3420 = vpack.c.b16 %v1996, %v1980
    %v3421 = vpack.c.b16 %v2013, %v1997
    %v3422 = vpack.c.b16 %v2014, %v1998
    %v3423 = vpack.c.b16 %v2015, %v1999
    %v3424 = vpack.c.b16 %v2016, %v2000
    %v3425 = vpack.c.b16 %v2017, %v2001
    %v3426 = vpack.c.b16 %v2018, %v2002
    %v3427 = vpack.c.b16 %v2019, %v2003
    %v3428 = vpack.c.b16 %v2020, %v2004
    %v3429 = vpack.c.b16 %v2021, %v2005
    %v3430 = vpack.c.b16 %v2022, %v2006
    %v3431 = vpack.c.b16 %v2023, %v2007
    %v3432 = vpack.c.b16 %v2024, %v2008
    %v3433 = vpack.c.b16 %v2025, %v2009
    %v3434 = vpack.c.b16 %v2026, %v2010
    %v3435 = vpack.c.b16 %v2027, %v2011
    %v3436 = vpack.c.b16 %v2028, %v2012
    %v3437 = vpack.c.b16 %v2045, %v2029
    %v3438 = vpack.c.b16 %v2046, %v2030
    %v3439 = vpack.c.b16 %v2047, %v2031
    %v3440 = vpack.c.b16 %v2048, %v2032
    %v3441 = vpack.c.b16 %v2049, %v2033
    %v3442 = vpack.c.b16 %v2050, %v2034
    %v3443 = vpack.c.b16 %v2051, %v2035
    %v3444 = vpack.c.b16 %v2052, %v2036
    %v3445 = vpack.c.b16 %v2053, %v2037
    %v3446 = vpack.c.b16 %v2054, %v2038
    %v3447 = vpack.c.b16 %v2055, %v2039
    %v3448 = vpack.c.b16 %v2056, %v2040
    %v3449 = vpack.c.b16 %v2057, %v2041
    %v3450 = vpack.c.b16 %v2058, %v2042
    %v3451 = vpack.c.b16 %v2059, %v2043
    %v3452 = vpack.c.b16 %v2060, %v2044
    %v3453 = vpack.c.b16 %v2077, %v2061
    %v3454 = vpack.c.b16 %v2078, %v2062
    %v3455 = vpack.c.b16 %v2079, %v2063
    %v3456 = vpack.c.b16 %v2080, %v2064
    %v3457 = vpack.c.b16 %v2081, %v2065
    %v3458 = vpack.c.b16 %v2082, %v2066
    %v3459 = vpack.c.b16 %v2083, %v2067
    %v3460 = vpack.c.b16 %v2084, %v2068
    %v3461 = vpack.c.b16 %v2085, %v2069
    %v3462 = vpack.c.b16 %v2086, %v2070
    %v3463 = vpack.c.b16 %v2087, %v2071
    %v3464 = vpack.c.b16 %v2088, %v2072
    %v3465 = vpack.c.b16 %v2089, %v2073
    %v3466 = vpack.c.b16 %v2090, %v2074
    %v3467 = vpack.c.b16 %v2091, %v2075
    %v3468 = vpack.c.b16 %v2092, %v2076
    %v3469 = vpack.c.b16 %v2109, %v2093
    %v3470 = vpack.c.b16 %v2110, %v2094
    %v3471 = vpack.c.b16 %v2111, %v2095
    %v3472 = vpack.c.b16 %v2112, %v2096
    %v3473 = vpack.c.b16 %v2113, %v2097
    %v3474 = vpack.c.b16 %v2114, %v2098
    %v3475 = vpack.c.b16 %v2115, %v2099
    %v3476 = vpack.c.b16 %v2116, %v2100
    %v3477 = vpack.c.b16 %v2117, %v2101
    %v3478 = vpack.c.b16 %v2118, %v2102
    %v3479 = vpack.c.b16 %v2119, %v2103
    %v3480 = vpack.c.b16 %v2120, %v2104
    %v3481 = vpack.c.b16 %v2121, %v2105
    %v3482 = vpack.c.b16 %v2122, %v2106
    %v3483 = vpack.c.b16 %v2123, %v2107
    %v3484 = vpack.c.b16 %v2124, %v2108
    %v3485 = vpack.c.b16 %v2141, %v2125
    %v3486 = vpack.c.b16 %v2142, %v2126
    %v3487 = vpack.c.b16 %v2143, %v2127
    %v3488 = vpack.c.b16 %v2144, %v2128
    %v3489 = vpack.c.b16 %v2145, %v2129
    %v3490 = vpack.c.b16 %v2146, %v2130
    %v3491 = vpack.c.b16 %v2147, %v2131
    %v3492 = vpack.c.b16 %v2148, %v2132
    %v3493 = vpack.c.b16 %v2149, %v2133
    %v3494 = vpack.c.b16 %v2150, %v2134
    %v3495 = vpack.c.b16 %v2151, %v2135
    %v3496 = vpack.c.b16 %v2152, %v2136
    %v3497 = vpack.c.b16 %v2153, %v2137
    %v3498 = vpack.c.b16 %v2154, %v2138
    %v3499 = vpack.c.b16 %v2155, %v2139
    %v3500 = vpack.c.b16 %v2156, %v2140
    %v3501 = vpack.c.b16 %v2173, %v2157
    %v3502 = vpack.c.b16 %v2174, %v2158
    %v3503 = vpack.c.b16 %v2175, %v2159
    %v3504 = vpack.c.b16 %v2176, %v2160
    %v3505 = vpack.c.b16 %v2177, %v2161
    %v3506 = vpack.c.b16 %v2178, %v2162
    %v3507 = vpack.c.b16 %v2179, %v2163
    %v3508 = vpack.c.b16 %v2180, %v2164
    %v3509 = vpack.c.b16 %v2181, %v2165
    %v3510 = vpack.c.b16 %v2182, %v2166
    %v3511 = vpack.c.b16 %v2183, %v2167
    %v3512 = vpack.c.b16 %v2184, %v2168
    %v3513 = vpack.c.b16 %v2185, %v2169
    %v3514 = vpack.c.b16 %v2186, %v2170
    %v3515 = vpack.c.b16 %v2187, %v2171
    %v3516 = vpack.c.b16 %v2188, %v2172
    %v3517 = vpack.c.b16 %v2205, %v2189
    %v3518 = vpack.c.b16 %v2206, %v2190
    %v3519 = vpack.c.b16 %v2207, %v2191
    %v3520 = vpack.c.b16 %v2208, %v2192
    %v3521 = vpack.c.b16 %v2209, %v2193
    %v3522 = vpack.c.b16 %v2210, %v2194
    %v3523 = vpack.c.b16 %v2211, %v2195
    %v3524 = vpack.c.b16 %v2212, %v2196
    %v3525 = vpack.c.b16 %v2213, %v2197
    %v3526 = vpack.c.b16 %v2214, %v2198
    %v3527 = vpack.c.b16 %v2215, %v2199
    %v3528 = vpack.c.b16 %v2216, %v2200
    %v3529 = vpack.c.b16 %v2217, %v2201
    %v3530 = vpack.c.b16 %v2218, %v2202
    %v3531 = vpack.c.b16 %v2219, %v2203
    %v3532 = vpack.c.b16 %v2220, %v2204
    %v3533 = vpack.c.b16 %v2237, %v2221
    %v3534 = vpack.c.b16 %v2238, %v2222
    %v3535 = vpack.c.b16 %v2239, %v2223
    %v3536 = vpack.c.b16 %v2240, %v2224
    %v3537 = vpack.c.b16 %v2241, %v2225
    %v3538 = vpack.c.b16 %v2242, %v2226
    %v3539 = vpack.c.b16 %v2243, %v2227
    %v3540 = vpack.c.b16 %v2244, %v2228
    %v3541 = vpack.c.b16 %v2245, %v2229
    %v3542 = vpack.c.b16 %v2246, %v2230
    %v3543 = vpack.c.b16 %v2247, %v2231
    %v3544 = vpack.c.b16 %v2248, %v2232
    %v3545 = vpack.c.b16 %v2249, %v2233
    %v3546 = vpack.c.b16 %v2250, %v2234
    %v3547 = vpack.c.b16 %v2251, %v2235
    %v3548 = vpack.c.b16 %v2252, %v2236
    %v3549 = vpack.c.b16 %v2269, %v2253
    %v3550 = vpack.c.b16 %v2270, %v2254
    %v3551 = vpack.c.b16 %v2271, %v2255
    %v3552 = vpack.c.b16 %v2272, %v2256
    %v3553 = vpack.c.b16 %v2273, %v2257
    %v3554 = vpack.c.b16 %v2274, %v2258
    %v3555 = vpack.c.b16 %v2275, %v2259
    %v3556 = vpack.c.b16 %v2276, %v2260
    %v3557 = vpack.c.b16 %v2277, %v2261
    %v3558 = vpack.c.b16 %v2278, %v2262
    %v3559 = vpack.c.b16 %v2279, %v2263
    %v3560 = vpack.c.b16 %v2280, %v2264
    %v3561 = vpack.c.b16 %v2281, %v2265
    %v3562 = vpack.c.b16 %v2282, %v2266
    %v3563 = vpack.c.b16 %v2283, %v2267
    %v3564 = vpack.c.b16 %v2284, %v2268
    %v3565 = vpack.c.b16 %v2301, %v2285
    %v3566 = vpack.c.b16 %v2302, %v2286
    %v3567 = vpack.c.b16 %v2303, %v2287
    %v3568 = vpack.c.b16 %v2304, %v2288
    %v3569 = vpack.c.b16 %v2305, %v2289
    %v3570 = vpack.c.b16 %v2306, %v2290
    %v3571 = vpack.c.b16 %v2307, %v2291
    %v3572 = vpack.c.b16 %v2308, %v2292
    %v3573 = vpack.c.b16 %v2309, %v2293
    %v3574 = vpack.c.b16 %v2310, %v2294
    %v3575 = vpack.c.b16 %v2311, %v2295
    %v3576 = vpack.c.b16 %v2312, %v2296
    %v3577 = vpack.c.b16 %v2313, %v2297
    %v3578 = vpack.c.b16 %v2314, %v2298
    %v3579 = vpack.c.b16 %v2315, %v2299
    %v3580 = vpack.c.b16 %v2316, %v2300
    %v3581 = vpack.c.b16 %v2333, %v2317
    %v3582 = vpack.c.b16 %v2334, %v2318
    %v3583 = vpack.c.b16 %v2335, %v2319
    %v3584 = vpack.c.b16 %v2336, %v2320
    %v3585 = vpack.c.b16 %v2337, %v2321
    %v3586 = vpack.c.b16 %v2338, %v2322
    %v3587 = vpack.c.b16 %v2339, %v2323
    %v3588 = vpack.c.b16 %v2340, %v2324
    %v3589 = vpack.c.b16 %v2341, %v2325
    %v3590 = vpack.c.b16 %v2342, %v2326
    %v3591 = vpack.c.b16 %v2343, %v2327
    %v3592 = vpack.c.b16 %v2344, %v2328
    %v3593 = vpack.c.b16 %v2345, %v2329
    %v3594 = vpack.c.b16 %v2346, %v2330
    %v3595 = vpack.c.b16 %v2347, %v2331
    %v3596 = vpack.c.b16 %v2348, %v2332
    %v3597 = vpack.c.b16 %v2365, %v2349
    %v3598 = vpack.c.b16 %v2366, %v2350
    %v3599 = vpack.c.b16 %v2367, %v2351
    %v3600 = vpack.c.b16 %v2368, %v2352
    %v3601 = vpack.c.b16 %v2369, %v2353
    %v3602 = vpack.c.b16 %v2370, %v2354
    %v3603 = vpack.c.b16 %v2371, %v2355
    %v3604 = vpack.c.b16 %v2372, %v2356
    %v3605 = vpack.c.b16 %v2373, %v2357
    %v3606 = vpack.c.b16 %v2374, %v2358
    %v3607 = vpack.c.b16 %v2375, %v2359
    %v3608 = vpack.c.b16 %v2376, %v2360
    %v3609 = vpack.c.b16 %v2377, %v2361
    %v3610 = vpack.c.b16 %v2378, %v2362
    %v3611 = vpack.c.b16 %v2379, %v2363
    %v3612 = vpack.c.b16 %v2380, %v2364
    %v3613 = vpack.c.b16 %v2397, %v2381
    %v3614 = vpack.c.b16 %v2398, %v2382
    %v3615 = vpack.c.b16 %v2399, %v2383
    %v3616 = vpack.c.b16 %v2400, %v2384
    %v3617 = vpack.c.b16 %v2401, %v2385
    %v3618 = vpack.c.b16 %v2402, %v2386
    %v3619 = vpack.c.b16 %v2403, %v2387
    %v3620 = vpack.c.b16 %v2404, %v2388
    %v3621 = vpack.c.b16 %v2405, %v2389
    %v3622 = vpack.c.b16 %v2406, %v2390
    %v3623 = vpack.c.b16 %v2407, %v2391
    %v3624 = vpack.c.b16 %v2408, %v2392
    %v3625 = vpack.c.b16 %v2409, %v2393
    %v3626 = vpack.c.b16 %v2410, %v2394
    %v3627 = vpack.c.b16 %v2411, %v2395
    %v3628 = vpack.c.b16 %v2412, %v2396
    %v3629 = vpack.c.b16 %v2429, %v2413
    %v3630 = vpack.c.b16 %v2430, %v2414
    %v3631 = vpack.c.b16 %v2431, %v2415
    %v3632 = vpack.c.b16 %v2432, %v2416
    %v3633 = vpack.c.b16 %v2433, %v2417
    %v3634 = vpack.c.b16 %v2434, %v2418
    %v3635 = vpack.c.b16 %v2435, %v2419
    %v3636 = vpack.c.b16 %v2436, %v2420
    %v3637 = vpack.c.b16 %v2437, %v2421
    %v3638 = vpack.c.b16 %v2438, %v2422
    %v3639 = vpack.c.b16 %v2439, %v2423
    %v3640 = vpack.c.b16 %v2440, %v2424
    %v3641 = vpack.c.b16 %v2441, %v2425
    %v3642 = vpack.c.b16 %v2442, %v2426
    %v3643 = vpack.c.b16 %v2443, %v2427
    %v3644 = vpack.c.b16 %v2444, %v2428
    %v3645 = vpack.c.b16 %v2461, %v2445
    %v3646 = vpack.c.b16 %v2462, %v2446
    %v3647 = vpack.c.b16 %v2463, %v2447
    %v3648 = vpack.c.b16 %v2464, %v2448
    %v3649 = vpack.c.b16 %v2465, %v2449
    %v3650 = vpack.c.b16 %v2466, %v2450
    %v3651 = vpack.c.b16 %v2467, %v2451
    %v3652 = vpack.c.b16 %v2468, %v2452
    %v3653 = vpack.c.b16 %v2469, %v2453
    %v3654 = vpack.c.b16 %v2470, %v2454
    %v3655 = vpack.c.b16 %v2471, %v2455
    %v3656 = vpack.c.b16 %v2472, %v2456
    %v3657 = vpack.c.b16 %v2473, %v2457
    %v3658 = vpack.c.b16 %v2474, %v2458
    %v3659 = vpack.c.b16 %v2475, %v2459
    %v3660 = vpack.c.b16 %v2476, %v2460
    %v3661 = vpack.c.b16 %v2493, %v2477
    %v3662 = vpack.c.b16 %v2494, %v2478
    %v3663 = vpack.c.b16 %v2495, %v2479
    %v3664 = vpack.c.b16 %v2496, %v2480
    %v3665 = vpack.c.b16 %v2497, %v2481
    %v3666 = vpack.c.b16 %v2498, %v2482
    %v3667 = vpack.c.b16 %v2499, %v2483
    %v3668 = vpack.c.b16 %v2500, %v2484
    %v3669 = vpack.c.b16 %v2501, %v2485
    %v3670 = vpack.c.b16 %v2502, %v2486
    %v3671 = vpack.c.b16 %v2503, %v2487
    %v3672 = vpack.c.b16 %v2504, %v2488
    %v3673 = vpack.c.b16 %v2505, %v2489
    %v3674 = vpack.c.b16 %v2506, %v2490
    %v3675 = vpack.c.b16 %v2507, %v2491
    %v3676 = vpack.c.b16 %v2508, %v2492
    %v3677 = vpack.c.b16 %v2525, %v2509
    %v3678 = vpack.c.b16 %v2526, %v2510
    %v3679 = vpack.c.b16 %v2527, %v2511
    %v3680 = vpack.c.b16 %v2528, %v2512
    %v3681 = vpack.c.b16 %v2529, %v2513
    %v3682 = vpack.c.b16 %v2530, %v2514
    %v3683 = vpack.c.b16 %v2531, %v2515
    %v3684 = vpack.c.b16 %v2532, %v2516
    %v3685 = vpack.c.b16 %v2533, %v2517
    %v3686 = vpack.c.b16 %v2534, %v2518
    %v3687 = vpack.c.b16 %v2535, %v2519
    %v3688 = vpack.c.b16 %v2536, %v2520
    %v3689 = vpack.c.b16 %v2537, %v2521
    %v3690 = vpack.c.b16 %v2538, %v2522
    %v3691 = vpack.c.b16 %v2539, %v2523
    %v3692 = vpack.c.b16 %v2540, %v2524
    %v3693 = vpack.c.b16 %v2557, %v2541
    %v3694 = vpack.c.b16 %v2558, %v2542
    %v3695 = vpack.c.b16 %v2559, %v2543
    %v3696 = vpack.c.b16 %v2560, %v2544
    %v3697 = vpack.c.b16 %v2561, %v2545
    %v3698 = vpack.c.b16 %v2562, %v2546
    %v3699 = vpack.c.b16 %v2563, %v2547
    %v3700 = vpack.c.b16 %v2564, %v2548
    %v3701 = vpack.c.b16 %v2565, %v2549
    %v3702 = vpack.c.b16 %v2566, %v2550
    %v3703 = vpack.c.b16 %v2567, %v2551
    %v3704 = vpack.c.b16 %v2568, %v2552
    %v3705 = vpack.c.b16 %v2569, %v2553
    %v3706 = vpack.c.b16 %v2570, %v2554
    %v3707 = vpack.c.b16 %v2571, %v2555
    %v3708 = vpack.c.b16 %v2572, %v2556
    %v3709 = vpack.c.b16 %v2589, %v2573
    %v3710 = vpack.c.b16 %v2590, %v2574
    %v3711 = vpack.c.b16 %v2591, %v2575
    %v3712 = vpack.c.b16 %v2592, %v2576
    %v3713 = vpack.c.b16 %v2593, %v2577
    %v3714 = vpack.c.b16 %v2594, %v2578
    %v3715 = vpack.c.b16 %v2595, %v2579
    %v3716 = vpack.c.b16 %v2596, %v2580
    %v3717 = vpack.c.b16 %v2597, %v2581
    %v3718 = vpack.c.b16 %v2598, %v2582
    %v3719 = vpack.c.b16 %v2599, %v2583
    %v3720 = vpack.c.b16 %v2600, %v2584
    %v3721 = vpack.c.b16 %v2601, %v2585
    %v3722 = vpack.c.b16 %v2602, %v2586
    %v3723 = vpack.c.b16 %v2603, %v2587
    %v3724 = vpack.c.b16 %v2604, %v2588
    %v3725 = vpack.c.b16 %v2621, %v2605
    %v3726 = vpack.c.b16 %v2622, %v2606
    %v3727 = vpack.c.b16 %v2623, %v2607
    %v3728 = vpack.c.b16 %v2624, %v2608
    %v3729 = vpack.c.b16 %v2625, %v2609
    %v3730 = vpack.c.b16 %v2626, %v2610
    %v3731 = vpack.c.b16 %v2627, %v2611
    %v3732 = vpack.c.b16 %v2628, %v2612
    %v3733 = vpack.c.b16 %v2629, %v2613
    %v3734 = vpack.c.b16 %v2630, %v2614
    %v3735 = vpack.c.b16 %v2631, %v2615
    %v3736 = vpack.c.b16 %v2632, %v2616
    %v3737 = vpack.c.b16 %v2633, %v2617
    %v3738 = vpack.c.b16 %v2634, %v2618
    %v3739 = vpack.c.b16 %v2635, %v2619
    %v3740 = vpack.c.b16 %v2636, %v2620
    %v3741 = vpack.c.b16 %v2653, %v2637
    %v3742 = vpack.c.b16 %v2654, %v2638
    %v3743 = vpack.c.b16 %v2655, %v2639
    %v3744 = vpack.c.b16 %v2656, %v2640
    %v3745 = vpack.c.b16 %v2657, %v2641
    %v3746 = vpack.c.b16 %v2658, %v2642
    %v3747 = vpack.c.b16 %v2659, %v2643
    %v3748 = vpack.c.b16 %v2660, %v2644
    %v3749 = vpack.c.b16 %v2661, %v2645
    %v3750 = vpack.c.b16 %v2662, %v2646
    %v3751 = vpack.c.b16 %v2663, %v2647
    %v3752 = vpack.c.b16 %v2664, %v2648
    %v3753 = vpack.c.b16 %v2665, %v2649
    %v3754 = vpack.c.b16 %v2666, %v2650
    %v3755 = vpack.c.b16 %v2667, %v2651
    %v3756 = vpack.c.b16 %v2668, %v2652
    %v3757 = vpack.c.b16 %v2685, %v2669
    %v3758 = vpack.c.b16 %v2686, %v2670
    %v3759 = vpack.c.b16 %v2687, %v2671
    %v3760 = vpack.c.b16 %v2688, %v2672
    %v3761 = vpack.c.b16 %v2689, %v2673
    %v3762 = vpack.c.b16 %v2690, %v2674
    %v3763 = vpack.c.b16 %v2691, %v2675
    %v3764 = vpack.c.b16 %v2692, %v2676
    %v3765 = vpack.c.b16 %v2693, %v2677
    %v3766 = vpack.c.b16 %v2694, %v2678
    %v3767 = vpack.c.b16 %v2695, %v2679
    %v3768 = vpack.c.b16 %v2696, %v2680
    %v3769 = vpack.c.b16 %v2697, %v2681
    %v3770 = vpack.c.b16 %v2698, %v2682
    %v3771 = vpack.c.b16 %v2699, %v2683
    %v3772 = vpack.c.b16 %v2700, %v2684
    %v3773 = vpack.c.b16 %v2717, %v2701
    %v3774 = vpack.c.b16 %v2718, %v2702
    %v3775 = vpack.c.b16 %v2719, %v2703
    %v3776 = vpack.c.b16 %v2720, %v2704
    %v3777 = vpack.c.b16 %v2721, %v2705
    %v3778 = vpack.c.b16 %v2722, %v2706
    %v3779 = vpack.c.b16 %v2723, %v2707
    %v3780 = vpack.c.b16 %v2724, %v2708
    %v3781 = vpack.c.b16 %v2725, %v2709
    %v3782 = vpack.c.b16 %v2726, %v2710
    %v3783 = vpack.c.b16 %v2727, %v2711
    %v3784 = vpack.c.b16 %v2728, %v2712
    %v3785 = vpack.c.b16 %v2729, %v2713
    %v3786 = vpack.c.b16 %v2730, %v2714
    %v3787 = vpack.c.b16 %v2731, %v2715
    %v3788 = vpack.c.b16 %v2732, %v2716
    %v3789 = vpack.c.b16 %v2749, %v2733
    %v3790 = vpack.c.b16 %v2750, %v2734
    %v3791 = vpack.c.b16 %v2751, %v2735
    %v3792 = vpack.c.b16 %v2752, %v2736
    %v3793 = vpack.c.b16 %v2753, %v2737
    %v3794 = vpack.c.b16 %v2754, %v2738
    %v3795 = vpack.c.b16 %v2755, %v2739
    %v3796 = vpack.c.b16 %v2756, %v2740
    %v3797 = vpack.c.b16 %v2757, %v2741
    %v3798 = vpack.c.b16 %v2758, %v2742
    %v3799 = vpack.c.b16 %v2759, %v2743
    %v3800 = vpack.c.b16 %v2760, %v2744
    %v3801 = vpack.c.b16 %v2761, %v2745
    %v3802 = vpack.c.b16 %v2762, %v2746
    %v3803 = vpack.c.b16 %v2763, %v2747
    %v3804 = vpack.c.b16 %v2764, %v2748
    %v3805 = vpack.c.b16 %v2781, %v2765
    %v3806 = vpack.c.b16 %v2782, %v2766
    %v3807 = vpack.c.b16 %v2783, %v2767
    %v3808 = vpack.c.b16 %v2784, %v2768
    %v3809 = vpack.c.b16 %v2785, %v2769
    %v3810 = vpack.c.b16 %v2786, %v2770
    %v3811 = vpack.c.b16 %v2787, %v2771
    %v3812 = vpack.c.b16 %v2788, %v2772
    %v3813 = vpack.c.b16 %v2789, %v2773
    %v3814 = vpack.c.b16 %v2790, %v2774
    %v3815 = vpack.c.b16 %v2791, %v2775
    %v3816 = vpack.c.b16 %v2792, %v2776
    %v3817 = vpack.c.b16 %v2793, %v2777
    %v3818 = vpack.c.b16 %v2794, %v2778
    %v3819 = vpack.c.b16 %v2795, %v2779
    %v3820 = vpack.c.b16 %v2796, %v2780
    %v3821 = vpack.c.b16 %v2813, %v2797
    %v3822 = vpack.c.b16 %v2814, %v2798
    %v3823 = vpack.c.b16 %v2815, %v2799
    %v3824 = vpack.c.b16 %v2816, %v2800
    %v3825 = vpack.c.b16 %v2817, %v2801
    %v3826 = vpack.c.b16 %v2818, %v2802
    %v3827 = vpack.c.b16 %v2819, %v2803
    %v3828 = vpack.c.b16 %v2820, %v2804
    %v3829 = vpack.c.b16 %v2821, %v2805
    %v3830 = vpack.c.b16 %v2822, %v2806
    %v3831 = vpack.c.b16 %v2823, %v2807
    %v3832 = vpack.c.b16 %v2824, %v2808
    %v3833 = vpack.c.b16 %v2825, %v2809
    %v3834 = vpack.c.b16 %v2826, %v2810
    %v3835 = vpack.c.b16 %v2827, %v2811
    %v3836 = vpack.c.b16 %v2828, %v2812
    %v3837 = vpack.c.b16 %v2845, %v2829
    %v3838 = vpack.c.b16 %v2846, %v2830
    %v3839 = vpack.c.b16 %v2847, %v2831
    %v3840 = vpack.c.b16 %v2848, %v2832
    %v3841 = vpack.c.b16 %v2849, %v2833
    %v3842 = vpack.c.b16 %v2850, %v2834
    %v3843 = vpack.c.b16 %v2851, %v2835
    %v3844 = vpack.c.b16 %v2852, %v2836
    %v3845 = vpack.c.b16 %v2853, %v2837
    %v3846 = vpack.c.b16 %v2854, %v2838
    %v3847 = vpack.c.b16 %v2855, %v2839
    %v3848 = vpack.c.b16 %v2856, %v2840
    %v3849 = vpack.c.b16 %v2857, %v2841
    %v3850 = vpack.c.b16 %v2858, %v2842
    %v3851 = vpack.c.b16 %v2859, %v2843
    %v3852 = vpack.c.b16 %v2860, %v2844
    %v3853 = vpack.c.b16 %v2877, %v2861
    %v3854 = vpack.c.b16 %v2878, %v2862
    %v3855 = vpack.c.b16 %v2879, %v2863
    %v3856 = vpack.c.b16 %v2880, %v2864
    %v3857 = vpack.c.b16 %v2881, %v2865
    %v3858 = vpack.c.b16 %v2882, %v2866
    %v3859 = vpack.c.b16 %v2883, %v2867
    %v3860 = vpack.c.b16 %v2884, %v2868
    %v3861 = vpack.c.b16 %v2885, %v2869
    %v3862 = vpack.c.b16 %v2886, %v2870
    %v3863 = vpack.c.b16 %v2887, %v2871
    %v3864 = vpack.c.b16 %v2888, %v2872
    %v3865 = vpack.c.b16 %v2889, %v2873
    %v3866 = vpack.c.b16 %v2890, %v2874
    %v3867 = vpack.c.b16 %v2891, %v2875
    %v3868 = vpack.c.b16 %v2892, %v2876
    %v3869 = vpack.c.b16 %v2909, %v2893
    %v3870 = vpack.c.b16 %v2910, %v2894
    %v3871 = vpack.c.b16 %v2911, %v2895
    %v3872 = vpack.c.b16 %v2912, %v2896
    %v3873 = vpack.c.b16 %v2913, %v2897
    %v3874 = vpack.c.b16 %v2914, %v2898
    %v3875 = vpack.c.b16 %v2915, %v2899
    %v3876 = vpack.c.b16 %v2916, %v2900
    %v3877 = vpack.c.b16 %v2917, %v2901
    %v3878 = vpack.c.b16 %v2918, %v2902
    %v3879 = vpack.c.b16 %v2919, %v2903
    %v3880 = vpack.c.b16 %v2920, %v2904
    %v3881 = vpack.c.b16 %v2921, %v2905
    %v3882 = vpack.c.b16 %v2922, %v2906
    %v3883 = vpack.c.b16 %v2923, %v2907
    %v3884 = vpack.c.b16 %v2924, %v2908
    %v3885 = vpack.c.b16 %v2941, %v2925
    %v3886 = vpack.c.b16 %v2942, %v2926
    %v3887 = vpack.c.b16 %v2943, %v2927
    %v3888 = vpack.c.b16 %v2944, %v2928
    %v3889 = vpack.c.b16 %v2945, %v2929
    %v3890 = vpack.c.b16 %v2946, %v2930
    %v3891 = vpack.c.b16 %v2947, %v2931
    %v3892 = vpack.c.b16 %v2948, %v2932
    %v3893 = vpack.c.b16 %v2949, %v2933
    %v3894 = vpack.c.b16 %v2950, %v2934
    %v3895 = vpack.c.b16 %v2951, %v2935
    %v3896 = vpack.c.b16 %v2952, %v2936
    %v3897 = vpack.c.b16 %v2953, %v2937
    %v3898 = vpack.c.b16 %v2954, %v2938
    %v3899 = vpack.c.b16 %v2955, %v2939
    %v3900 = vpack.c.b16 %v2956, %v2940
    %v3901 = vpack.c.b16 %v2973, %v2957
    %v3902 = vpack.c.b16 %v2974, %v2958
    %v3903 = vpack.c.b16 %v2975, %v2959
    %v3904 = vpack.c.b16 %v2976, %v2960
    %v3905 = vpack.c.b16 %v2977, %v2961
    %v3906 = vpack.c.b16 %v2978, %v2962
    %v3907 = vpack.c.b16 %v2979, %v2963
    %v3908 = vpack.c.b16 %v2980, %v2964
    %v3909 = vpack.c.b16 %v2981, %v2965
    %v3910 = vpack.c.b16 %v2982, %v2966
    %v3911 = vpack.c.b16 %v2983, %v2967
    %v3912 = vpack.c.b16 %v2984, %v2968
    %v3913 = vpack.c.b16 %v2985, %v2969
    %v3914 = vpack.c.b16 %v2986, %v2970
    %v3915 = vpack.c.b16 %v2987, %v2971
    %v3916 = vpack.c.b16 %v2988, %v2972
    %v3917 = vpack.c.b16 %v3005, %v2989
    %v3918 = vpack.c.b16 %v3006, %v2990
    %v3919 = vpack.c.b16 %v3007, %v2991
    %v3920 = vpack.c.b16 %v3008, %v2992
    %v3921 = vpack.c.b16 %v3009, %v2993
    %v3922 = vpack.c.b16 %v3010, %v2994
    %v3923 = vpack.c.b16 %v3011, %v2995
    %v3924 = vpack.c.b16 %v3012, %v2996
    %v3925 = vpack.c.b16 %v3013, %v2997
    %v3926 = vpack.c.b16 %v3014, %v2998
    %v3927 = vpack.c.b16 %v3015, %v2999
    %v3928 = vpack.c.b16 %v3016, %v3000
    %v3929 = vpack.c.b16 %v3017, %v3001
    %v3930 = vpack.c.b16 %v3018, %v3002
    %v3931 = vpack.c.b16 %v3019, %v3003
    %v3932 = vpack.c.b16 %v3020, %v3004
    %v3933 = vpack.c.b16 %v3037, %v3021
    %v3934 = vpack.c.b16 %v3038, %v3022
    %v3935 = vpack.c.b16 %v3039, %v3023
    %v3936 = vpack.c.b16 %v3040, %v3024
    %v3937 = vpack.c.b16 %v3041, %v3025
    %v3938 = vpack.c.b16 %v3042, %v3026
    %v3939 = vpack.c.b16 %v3043, %v3027
    %v3940 = vpack.c.b16 %v3044, %v3028
    %v3941 = vpack.c.b16 %v3045, %v3029
    %v3942 = vpack.c.b16 %v3046, %v3030
    %v3943 = vpack.c.b16 %v3047, %v3031
    %v3944 = vpack.c.b16 %v3048, %v3032
    %v3945 = vpack.c.b16 %v3049, %v3033
    %v3946 = vpack.c.b16 %v3050, %v3034
    %v3947 = vpack.c.b16 %v3051, %v3035
    %v3948 = vpack.c.b16 %v3052, %v3036
    %v3949 = vpack.c.b16 %v3069, %v3053
    %v3950 = vpack.c.b16 %v3070, %v3054
    %v3951 = vpack.c.b16 %v3071, %v3055
    %v3952 = vpack.c.b16 %v3072, %v3056
    %v3953 = vpack.c.b16 %v3073, %v3057
    %v3954 = vpack.c.b16 %v3074, %v3058
    %v3955 = vpack.c.b16 %v3075, %v3059
    %v3956 = vpack.c.b16 %v3076, %v3060
    %v3957 = vpack.c.b16 %v3077, %v3061
    %v3958 = vpack.c.b16 %v3078, %v3062
    %v3959 = vpack.c.b16 %v3079, %v3063
    %v3960 = vpack.c.b16 %v3080, %v3064
    %v3961 = vpack.c.b16 %v3081, %v3065
    %v3962 = vpack.c.b16 %v3082, %v3066
    %v3963 = vpack.c.b16 %v3083, %v3067
    %v3964 = vpack.c.b16 %v3084, %v3068
    %v3965 = vpack.c.b16 %v3101, %v3085
    %v3966 = vpack.c.b16 %v3102, %v3086
    %v3967 = vpack.c.b16 %v3103, %v3087
    %v3968 = vpack.c.b16 %v3104, %v3088
    %v3969 = vpack.c.b16 %v3105, %v3089
    %v3970 = vpack.c.b16 %v3106, %v3090
    %v3971 = vpack.c.b16 %v3107, %v3091
    %v3972 = vpack.c.b16 %v3108, %v3092
    %v3973 = vpack.c.b16 %v3109, %v3093
    %v3974 = vpack.c.b16 %v3110, %v3094
    %v3975 = vpack.c.b16 %v3111, %v3095
    %v3976 = vpack.c.b16 %v3112, %v3096
    %v3977 = vpack.c.b16 %v3113, %v3097
    %v3978 = vpack.c.b16 %v3114, %v3098
    %v3979 = vpack.c.b16 %v3115, %v3099
    %v3980 = vpack.c.b16 %v3116, %v3100
    %v3981 = vpack.c.b16 %v3133, %v3117
    %v3982 = vpack.c.b16 %v3134, %v3118
    %v3983 = vpack.c.b16 %v3135, %v3119
    %v3984 = vpack.c.b16 %v3136, %v3120
    %v3985 = vpack.c.b16 %v3137, %v3121
    %v3986 = vpack.c.b16 %v3138, %v3122
    %v3987 = vpack.c.b16 %v3139, %v3123
    %v3988 = vpack.c.b16 %v3140, %v3124
    %v3989 = vpack.c.b16 %v3141, %v3125
    %v3990 = vpack.c.b16 %v3142, %v3126
    %v3991 = vpack.c.b16 %v3143, %v3127
    %v3992 = vpack.c.b16 %v3144, %v3128
    %v3993 = vpack.c.b16 %v3145, %v3129
    %v3994 = vpack.c.b16 %v3146, %v3130
    %v3995 = vpack.c.b16 %v3147, %v3131
    %v3996 = vpack.c.b16 %v3148, %v3132
    %v3997 = vpack.c.b16 %v3165, %v3149
    %v3998 = vpack.c.b16 %v3166, %v3150
    %v3999 = vpack.c.b16 %v3167, %v3151
    %v4000 = vpack.c.b16 %v3168, %v3152
    %v4001 = vpack.c.b16 %v3169, %v3153
    %v4002 = vpack.c.b16 %v3170, %v3154
    %v4003 = vpack.c.b16 %v3171, %v3155
    %v4004 = vpack.c.b16 %v3172, %v3156
    %v4005 = vpack.c.b16 %v3173, %v3157
    %v4006 = vpack.c.b16 %v3174, %v3158
    %v4007 = vpack.c.b16 %v3175, %v3159
    %v4008 = vpack.c.b16 %v3176, %v3160
    %v4009 = vpack.c.b16 %v3177, %v3161
    %v4010 = vpack.c.b16 %v3178, %v3162
    %v4011 = vpack.c.b16 %v3179, %v3163
    %v4012 = vpack.c.b16 %v3180, %v3164
    %v4013 = vpack.c.b16 %v3197, %v3181
    %v4014 = vpack.c.b16 %v3198, %v3182
    %v4015 = vpack.c.b16 %v3199, %v3183
    %v4016 = vpack.c.b16 %v3200, %v3184
    %v4017 = vpack.c.b16 %v3201, %v3185
    %v4018 = vpack.c.b16 %v3202, %v3186
    %v4019 = vpack.c.b16 %v3203, %v3187
    %v4020 = vpack.c.b16 %v3204, %v3188
    %v4021 = vpack.c.b16 %v3205, %v3189
    %v4022 = vpack.c.b16 %v3206, %v3190
    %v4023 = vpack.c.b16 %v3207, %v3191
    %v4024 = vpack.c.b16 %v3208, %v3192
    %v4025 = vpack.c.b16 %v3209, %v3193
    %v4026 = vpack.c.b16 %v3210, %v3194
    %v4027 = vpack.c.b16 %v3211, %v3195
    %v4028 = vpack.c.b16 %v3212, %v3196
    %v4029 = vpack.c.b16 %v3229, %v3213
    %v4030 = vpack.c.b16 %v3230, %v3214
    %v4031 = vpack.c.b16 %v3231, %v3215
    %v4032 = vpack.c.b16 %v3232, %v3216
    %v4033 = vpack.c.b16 %v3233, %v3217
    %v4034 = vpack.c.b16 %v3234, %v3218
    %v4035 = vpack.c.b16 %v3235, %v3219
    %v4036 = vpack.c.b16 %v3236, %v3220
    %v4037 = vpack.c.b16 %v3237, %v3221
    %v4038 = vpack.c.b16 %v3238, %v3222
    %v4039 = vpack.c.b16 %v3239, %v3223
    %v4040 = vpack.c.b16 %v3240, %v3224
    %v4041 = vpack.c.b16 %v3241, %v3225
    %v4042 = vpack.c.b16 %v3242, %v3226
    %v4043 = vpack.c.b16 %v3243, %v3227
    %v4044 = vpack.c.b16 %v3244, %v3228
    %v4045 = vpack.c.b16 %v3261, %v3245
    %v4046 = vpack.c.b16 %v3262, %v3246
    %v4047 = vpack.c.b16 %v3263, %v3247
    %v4048 = vpack.c.b16 %v3264, %v3248
    %v4049 = vpack.c.b16 %v3265, %v3249
    %v4050 = vpack.c.b16 %v3266, %v3250
    %v4051 = vpack.c.b16 %v3267, %v3251
    %v4052 = vpack.c.b16 %v3268, %v3252
    %v4053 = vpack.c.b16 %v3269, %v3253
    %v4054 = vpack.c.b16 %v3270, %v3254
    %v4055 = vpack.c.b16 %v3271, %v3255
    %v4056 = vpack.c.b16 %v3272, %v3256
    %v4057 = vpack.c.b16 %v3273, %v3257
    %v4058 = vpack.c.b16 %v3274, %v3258
    %v4059 = vpack.c.b16 %v3275, %v3259
    %v4060 = vpack.c.b16 %v3276, %v3260
    %v4061 = vpack.c.b16 %v3293, %v3277
    %v4062 = vpack.c.b16 %v3294, %v3278
    %v4063 = vpack.c.b16 %v3295, %v3279
    %v4064 = vpack.c.b16 %v3296, %v3280
    %v4065 = vpack.c.b16 %v3297, %v3281
    %v4066 = vpack.c.b16 %v3298, %v3282
    %v4067 = vpack.c.b16 %v3299, %v3283
    %v4068 = vpack.c.b16 %v3300, %v3284
    %v4069 = vpack.c.b16 %v3301, %v3285
    %v4070 = vpack.c.b16 %v3302, %v3286
    %v4071 = vpack.c.b16 %v3303, %v3287
    %v4072 = vpack.c.b16 %v3304, %v3288
    %v4073 = vpack.c.b16 %v3305, %v3289
    %v4074 = vpack.c.b16 %v3306, %v3290
    %v4075 = vpack.c.b16 %v3307, %v3291
    %v4076 = vpack.c.b16 %v3308, %v3292
    %4845 = vmatprep.subr.bf16.mxu0 %v3310
    %4846 = vmatpush1.bf16.msra.mxu0 %v3309
    %4847 = vmatprep.subr.bf16.mxu0 %v3326
    %4848 = vmatpush1.bf16.msra.mxu0 %v3325
    %4849 = vmatprep.subr.bf16.mxu0 %v3342
    %4850 = vmatpush1.bf16.msra.mxu0 %v3341
    %4851 = vmatprep.subr.bf16.mxu0 %v3358
    %4852 = vmatpush1.bf16.msra.mxu0 %v3357
    %4853 = vmatprep.subr.bf16.mxu0 %v3374
    %4854 = vmatpush1.bf16.msra.mxu0 %v3373
    %4855 = vmatprep.subr.bf16.mxu0 %v3390
    %4856 = vmatpush1.bf16.msra.mxu0 %v3389
    %4857 = vmatprep.subr.bf16.mxu0 %v3406
    %4858 = vmatpush1.bf16.msra.mxu0 %v3405
    %4859 = vmatprep.subr.bf16.mxu0 %v3422
    %4860 = vmatpush1.bf16.msra.mxu0 %v3421
    %4861 = vmatprep.subr.bf16.mxu0 %v3438
    %4862 = vmatpush1.bf16.msra.mxu0 %v3437
    %4863 = vmatprep.subr.bf16.mxu0 %v3454
    %4864 = vmatpush1.bf16.msra.mxu0 %v3453
    %4865 = vmatprep.subr.bf16.mxu0 %v3470
    %4866 = vmatpush1.bf16.msra.mxu0 %v3469
    %4867 = vmatprep.subr.bf16.mxu0 %v3486
    %4868 = vmatpush1.bf16.msra.mxu0 %v3485
    %4869 = vmatprep.subr.bf16.mxu0 %v3502
    %4870 = vmatpush1.bf16.msra.mxu0 %v3501
    %4871 = vmatprep.subr.bf16.mxu0 %v3518
    %4872 = vmatpush1.bf16.msra.mxu0 %v3517
    %4873 = vmatprep.subr.bf16.mxu0 %v3534
    %4874 = vmatpush1.bf16.msra.mxu0 %v3533
    %4875 = vmatprep.subr.bf16.mxu0 %v3550
    %4876 = vmatpush1.bf16.msra.mxu0 %v3549
    %4877 = vmatprep.mubr.bf16.mxu0 %v148
    %4878 = vmatmul.mubr.bf16.gmra.mrb[0].mxu0 %v147
    %v4879 = vpop.f32.mrb[0].mxu0
    %v4880 = vadd.f32 %v928, %v4879
    %v4881 = vpop.f32.mrb[0].mxu0
    %v4882 = vadd.f32 %v932, %v4881
    %v4883 = vpop.f32.mrb[0].mxu0
    %v4884 = vpop.f32.mrb[0].mxu0
    %4885 = vdwg.mxu0
    %4886 = vmatprep.subr.bf16.mxu0 %v3566
    %4887 = vmatpush1.bf16.msra.mxu0 %v3565
    %4888 = vmatprep.subr.bf16.mxu0 %v3582
    %4889 = vmatpush1.bf16.msra.mxu0 %v3581
    %4890 = vmatprep.subr.bf16.mxu0 %v3598
    %4891 = vmatpush1.bf16.msra.mxu0 %v3597
    %4892 = vmatprep.subr.bf16.mxu0 %v3614
    %4893 = vmatpush1.bf16.msra.mxu0 %v3613
    %4894 = vmatprep.subr.bf16.mxu0 %v3630
    %4895 = vmatpush1.bf16.msra.mxu0 %v3629
    %4896 = vmatprep.subr.bf16.mxu0 %v3646
    %4897 = vmatpush1.bf16.msra.mxu0 %v3645
    %4898 = vmatprep.subr.bf16.mxu0 %v3662
    %4899 = vmatpush1.bf16.msra.mxu0 %v3661
    %4900 = vmatprep.subr.bf16.mxu0 %v3678
    %4901 = vmatpush1.bf16.msra.mxu0 %v3677
    %4902 = vmatprep.subr.bf16.mxu0 %v3694
    %4903 = vmatpush1.bf16.msra.mxu0 %v3693
    %4904 = vmatprep.subr.bf16.mxu0 %v3710
    %4905 = vmatpush1.bf16.msra.mxu0 %v3709
    %4906 = vmatprep.subr.bf16.mxu0 %v3726
    %4907 = vmatpush1.bf16.msra.mxu0 %v3725
    %4908 = vmatprep.subr.bf16.mxu0 %v3742
    %4909 = vmatpush1.bf16.msra.mxu0 %v3741
    %4910 = vmatprep.subr.bf16.mxu0 %v3758
    %4911 = vmatpush1.bf16.msra.mxu0 %v3757
    %4912 = vmatprep.subr.bf16.mxu0 %v3774
    %4913 = vmatpush1.bf16.msra.mxu0 %v3773
    %4914 = vmatprep.subr.bf16.mxu0 %v3790
    %4915 = vmatpush1.bf16.msra.mxu0 %v3789
    %4916 = vmatprep.subr.bf16.mxu0 %v3806
    %4917 = vmatpush1.bf16.msra.mxu0 %v3805
    %4918 = vmatprep.mubr.bf16.mxu0 %v150
    %4919 = vmatmul.mubr.bf16.gmra.mrb[0].mxu0 %v149
    %v4920 = vpop.f32.mrb[0].mxu0
    %v4921 = vadd.f32 %v4880, %v4920
    %v4922 = vpop.f32.mrb[0].mxu0
    %v4923 = vadd.f32 %v4882, %v4922
    %v4924 = vpop.f32.mrb[0].mxu0
    %v4925 = vpop.f32.mrb[0].mxu0
    %4926 = vdwg.mxu0
    %4927 = vmatprep.subr.bf16.mxu0 %v3822
    %4928 = vmatpush1.bf16.msra.mxu0 %v3821
    %4929 = vmatprep.subr.bf16.mxu0 %v3838
    %4930 = vmatpush1.bf16.msra.mxu0 %v3837
    %4931 = vmatprep.subr.bf16.mxu0 %v3854
    %4932 = vmatpush1.bf16.msra.mxu0 %v3853
    %4933 = vmatprep.subr.bf16.mxu0 %v3870
    %4934 = vmatpush1.bf16.msra.mxu0 %v3869
    %4935 = vmatprep.subr.bf16.mxu0 %v3886
    %4936 = vmatpush1.bf16.msra.mxu0 %v3885
    %4937 = vmatprep.subr.bf16.mxu0 %v3902
    %4938 = vmatpush1.bf16.msra.mxu0 %v3901
    %4939 = vmatprep.subr.bf16.mxu0 %v3918
    %4940 = vmatpush1.bf16.msra.mxu0 %v3917
    %4941 = vmatprep.subr.bf16.mxu0 %v3934
    %4942 = vmatpush1.bf16.msra.mxu0 %v3933
    %4943 = vmatprep.subr.bf16.mxu0 %v3950
    %4944 = vmatpush1.bf16.msra.mxu0 %v3949
    %4945 = vmatprep.subr.bf16.mxu0 %v3966
    %4946 = vmatpush1.bf16.msra.mxu0 %v3965
    %4947 = vmatprep.subr.bf16.mxu0 %v3982
    %4948 = vmatpush1.bf16.msra.mxu0 %v3981
    %4949 = vmatprep.subr.bf16.mxu0 %v3998
    %4950 = vmatpush1.bf16.msra.mxu0 %v3997
    %4951 = vmatprep.subr.bf16.mxu0 %v4014
    %4952 = vmatpush1.bf16.msra.mxu0 %v4013
    %4953 = vmatprep.subr.bf16.mxu0 %v4030
    %4954 = vmatpush1.bf16.msra.mxu0 %v4029
    %4955 = vmatprep.subr.bf16.mxu0 %v4046
    %4956 = vmatpush1.bf16.msra.mxu0 %v4045
    %4957 = vmatprep.subr.bf16.mxu0 %v4062
    %4958 = vmatpush1.bf16.msra.mxu0 %v4061
    %4959 = vmatprep.mubr.bf16.mxu0 %v152
    %4960 = vmatmul.mubr.bf16.gmra.mrb[0].mxu0 %v151
    %v4961 = vpop.f32.mrb[0].mxu0
    %v4962 = vadd.f32 %v4921, %v4961
    %v4963 = vpop.f32.mrb[0].mxu0
    %v4964 = vadd.f32 %v4923, %v4963
    %v4965 = vpop.f32.mrb[0].mxu0
    %v4966 = vpop.f32.mrb[0].mxu0
    %4967 = vdwg.mxu0
    %4968 = vmatprep.subr.bf16.mxu0 %v3312
    %4969 = vmatpush1.bf16.msra.mxu0 %v3311
    %4970 = vmatprep.subr.bf16.mxu0 %v3328
    %4971 = vmatpush1.bf16.msra.mxu0 %v3327
    %4972 = vmatprep.subr.bf16.mxu0 %v3344
    %4973 = vmatpush1.bf16.msra.mxu0 %v3343
    %4974 = vmatprep.subr.bf16.mxu0 %v3360
    %4975 = vmatpush1.bf16.msra.mxu0 %v3359
    %4976 = vmatprep.subr.bf16.mxu0 %v3376
    %4977 = vmatpush1.bf16.msra.mxu0 %v3375
    %4978 = vmatprep.subr.bf16.mxu0 %v3392
    %4979 = vmatpush1.bf16.msra.mxu0 %v3391
    %4980 = vmatprep.subr.bf16.mxu0 %v3408
    %4981 = vmatpush1.bf16.msra.mxu0 %v3407
    %4982 = vmatprep.subr.bf16.mxu0 %v3424
    %4983 = vmatpush1.bf16.msra.mxu0 %v3423
    %4984 = vmatprep.subr.bf16.mxu0 %v3440
    %4985 = vmatpush1.bf16.msra.mxu0 %v3439
    %4986 = vmatprep.subr.bf16.mxu0 %v3456
    %4987 = vmatpush1.bf16.msra.mxu0 %v3455
    %4988 = vmatprep.subr.bf16.mxu0 %v3472
    %4989 = vmatpush1.bf16.msra.mxu0 %v3471
    %4990 = vmatprep.subr.bf16.mxu0 %v3488
    %4991 = vmatpush1.bf16.msra.mxu0 %v3487
    %4992 = vmatprep.subr.bf16.mxu0 %v3504
    %4993 = vmatpush1.bf16.msra.mxu0 %v3503
    %4994 = vmatprep.subr.bf16.mxu0 %v3520
    %4995 = vmatpush1.bf16.msra.mxu0 %v3519
    %4996 = vmatprep.subr.bf16.mxu0 %v3536
    %4997 = vmatpush1.bf16.msra.mxu0 %v3535
    %4998 = vmatprep.subr.bf16.mxu0 %v3552
    %4999 = vmatpush1.bf16.msra.mxu0 %v3551
    %5000 = vmatprep.mubr.bf16.mxu0 %v148
    %5001 = vmatmul.mubr.bf16.gmra.mrb[0].mxu0 %v147
    %v5002 = vpop.f32.mrb[0].mxu0
    %v5003 = vadd.f32 %v936, %v5002
    %v5004 = vpop.f32.mrb[0].mxu0
    %v5005 = vadd.f32 %v940, %v5004
    %v5006 = vpop.f32.mrb[0].mxu0
    %v5007 = vpop.f32.mrb[0].mxu0
    %5008 = vdwg.mxu0
    %5009 = vmatprep.subr.bf16.mxu0 %v3568
    %5010 = vmatpush1.bf16.msra.mxu0 %v3567
    %5011 = vmatprep.subr.bf16.mxu0 %v3584
    %5012 = vmatpush1.bf16.msra.mxu0 %v3583
    %5013 = vmatprep.subr.bf16.mxu0 %v3600
    %5014 = vmatpush1.bf16.msra.mxu0 %v3599
    %5015 = vmatprep.subr.bf16.mxu0 %v3616
    %5016 = vmatpush1.bf16.msra.mxu0 %v3615
    %5017 = vmatprep.subr.bf16.mxu0 %v3632
    %5018 = vmatpush1.bf16.msra.mxu0 %v3631
    %5019 = vmatprep.subr.bf16.mxu0 %v3648
    %5020 = vmatpush1.bf16.msra.mxu0 %v3647
    %5021 = vmatprep.subr.bf16.mxu0 %v3664
    %5022 = vmatpush1.bf16.msra.mxu0 %v3663
    %5023 = vmatprep.subr.bf16.mxu0 %v3680
    %5024 = vmatpush1.bf16.msra.mxu0 %v3679
    %5025 = vmatprep.subr.bf16.mxu0 %v3696
    %5026 = vmatpush1.bf16.msra.mxu0 %v3695
    %5027 = vmatprep.subr.bf16.mxu0 %v3712
    %5028 = vmatpush1.bf16.msra.mxu0 %v3711
    %5029 = vmatprep.subr.bf16.mxu0 %v3728
    %5030 = vmatpush1.bf16.msra.mxu0 %v3727
    %5031 = vmatprep.subr.bf16.mxu0 %v3744
    %5032 = vmatpush1.bf16.msra.mxu0 %v3743
    %5033 = vmatprep.subr.bf16.mxu0 %v3760
    %5034 = vmatpush1.bf16.msra.mxu0 %v3759
    %5035 = vmatprep.subr.bf16.mxu0 %v3776
    %5036 = vmatpush1.bf16.msra.mxu0 %v3775
    %5037 = vmatprep.subr.bf16.mxu0 %v3792
    %5038 = vmatpush1.bf16.msra.mxu0 %v3791
    %5039 = vmatprep.subr.bf16.mxu0 %v3808
    %5040 = vmatpush1.bf16.msra.mxu0 %v3807
    %5041 = vmatprep.mubr.bf16.mxu0 %v150
    %5042 = vmatmul.mubr.bf16.gmra.mrb[0].mxu0 %v149
    %v5043 = vpop.f32.mrb[0].mxu0
    %v5044 = vadd.f32 %v5003, %v5043
    %v5045 = vpop.f32.mrb[0].mxu0
    %v5046 = vadd.f32 %v5005, %v5045
    %v5047 = vpop.f32.mrb[0].mxu0
    %v5048 = vpop.f32.mrb[0].mxu0
    %5049 = vdwg.mxu0
    %5050 = vmatprep.subr.bf16.mxu0 %v3824
    %5051 = vmatpush1.bf16.msra.mxu0 %v3823
    %5052 = vmatprep.subr.bf16.mxu0 %v3840
    %5053 = vmatpush1.bf16.msra.mxu0 %v3839
    %5054 = vmatprep.subr.bf16.mxu0 %v3856
    %5055 = vmatpush1.bf16.msra.mxu0 %v3855
    %5056 = vmatprep.subr.bf16.mxu0 %v3872
    %5057 = vmatpush1.bf16.msra.mxu0 %v3871
    %5058 = vmatprep.subr.bf16.mxu0 %v3888
    %5059 = vmatpush1.bf16.msra.mxu0 %v3887
    %5060 = vmatprep.subr.bf16.mxu0 %v3904
    %5061 = vmatpush1.bf16.msra.mxu0 %v3903
    %5062 = vmatprep.subr.bf16.mxu0 %v3920
    %5063 = vmatpush1.bf16.msra.mxu0 %v3919
    %5064 = vmatprep.subr.bf16.mxu0 %v3936
    %5065 = vmatpush1.bf16.msra.mxu0 %v3935
    %5066 = vmatprep.subr.bf16.mxu0 %v3952
    %5067 = vmatpush1.bf16.msra.mxu0 %v3951
    %5068 = vmatprep.subr.bf16.mxu0 %v3968
    %5069 = vmatpush1.bf16.msra.mxu0 %v3967
    %5070 = vmatprep.subr.bf16.mxu0 %v3984
    %5071 = vmatpush1.bf16.msra.mxu0 %v3983
    %5072 = vmatprep.subr.bf16.mxu0 %v4000
    %5073 = vmatpush1.bf16.msra.mxu0 %v3999
    %5074 = vmatprep.subr.bf16.mxu0 %v4016
    %5075 = vmatpush1.bf16.msra.mxu0 %v4015
    %5076 = vmatprep.subr.bf16.mxu0 %v4032
    %5077 = vmatpush1.bf16.msra.mxu0 %v4031
    %5078 = vmatprep.subr.bf16.mxu0 %v4048
    %5079 = vmatpush1.bf16.msra.mxu0 %v4047
    %5080 = vmatprep.subr.bf16.mxu0 %v4064
    %5081 = vmatpush1.bf16.msra.mxu0 %v4063
    %5082 = vmatprep.mubr.bf16.mxu0 %v152
    %5083 = vmatmul.mubr.bf16.gmra.mrb[0].mxu0 %v151
    %v5084 = vpop.f32.mrb[0].mxu0
    %v5085 = vadd.f32 %v5044, %v5084
    %v5086 = vpop.f32.mrb[0].mxu0
    %v5087 = vadd.f32 %v5046, %v5086
    %v5088 = vpop.f32.mrb[0].mxu0
    %v5089 = vpop.f32.mrb[0].mxu0
    %5090 = vdwg.mxu0
    %5091 = vmatprep.subr.bf16.mxu0 %v3314
    %5092 = vmatpush1.bf16.msra.mxu0 %v3313
    %5093 = vmatprep.subr.bf16.mxu0 %v3330
    %5094 = vmatpush1.bf16.msra.mxu0 %v3329
    %5095 = vmatprep.subr.bf16.mxu0 %v3346
    %5096 = vmatpush1.bf16.msra.mxu0 %v3345
    %5097 = vmatprep.subr.bf16.mxu0 %v3362
    %5098 = vmatpush1.bf16.msra.mxu0 %v3361
    %5099 = vmatprep.subr.bf16.mxu0 %v3378
    %5100 = vmatpush1.bf16.msra.mxu0 %v3377
    %5101 = vmatprep.subr.bf16.mxu0 %v3394
    %5102 = vmatpush1.bf16.msra.mxu0 %v3393
    %5103 = vmatprep.subr.bf16.mxu0 %v3410
    %5104 = vmatpush1.bf16.msra.mxu0 %v3409
    %5105 = vmatprep.subr.bf16.mxu0 %v3426
    %5106 = vmatpush1.bf16.msra.mxu0 %v3425
    %5107 = vmatprep.subr.bf16.mxu0 %v3442
    %5108 = vmatpush1.bf16.msra.mxu0 %v3441
    %5109 = vmatprep.subr.bf16.mxu0 %v3458
    %5110 = vmatpush1.bf16.msra.mxu0 %v3457
    %5111 = vmatprep.subr.bf16.mxu0 %v3474
    %5112 = vmatpush1.bf16.msra.mxu0 %v3473
    %5113 = vmatprep.subr.bf16.mxu0 %v3490
    %5114 = vmatpush1.bf16.msra.mxu0 %v3489
    %5115 = vmatprep.subr.bf16.mxu0 %v3506
    %5116 = vmatpush1.bf16.msra.mxu0 %v3505
    %5117 = vmatprep.subr.bf16.mxu0 %v3522
    %5118 = vmatpush1.bf16.msra.mxu0 %v3521
    %5119 = vmatprep.subr.bf16.mxu0 %v3538
    %5120 = vmatpush1.bf16.msra.mxu0 %v3537
    %5121 = vmatprep.subr.bf16.mxu0 %v3554
    %5122 = vmatpush1.bf16.msra.mxu0 %v3553
    %5123 = vmatprep.mubr.bf16.mxu0 %v148
    %5124 = vmatmul.mubr.bf16.gmra.mrb[0].mxu0 %v147
    %v5125 = vpop.f32.mrb[0].mxu0
    %v5126 = vadd.f32 %v944, %v5125
    %v5127 = vpop.f32.mrb[0].mxu0
    %v5128 = vadd.f32 %v948, %v5127
    %v5129 = vpop.f32.mrb[0].mxu0
    %v5130 = vpop.f32.mrb[0].mxu0
    %5131 = vdwg.mxu0
    %5132 = vmatprep.subr.bf16.mxu0 %v3570
    %5133 = vmatpush1.bf16.msra.mxu0 %v3569
    %5134 = vmatprep.subr.bf16.mxu0 %v3586
    %5135 = vmatpush1.bf16.msra.mxu0 %v3585
    %5136 = vmatprep.subr.bf16.mxu0 %v3602
    %5137 = vmatpush1.bf16.msra.mxu0 %v3601
    %5138 = vmatprep.subr.bf16.mxu0 %v3618
    %5139 = vmatpush1.bf16.msra.mxu0 %v3617
    %5140 = vmatprep.subr.bf16.mxu0 %v3634
    %5141 = vmatpush1.bf16.msra.mxu0 %v3633
    %5142 = vmatprep.subr.bf16.mxu0 %v3650
    %5143 = vmatpush1.bf16.msra.mxu0 %v3649
    %5144 = vmatprep.subr.bf16.mxu0 %v3666
    %5145 = vmatpush1.bf16.msra.mxu0 %v3665
    %5146 = vmatprep.subr.bf16.mxu0 %v3682
    %5147 = vmatpush1.bf16.msra.mxu0 %v3681
    %5148 = vmatprep.subr.bf16.mxu0 %v3698
    %5149 = vmatpush1.bf16.msra.mxu0 %v3697
    %5150 = vmatprep.subr.bf16.mxu0 %v3714
    %5151 = vmatpush1.bf16.msra.mxu0 %v3713
    %5152 = vmatprep.subr.bf16.mxu0 %v3730
    %5153 = vmatpush1.bf16.msra.mxu0 %v3729
    %5154 = vmatprep.subr.bf16.mxu0 %v3746
    %5155 = vmatpush1.bf16.msra.mxu0 %v3745
    %5156 = vmatprep.subr.bf16.mxu0 %v3762
    %5157 = vmatpush1.bf16.msra.mxu0 %v3761
    %5158 = vmatprep.subr.bf16.mxu0 %v3778
    %5159 = vmatpush1.bf16.msra.mxu0 %v3777
    %5160 = vmatprep.subr.bf16.mxu0 %v3794
    %5161 = vmatpush1.bf16.msra.mxu0 %v3793
    %5162 = vmatprep.subr.bf16.mxu0 %v3810
    %5163 = vmatpush1.bf16.msra.mxu0 %v3809
    %5164 = vmatprep.mubr.bf16.mxu0 %v150
    %5165 = vmatmul.mubr.bf16.gmra.mrb[0].mxu0 %v149
    %v5166 = vpop.f32.mrb[0].mxu0
    %v5167 = vadd.f32 %v5126, %v5166
    %v5168 = vpop.f32.mrb[0].mxu0
    %v5169 = vadd.f32 %v5128, %v5168
    %v5170 = vpop.f32.mrb[0].mxu0
    %v5171 = vpop.f32.mrb[0].mxu0
    %5172 = vdwg.mxu0
    %5173 = vmatprep.subr.bf16.mxu0 %v3826
    %5174 = vmatpush1.bf16.msra.mxu0 %v3825
    %5175 = vmatprep.subr.bf16.mxu0 %v3842
    %5176 = vmatpush1.bf16.msra.mxu0 %v3841
    %5177 = vmatprep.subr.bf16.mxu0 %v3858
    %5178 = vmatpush1.bf16.msra.mxu0 %v3857
    %5179 = vmatprep.subr.bf16.mxu0 %v3874
    %5180 = vmatpush1.bf16.msra.mxu0 %v3873
    %5181 = vmatprep.subr.bf16.mxu0 %v3890
    %5182 = vmatpush1.bf16.msra.mxu0 %v3889
    %5183 = vmatprep.subr.bf16.mxu0 %v3906
    %5184 = vmatpush1.bf16.msra.mxu0 %v3905
    %5185 = vmatprep.subr.bf16.mxu0 %v3922
    %5186 = vmatpush1.bf16.msra.mxu0 %v3921
    %5187 = vmatprep.subr.bf16.mxu0 %v3938
    %5188 = vmatpush1.bf16.msra.mxu0 %v3937
    %5189 = vmatprep.subr.bf16.mxu0 %v3954
    %5190 = vmatpush1.bf16.msra.mxu0 %v3953
    %5191 = vmatprep.subr.bf16.mxu0 %v3970
    %5192 = vmatpush1.bf16.msra.mxu0 %v3969
    %5193 = vmatprep.subr.bf16.mxu0 %v3986
    %5194 = vmatpush1.bf16.msra.mxu0 %v3985
    %5195 = vmatprep.subr.bf16.mxu0 %v4002
    %5196 = vmatpush1.bf16.msra.mxu0 %v4001
    %5197 = vmatprep.subr.bf16.mxu0 %v4018
    %5198 = vmatpush1.bf16.msra.mxu0 %v4017
    %5199 = vmatprep.subr.bf16.mxu0 %v4034
    %5200 = vmatpush1.bf16.msra.mxu0 %v4033
    %5201 = vmatprep.subr.bf16.mxu0 %v4050
    %5202 = vmatpush1.bf16.msra.mxu0 %v4049
    %5203 = vmatprep.subr.bf16.mxu0 %v4066
    %5204 = vmatpush1.bf16.msra.mxu0 %v4065
    %5205 = vmatprep.mubr.bf16.mxu0 %v152
    %5206 = vmatmul.mubr.bf16.gmra.mrb[0].mxu0 %v151
    %v5207 = vpop.f32.mrb[0].mxu0
    %v5208 = vadd.f32 %v5167, %v5207
    %v5209 = vpop.f32.mrb[0].mxu0
    %v5210 = vadd.f32 %v5169, %v5209
    %v5211 = vpop.f32.mrb[0].mxu0
    %v5212 = vpop.f32.mrb[0].mxu0
    %5213 = vdwg.mxu0
    %5214 = vmatprep.subr.bf16.mxu0 %v3316
    %5215 = vmatpush1.bf16.msra.mxu0 %v3315
    %5216 = vmatprep.subr.bf16.mxu0 %v3332
    %5217 = vmatpush1.bf16.msra.mxu0 %v3331
    %5218 = vmatprep.subr.bf16.mxu0 %v3348
    %5219 = vmatpush1.bf16.msra.mxu0 %v3347
    %5220 = vmatprep.subr.bf16.mxu0 %v3364
    %5221 = vmatpush1.bf16.msra.mxu0 %v3363
    %5222 = vmatprep.subr.bf16.mxu0 %v3380
    %5223 = vmatpush1.bf16.msra.mxu0 %v3379
    %5224 = vmatprep.subr.bf16.mxu0 %v3396
    %5225 = vmatpush1.bf16.msra.mxu0 %v3395
    %5226 = vmatprep.subr.bf16.mxu0 %v3412
    %5227 = vmatpush1.bf16.msra.mxu0 %v3411
    %5228 = vmatprep.subr.bf16.mxu0 %v3428
    %5229 = vmatpush1.bf16.msra.mxu0 %v3427
    %5230 = vmatprep.subr.bf16.mxu0 %v3444
    %5231 = vmatpush1.bf16.msra.mxu0 %v3443
    %5232 = vmatprep.subr.bf16.mxu0 %v3460
    %5233 = vmatpush1.bf16.msra.mxu0 %v3459
    %5234 = vmatprep.subr.bf16.mxu0 %v3476
    %5235 = vmatpush1.bf16.msra.mxu0 %v3475
    %5236 = vmatprep.subr.bf16.mxu0 %v3492
    %5237 = vmatpush1.bf16.msra.mxu0 %v3491
    %5238 = vmatprep.subr.bf16.mxu0 %v3508
    %5239 = vmatpush1.bf16.msra.mxu0 %v3507
    %5240 = vmatprep.subr.bf16.mxu0 %v3524
    %5241 = vmatpush1.bf16.msra.mxu0 %v3523
    %5242 = vmatprep.subr.bf16.mxu0 %v3540
    %5243 = vmatpush1.bf16.msra.mxu0 %v3539
    %5244 = vmatprep.subr.bf16.mxu0 %v3556
    %5245 = vmatpush1.bf16.msra.mxu0 %v3555
    %5246 = vmatprep.mubr.bf16.mxu0 %v148
    %5247 = vmatmul.mubr.bf16.gmra.mrb[0].mxu0 %v147
    %v5248 = vpop.f32.mrb[0].mxu0
    %v5249 = vadd.f32 %v952, %v5248
    %v5250 = vpop.f32.mrb[0].mxu0
    %v5251 = vadd.f32 %v956, %v5250
    %v5252 = vpop.f32.mrb[0].mxu0
    %v5253 = vpop.f32.mrb[0].mxu0
    %5254 = vdwg.mxu0
    %5255 = vmatprep.subr.bf16.mxu0 %v3572
    %5256 = vmatpush1.bf16.msra.mxu0 %v3571
    %5257 = vmatprep.subr.bf16.mxu0 %v3588
    %5258 = vmatpush1.bf16.msra.mxu0 %v3587
    %5259 = vmatprep.subr.bf16.mxu0 %v3604
    %5260 = vmatpush1.bf16.msra.mxu0 %v3603
    %5261 = vmatprep.subr.bf16.mxu0 %v3620
    %5262 = vmatpush1.bf16.msra.mxu0 %v3619
    %5263 = vmatprep.subr.bf16.mxu0 %v3636
    %5264 = vmatpush1.bf16.msra.mxu0 %v3635
    %5265 = vmatprep.subr.bf16.mxu0 %v3652
    %5266 = vmatpush1.bf16.msra.mxu0 %v3651
    %5267 = vmatprep.subr.bf16.mxu0 %v3668
    %5268 = vmatpush1.bf16.msra.mxu0 %v3667
    %5269 = vmatprep.subr.bf16.mxu0 %v3684
    %5270 = vmatpush1.bf16.msra.mxu0 %v3683
    %5271 = vmatprep.subr.bf16.mxu0 %v3700
    %5272 = vmatpush1.bf16.msra.mxu0 %v3699
    %5273 = vmatprep.subr.bf16.mxu0 %v3716
    %5274 = vmatpush1.bf16.msra.mxu0 %v3715
    %5275 = vmatprep.subr.bf16.mxu0 %v3732
    %5276 = vmatpush1.bf16.msra.mxu0 %v3731
    %5277 = vmatprep.subr.bf16.mxu0 %v3748
    %5278 = vmatpush1.bf16.msra.mxu0 %v3747
    %5279 = vmatprep.subr.bf16.mxu0 %v3764
    %5280 = vmatpush1.bf16.msra.mxu0 %v3763
    %5281 = vmatprep.subr.bf16.mxu0 %v3780
    %5282 = vmatpush1.bf16.msra.mxu0 %v3779
    %5283 = vmatprep.subr.bf16.mxu0 %v3796
    %5284 = vmatpush1.bf16.msra.mxu0 %v3795
    %5285 = vmatprep.subr.bf16.mxu0 %v3812
    %5286 = vmatpush1.bf16.msra.mxu0 %v3811
    %5287 = vmatprep.mubr.bf16.mxu0 %v150
    %5288 = vmatmul.mubr.bf16.gmra.mrb[0].mxu0 %v149
    %v5289 = vpop.f32.mrb[0].mxu0
    %v5290 = vadd.f32 %v5249, %v5289
    %v5291 = vpop.f32.mrb[0].mxu0
    %v5292 = vadd.f32 %v5251, %v5291
    %v5293 = vpop.f32.mrb[0].mxu0
    %v5294 = vpop.f32.mrb[0].mxu0
    %5295 = vdwg.mxu0
    %5296 = vmatprep.subr.bf16.mxu0 %v3828
    %5297 = vmatpush1.bf16.msra.mxu0 %v3827
    %5298 = vmatprep.subr.bf16.mxu0 %v3844
    %5299 = vmatpush1.bf16.msra.mxu0 %v3843
    %5300 = vmatprep.subr.bf16.mxu0 %v3860
    %5301 = vmatpush1.bf16.msra.mxu0 %v3859
    %5302 = vmatprep.subr.bf16.mxu0 %v3876
    %5303 = vmatpush1.bf16.msra.mxu0 %v3875
    %5304 = vmatprep.subr.bf16.mxu0 %v3892
    %5305 = vmatpush1.bf16.msra.mxu0 %v3891
    %5306 = vmatprep.subr.bf16.mxu0 %v3908
    %5307 = vmatpush1.bf16.msra.mxu0 %v3907
    %5308 = vmatprep.subr.bf16.mxu0 %v3924
    %5309 = vmatpush1.bf16.msra.mxu0 %v3923
    %5310 = vmatprep.subr.bf16.mxu0 %v3940
    %5311 = vmatpush1.bf16.msra.mxu0 %v3939
    %5312 = vmatprep.subr.bf16.mxu0 %v3956
    %5313 = vmatpush1.bf16.msra.mxu0 %v3955
    %5314 = vmatprep.subr.bf16.mxu0 %v3972
    %5315 = vmatpush1.bf16.msra.mxu0 %v3971
    %5316 = vmatprep.subr.bf16.mxu0 %v3988
    %5317 = vmatpush1.bf16.msra.mxu0 %v3987
    %5318 = vmatprep.subr.bf16.mxu0 %v4004
    %5319 = vmatpush1.bf16.msra.mxu0 %v4003
    %5320 = vmatprep.subr.bf16.mxu0 %v4020
    %5321 = vmatpush1.bf16.msra.mxu0 %v4019
    %5322 = vmatprep.subr.bf16.mxu0 %v4036
    %5323 = vmatpush1.bf16.msra.mxu0 %v4035
    %5324 = vmatprep.subr.bf16.mxu0 %v4052
    %5325 = vmatpush1.bf16.msra.mxu0 %v4051
    %5326 = vmatprep.subr.bf16.mxu0 %v4068
    %5327 = vmatpush1.bf16.msra.mxu0 %v4067
    %5328 = vmatprep.mubr.bf16.mxu0 %v152
    %5329 = vmatmul.mubr.bf16.gmra.mrb[0].mxu0 %v151
    %v5330 = vpop.f32.mrb[0].mxu0
    %v5331 = vadd.f32 %v5290, %v5330
    %v5332 = vpop.f32.mrb[0].mxu0
    %v5333 = vadd.f32 %v5292, %v5332
    %v5334 = vpop.f32.mrb[0].mxu0
    %v5335 = vpop.f32.mrb[0].mxu0
    %5336 = vdwg.mxu0
    %5337 = vmatprep.subr.bf16.mxu0 %v3318
    %5338 = vmatpush1.bf16.msra.mxu0 %v3317
    %5339 = vmatprep.subr.bf16.mxu0 %v3334
    %5340 = vmatpush1.bf16.msra.mxu0 %v3333
    %5341 = vmatprep.subr.bf16.mxu0 %v3350
    %5342 = vmatpush1.bf16.msra.mxu0 %v3349
    %5343 = vmatprep.subr.bf16.mxu0 %v3366
    %5344 = vmatpush1.bf16.msra.mxu0 %v3365
    %5345 = vmatprep.subr.bf16.mxu0 %v3382
    %5346 = vmatpush1.bf16.msra.mxu0 %v3381
    %5347 = vmatprep.subr.bf16.mxu0 %v3398
    %5348 = vmatpush1.bf16.msra.mxu0 %v3397
    %5349 = vmatprep.subr.bf16.mxu0 %v3414
    %5350 = vmatpush1.bf16.msra.mxu0 %v3413
    %5351 = vmatprep.subr.bf16.mxu0 %v3430
    %5352 = vmatpush1.bf16.msra.mxu0 %v3429
    %5353 = vmatprep.subr.bf16.mxu0 %v3446
    %5354 = vmatpush1.bf16.msra.mxu0 %v3445
    %5355 = vmatprep.subr.bf16.mxu0 %v3462
    %5356 = vmatpush1.bf16.msra.mxu0 %v3461
    %5357 = vmatprep.subr.bf16.mxu0 %v3478
    %5358 = vmatpush1.bf16.msra.mxu0 %v3477
    %5359 = vmatprep.subr.bf16.mxu0 %v3494
    %5360 = vmatpush1.bf16.msra.mxu0 %v3493
    %5361 = vmatprep.subr.bf16.mxu0 %v3510
    %5362 = vmatpush1.bf16.msra.mxu0 %v3509
    %5363 = vmatprep.subr.bf16.mxu0 %v3526
    %5364 = vmatpush1.bf16.msra.mxu0 %v3525
    %5365 = vmatprep.subr.bf16.mxu0 %v3542
    %5366 = vmatpush1.bf16.msra.mxu0 %v3541
    %5367 = vmatprep.subr.bf16.mxu0 %v3558
    %5368 = vmatpush1.bf16.msra.mxu0 %v3557
    %5369 = vmatprep.mubr.bf16.mxu0 %v148
    %5370 = vmatmul.mubr.bf16.gmra.mrb[0].mxu0 %v147
    %v5371 = vpop.f32.mrb[0].mxu0
    %v5372 = vadd.f32 %v960, %v5371
    %v5373 = vpop.f32.mrb[0].mxu0
    %v5374 = vadd.f32 %v964, %v5373
    %v5375 = vpop.f32.mrb[0].mxu0
    %v5376 = vpop.f32.mrb[0].mxu0
    %5377 = vdwg.mxu0
    %5378 = vmatprep.subr.bf16.mxu0 %v3574
    %5379 = vmatpush1.bf16.msra.mxu0 %v3573
    %5380 = vmatprep.subr.bf16.mxu0 %v3590
    %5381 = vmatpush1.bf16.msra.mxu0 %v3589
    %5382 = vmatprep.subr.bf16.mxu0 %v3606
    %5383 = vmatpush1.bf16.msra.mxu0 %v3605
    %5384 = vmatprep.subr.bf16.mxu0 %v3622
    %5385 = vmatpush1.bf16.msra.mxu0 %v3621
    %5386 = vmatprep.subr.bf16.mxu0 %v3638
    %5387 = vmatpush1.bf16.msra.mxu0 %v3637
    %5388 = vmatprep.subr.bf16.mxu0 %v3654
    %5389 = vmatpush1.bf16.msra.mxu0 %v3653
    %5390 = vmatprep.subr.bf16.mxu0 %v3670
    %5391 = vmatpush1.bf16.msra.mxu0 %v3669
    %5392 = vmatprep.subr.bf16.mxu0 %v3686
    %5393 = vmatpush1.bf16.msra.mxu0 %v3685
    %5394 = vmatprep.subr.bf16.mxu0 %v3702
    %5395 = vmatpush1.bf16.msra.mxu0 %v3701
    %5396 = vmatprep.subr.bf16.mxu0 %v3718
    %5397 = vmatpush1.bf16.msra.mxu0 %v3717
    %5398 = vmatprep.subr.bf16.mxu0 %v3734
    %5399 = vmatpush1.bf16.msra.mxu0 %v3733
    %5400 = vmatprep.subr.bf16.mxu0 %v3750
    %5401 = vmatpush1.bf16.msra.mxu0 %v3749
    %5402 = vmatprep.subr.bf16.mxu0 %v3766
    %5403 = vmatpush1.bf16.msra.mxu0 %v3765
    %5404 = vmatprep.subr.bf16.mxu0 %v3782
    %5405 = vmatpush1.bf16.msra.mxu0 %v3781
    %5406 = vmatprep.subr.bf16.mxu0 %v3798
    %5407 = vmatpush1.bf16.msra.mxu0 %v3797
    %5408 = vmatprep.subr.bf16.mxu0 %v3814
    %5409 = vmatpush1.bf16.msra.mxu0 %v3813
    %5410 = vmatprep.mubr.bf16.mxu0 %v150
    %5411 = vmatmul.mubr.bf16.gmra.mrb[0].mxu0 %v149
    %v5412 = vpop.f32.mrb[0].mxu0
    %v5413 = vadd.f32 %v5372, %v5412
    %v5414 = vpop.f32.mrb[0].mxu0
    %v5415 = vadd.f32 %v5374, %v5414
    %v5416 = vpop.f32.mrb[0].mxu0
    %v5417 = vpop.f32.mrb[0].mxu0
    %5418 = vdwg.mxu0
    %5419 = vmatprep.subr.bf16.mxu0 %v3830
    %5420 = vmatpush1.bf16.msra.mxu0 %v3829
    %5421 = vmatprep.subr.bf16.mxu0 %v3846
    %5422 = vmatpush1.bf16.msra.mxu0 %v3845
    %5423 = vmatprep.subr.bf16.mxu0 %v3862
    %5424 = vmatpush1.bf16.msra.mxu0 %v3861
    %5425 = vmatprep.subr.bf16.mxu0 %v3878
    %5426 = vmatpush1.bf16.msra.mxu0 %v3877
    %5427 = vmatprep.subr.bf16.mxu0 %v3894
    %5428 = vmatpush1.bf16.msra.mxu0 %v3893
    %5429 = vmatprep.subr.bf16.mxu0 %v3910
    %5430 = vmatpush1.bf16.msra.mxu0 %v3909
    %5431 = vmatprep.subr.bf16.mxu0 %v3926
    %5432 = vmatpush1.bf16.msra.mxu0 %v3925
    %5433 = vmatprep.subr.bf16.mxu0 %v3942
    %5434 = vmatpush1.bf16.msra.mxu0 %v3941
    %5435 = vmatprep.subr.bf16.mxu0 %v3958
    %5436 = vmatpush1.bf16.msra.mxu0 %v3957
    %5437 = vmatprep.subr.bf16.mxu0 %v3974
    %5438 = vmatpush1.bf16.msra.mxu0 %v3973
    %5439 = vmatprep.subr.bf16.mxu0 %v3990
    %5440 = vmatpush1.bf16.msra.mxu0 %v3989
    %5441 = vmatprep.subr.bf16.mxu0 %v4006
    %5442 = vmatpush1.bf16.msra.mxu0 %v4005
    %5443 = vmatprep.subr.bf16.mxu0 %v4022
    %5444 = vmatpush1.bf16.msra.mxu0 %v4021
    %5445 = vmatprep.subr.bf16.mxu0 %v4038
    %5446 = vmatpush1.bf16.msra.mxu0 %v4037
    %5447 = vmatprep.subr.bf16.mxu0 %v4054
    %5448 = vmatpush1.bf16.msra.mxu0 %v4053
    %5449 = vmatprep.subr.bf16.mxu0 %v4070
    %5450 = vmatpush1.bf16.msra.mxu0 %v4069
    %5451 = vmatprep.mubr.bf16.mxu0 %v152
    %5452 = vmatmul.mubr.bf16.gmra.mrb[0].mxu0 %v151
    %v5453 = vpop.f32.mrb[0].mxu0
    %v5454 = vadd.f32 %v5413, %v5453
    %v5455 = vpop.f32.mrb[0].mxu0
    %v5456 = vadd.f32 %v5415, %v5455
    %v5457 = vpop.f32.mrb[0].mxu0
    %v5458 = vpop.f32.mrb[0].mxu0
    %5459 = vdwg.mxu0
    %5460 = vmatprep.subr.bf16.mxu0 %v3320
    %5461 = vmatpush1.bf16.msra.mxu0 %v3319
    %5462 = vmatprep.subr.bf16.mxu0 %v3336
    %5463 = vmatpush1.bf16.msra.mxu0 %v3335
    %5464 = vmatprep.subr.bf16.mxu0 %v3352
    %5465 = vmatpush1.bf16.msra.mxu0 %v3351
    %5466 = vmatprep.subr.bf16.mxu0 %v3368
    %5467 = vmatpush1.bf16.msra.mxu0 %v3367
    %5468 = vmatprep.subr.bf16.mxu0 %v3384
    %5469 = vmatpush1.bf16.msra.mxu0 %v3383
    %5470 = vmatprep.subr.bf16.mxu0 %v3400
    %5471 = vmatpush1.bf16.msra.mxu0 %v3399
    %5472 = vmatprep.subr.bf16.mxu0 %v3416
    %5473 = vmatpush1.bf16.msra.mxu0 %v3415
    %5474 = vmatprep.subr.bf16.mxu0 %v3432
    %5475 = vmatpush1.bf16.msra.mxu0 %v3431
    %5476 = vmatprep.subr.bf16.mxu0 %v3448
    %5477 = vmatpush1.bf16.msra.mxu0 %v3447
    %5478 = vmatprep.subr.bf16.mxu0 %v3464
    %5479 = vmatpush1.bf16.msra.mxu0 %v3463
    %5480 = vmatprep.subr.bf16.mxu0 %v3480
    %5481 = vmatpush1.bf16.msra.mxu0 %v3479
    %5482 = vmatprep.subr.bf16.mxu0 %v3496
    %5483 = vmatpush1.bf16.msra.mxu0 %v3495
    %5484 = vmatprep.subr.bf16.mxu0 %v3512
    %5485 = vmatpush1.bf16.msra.mxu0 %v3511
    %5486 = vmatprep.subr.bf16.mxu0 %v3528
    %5487 = vmatpush1.bf16.msra.mxu0 %v3527
    %5488 = vmatprep.subr.bf16.mxu0 %v3544
    %5489 = vmatpush1.bf16.msra.mxu0 %v3543
    %5490 = vmatprep.subr.bf16.mxu0 %v3560
    %5491 = vmatpush1.bf16.msra.mxu0 %v3559
    %5492 = vmatprep.mubr.bf16.mxu0 %v148
    %5493 = vmatmul.mubr.bf16.gmra.mrb[0].mxu0 %v147
    %v5494 = vpop.f32.mrb[0].mxu0
    %v5495 = vadd.f32 %v968, %v5494
    %v5496 = vpop.f32.mrb[0].mxu0
    %v5497 = vadd.f32 %v972, %v5496
    %v5498 = vpop.f32.mrb[0].mxu0
    %v5499 = vpop.f32.mrb[0].mxu0
    %5500 = vdwg.mxu0
    %5501 = vmatprep.subr.bf16.mxu0 %v3576
    %5502 = vmatpush1.bf16.msra.mxu0 %v3575
    %5503 = vmatprep.subr.bf16.mxu0 %v3592
    %5504 = vmatpush1.bf16.msra.mxu0 %v3591
    %5505 = vmatprep.subr.bf16.mxu0 %v3608
    %5506 = vmatpush1.bf16.msra.mxu0 %v3607
    %5507 = vmatprep.subr.bf16.mxu0 %v3624
    %5508 = vmatpush1.bf16.msra.mxu0 %v3623
    %5509 = vmatprep.subr.bf16.mxu0 %v3640
    %5510 = vmatpush1.bf16.msra.mxu0 %v3639
    %5511 = vmatprep.subr.bf16.mxu0 %v3656
    %5512 = vmatpush1.bf16.msra.mxu0 %v3655
    %5513 = vmatprep.subr.bf16.mxu0 %v3672
    %5514 = vmatpush1.bf16.msra.mxu0 %v3671
    %5515 = vmatprep.subr.bf16.mxu0 %v3688
    %5516 = vmatpush1.bf16.msra.mxu0 %v3687
    %5517 = vmatprep.subr.bf16.mxu0 %v3704
    %5518 = vmatpush1.bf16.msra.mxu0 %v3703
    %5519 = vmatprep.subr.bf16.mxu0 %v3720
    %5520 = vmatpush1.bf16.msra.mxu0 %v3719
    %5521 = vmatprep.subr.bf16.mxu0 %v3736
    %5522 = vmatpush1.bf16.msra.mxu0 %v3735
    %5523 = vmatprep.subr.bf16.mxu0 %v3752
    %5524 = vmatpush1.bf16.msra.mxu0 %v3751
    %5525 = vmatprep.subr.bf16.mxu0 %v3768
    %5526 = vmatpush1.bf16.msra.mxu0 %v3767
    %5527 = vmatprep.subr.bf16.mxu0 %v3784
    %5528 = vmatpush1.bf16.msra.mxu0 %v3783
    %5529 = vmatprep.subr.bf16.mxu0 %v3800
    %5530 = vmatpush1.bf16.msra.mxu0 %v3799
    %5531 = vmatprep.subr.bf16.mxu0 %v3816
    %5532 = vmatpush1.bf16.msra.mxu0 %v3815
    %5533 = vmatprep.mubr.bf16.mxu0 %v150
    %5534 = vmatmul.mubr.bf16.gmra.mrb[0].mxu0 %v149
    %v5535 = vpop.f32.mrb[0].mxu0
    %v5536 = vadd.f32 %v5495, %v5535
    %v5537 = vpop.f32.mrb[0].mxu0
    %v5538 = vadd.f32 %v5497, %v5537
    %v5539 = vpop.f32.mrb[0].mxu0
    %v5540 = vpop.f32.mrb[0].mxu0
    %5541 = vdwg.mxu0
    %5542 = vmatprep.subr.bf16.mxu0 %v3832
    %5543 = vmatpush1.bf16.msra.mxu0 %v3831
    %5544 = vmatprep.subr.bf16.mxu0 %v3848
    %5545 = vmatpush1.bf16.msra.mxu0 %v3847
    %5546 = vmatprep.subr.bf16.mxu0 %v3864
    %5547 = vmatpush1.bf16.msra.mxu0 %v3863
    %5548 = vmatprep.subr.bf16.mxu0 %v3880
    %5549 = vmatpush1.bf16.msra.mxu0 %v3879
    %5550 = vmatprep.subr.bf16.mxu0 %v3896
    %5551 = vmatpush1.bf16.msra.mxu0 %v3895
    %5552 = vmatprep.subr.bf16.mxu0 %v3912
    %5553 = vmatpush1.bf16.msra.mxu0 %v3911
    %5554 = vmatprep.subr.bf16.mxu0 %v3928
    %5555 = vmatpush1.bf16.msra.mxu0 %v3927
    %5556 = vmatprep.subr.bf16.mxu0 %v3944
    %5557 = vmatpush1.bf16.msra.mxu0 %v3943
    %5558 = vmatprep.subr.bf16.mxu0 %v3960
    %5559 = vmatpush1.bf16.msra.mxu0 %v3959
    %5560 = vmatprep.subr.bf16.mxu0 %v3976
    %5561 = vmatpush1.bf16.msra.mxu0 %v3975
    %5562 = vmatprep.subr.bf16.mxu0 %v3992
    %5563 = vmatpush1.bf16.msra.mxu0 %v3991
    %5564 = vmatprep.subr.bf16.mxu0 %v4008
    %5565 = vmatpush1.bf16.msra.mxu0 %v4007
    %5566 = vmatprep.subr.bf16.mxu0 %v4024
    %5567 = vmatpush1.bf16.msra.mxu0 %v4023
    %5568 = vmatprep.subr.bf16.mxu0 %v4040
    %5569 = vmatpush1.bf16.msra.mxu0 %v4039
    %5570 = vmatprep.subr.bf16.mxu0 %v4056
    %5571 = vmatpush1.bf16.msra.mxu0 %v4055
    %5572 = vmatprep.subr.bf16.mxu0 %v4072
    %5573 = vmatpush1.bf16.msra.mxu0 %v4071
    %5574 = vmatprep.mubr.bf16.mxu0 %v152
    %5575 = vmatmul.mubr.bf16.gmra.mrb[0].mxu0 %v151
    %v5576 = vpop.f32.mrb[0].mxu0
    %v5577 = vadd.f32 %v5536, %v5576
    %v5578 = vpop.f32.mrb[0].mxu0
    %v5579 = vadd.f32 %v5538, %v5578
    %v5580 = vpop.f32.mrb[0].mxu0
    %v5581 = vpop.f32.mrb[0].mxu0
    %5582 = vdwg.mxu0
    %5583 = vmatprep.subr.bf16.mxu0 %v3322
    %5584 = vmatpush1.bf16.msra.mxu0 %v3321
    %5585 = vmatprep.subr.bf16.mxu0 %v3338
    %5586 = vmatpush1.bf16.msra.mxu0 %v3337
    %5587 = vmatprep.subr.bf16.mxu0 %v3354
    %5588 = vmatpush1.bf16.msra.mxu0 %v3353
    %5589 = vmatprep.subr.bf16.mxu0 %v3370
    %5590 = vmatpush1.bf16.msra.mxu0 %v3369
    %5591 = vmatprep.subr.bf16.mxu0 %v3386
    %5592 = vmatpush1.bf16.msra.mxu0 %v3385
    %5593 = vmatprep.subr.bf16.mxu0 %v3402
    %5594 = vmatpush1.bf16.msra.mxu0 %v3401
    %5595 = vmatprep.subr.bf16.mxu0 %v3418
    %5596 = vmatpush1.bf16.msra.mxu0 %v3417
    %5597 = vmatprep.subr.bf16.mxu0 %v3434
    %5598 = vmatpush1.bf16.msra.mxu0 %v3433
    %5599 = vmatprep.subr.bf16.mxu0 %v3450
    %5600 = vmatpush1.bf16.msra.mxu0 %v3449
    %5601 = vmatprep.subr.bf16.mxu0 %v3466
    %5602 = vmatpush1.bf16.msra.mxu0 %v3465
    %5603 = vmatprep.subr.bf16.mxu0 %v3482
    %5604 = vmatpush1.bf16.msra.mxu0 %v3481
    %5605 = vmatprep.subr.bf16.mxu0 %v3498
    %5606 = vmatpush1.bf16.msra.mxu0 %v3497
    %5607 = vmatprep.subr.bf16.mxu0 %v3514
    %5608 = vmatpush1.bf16.msra.mxu0 %v3513
    %5609 = vmatprep.subr.bf16.mxu0 %v3530
    %5610 = vmatpush1.bf16.msra.mxu0 %v3529
    %5611 = vmatprep.subr.bf16.mxu0 %v3546
    %5612 = vmatpush1.bf16.msra.mxu0 %v3545
    %5613 = vmatprep.subr.bf16.mxu0 %v3562
    %5614 = vmatpush1.bf16.msra.mxu0 %v3561
    %5615 = vmatprep.mubr.bf16.mxu0 %v148
    %5616 = vmatmul.mubr.bf16.gmra.mrb[0].mxu0 %v147
    %v5617 = vpop.f32.mrb[0].mxu0
    %v5618 = vadd.f32 %v976, %v5617
    %v5619 = vpop.f32.mrb[0].mxu0
    %v5620 = vadd.f32 %v980, %v5619
    %v5621 = vpop.f32.mrb[0].mxu0
    %v5622 = vpop.f32.mrb[0].mxu0
    %5623 = vdwg.mxu0
    %5624 = vmatprep.subr.bf16.mxu0 %v3578
    %5625 = vmatpush1.bf16.msra.mxu0 %v3577
    %5626 = vmatprep.subr.bf16.mxu0 %v3594
    %5627 = vmatpush1.bf16.msra.mxu0 %v3593
    %5628 = vmatprep.subr.bf16.mxu0 %v3610
    %5629 = vmatpush1.bf16.msra.mxu0 %v3609
    %5630 = vmatprep.subr.bf16.mxu0 %v3626
    %5631 = vmatpush1.bf16.msra.mxu0 %v3625
    %5632 = vmatprep.subr.bf16.mxu0 %v3642
    %5633 = vmatpush1.bf16.msra.mxu0 %v3641
    %5634 = vmatprep.subr.bf16.mxu0 %v3658
    %5635 = vmatpush1.bf16.msra.mxu0 %v3657
    %5636 = vmatprep.subr.bf16.mxu0 %v3674
    %5637 = vmatpush1.bf16.msra.mxu0 %v3673
    %5638 = vmatprep.subr.bf16.mxu0 %v3690
    %5639 = vmatpush1.bf16.msra.mxu0 %v3689
    %5640 = vmatprep.subr.bf16.mxu0 %v3706
    %5641 = vmatpush1.bf16.msra.mxu0 %v3705
    %5642 = vmatprep.subr.bf16.mxu0 %v3722
    %5643 = vmatpush1.bf16.msra.mxu0 %v3721
    %5644 = vmatprep.subr.bf16.mxu0 %v3738
    %5645 = vmatpush1.bf16.msra.mxu0 %v3737
    %5646 = vmatprep.subr.bf16.mxu0 %v3754
    %5647 = vmatpush1.bf16.msra.mxu0 %v3753
    %5648 = vmatprep.subr.bf16.mxu0 %v3770
    %5649 = vmatpush1.bf16.msra.mxu0 %v3769
    %5650 = vmatprep.subr.bf16.mxu0 %v3786
    %5651 = vmatpush1.bf16.msra.mxu0 %v3785
    %5652 = vmatprep.subr.bf16.mxu0 %v3802
    %5653 = vmatpush1.bf16.msra.mxu0 %v3801
    %5654 = vmatprep.subr.bf16.mxu0 %v3818
    %5655 = vmatpush1.bf16.msra.mxu0 %v3817
    %5656 = vmatprep.mubr.bf16.mxu0 %v150
    %5657 = vmatmul.mubr.bf16.gmra.mrb[0].mxu0 %v149
    %v5658 = vpop.f32.mrb[0].mxu0
    %v5659 = vadd.f32 %v5618, %v5658
    %v5660 = vpop.f32.mrb[0].mxu0
    %v5661 = vadd.f32 %v5620, %v5660
    %v5662 = vpop.f32.mrb[0].mxu0
    %v5663 = vpop.f32.mrb[0].mxu0
    %5664 = vdwg.mxu0
    %5665 = vmatprep.subr.bf16.mxu0 %v3834
    %5666 = vmatpush1.bf16.msra.mxu0 %v3833
    %5667 = vmatprep.subr.bf16.mxu0 %v3850
    %5668 = vmatpush1.bf16.msra.mxu0 %v3849
    %5669 = vmatprep.subr.bf16.mxu0 %v3866
    %5670 = vmatpush1.bf16.msra.mxu0 %v3865
    %5671 = vmatprep.subr.bf16.mxu0 %v3882
    %5672 = vmatpush1.bf16.msra.mxu0 %v3881
    %5673 = vmatprep.subr.bf16.mxu0 %v3898
    %5674 = vmatpush1.bf16.msra.mxu0 %v3897
    %5675 = vmatprep.subr.bf16.mxu0 %v3914
    %5676 = vmatpush1.bf16.msra.mxu0 %v3913
    %5677 = vmatprep.subr.bf16.mxu0 %v3930
    %5678 = vmatpush1.bf16.msra.mxu0 %v3929
    %5679 = vmatprep.subr.bf16.mxu0 %v3946
    %5680 = vmatpush1.bf16.msra.mxu0 %v3945
    %5681 = vmatprep.subr.bf16.mxu0 %v3962
    %5682 = vmatpush1.bf16.msra.mxu0 %v3961
    %5683 = vmatprep.subr.bf16.mxu0 %v3978
    %5684 = vmatpush1.bf16.msra.mxu0 %v3977
    %5685 = vmatprep.subr.bf16.mxu0 %v3994
    %5686 = vmatpush1.bf16.msra.mxu0 %v3993
    %5687 = vmatprep.subr.bf16.mxu0 %v4010
    %5688 = vmatpush1.bf16.msra.mxu0 %v4009
    %5689 = vmatprep.subr.bf16.mxu0 %v4026
    %5690 = vmatpush1.bf16.msra.mxu0 %v4025
    %5691 = vmatprep.subr.bf16.mxu0 %v4042
    %5692 = vmatpush1.bf16.msra.mxu0 %v4041
    %5693 = vmatprep.subr.bf16.mxu0 %v4058
    %5694 = vmatpush1.bf16.msra.mxu0 %v4057
    %5695 = vmatprep.subr.bf16.mxu0 %v4074
    %5696 = vmatpush1.bf16.msra.mxu0 %v4073
    %5697 = vmatprep.mubr.bf16.mxu0 %v152
    %5698 = vmatmul.mubr.bf16.gmra.mrb[0].mxu0 %v151
    %v5699 = vpop.f32.mrb[0].mxu0
    %v5700 = vadd.f32 %v5659, %v5699
    %v5701 = vpop.f32.mrb[0].mxu0
    %v5702 = vadd.f32 %v5661, %v5701
    %v5703 = vpop.f32.mrb[0].mxu0
    %v5704 = vpop.f32.mrb[0].mxu0
    %5705 = vdwg.mxu0
    %5706 = vmatprep.subr.bf16.mxu0 %v3324
    %5707 = vmatpush1.bf16.msra.mxu0 %v3323
    %5708 = vmatprep.subr.bf16.mxu0 %v3340
    %5709 = vmatpush1.bf16.msra.mxu0 %v3339
    %5710 = vmatprep.subr.bf16.mxu0 %v3356
    %5711 = vmatpush1.bf16.msra.mxu0 %v3355
    %5712 = vmatprep.subr.bf16.mxu0 %v3372
    %5713 = vmatpush1.bf16.msra.mxu0 %v3371
    %5714 = vmatprep.subr.bf16.mxu0 %v3388
    %5715 = vmatpush1.bf16.msra.mxu0 %v3387
    %5716 = vmatprep.subr.bf16.mxu0 %v3404
    %5717 = vmatpush1.bf16.msra.mxu0 %v3403
    %5718 = vmatprep.subr.bf16.mxu0 %v3420
    %5719 = vmatpush1.bf16.msra.mxu0 %v3419
    %5720 = vmatprep.subr.bf16.mxu0 %v3436
    %5721 = vmatpush1.bf16.msra.mxu0 %v3435
    %5722 = vmatprep.subr.bf16.mxu0 %v3452
    %5723 = vmatpush1.bf16.msra.mxu0 %v3451
    %5724 = vmatprep.subr.bf16.mxu0 %v3468
    %5725 = vmatpush1.bf16.msra.mxu0 %v3467
    %5726 = vmatprep.subr.bf16.mxu0 %v3484
    %5727 = vmatpush1.bf16.msra.mxu0 %v3483
    %5728 = vmatprep.subr.bf16.mxu0 %v3500
    %5729 = vmatpush1.bf16.msra.mxu0 %v3499
    %5730 = vmatprep.subr.bf16.mxu0 %v3516
    %5731 = vmatpush1.bf16.msra.mxu0 %v3515
    %5732 = vmatprep.subr.bf16.mxu0 %v3532
    %5733 = vmatpush1.bf16.msra.mxu0 %v3531
    %5734 = vmatprep.subr.bf16.mxu0 %v3548
    %5735 = vmatpush1.bf16.msra.mxu0 %v3547
    %5736 = vmatprep.subr.bf16.mxu0 %v3564
    %5737 = vmatpush1.bf16.msra.mxu0 %v3563
    %5738 = vmatprep.mubr.bf16.mxu0 %v148
    %5739 = vmatmul.mubr.bf16.gmra.mrb[0].mxu0 %v147
    %v5740 = vpop.f32.mrb[0].mxu0
    %v5741 = vadd.f32 %v984, %v5740
    %v5742 = vpop.f32.mrb[0].mxu0
    %v5743 = vadd.f32 %v988, %v5742
    %v5744 = vpop.f32.mrb[0].mxu0
    %v5745 = vpop.f32.mrb[0].mxu0
    %5746 = vdwg.mxu0
    %5747 = vmatprep.subr.bf16.mxu0 %v3580
    %5748 = vmatpush1.bf16.msra.mxu0 %v3579
    %5749 = vmatprep.subr.bf16.mxu0 %v3596
    %5750 = vmatpush1.bf16.msra.mxu0 %v3595
    %5751 = vmatprep.subr.bf16.mxu0 %v3612
    %5752 = vmatpush1.bf16.msra.mxu0 %v3611
    %5753 = vmatprep.subr.bf16.mxu0 %v3628
    %5754 = vmatpush1.bf16.msra.mxu0 %v3627
    %5755 = vmatprep.subr.bf16.mxu0 %v3644
    %5756 = vmatpush1.bf16.msra.mxu0 %v3643
    %5757 = vmatprep.subr.bf16.mxu0 %v3660
    %5758 = vmatpush1.bf16.msra.mxu0 %v3659
    %5759 = vmatprep.subr.bf16.mxu0 %v3676
    %5760 = vmatpush1.bf16.msra.mxu0 %v3675
    %5761 = vmatprep.subr.bf16.mxu0 %v3692
    %5762 = vmatpush1.bf16.msra.mxu0 %v3691
    %5763 = vmatprep.subr.bf16.mxu0 %v3708
    %5764 = vmatpush1.bf16.msra.mxu0 %v3707
    %5765 = vmatprep.subr.bf16.mxu0 %v3724
    %5766 = vmatpush1.bf16.msra.mxu0 %v3723
    %5767 = vmatprep.subr.bf16.mxu0 %v3740
    %5768 = vmatpush1.bf16.msra.mxu0 %v3739
    %5769 = vmatprep.subr.bf16.mxu0 %v3756
    %5770 = vmatpush1.bf16.msra.mxu0 %v3755
    %5771 = vmatprep.subr.bf16.mxu0 %v3772
    %5772 = vmatpush1.bf16.msra.mxu0 %v3771
    %5773 = vmatprep.subr.bf16.mxu0 %v3788
    %5774 = vmatpush1.bf16.msra.mxu0 %v3787
    %5775 = vmatprep.subr.bf16.mxu0 %v3804
    %5776 = vmatpush1.bf16.msra.mxu0 %v3803
    %5777 = vmatprep.subr.bf16.mxu0 %v3820
    %5778 = vmatpush1.bf16.msra.mxu0 %v3819
    %5779 = vmatprep.mubr.bf16.mxu0 %v150
    %5780 = vmatmul.mubr.bf16.gmra.mrb[0].mxu0 %v149
    %v5781 = vpop.f32.mrb[0].mxu0
    %v5782 = vadd.f32 %v5741, %v5781
    %v5783 = vpop.f32.mrb[0].mxu0
    %v5784 = vadd.f32 %v5743, %v5783
    %v5785 = vpop.f32.mrb[0].mxu0
    %v5786 = vpop.f32.mrb[0].mxu0
    %5787 = vdwg.mxu0
    %5788 = vmatprep.subr.bf16.mxu0 %v3836
    %5789 = vmatpush1.bf16.msra.mxu0 %v3835
    %5790 = vmatprep.subr.bf16.mxu0 %v3852
    %5791 = vmatpush1.bf16.msra.mxu0 %v3851
    %5792 = vmatprep.subr.bf16.mxu0 %v3868
    %5793 = vmatpush1.bf16.msra.mxu0 %v3867
    %5794 = vmatprep.subr.bf16.mxu0 %v3884
    %5795 = vmatpush1.bf16.msra.mxu0 %v3883
    %5796 = vmatprep.subr.bf16.mxu0 %v3900
    %5797 = vmatpush1.bf16.msra.mxu0 %v3899
    %5798 = vmatprep.subr.bf16.mxu0 %v3916
    %5799 = vmatpush1.bf16.msra.mxu0 %v3915
    %5800 = vmatprep.subr.bf16.mxu0 %v3932
    %5801 = vmatpush1.bf16.msra.mxu0 %v3931
    %5802 = vmatprep.subr.bf16.mxu0 %v3948
    %5803 = vmatpush1.bf16.msra.mxu0 %v3947
    %5804 = vmatprep.subr.bf16.mxu0 %v3964
    %5805 = vmatpush1.bf16.msra.mxu0 %v3963
    %5806 = vmatprep.subr.bf16.mxu0 %v3980
    %5807 = vmatpush1.bf16.msra.mxu0 %v3979
    %5808 = vmatprep.subr.bf16.mxu0 %v3996
    %5809 = vmatpush1.bf16.msra.mxu0 %v3995
    %5810 = vmatprep.subr.bf16.mxu0 %v4012
    %5811 = vmatpush1.bf16.msra.mxu0 %v4011
    %5812 = vmatprep.subr.bf16.mxu0 %v4028
    %5813 = vmatpush1.bf16.msra.mxu0 %v4027
    %5814 = vmatprep.subr.bf16.mxu0 %v4044
    %5815 = vmatpush1.bf16.msra.mxu0 %v4043
    %5816 = vmatprep.subr.bf16.mxu0 %v4060
    %5817 = vmatpush1.bf16.msra.mxu0 %v4059
    %5818 = vmatprep.subr.bf16.mxu0 %v4076
    %5819 = vmatpush1.bf16.msra.mxu0 %v4075
    %5820 = vmatprep.mubr.bf16.mxu0 %v152
    %5821 = vmatmul.mubr.bf16.gmra.mrb[0].mxu0 %v151
    %v5822 = vpop.f32.mrb[0].mxu0
    %v5823 = vadd.f32 %v5782, %v5822
    %v5824 = vpop.f32.mrb[0].mxu0
    %v5825 = vadd.f32 %v5784, %v5824
    %v5826 = vpop.f32.mrb[0].mxu0
    %v5827 = vpop.f32.mrb[0].mxu0
    %5828 = vdwg.mxu0
    %vm5829 = vcmp.ge.f32.partialorder %v4962, 0.0
    %vm5830 = vcmp.ge.f32.partialorder %v4964, 0.0
    %vm5831 = vcmp.ge.f32.partialorder %v5085, 0.0
    %vm5832 = vcmp.ge.f32.partialorder %v5087, 0.0
    %vm5833 = vcmp.ge.f32.partialorder %v5208, 0.0
    %vm5834 = vcmp.ge.f32.partialorder %v5210, 0.0
    %vm5835 = vcmp.ge.f32.partialorder %v5331, 0.0
    %vm5836 = vcmp.ge.f32.partialorder %v5333, 0.0
    %vm5837 = vcmp.ge.f32.partialorder %v5454, 0.0
    %vm5838 = vcmp.ge.f32.partialorder %v5456, 0.0
    %vm5839 = vcmp.ge.f32.partialorder %v5577, 0.0
    %vm5840 = vcmp.ge.f32.partialorder %v5579, 0.0
    %vm5841 = vcmp.ge.f32.partialorder %v5700, 0.0
    %vm5842 = vcmp.ge.f32.partialorder %v5702, 0.0
    %vm5843 = vcmp.ge.f32.partialorder %v5823, 0.0
    %vm5844 = vcmp.ge.f32.partialorder %v5825, 0.0
    %v5845 = vmul.f32 %v4962, 0.05
    %v5846 = vmul.f32 %v4964, 0.05
    %v5847 = vmul.f32 %v5085, 0.05
    %v5848 = vmul.f32 %v5087, 0.05
    %v5849 = vmul.f32 %v5208, 0.05
    %v5850 = vmul.f32 %v5210, 0.05
    %v5851 = vmul.f32 %v5331, 0.05
    %v5852 = vmul.f32 %v5333, 0.05
    %v5853 = vmul.f32 %v5454, 0.05
    %v5854 = vmul.f32 %v5456, 0.05
    %v5855 = vmul.f32 %v5577, 0.05
    %v5856 = vmul.f32 %v5579, 0.05
    %v5857 = vmul.f32 %v5700, 0.05
    %v5858 = vmul.f32 %v5702, 0.05
    %v5859 = vmul.f32 %v5823, 0.05
    %v5860 = vmul.f32 %v5825, 0.05
    %v5861 = vsel %vm5829, %v4962, %v5845
    %v5862 = vsel %vm5830, %v4964, %v5846
    %v5863 = vsel %vm5831, %v5085, %v5847
    %v5864 = vsel %vm5832, %v5087, %v5848
    %v5865 = vsel %vm5833, %v5208, %v5849
    %v5866 = vsel %vm5834, %v5210, %v5850
    %v5867 = vsel %vm5835, %v5331, %v5851
    %v5868 = vsel %vm5836, %v5333, %v5852
    %v5869 = vsel %vm5837, %v5454, %v5853
    %v5870 = vsel %vm5838, %v5456, %v5854
    %v5871 = vsel %vm5839, %v5577, %v5855
    %v5872 = vsel %vm5840, %v5579, %v5856
    %v5873 = vsel %vm5841, %v5700, %v5857
    %v5874 = vsel %vm5842, %v5702, %v5858
    %v5875 = vsel %vm5843, %v5823, %v5859
    %v5876 = vsel %vm5844, %v5825, %v5860
    %v5877 = vpack.c.bf16 %v5861, %v5861
    %v5878 = vpack.c.bf16 %v5862, %v5862
    %v5879 = vpack.c.bf16 %v5863, %v5863
    %v5880 = vpack.c.bf16 %v5864, %v5864
    %v5881 = vpack.c.bf16 %v5865, %v5865
    %v5882 = vpack.c.bf16 %v5866, %v5866
    %v5883 = vpack.c.bf16 %v5867, %v5867
    %v5884 = vpack.c.bf16 %v5868, %v5868
    %v5885 = vpack.c.bf16 %v5869, %v5869
    %v5886 = vpack.c.bf16 %v5870, %v5870
    %v5887 = vpack.c.bf16 %v5871, %v5871
    %v5888 = vpack.c.bf16 %v5872, %v5872
    %v5889 = vpack.c.bf16 %v5873, %v5873
    %v5890 = vpack.c.bf16 %v5874, %v5874
    %v5891 = vpack.c.bf16 %v5875, %v5875
    %v5892 = vpack.c.bf16 %v5876, %v5876
    %v5893 = vld [vmem:[#allocation7] sm:$0xff]
    %v5894 = vld [vmem:[#allocation7 + $0x8] sm:$0xff]
    %v5895 = vld [vmem:[#allocation7 + $0x10] sm:$0xff]
    %v5896 = vld [vmem:[#allocation7 + $0x18] sm:$0xff]
    %v5897 = vld [vmem:[#allocation7 + $0x20] sm:$0xff]
    %v5898 = vld [vmem:[#allocation7 + $0x28] sm:$0xff]
    %v5899 = vld [vmem:[#allocation7 + $0x30] sm:$0xff]
    %v5900 = vld [vmem:[#allocation7 + $0x38] sm:$0xff]
    %v5901 = vld [vmem:[#allocation7 + $0x40] sm:$0xff]
    %v5902 = vld [vmem:[#allocation7 + $0x48] sm:$0xff]
    %v5903 = vld [vmem:[#allocation7 + $0x50] sm:$0xff]
    %v5904 = vld [vmem:[#allocation7 + $0x58] sm:$0xff]
    %v5905 = vld [vmem:[#allocation7 + $0x60] sm:$0xff]
    %v5906 = vld [vmem:[#allocation7 + $0x68] sm:$0xff]
    %v5907 = vld [vmem:[#allocation7 + $0x70] sm:$0xff]
    %v5908 = vld [vmem:[#allocation7 + $0x78] sm:$0xff]
    %v5909 = vld [vmem:[#allocation7 + $0x80] sm:$0xff]
    %v5910 = vld [vmem:[#allocation7 + $0x88] sm:$0xff]
    %v5911 = vld [vmem:[#allocation7 + $0x90] sm:$0xff]
    %v5912 = vld [vmem:[#allocation7 + $0x98] sm:$0xff]
    %v5913 = vld [vmem:[#allocation7 + $0xa0] sm:$0xff]
    %v5914 = vld [vmem:[#allocation7 + $0xa8] sm:$0xff]
    %v5915 = vld [vmem:[#allocation7 + $0xb0] sm:$0xff]
    %v5916 = vld [vmem:[#allocation7 + $0xb8] sm:$0xff]
    %v5917 = vld [vmem:[#allocation7 + $0xc0] sm:$0xff]
    %v5918 = vld [vmem:[#allocation7 + $0xc8] sm:$0xff]
    %v5919 = vld [vmem:[#allocation7 + $0xd0] sm:$0xff]
    %v5920 = vld [vmem:[#allocation7 + $0xd8] sm:$0xff]
    %v5921 = vld [vmem:[#allocation7 + $0xe0] sm:$0xff]
    %v5922 = vld [vmem:[#allocation7 + $0xe8] sm:$0xff]
    %v5923 = vld [vmem:[#allocation7 + $0xf0] sm:$0xff]
    %v5924 = vld [vmem:[#allocation7 + $0xf8] sm:$0xff]
    %v5925 = vld [vmem:[#allocation7 + $0x100] sm:$0xff]
    %v5926 = vld [vmem:[#allocation7 + $0x108] sm:$0xff]
    %v5927 = vld [vmem:[#allocation7 + $0x110] sm:$0xff]
    %v5928 = vld [vmem:[#allocation7 + $0x118] sm:$0xff]
    %v5929 = vld [vmem:[#allocation7 + $0x120] sm:$0xff]
    %v5930 = vld [vmem:[#allocation7 + $0x128] sm:$0xff]
    %v5931 = vld [vmem:[#allocation7 + $0x130] sm:$0xff]
    %v5932 = vld [vmem:[#allocation7 + $0x138] sm:$0xff]
    %v5933 = vld [vmem:[#allocation7 + $0x140] sm:$0xff]
    %v5934 = vld [vmem:[#allocation7 + $0x148] sm:$0xff]
    %v5935 = vld [vmem:[#allocation7 + $0x150] sm:$0xff]
    %v5936 = vld [vmem:[#allocation7 + $0x158] sm:$0xff]
    %v5937 = vld [vmem:[#allocation7 + $0x160] sm:$0xff]
    %v5938 = vld [vmem:[#allocation7 + $0x168] sm:$0xff]
    %v5939 = vld [vmem:[#allocation7 + $0x170] sm:$0xff]
    %v5940 = vld [vmem:[#allocation7 + $0x178] sm:$0xff]
    %v5941 = vld [vmem:[#allocation7 + $0x180] sm:$0xff]
    %v5942 = vld [vmem:[#allocation7 + $0x188] sm:$0xff]
    %v5943 = vld [vmem:[#allocation7 + $0x190] sm:$0xff]
    %v5944 = vld [vmem:[#allocation7 + $0x198] sm:$0xff]
    %v5945 = vld [vmem:[#allocation7 + $0x1a0] sm:$0xff]
    %v5946 = vld [vmem:[#allocation7 + $0x1a8] sm:$0xff]
    %v5947 = vld [vmem:[#allocation7 + $0x1b0] sm:$0xff]
    %v5948 = vld [vmem:[#allocation7 + $0x1b8] sm:$0xff]
    %v5949 = vld [vmem:[#allocation7 + $0x1c0] sm:$0xff]
    %v5950 = vld [vmem:[#allocation7 + $0x1c8] sm:$0xff]
    %v5951 = vld [vmem:[#allocation7 + $0x1d0] sm:$0xff]
    %v5952 = vld [vmem:[#allocation7 + $0x1d8] sm:$0xff]
    %v5953 = vld [vmem:[#allocation7 + $0x1e0] sm:$0xff]
    %v5954 = vld [vmem:[#allocation7 + $0x1e8] sm:$0xff]
    %v5955 = vld [vmem:[#allocation7 + $0x1f0] sm:$0xff]
    %v5956 = vld [vmem:[#allocation7 + $0x1f8] sm:$0xff]
    %v5957 = vld [vmem:[#allocation7 + $0x200] sm:$0xff]
    %v5958 = vld [vmem:[#allocation7 + $0x208] sm:$0xff]
    %v5959 = vld [vmem:[#allocation7 + $0x210] sm:$0xff]
    %v5960 = vld [vmem:[#allocation7 + $0x218] sm:$0xff]
    %v5961 = vld [vmem:[#allocation7 + $0x220] sm:$0xff]
    %v5962 = vld [vmem:[#allocation7 + $0x228] sm:$0xff]
    %v5963 = vld [vmem:[#allocation7 + $0x230] sm:$0xff]
    %v5964 = vld [vmem:[#allocation7 + $0x238] sm:$0xff]
    %v5965 = vld [vmem:[#allocation7 + $0x240] sm:$0xff]
    %v5966 = vld [vmem:[#allocation7 + $0x248] sm:$0xff]
    %v5967 = vld [vmem:[#allocation7 + $0x250] sm:$0xff]
    %v5968 = vld [vmem:[#allocation7 + $0x258] sm:$0xff]
    %v5969 = vld [vmem:[#allocation7 + $0x260] sm:$0xff]
    %v5970 = vld [vmem:[#allocation7 + $0x268] sm:$0xff]
    %v5971 = vld [vmem:[#allocation7 + $0x270] sm:$0xff]
    %v5972 = vld [vmem:[#allocation7 + $0x278] sm:$0xff]
    %v5973 = vld [vmem:[#allocation7 + $0x280] sm:$0xff]
    %v5974 = vld [vmem:[#allocation7 + $0x288] sm:$0xff]
    %v5975 = vld [vmem:[#allocation7 + $0x290] sm:$0xff]
    %v5976 = vld [vmem:[#allocation7 + $0x298] sm:$0xff]
    %v5977 = vld [vmem:[#allocation7 + $0x2a0] sm:$0xff]
    %v5978 = vld [vmem:[#allocation7 + $0x2a8] sm:$0xff]
    %v5979 = vld [vmem:[#allocation7 + $0x2b0] sm:$0xff]
    %v5980 = vld [vmem:[#allocation7 + $0x2b8] sm:$0xff]
    %v5981 = vld [vmem:[#allocation7 + $0x2c0] sm:$0xff]
    %v5982 = vld [vmem:[#allocation7 + $0x2c8] sm:$0xff]
    %v5983 = vld [vmem:[#allocation7 + $0x2d0] sm:$0xff]
    %v5984 = vld [vmem:[#allocation7 + $0x2d8] sm:$0xff]
    %v5985 = vld [vmem:[#allocation7 + $0x2e0] sm:$0xff]
    %v5986 = vld [vmem:[#allocation7 + $0x2e8] sm:$0xff]
    %v5987 = vld [vmem:[#allocation7 + $0x2f0] sm:$0xff]
    %v5988 = vld [vmem:[#allocation7 + $0x2f8] sm:$0xff]
    %v5989 = vld [vmem:[#allocation7 + $0x300] sm:$0xff]
    %v5990 = vld [vmem:[#allocation7 + $0x308] sm:$0xff]
    %v5991 = vld [vmem:[#allocation7 + $0x310] sm:$0xff]
    %v5992 = vld [vmem:[#allocation7 + $0x318] sm:$0xff]
    %v5993 = vld [vmem:[#allocation7 + $0x320] sm:$0xff]
    %v5994 = vld [vmem:[#allocation7 + $0x328] sm:$0xff]
    %v5995 = vld [vmem:[#allocation7 + $0x330] sm:$0xff]
    %v5996 = vld [vmem:[#allocation7 + $0x338] sm:$0xff]
    %v5997 = vld [vmem:[#allocation7 + $0x340] sm:$0xff]
    %v5998 = vld [vmem:[#allocation7 + $0x348] sm:$0xff]
    %v5999 = vld [vmem:[#allocation7 + $0x350] sm:$0xff]
    %v6000 = vld [vmem:[#allocation7 + $0x358] sm:$0xff]
    %v6001 = vld [vmem:[#allocation7 + $0x360] sm:$0xff]
    %v6002 = vld [vmem:[#allocation7 + $0x368] sm:$0xff]
    %v6003 = vld [vmem:[#allocation7 + $0x370] sm:$0xff]
    %v6004 = vld [vmem:[#allocation7 + $0x378] sm:$0xff]
    %v6005 = vld [vmem:[#allocation7 + $0x380] sm:$0xff]
    %v6006 = vld [vmem:[#allocation7 + $0x388] sm:$0xff]
    %v6007 = vld [vmem:[#allocation7 + $0x390] sm:$0xff]
    %v6008 = vld [vmem:[#allocation7 + $0x398] sm:$0xff]
    %v6009 = vld [vmem:[#allocation7 + $0x3a0] sm:$0xff]
    %v6010 = vld [vmem:[#allocation7 + $0x3a8] sm:$0xff]
    %v6011 = vld [vmem:[#allocation7 + $0x3b0] sm:$0xff]
    %v6012 = vld [vmem:[#allocation7 + $0x3b8] sm:$0xff]
    %v6013 = vld [vmem:[#allocation7 + $0x3c0] sm:$0xff]
    %v6014 = vld [vmem:[#allocation7 + $0x3c8] sm:$0xff]
    %v6015 = vld [vmem:[#allocation7 + $0x3d0] sm:$0xff]
    %v6016 = vld [vmem:[#allocation7 + $0x3d8] sm:$0xff]
    %v6017 = vld [vmem:[#allocation7 + $0x3e0] sm:$0xff]
    %v6018 = vld [vmem:[#allocation7 + $0x3e8] sm:$0xff]
    %v6019 = vld [vmem:[#allocation7 + $0x3f0] sm:$0xff]
    %v6020 = vld [vmem:[#allocation7 + $0x3f8] sm:$0xff]
    %v6021 = vld [vmem:[#allocation7 + $0x400] sm:$0xff]
    %v6022 = vld [vmem:[#allocation7 + $0x408] sm:$0xff]
    %v6023 = vld [vmem:[#allocation7 + $0x410] sm:$0xff]
    %v6024 = vld [vmem:[#allocation7 + $0x418] sm:$0xff]
    %v6025 = vld [vmem:[#allocation7 + $0x420] sm:$0xff]
    %v6026 = vld [vmem:[#allocation7 + $0x428] sm:$0xff]
    %v6027 = vld [vmem:[#allocation7 + $0x430] sm:$0xff]
    %v6028 = vld [vmem:[#allocation7 + $0x438] sm:$0xff]
    %v6029 = vld [vmem:[#allocation7 + $0x440] sm:$0xff]
    %v6030 = vld [vmem:[#allocation7 + $0x448] sm:$0xff]
    %v6031 = vld [vmem:[#allocation7 + $0x450] sm:$0xff]
    %v6032 = vld [vmem:[#allocation7 + $0x458] sm:$0xff]
    %v6033 = vld [vmem:[#allocation7 + $0x460] sm:$0xff]
    %v6034 = vld [vmem:[#allocation7 + $0x468] sm:$0xff]
    %v6035 = vld [vmem:[#allocation7 + $0x470] sm:$0xff]
    %v6036 = vld [vmem:[#allocation7 + $0x478] sm:$0xff]
    %v6037 = vld [vmem:[#allocation7 + $0x480] sm:$0xff]
    %v6038 = vld [vmem:[#allocation7 + $0x488] sm:$0xff]
    %v6039 = vld [vmem:[#allocation7 + $0x490] sm:$0xff]
    %v6040 = vld [vmem:[#allocation7 + $0x498] sm:$0xff]
    %v6041 = vld [vmem:[#allocation7 + $0x4a0] sm:$0xff]
    %v6042 = vld [vmem:[#allocation7 + $0x4a8] sm:$0xff]
    %v6043 = vld [vmem:[#allocation7 + $0x4b0] sm:$0xff]
    %v6044 = vld [vmem:[#allocation7 + $0x4b8] sm:$0xff]
    %v6045 = vld [vmem:[#allocation7 + $0x4c0] sm:$0xff]
    %v6046 = vld [vmem:[#allocation7 + $0x4c8] sm:$0xff]
    %v6047 = vld [vmem:[#allocation7 + $0x4d0] sm:$0xff]
    %v6048 = vld [vmem:[#allocation7 + $0x4d8] sm:$0xff]
    %v6049 = vld [vmem:[#allocation7 + $0x4e0] sm:$0xff]
    %v6050 = vld [vmem:[#allocation7 + $0x4e8] sm:$0xff]
    %v6051 = vld [vmem:[#allocation7 + $0x4f0] sm:$0xff]
    %v6052 = vld [vmem:[#allocation7 + $0x4f8] sm:$0xff]
    %v6053 = vld [vmem:[#allocation7 + $0x500] sm:$0xff]
    %v6054 = vld [vmem:[#allocation7 + $0x508] sm:$0xff]
    %v6055 = vld [vmem:[#allocation7 + $0x510] sm:$0xff]
    %v6056 = vld [vmem:[#allocation7 + $0x518] sm:$0xff]
    %v6057 = vld [vmem:[#allocation7 + $0x520] sm:$0xff]
    %v6058 = vld [vmem:[#allocation7 + $0x528] sm:$0xff]
    %v6059 = vld [vmem:[#allocation7 + $0x530] sm:$0xff]
    %v6060 = vld [vmem:[#allocation7 + $0x538] sm:$0xff]
    %v6061 = vld [vmem:[#allocation7 + $0x540] sm:$0xff]
    %v6062 = vld [vmem:[#allocation7 + $0x548] sm:$0xff]
    %v6063 = vld [vmem:[#allocation7 + $0x550] sm:$0xff]
    %v6064 = vld [vmem:[#allocation7 + $0x558] sm:$0xff]
    %v6065 = vld [vmem:[#allocation7 + $0x560] sm:$0xff]
    %v6066 = vld [vmem:[#allocation7 + $0x568] sm:$0xff]
    %v6067 = vld [vmem:[#allocation7 + $0x570] sm:$0xff]
    %v6068 = vld [vmem:[#allocation7 + $0x578] sm:$0xff]
    %v6069 = vld [vmem:[#allocation7 + $0x580] sm:$0xff]
    %v6070 = vld [vmem:[#allocation7 + $0x588] sm:$0xff]
    %v6071 = vld [vmem:[#allocation7 + $0x590] sm:$0xff]
    %v6072 = vld [vmem:[#allocation7 + $0x598] sm:$0xff]
    %v6073 = vld [vmem:[#allocation7 + $0x5a0] sm:$0xff]
    %v6074 = vld [vmem:[#allocation7 + $0x5a8] sm:$0xff]
    %v6075 = vld [vmem:[#allocation7 + $0x5b0] sm:$0xff]
    %v6076 = vld [vmem:[#allocation7 + $0x5b8] sm:$0xff]
    %v6077 = vld [vmem:[#allocation7 + $0x5c0] sm:$0xff]
    %v6078 = vld [vmem:[#allocation7 + $0x5c8] sm:$0xff]
    %v6079 = vld [vmem:[#allocation7 + $0x5d0] sm:$0xff]
    %v6080 = vld [vmem:[#allocation7 + $0x5d8] sm:$0xff]
    %v6081 = vld [vmem:[#allocation7 + $0x5e0] sm:$0xff]
    %v6082 = vld [vmem:[#allocation7 + $0x5e8] sm:$0xff]
    %v6083 = vld [vmem:[#allocation7 + $0x5f0] sm:$0xff]
    %v6084 = vld [vmem:[#allocation7 + $0x5f8] sm:$0xff]
    %v6085 = vld [vmem:[#allocation7 + $0x600] sm:$0xff]
    %v6086 = vld [vmem:[#allocation7 + $0x608] sm:$0xff]
    %v6087 = vld [vmem:[#allocation7 + $0x610] sm:$0xff]
    %v6088 = vld [vmem:[#allocation7 + $0x618] sm:$0xff]
    %v6089 = vld [vmem:[#allocation7 + $0x620] sm:$0xff]
    %v6090 = vld [vmem:[#allocation7 + $0x628] sm:$0xff]
    %v6091 = vld [vmem:[#allocation7 + $0x630] sm:$0xff]
    %v6092 = vld [vmem:[#allocation7 + $0x638] sm:$0xff]
    %v6093 = vld [vmem:[#allocation7 + $0x640] sm:$0xff]
    %v6094 = vld [vmem:[#allocation7 + $0x648] sm:$0xff]
    %v6095 = vld [vmem:[#allocation7 + $0x650] sm:$0xff]
    %v6096 = vld [vmem:[#allocation7 + $0x658] sm:$0xff]
    %v6097 = vld [vmem:[#allocation7 + $0x660] sm:$0xff]
    %v6098 = vld [vmem:[#allocation7 + $0x668] sm:$0xff]
    %v6099 = vld [vmem:[#allocation7 + $0x670] sm:$0xff]
    %v6100 = vld [vmem:[#allocation7 + $0x678] sm:$0xff]
    %v6101 = vld [vmem:[#allocation7 + $0x680] sm:$0xff]
    %v6102 = vld [vmem:[#allocation7 + $0x688] sm:$0xff]
    %v6103 = vld [vmem:[#allocation7 + $0x690] sm:$0xff]
    %v6104 = vld [vmem:[#allocation7 + $0x698] sm:$0xff]
    %v6105 = vld [vmem:[#allocation7 + $0x6a0] sm:$0xff]
    %v6106 = vld [vmem:[#allocation7 + $0x6a8] sm:$0xff]
    %v6107 = vld [vmem:[#allocation7 + $0x6b0] sm:$0xff]
    %v6108 = vld [vmem:[#allocation7 + $0x6b8] sm:$0xff]
    %v6109 = vld [vmem:[#allocation7 + $0x6c0] sm:$0xff]
    %v6110 = vld [vmem:[#allocation7 + $0x6c8] sm:$0xff]
    %v6111 = vld [vmem:[#allocation7 + $0x6d0] sm:$0xff]
    %v6112 = vld [vmem:[#allocation7 + $0x6d8] sm:$0xff]
    %v6113 = vld [vmem:[#allocation7 + $0x6e0] sm:$0xff]
    %v6114 = vld [vmem:[#allocation7 + $0x6e8] sm:$0xff]
    %v6115 = vld [vmem:[#allocation7 + $0x6f0] sm:$0xff]
    %v6116 = vld [vmem:[#allocation7 + $0x6f8] sm:$0xff]
    %v6117 = vld [vmem:[#allocation7 + $0x700] sm:$0xff]
    %v6118 = vld [vmem:[#allocation7 + $0x708] sm:$0xff]
    %v6119 = vld [vmem:[#allocation7 + $0x710] sm:$0xff]
    %v6120 = vld [vmem:[#allocation7 + $0x718] sm:$0xff]
    %v6121 = vld [vmem:[#allocation7 + $0x720] sm:$0xff]
    %v6122 = vld [vmem:[#allocation7 + $0x728] sm:$0xff]
    %v6123 = vld [vmem:[#allocation7 + $0x730] sm:$0xff]
    %v6124 = vld [vmem:[#allocation7 + $0x738] sm:$0xff]
    %v6125 = vld [vmem:[#allocation7 + $0x740] sm:$0xff]
    %v6126 = vld [vmem:[#allocation7 + $0x748] sm:$0xff]
    %v6127 = vld [vmem:[#allocation7 + $0x750] sm:$0xff]
    %v6128 = vld [vmem:[#allocation7 + $0x758] sm:$0xff]
    %v6129 = vld [vmem:[#allocation7 + $0x760] sm:$0xff]
    %v6130 = vld [vmem:[#allocation7 + $0x768] sm:$0xff]
    %v6131 = vld [vmem:[#allocation7 + $0x770] sm:$0xff]
    %v6132 = vld [vmem:[#allocation7 + $0x778] sm:$0xff]
    %v6133 = vld [vmem:[#allocation7 + $0x780] sm:$0xff]
    %v6134 = vld [vmem:[#allocation7 + $0x788] sm:$0xff]
    %v6135 = vld [vmem:[#allocation7 + $0x790] sm:$0xff]
    %v6136 = vld [vmem:[#allocation7 + $0x798] sm:$0xff]
    %v6137 = vld [vmem:[#allocation7 + $0x7a0] sm:$0xff]
    %v6138 = vld [vmem:[#allocation7 + $0x7a8] sm:$0xff]
    %v6139 = vld [vmem:[#allocation7 + $0x7b0] sm:$0xff]
    %v6140 = vld [vmem:[#allocation7 + $0x7b8] sm:$0xff]
    %v6141 = vld [vmem:[#allocation7 + $0x7c0] sm:$0xff]
    %v6142 = vld [vmem:[#allocation7 + $0x7c8] sm:$0xff]
    %v6143 = vld [vmem:[#allocation7 + $0x7d0] sm:$0xff]
    %v6144 = vld [vmem:[#allocation7 + $0x7d8] sm:$0xff]
    %v6145 = vld [vmem:[#allocation7 + $0x7e0] sm:$0xff]
    %v6146 = vld [vmem:[#allocation7 + $0x7e8] sm:$0xff]
    %v6147 = vld [vmem:[#allocation7 + $0x7f0] sm:$0xff]
    %v6148 = vld [vmem:[#allocation7 + $0x7f8] sm:$0xff]
    %v6149 = vld [vmem:[#allocation7 + $0x800] sm:$0xff]
    %v6150 = vld [vmem:[#allocation7 + $0x808] sm:$0xff]
    %v6151 = vld [vmem:[#allocation7 + $0x810] sm:$0xff]
    %v6152 = vld [vmem:[#allocation7 + $0x818] sm:$0xff]
    %v6153 = vld [vmem:[#allocation7 + $0x820] sm:$0xff]
    %v6154 = vld [vmem:[#allocation7 + $0x828] sm:$0xff]
    %v6155 = vld [vmem:[#allocation7 + $0x830] sm:$0xff]
    %v6156 = vld [vmem:[#allocation7 + $0x838] sm:$0xff]
    %v6157 = vld [vmem:[#allocation7 + $0x840] sm:$0xff]
    %v6158 = vld [vmem:[#allocation7 + $0x848] sm:$0xff]
    %v6159 = vld [vmem:[#allocation7 + $0x850] sm:$0xff]
    %v6160 = vld [vmem:[#allocation7 + $0x858] sm:$0xff]
    %v6161 = vld [vmem:[#allocation7 + $0x860] sm:$0xff]
    %v6162 = vld [vmem:[#allocation7 + $0x868] sm:$0xff]
    %v6163 = vld [vmem:[#allocation7 + $0x870] sm:$0xff]
    %v6164 = vld [vmem:[#allocation7 + $0x878] sm:$0xff]
    %v6165 = vld [vmem:[#allocation7 + $0x880] sm:$0xff]
    %v6166 = vld [vmem:[#allocation7 + $0x888] sm:$0xff]
    %v6167 = vld [vmem:[#allocation7 + $0x890] sm:$0xff]
    %v6168 = vld [vmem:[#allocation7 + $0x898] sm:$0xff]
    %v6169 = vld [vmem:[#allocation7 + $0x8a0] sm:$0xff]
    %v6170 = vld [vmem:[#allocation7 + $0x8a8] sm:$0xff]
    %v6171 = vld [vmem:[#allocation7 + $0x8b0] sm:$0xff]
    %v6172 = vld [vmem:[#allocation7 + $0x8b8] sm:$0xff]
    %v6173 = vld [vmem:[#allocation7 + $0x8c0] sm:$0xff]
    %v6174 = vld [vmem:[#allocation7 + $0x8c8] sm:$0xff]
    %v6175 = vld [vmem:[#allocation7 + $0x8d0] sm:$0xff]
    %v6176 = vld [vmem:[#allocation7 + $0x8d8] sm:$0xff]
    %v6177 = vld [vmem:[#allocation7 + $0x8e0] sm:$0xff]
    %v6178 = vld [vmem:[#allocation7 + $0x8e8] sm:$0xff]
    %v6179 = vld [vmem:[#allocation7 + $0x8f0] sm:$0xff]
    %v6180 = vld [vmem:[#allocation7 + $0x8f8] sm:$0xff]
    %v6181 = vld [vmem:[#allocation7 + $0x900] sm:$0xff]
    %v6182 = vld [vmem:[#allocation7 + $0x908] sm:$0xff]
    %v6183 = vld [vmem:[#allocation7 + $0x910] sm:$0xff]
    %v6184 = vld [vmem:[#allocation7 + $0x918] sm:$0xff]
    %v6185 = vld [vmem:[#allocation7 + $0x920] sm:$0xff]
    %v6186 = vld [vmem:[#allocation7 + $0x928] sm:$0xff]
    %v6187 = vld [vmem:[#allocation7 + $0x930] sm:$0xff]
    %v6188 = vld [vmem:[#allocation7 + $0x938] sm:$0xff]
    %v6189 = vld [vmem:[#allocation7 + $0x940] sm:$0xff]
    %v6190 = vld [vmem:[#allocation7 + $0x948] sm:$0xff]
    %v6191 = vld [vmem:[#allocation7 + $0x950] sm:$0xff]
    %v6192 = vld [vmem:[#allocation7 + $0x958] sm:$0xff]
    %v6193 = vld [vmem:[#allocation7 + $0x960] sm:$0xff]
    %v6194 = vld [vmem:[#allocation7 + $0x968] sm:$0xff]
    %v6195 = vld [vmem:[#allocation7 + $0x970] sm:$0xff]
    %v6196 = vld [vmem:[#allocation7 + $0x978] sm:$0xff]
    %v6197 = vld [vmem:[#allocation7 + $0x980] sm:$0xff]
    %v6198 = vld [vmem:[#allocation7 + $0x988] sm:$0xff]
    %v6199 = vld [vmem:[#allocation7 + $0x990] sm:$0xff]
    %v6200 = vld [vmem:[#allocation7 + $0x998] sm:$0xff]
    %v6201 = vld [vmem:[#allocation7 + $0x9a0] sm:$0xff]
    %v6202 = vld [vmem:[#allocation7 + $0x9a8] sm:$0xff]
    %v6203 = vld [vmem:[#allocation7 + $0x9b0] sm:$0xff]
    %v6204 = vld [vmem:[#allocation7 + $0x9b8] sm:$0xff]
    %v6205 = vld [vmem:[#allocation7 + $0x9c0] sm:$0xff]
    %v6206 = vld [vmem:[#allocation7 + $0x9c8] sm:$0xff]
    %v6207 = vld [vmem:[#allocation7 + $0x9d0] sm:$0xff]
    %v6208 = vld [vmem:[#allocation7 + $0x9d8] sm:$0xff]
    %v6209 = vld [vmem:[#allocation7 + $0x9e0] sm:$0xff]
    %v6210 = vld [vmem:[#allocation7 + $0x9e8] sm:$0xff]
    %v6211 = vld [vmem:[#allocation7 + $0x9f0] sm:$0xff]
    %v6212 = vld [vmem:[#allocation7 + $0x9f8] sm:$0xff]
    %v6213 = vld [vmem:[#allocation7 + $0xa00] sm:$0xff]
    %v6214 = vld [vmem:[#allocation7 + $0xa08] sm:$0xff]
    %v6215 = vld [vmem:[#allocation7 + $0xa10] sm:$0xff]
    %v6216 = vld [vmem:[#allocation7 + $0xa18] sm:$0xff]
    %v6217 = vld [vmem:[#allocation7 + $0xa20] sm:$0xff]
    %v6218 = vld [vmem:[#allocation7 + $0xa28] sm:$0xff]
    %v6219 = vld [vmem:[#allocation7 + $0xa30] sm:$0xff]
    %v6220 = vld [vmem:[#allocation7 + $0xa38] sm:$0xff]
    %v6221 = vld [vmem:[#allocation7 + $0xa40] sm:$0xff]
    %v6222 = vld [vmem:[#allocation7 + $0xa48] sm:$0xff]
    %v6223 = vld [vmem:[#allocation7 + $0xa50] sm:$0xff]
    %v6224 = vld [vmem:[#allocation7 + $0xa58] sm:$0xff]
    %v6225 = vld [vmem:[#allocation7 + $0xa60] sm:$0xff]
    %v6226 = vld [vmem:[#allocation7 + $0xa68] sm:$0xff]
    %v6227 = vld [vmem:[#allocation7 + $0xa70] sm:$0xff]
    %v6228 = vld [vmem:[#allocation7 + $0xa78] sm:$0xff]
    %v6229 = vld [vmem:[#allocation7 + $0xa80] sm:$0xff]
    %v6230 = vld [vmem:[#allocation7 + $0xa88] sm:$0xff]
    %v6231 = vld [vmem:[#allocation7 + $0xa90] sm:$0xff]
    %v6232 = vld [vmem:[#allocation7 + $0xa98] sm:$0xff]
    %v6233 = vld [vmem:[#allocation7 + $0xaa0] sm:$0xff]
    %v6234 = vld [vmem:[#allocation7 + $0xaa8] sm:$0xff]
    %v6235 = vld [vmem:[#allocation7 + $0xab0] sm:$0xff]
    %v6236 = vld [vmem:[#allocation7 + $0xab8] sm:$0xff]
    %v6237 = vld [vmem:[#allocation7 + $0xac0] sm:$0xff]
    %v6238 = vld [vmem:[#allocation7 + $0xac8] sm:$0xff]
    %v6239 = vld [vmem:[#allocation7 + $0xad0] sm:$0xff]
    %v6240 = vld [vmem:[#allocation7 + $0xad8] sm:$0xff]
    %v6241 = vld [vmem:[#allocation7 + $0xae0] sm:$0xff]
    %v6242 = vld [vmem:[#allocation7 + $0xae8] sm:$0xff]
    %v6243 = vld [vmem:[#allocation7 + $0xaf0] sm:$0xff]
    %v6244 = vld [vmem:[#allocation7 + $0xaf8] sm:$0xff]
    %v6245 = vld [vmem:[#allocation7 + $0xb00] sm:$0xff]
    %v6246 = vld [vmem:[#allocation7 + $0xb08] sm:$0xff]
    %v6247 = vld [vmem:[#allocation7 + $0xb10] sm:$0xff]
    %v6248 = vld [vmem:[#allocation7 + $0xb18] sm:$0xff]
    %v6249 = vld [vmem:[#allocation7 + $0xb20] sm:$0xff]
    %v6250 = vld [vmem:[#allocation7 + $0xb28] sm:$0xff]
    %v6251 = vld [vmem:[#allocation7 + $0xb30] sm:$0xff]
    %v6252 = vld [vmem:[#allocation7 + $0xb38] sm:$0xff]
    %v6253 = vld [vmem:[#allocation7 + $0xb40] sm:$0xff]
    %v6254 = vld [vmem:[#allocation7 + $0xb48] sm:$0xff]
    %v6255 = vld [vmem:[#allocation7 + $0xb50] sm:$0xff]
    %v6256 = vld [vmem:[#allocation7 + $0xb58] sm:$0xff]
    %v6257 = vld [vmem:[#allocation7 + $0xb60] sm:$0xff]
    %v6258 = vld [vmem:[#allocation7 + $0xb68] sm:$0xff]
    %v6259 = vld [vmem:[#allocation7 + $0xb70] sm:$0xff]
    %v6260 = vld [vmem:[#allocation7 + $0xb78] sm:$0xff]
    %v6261 = vld [vmem:[#allocation7 + $0xb80] sm:$0xff]
    %v6262 = vld [vmem:[#allocation7 + $0xb88] sm:$0xff]
    %v6263 = vld [vmem:[#allocation7 + $0xb90] sm:$0xff]
    %v6264 = vld [vmem:[#allocation7 + $0xb98] sm:$0xff]
    %v6265 = vld [vmem:[#allocation7 + $0xba0] sm:$0xff]
    %v6266 = vld [vmem:[#allocation7 + $0xba8] sm:$0xff]
    %v6267 = vld [vmem:[#allocation7 + $0xbb0] sm:$0xff]
    %v6268 = vld [vmem:[#allocation7 + $0xbb8] sm:$0xff]
    %v6269 = vld [vmem:[#allocation7 + $0xbc0] sm:$0xff]
    %v6270 = vld [vmem:[#allocation7 + $0xbc8] sm:$0xff]
    %v6271 = vld [vmem:[#allocation7 + $0xbd0] sm:$0xff]
    %v6272 = vld [vmem:[#allocation7 + $0xbd8] sm:$0xff]
    %v6273 = vld [vmem:[#allocation7 + $0xbe0] sm:$0xff]
    %v6274 = vld [vmem:[#allocation7 + $0xbe8] sm:$0xff]
    %v6275 = vld [vmem:[#allocation7 + $0xbf0] sm:$0xff]
    %v6276 = vld [vmem:[#allocation7 + $0xbf8] sm:$0xff]
    %v6277 = vld [vmem:[#allocation7 + $0xc00] sm:$0xff]
    %v6278 = vld [vmem:[#allocation7 + $0xc08] sm:$0xff]
    %v6279 = vld [vmem:[#allocation7 + $0xc10] sm:$0xff]
    %v6280 = vld [vmem:[#allocation7 + $0xc18] sm:$0xff]
    %v6281 = vld [vmem:[#allocation7 + $0xc20] sm:$0xff]
    %v6282 = vld [vmem:[#allocation7 + $0xc28] sm:$0xff]
    %v6283 = vld [vmem:[#allocation7 + $0xc30] sm:$0xff]
    %v6284 = vld [vmem:[#allocation7 + $0xc38] sm:$0xff]
    %v6285 = vld [vmem:[#allocation7 + $0xc40] sm:$0xff]
    %v6286 = vld [vmem:[#allocation7 + $0xc48] sm:$0xff]
    %v6287 = vld [vmem:[#allocation7 + $0xc50] sm:$0xff]
    %v6288 = vld [vmem:[#allocation7 + $0xc58] sm:$0xff]
    %v6289 = vld [vmem:[#allocation7 + $0xc60] sm:$0xff]
    %v6290 = vld [vmem:[#allocation7 + $0xc68] sm:$0xff]
    %v6291 = vld [vmem:[#allocation7 + $0xc70] sm:$0xff]
    %v6292 = vld [vmem:[#allocation7 + $0xc78] sm:$0xff]
    %v6293 = vld [vmem:[#allocation7 + $0xc80] sm:$0xff]
    %v6294 = vld [vmem:[#allocation7 + $0xc88] sm:$0xff]
    %v6295 = vld [vmem:[#allocation7 + $0xc90] sm:$0xff]
    %v6296 = vld [vmem:[#allocation7 + $0xc98] sm:$0xff]
    %v6297 = vld [vmem:[#allocation7 + $0xca0] sm:$0xff]
    %v6298 = vld [vmem:[#allocation7 + $0xca8] sm:$0xff]
    %v6299 = vld [vmem:[#allocation7 + $0xcb0] sm:$0xff]
    %v6300 = vld [vmem:[#allocation7 + $0xcb8] sm:$0xff]
    %v6301 = vld [vmem:[#allocation7 + $0xcc0] sm:$0xff]
    %v6302 = vld [vmem:[#allocation7 + $0xcc8] sm:$0xff]
    %v6303 = vld [vmem:[#allocation7 + $0xcd0] sm:$0xff]
    %v6304 = vld [vmem:[#allocation7 + $0xcd8] sm:$0xff]
    %v6305 = vld [vmem:[#allocation7 + $0xce0] sm:$0xff]
    %v6306 = vld [vmem:[#allocation7 + $0xce8] sm:$0xff]
    %v6307 = vld [vmem:[#allocation7 + $0xcf0] sm:$0xff]
    %v6308 = vld [vmem:[#allocation7 + $0xcf8] sm:$0xff]
    %v6309 = vld [vmem:[#allocation7 + $0xd00] sm:$0xff]
    %v6310 = vld [vmem:[#allocation7 + $0xd08] sm:$0xff]
    %v6311 = vld [vmem:[#allocation7 + $0xd10] sm:$0xff]
    %v6312 = vld [vmem:[#allocation7 + $0xd18] sm:$0xff]
    %v6313 = vld [vmem:[#allocation7 + $0xd20] sm:$0xff]
    %v6314 = vld [vmem:[#allocation7 + $0xd28] sm:$0xff]
    %v6315 = vld [vmem:[#allocation7 + $0xd30] sm:$0xff]
    %v6316 = vld [vmem:[#allocation7 + $0xd38] sm:$0xff]
    %v6317 = vld [vmem:[#allocation7 + $0xd40] sm:$0xff]
    %v6318 = vld [vmem:[#allocation7 + $0xd48] sm:$0xff]
    %v6319 = vld [vmem:[#allocation7 + $0xd50] sm:$0xff]
    %v6320 = vld [vmem:[#allocation7 + $0xd58] sm:$0xff]
    %v6321 = vld [vmem:[#allocation7 + $0xd60] sm:$0xff]
    %v6322 = vld [vmem:[#allocation7 + $0xd68] sm:$0xff]
    %v6323 = vld [vmem:[#allocation7 + $0xd70] sm:$0xff]
    %v6324 = vld [vmem:[#allocation7 + $0xd78] sm:$0xff]
    %v6325 = vld [vmem:[#allocation7 + $0xd80] sm:$0xff]
    %v6326 = vld [vmem:[#allocation7 + $0xd88] sm:$0xff]
    %v6327 = vld [vmem:[#allocation7 + $0xd90] sm:$0xff]
    %v6328 = vld [vmem:[#allocation7 + $0xd98] sm:$0xff]
    %v6329 = vld [vmem:[#allocation7 + $0xda0] sm:$0xff]
    %v6330 = vld [vmem:[#allocation7 + $0xda8] sm:$0xff]
    %v6331 = vld [vmem:[#allocation7 + $0xdb0] sm:$0xff]
    %v6332 = vld [vmem:[#allocation7 + $0xdb8] sm:$0xff]
    %v6333 = vld [vmem:[#allocation7 + $0xdc0] sm:$0xff]
    %v6334 = vld [vmem:[#allocation7 + $0xdc8] sm:$0xff]
    %v6335 = vld [vmem:[#allocation7 + $0xdd0] sm:$0xff]
    %v6336 = vld [vmem:[#allocation7 + $0xdd8] sm:$0xff]
    %v6337 = vld [vmem:[#allocation7 + $0xde0] sm:$0xff]
    %v6338 = vld [vmem:[#allocation7 + $0xde8] sm:$0xff]
    %v6339 = vld [vmem:[#allocation7 + $0xdf0] sm:$0xff]
    %v6340 = vld [vmem:[#allocation7 + $0xdf8] sm:$0xff]
    %v6341 = vld [vmem:[#allocation7 + $0xe00] sm:$0xff]
    %v6342 = vld [vmem:[#allocation7 + $0xe08] sm:$0xff]
    %v6343 = vld [vmem:[#allocation7 + $0xe10] sm:$0xff]
    %v6344 = vld [vmem:[#allocation7 + $0xe18] sm:$0xff]
    %v6345 = vld [vmem:[#allocation7 + $0xe20] sm:$0xff]
    %v6346 = vld [vmem:[#allocation7 + $0xe28] sm:$0xff]
    %v6347 = vld [vmem:[#allocation7 + $0xe30] sm:$0xff]
    %v6348 = vld [vmem:[#allocation7 + $0xe38] sm:$0xff]
    %v6349 = vld [vmem:[#allocation7 + $0xe40] sm:$0xff]
    %v6350 = vld [vmem:[#allocation7 + $0xe48] sm:$0xff]
    %v6351 = vld [vmem:[#allocation7 + $0xe50] sm:$0xff]
    %v6352 = vld [vmem:[#allocation7 + $0xe58] sm:$0xff]
    %v6353 = vld [vmem:[#allocation7 + $0xe60] sm:$0xff]
    %v6354 = vld [vmem:[#allocation7 + $0xe68] sm:$0xff]
    %v6355 = vld [vmem:[#allocation7 + $0xe70] sm:$0xff]
    %v6356 = vld [vmem:[#allocation7 + $0xe78] sm:$0xff]
    %v6357 = vld [vmem:[#allocation7 + $0xe80] sm:$0xff]
    %v6358 = vld [vmem:[#allocation7 + $0xe88] sm:$0xff]
    %v6359 = vld [vmem:[#allocation7 + $0xe90] sm:$0xff]
    %v6360 = vld [vmem:[#allocation7 + $0xe98] sm:$0xff]
    %v6361 = vld [vmem:[#allocation7 + $0xea0] sm:$0xff]
    %v6362 = vld [vmem:[#allocation7 + $0xea8] sm:$0xff]
    %v6363 = vld [vmem:[#allocation7 + $0xeb0] sm:$0xff]
    %v6364 = vld [vmem:[#allocation7 + $0xeb8] sm:$0xff]
    %v6365 = vld [vmem:[#allocation7 + $0xec0] sm:$0xff]
    %v6366 = vld [vmem:[#allocation7 + $0xec8] sm:$0xff]
    %v6367 = vld [vmem:[#allocation7 + $0xed0] sm:$0xff]
    %v6368 = vld [vmem:[#allocation7 + $0xed8] sm:$0xff]
    %v6369 = vld [vmem:[#allocation7 + $0xee0] sm:$0xff]
    %v6370 = vld [vmem:[#allocation7 + $0xee8] sm:$0xff]
    %v6371 = vld [vmem:[#allocation7 + $0xef0] sm:$0xff]
    %v6372 = vld [vmem:[#allocation7 + $0xef8] sm:$0xff]
    %v6373 = vld [vmem:[#allocation7 + $0xf00] sm:$0xff]
    %v6374 = vld [vmem:[#allocation7 + $0xf08] sm:$0xff]
    %v6375 = vld [vmem:[#allocation7 + $0xf10] sm:$0xff]
    %v6376 = vld [vmem:[#allocation7 + $0xf18] sm:$0xff]
    %v6377 = vld [vmem:[#allocation7 + $0xf20] sm:$0xff]
    %v6378 = vld [vmem:[#allocation7 + $0xf28] sm:$0xff]
    %v6379 = vld [vmem:[#allocation7 + $0xf30] sm:$0xff]
    %v6380 = vld [vmem:[#allocation7 + $0xf38] sm:$0xff]
    %v6381 = vld [vmem:[#allocation7 + $0xf40] sm:$0xff]
    %v6382 = vld [vmem:[#allocation7 + $0xf48] sm:$0xff]
    %v6383 = vld [vmem:[#allocation7 + $0xf50] sm:$0xff]
    %v6384 = vld [vmem:[#allocation7 + $0xf58] sm:$0xff]
    %v6385 = vld [vmem:[#allocation7 + $0xf60] sm:$0xff]
    %v6386 = vld [vmem:[#allocation7 + $0xf68] sm:$0xff]
    %v6387 = vld [vmem:[#allocation7 + $0xf70] sm:$0xff]
    %v6388 = vld [vmem:[#allocation7 + $0xf78] sm:$0xff]
    %v6389 = vld [vmem:[#allocation7 + $0xf80] sm:$0xff]
    %v6390 = vld [vmem:[#allocation7 + $0xf88] sm:$0xff]
    %v6391 = vld [vmem:[#allocation7 + $0xf90] sm:$0xff]
    %v6392 = vld [vmem:[#allocation7 + $0xf98] sm:$0xff]
    %v6393 = vld [vmem:[#allocation7 + $0xfa0] sm:$0xff]
    %v6394 = vld [vmem:[#allocation7 + $0xfa8] sm:$0xff]
    %v6395 = vld [vmem:[#allocation7 + $0xfb0] sm:$0xff]
    %v6396 = vld [vmem:[#allocation7 + $0xfb8] sm:$0xff]
    %v6397 = vld [vmem:[#allocation7 + $0xfc0] sm:$0xff]
    %v6398 = vld [vmem:[#allocation7 + $0xfc8] sm:$0xff]
    %v6399 = vld [vmem:[#allocation7 + $0xfd0] sm:$0xff]
    %v6400 = vld [vmem:[#allocation7 + $0xfd8] sm:$0xff]
    %v6401 = vld [vmem:[#allocation7 + $0xfe0] sm:$0xff]
    %v6402 = vld [vmem:[#allocation7 + $0xfe8] sm:$0xff]
    %v6403 = vld [vmem:[#allocation7 + $0xff0] sm:$0xff]
    %v6404 = vld [vmem:[#allocation7 + $0xff8] sm:$0xff]
    %v6405 = vld [vmem:[#allocation8] sm:$0xff]
    %v6407 = vlaneseq
    %v6408 = vshrl.u32 %v6407, 7
    %v6409 = vsub.s32 0, %v6408
    %v6410 = vrot.slane %v6405, %v6409
    %v6411 = vlaneseq
    %v6412 = vshrl.u32 %v6411, 7
    %v6413 = vsub.s32 1, %v6412
    %v6414 = vrot.slane %v6405, %v6413
    %v6415 = vlaneseq
    %v6416 = vshrl.u32 %v6415, 7
    %v6417 = vsub.s32 2, %v6416
    %v6418 = vrot.slane %v6405, %v6417
    %v6419 = vlaneseq
    %v6420 = vshrl.u32 %v6419, 7
    %v6421 = vsub.s32 3, %v6420
    %v6422 = vrot.slane %v6405, %v6421
    %v6423 = vlaneseq
    %v6424 = vshrl.u32 %v6423, 7
    %v6425 = vsub.s32 4, %v6424
    %v6426 = vrot.slane %v6405, %v6425
    %v6427 = vlaneseq
    %v6428 = vshrl.u32 %v6427, 7
    %v6429 = vsub.s32 5, %v6428
    %v6430 = vrot.slane %v6405, %v6429
    %v6431 = vlaneseq
    %v6432 = vshrl.u32 %v6431, 7
    %v6433 = vsub.s32 6, %v6432
    %v6434 = vrot.slane %v6405, %v6433
    %v6435 = vlaneseq
    %v6436 = vshrl.u32 %v6435, 7
    %v6437 = vsub.s32 7, %v6436
    %v6438 = vrot.slane %v6405, %v6437
    %v6959 = vunpack.c.l.b16 %v5893
    %v6960 = vunpack.c.h.b16 %v5893
    %v6961 = vunpack.c.l.b16 %v5894
    %v6962 = vunpack.c.h.b16 %v5894
    %v6963 = vunpack.c.l.b16 %v5895
    %v6964 = vunpack.c.h.b16 %v5895
    %v6965 = vunpack.c.l.b16 %v5896
    %v6966 = vunpack.c.h.b16 %v5896
    %v6967 = vunpack.c.l.b16 %v5897
    %v6968 = vunpack.c.h.b16 %v5897
    %v6969 = vunpack.c.l.b16 %v5898
    %v6970 = vunpack.c.h.b16 %v5898
    %v6971 = vunpack.c.l.b16 %v5899
    %v6972 = vunpack.c.h.b16 %v5899
    %v6973 = vunpack.c.l.b16 %v5900
    %v6974 = vunpack.c.h.b16 %v5900
    %v6975 = vunpack.c.l.b16 %v5901
    %v6976 = vunpack.c.h.b16 %v5901
    %v6977 = vunpack.c.l.b16 %v5902
    %v6978 = vunpack.c.h.b16 %v5902
    %v6979 = vunpack.c.l.b16 %v5903
    %v6980 = vunpack.c.h.b16 %v5903
    %v6981 = vunpack.c.l.b16 %v5904
    %v6982 = vunpack.c.h.b16 %v5904
    %v6983 = vunpack.c.l.b16 %v5905
    %v6984 = vunpack.c.h.b16 %v5905
    %v6985 = vunpack.c.l.b16 %v5906
    %v6986 = vunpack.c.h.b16 %v5906
    %v6987 = vunpack.c.l.b16 %v5907
    %v6988 = vunpack.c.h.b16 %v5907
    %v6989 = vunpack.c.l.b16 %v5908
    %v6990 = vunpack.c.h.b16 %v5908
    %v6991 = vunpack.c.l.b16 %v5909
    %v6992 = vunpack.c.h.b16 %v5909
    %v6993 = vunpack.c.l.b16 %v5910
    %v6994 = vunpack.c.h.b16 %v5910
    %v6995 = vunpack.c.l.b16 %v5911
    %v6996 = vunpack.c.h.b16 %v5911
    %v6997 = vunpack.c.l.b16 %v5912
    %v6998 = vunpack.c.h.b16 %v5912
    %v6999 = vunpack.c.l.b16 %v5913
    %v7000 = vunpack.c.h.b16 %v5913
    %v7001 = vunpack.c.l.b16 %v5914
    %v7002 = vunpack.c.h.b16 %v5914
    %v7003 = vunpack.c.l.b16 %v5915
    %v7004 = vunpack.c.h.b16 %v5915
    %v7005 = vunpack.c.l.b16 %v5916
    %v7006 = vunpack.c.h.b16 %v5916
    %v7007 = vunpack.c.l.b16 %v5917
    %v7008 = vunpack.c.h.b16 %v5917
    %v7009 = vunpack.c.l.b16 %v5918
    %v7010 = vunpack.c.h.b16 %v5918
    %v7011 = vunpack.c.l.b16 %v5919
    %v7012 = vunpack.c.h.b16 %v5919
    %v7013 = vunpack.c.l.b16 %v5920
    %v7014 = vunpack.c.h.b16 %v5920
    %v7015 = vunpack.c.l.b16 %v5921
    %v7016 = vunpack.c.h.b16 %v5921
    %v7017 = vunpack.c.l.b16 %v5922
    %v7018 = vunpack.c.h.b16 %v5922
    %v7019 = vunpack.c.l.b16 %v5923
    %v7020 = vunpack.c.h.b16 %v5923
    %v7021 = vunpack.c.l.b16 %v5924
    %v7022 = vunpack.c.h.b16 %v5924
    %v7023 = vunpack.c.l.b16 %v5925
    %v7024 = vunpack.c.h.b16 %v5925
    %v7025 = vunpack.c.l.b16 %v5926
    %v7026 = vunpack.c.h.b16 %v5926
    %v7027 = vunpack.c.l.b16 %v5927
    %v7028 = vunpack.c.h.b16 %v5927
    %v7029 = vunpack.c.l.b16 %v5928
    %v7030 = vunpack.c.h.b16 %v5928
    %v7031 = vunpack.c.l.b16 %v5929
    %v7032 = vunpack.c.h.b16 %v5929
    %v7033 = vunpack.c.l.b16 %v5930
    %v7034 = vunpack.c.h.b16 %v5930
    %v7035 = vunpack.c.l.b16 %v5931
    %v7036 = vunpack.c.h.b16 %v5931
    %v7037 = vunpack.c.l.b16 %v5932
    %v7038 = vunpack.c.h.b16 %v5932
    %v7039 = vunpack.c.l.b16 %v5933
    %v7040 = vunpack.c.h.b16 %v5933
    %v7041 = vunpack.c.l.b16 %v5934
    %v7042 = vunpack.c.h.b16 %v5934
    %v7043 = vunpack.c.l.b16 %v5935
    %v7044 = vunpack.c.h.b16 %v5935
    %v7045 = vunpack.c.l.b16 %v5936
    %v7046 = vunpack.c.h.b16 %v5936
    %v7047 = vunpack.c.l.b16 %v5937
    %v7048 = vunpack.c.h.b16 %v5937
    %v7049 = vunpack.c.l.b16 %v5938
    %v7050 = vunpack.c.h.b16 %v5938
    %v7051 = vunpack.c.l.b16 %v5939
    %v7052 = vunpack.c.h.b16 %v5939
    %v7053 = vunpack.c.l.b16 %v5940
    %v7054 = vunpack.c.h.b16 %v5940
    %v7055 = vunpack.c.l.b16 %v5941
    %v7056 = vunpack.c.h.b16 %v5941
    %v7057 = vunpack.c.l.b16 %v5942
    %v7058 = vunpack.c.h.b16 %v5942
    %v7059 = vunpack.c.l.b16 %v5943
    %v7060 = vunpack.c.h.b16 %v5943
    %v7061 = vunpack.c.l.b16 %v5944
    %v7062 = vunpack.c.h.b16 %v5944
    %v7063 = vunpack.c.l.b16 %v5945
    %v7064 = vunpack.c.h.b16 %v5945
    %v7065 = vunpack.c.l.b16 %v5946
    %v7066 = vunpack.c.h.b16 %v5946
    %v7067 = vunpack.c.l.b16 %v5947
    %v7068 = vunpack.c.h.b16 %v5947
    %v7069 = vunpack.c.l.b16 %v5948
    %v7070 = vunpack.c.h.b16 %v5948
    %v7071 = vunpack.c.l.b16 %v5949
    %v7072 = vunpack.c.h.b16 %v5949
    %v7073 = vunpack.c.l.b16 %v5950
    %v7074 = vunpack.c.h.b16 %v5950
    %v7075 = vunpack.c.l.b16 %v5951
    %v7076 = vunpack.c.h.b16 %v5951
    %v7077 = vunpack.c.l.b16 %v5952
    %v7078 = vunpack.c.h.b16 %v5952
    %v7079 = vunpack.c.l.b16 %v5953
    %v7080 = vunpack.c.h.b16 %v5953
    %v7081 = vunpack.c.l.b16 %v5954
    %v7082 = vunpack.c.h.b16 %v5954
    %v7083 = vunpack.c.l.b16 %v5955
    %v7084 = vunpack.c.h.b16 %v5955
    %v7085 = vunpack.c.l.b16 %v5956
    %v7086 = vunpack.c.h.b16 %v5956
    %v7087 = vunpack.c.l.b16 %v5957
    %v7088 = vunpack.c.h.b16 %v5957
    %v7089 = vunpack.c.l.b16 %v5958
    %v7090 = vunpack.c.h.b16 %v5958
    %v7091 = vunpack.c.l.b16 %v5959
    %v7092 = vunpack.c.h.b16 %v5959
    %v7093 = vunpack.c.l.b16 %v5960
    %v7094 = vunpack.c.h.b16 %v5960
    %v7095 = vunpack.c.l.b16 %v5961
    %v7096 = vunpack.c.h.b16 %v5961
    %v7097 = vunpack.c.l.b16 %v5962
    %v7098 = vunpack.c.h.b16 %v5962
    %v7099 = vunpack.c.l.b16 %v5963
    %v7100 = vunpack.c.h.b16 %v5963
    %v7101 = vunpack.c.l.b16 %v5964
    %v7102 = vunpack.c.h.b16 %v5964
    %v7103 = vunpack.c.l.b16 %v5965
    %v7104 = vunpack.c.h.b16 %v5965
    %v7105 = vunpack.c.l.b16 %v5966
    %v7106 = vunpack.c.h.b16 %v5966
    %v7107 = vunpack.c.l.b16 %v5967
    %v7108 = vunpack.c.h.b16 %v5967
    %v7109 = vunpack.c.l.b16 %v5968
    %v7110 = vunpack.c.h.b16 %v5968
    %v7111 = vunpack.c.l.b16 %v5969
    %v7112 = vunpack.c.h.b16 %v5969
    %v7113 = vunpack.c.l.b16 %v5970
    %v7114 = vunpack.c.h.b16 %v5970
    %v7115 = vunpack.c.l.b16 %v5971
    %v7116 = vunpack.c.h.b16 %v5971
    %v7117 = vunpack.c.l.b16 %v5972
    %v7118 = vunpack.c.h.b16 %v5972
    %v7119 = vunpack.c.l.b16 %v5973
    %v7120 = vunpack.c.h.b16 %v5973
    %v7121 = vunpack.c.l.b16 %v5974
    %v7122 = vunpack.c.h.b16 %v5974
    %v7123 = vunpack.c.l.b16 %v5975
    %v7124 = vunpack.c.h.b16 %v5975
    %v7125 = vunpack.c.l.b16 %v5976
    %v7126 = vunpack.c.h.b16 %v5976
    %v7127 = vunpack.c.l.b16 %v5977
    %v7128 = vunpack.c.h.b16 %v5977
    %v7129 = vunpack.c.l.b16 %v5978
    %v7130 = vunpack.c.h.b16 %v5978
    %v7131 = vunpack.c.l.b16 %v5979
    %v7132 = vunpack.c.h.b16 %v5979
    %v7133 = vunpack.c.l.b16 %v5980
    %v7134 = vunpack.c.h.b16 %v5980
    %v7135 = vunpack.c.l.b16 %v5981
    %v7136 = vunpack.c.h.b16 %v5981
    %v7137 = vunpack.c.l.b16 %v5982
    %v7138 = vunpack.c.h.b16 %v5982
    %v7139 = vunpack.c.l.b16 %v5983
    %v7140 = vunpack.c.h.b16 %v5983
    %v7141 = vunpack.c.l.b16 %v5984
    %v7142 = vunpack.c.h.b16 %v5984
    %v7143 = vunpack.c.l.b16 %v5985
    %v7144 = vunpack.c.h.b16 %v5985
    %v7145 = vunpack.c.l.b16 %v5986
    %v7146 = vunpack.c.h.b16 %v5986
    %v7147 = vunpack.c.l.b16 %v5987
    %v7148 = vunpack.c.h.b16 %v5987
    %v7149 = vunpack.c.l.b16 %v5988
    %v7150 = vunpack.c.h.b16 %v5988
    %v7151 = vunpack.c.l.b16 %v5989
    %v7152 = vunpack.c.h.b16 %v5989
    %v7153 = vunpack.c.l.b16 %v5990
    %v7154 = vunpack.c.h.b16 %v5990
    %v7155 = vunpack.c.l.b16 %v5991
    %v7156 = vunpack.c.h.b16 %v5991
    %v7157 = vunpack.c.l.b16 %v5992
    %v7158 = vunpack.c.h.b16 %v5992
    %v7159 = vunpack.c.l.b16 %v5993
    %v7160 = vunpack.c.h.b16 %v5993
    %v7161 = vunpack.c.l.b16 %v5994
    %v7162 = vunpack.c.h.b16 %v5994
    %v7163 = vunpack.c.l.b16 %v5995
    %v7164 = vunpack.c.h.b16 %v5995
    %v7165 = vunpack.c.l.b16 %v5996
    %v7166 = vunpack.c.h.b16 %v5996
    %v7167 = vunpack.c.l.b16 %v5997
    %v7168 = vunpack.c.h.b16 %v5997
    %v7169 = vunpack.c.l.b16 %v5998
    %v7170 = vunpack.c.h.b16 %v5998
    %v7171 = vunpack.c.l.b16 %v5999
    %v7172 = vunpack.c.h.b16 %v5999
    %v7173 = vunpack.c.l.b16 %v6000
    %v7174 = vunpack.c.h.b16 %v6000
    %v7175 = vunpack.c.l.b16 %v6001
    %v7176 = vunpack.c.h.b16 %v6001
    %v7177 = vunpack.c.l.b16 %v6002
    %v7178 = vunpack.c.h.b16 %v6002
    %v7179 = vunpack.c.l.b16 %v6003
    %v7180 = vunpack.c.h.b16 %v6003
    %v7181 = vunpack.c.l.b16 %v6004
    %v7182 = vunpack.c.h.b16 %v6004
    %v7183 = vunpack.c.l.b16 %v6005
    %v7184 = vunpack.c.h.b16 %v6005
    %v7185 = vunpack.c.l.b16 %v6006
    %v7186 = vunpack.c.h.b16 %v6006
    %v7187 = vunpack.c.l.b16 %v6007
    %v7188 = vunpack.c.h.b16 %v6007
    %v7189 = vunpack.c.l.b16 %v6008
    %v7190 = vunpack.c.h.b16 %v6008
    %v7191 = vunpack.c.l.b16 %v6009
    %v7192 = vunpack.c.h.b16 %v6009
    %v7193 = vunpack.c.l.b16 %v6010
    %v7194 = vunpack.c.h.b16 %v6010
    %v7195 = vunpack.c.l.b16 %v6011
    %v7196 = vunpack.c.h.b16 %v6011
    %v7197 = vunpack.c.l.b16 %v6012
    %v7198 = vunpack.c.h.b16 %v6012
    %v7199 = vunpack.c.l.b16 %v6013
    %v7200 = vunpack.c.h.b16 %v6013
    %v7201 = vunpack.c.l.b16 %v6014
    %v7202 = vunpack.c.h.b16 %v6014
    %v7203 = vunpack.c.l.b16 %v6015
    %v7204 = vunpack.c.h.b16 %v6015
    %v7205 = vunpack.c.l.b16 %v6016
    %v7206 = vunpack.c.h.b16 %v6016
    %v7207 = vunpack.c.l.b16 %v6017
    %v7208 = vunpack.c.h.b16 %v6017
    %v7209 = vunpack.c.l.b16 %v6018
    %v7210 = vunpack.c.h.b16 %v6018
    %v7211 = vunpack.c.l.b16 %v6019
    %v7212 = vunpack.c.h.b16 %v6019
    %v7213 = vunpack.c.l.b16 %v6020
    %v7214 = vunpack.c.h.b16 %v6020
    %v7215 = vunpack.c.l.b16 %v6021
    %v7216 = vunpack.c.h.b16 %v6021
    %v7217 = vunpack.c.l.b16 %v6022
    %v7218 = vunpack.c.h.b16 %v6022
    %v7219 = vunpack.c.l.b16 %v6023
    %v7220 = vunpack.c.h.b16 %v6023
    %v7221 = vunpack.c.l.b16 %v6024
    %v7222 = vunpack.c.h.b16 %v6024
    %v7223 = vunpack.c.l.b16 %v6025
    %v7224 = vunpack.c.h.b16 %v6025
    %v7225 = vunpack.c.l.b16 %v6026
    %v7226 = vunpack.c.h.b16 %v6026
    %v7227 = vunpack.c.l.b16 %v6027
    %v7228 = vunpack.c.h.b16 %v6027
    %v7229 = vunpack.c.l.b16 %v6028
    %v7230 = vunpack.c.h.b16 %v6028
    %v7231 = vunpack.c.l.b16 %v6029
    %v7232 = vunpack.c.h.b16 %v6029
    %v7233 = vunpack.c.l.b16 %v6030
    %v7234 = vunpack.c.h.b16 %v6030
    %v7235 = vunpack.c.l.b16 %v6031
    %v7236 = vunpack.c.h.b16 %v6031
    %v7237 = vunpack.c.l.b16 %v6032
    %v7238 = vunpack.c.h.b16 %v6032
    %v7239 = vunpack.c.l.b16 %v6033
    %v7240 = vunpack.c.h.b16 %v6033
    %v7241 = vunpack.c.l.b16 %v6034
    %v7242 = vunpack.c.h.b16 %v6034
    %v7243 = vunpack.c.l.b16 %v6035
    %v7244 = vunpack.c.h.b16 %v6035
    %v7245 = vunpack.c.l.b16 %v6036
    %v7246 = vunpack.c.h.b16 %v6036
    %v7247 = vunpack.c.l.b16 %v6037
    %v7248 = vunpack.c.h.b16 %v6037
    %v7249 = vunpack.c.l.b16 %v6038
    %v7250 = vunpack.c.h.b16 %v6038
    %v7251 = vunpack.c.l.b16 %v6039
    %v7252 = vunpack.c.h.b16 %v6039
    %v7253 = vunpack.c.l.b16 %v6040
    %v7254 = vunpack.c.h.b16 %v6040
    %v7255 = vunpack.c.l.b16 %v6041
    %v7256 = vunpack.c.h.b16 %v6041
    %v7257 = vunpack.c.l.b16 %v6042
    %v7258 = vunpack.c.h.b16 %v6042
    %v7259 = vunpack.c.l.b16 %v6043
    %v7260 = vunpack.c.h.b16 %v6043
    %v7261 = vunpack.c.l.b16 %v6044
    %v7262 = vunpack.c.h.b16 %v6044
    %v7263 = vunpack.c.l.b16 %v6045
    %v7264 = vunpack.c.h.b16 %v6045
    %v7265 = vunpack.c.l.b16 %v6046
    %v7266 = vunpack.c.h.b16 %v6046
    %v7267 = vunpack.c.l.b16 %v6047
    %v7268 = vunpack.c.h.b16 %v6047
    %v7269 = vunpack.c.l.b16 %v6048
    %v7270 = vunpack.c.h.b16 %v6048
    %v7271 = vunpack.c.l.b16 %v6049
    %v7272 = vunpack.c.h.b16 %v6049
    %v7273 = vunpack.c.l.b16 %v6050
    %v7274 = vunpack.c.h.b16 %v6050
    %v7275 = vunpack.c.l.b16 %v6051
    %v7276 = vunpack.c.h.b16 %v6051
    %v7277 = vunpack.c.l.b16 %v6052
    %v7278 = vunpack.c.h.b16 %v6052
    %v7279 = vunpack.c.l.b16 %v6053
    %v7280 = vunpack.c.h.b16 %v6053
    %v7281 = vunpack.c.l.b16 %v6054
    %v7282 = vunpack.c.h.b16 %v6054
    %v7283 = vunpack.c.l.b16 %v6055
    %v7284 = vunpack.c.h.b16 %v6055
    %v7285 = vunpack.c.l.b16 %v6056
    %v7286 = vunpack.c.h.b16 %v6056
    %v7287 = vunpack.c.l.b16 %v6057
    %v7288 = vunpack.c.h.b16 %v6057
    %v7289 = vunpack.c.l.b16 %v6058
    %v7290 = vunpack.c.h.b16 %v6058
    %v7291 = vunpack.c.l.b16 %v6059
    %v7292 = vunpack.c.h.b16 %v6059
    %v7293 = vunpack.c.l.b16 %v6060
    %v7294 = vunpack.c.h.b16 %v6060
    %v7295 = vunpack.c.l.b16 %v6061
    %v7296 = vunpack.c.h.b16 %v6061
    %v7297 = vunpack.c.l.b16 %v6062
    %v7298 = vunpack.c.h.b16 %v6062
    %v7299 = vunpack.c.l.b16 %v6063
    %v7300 = vunpack.c.h.b16 %v6063
    %v7301 = vunpack.c.l.b16 %v6064
    %v7302 = vunpack.c.h.b16 %v6064
    %v7303 = vunpack.c.l.b16 %v6065
    %v7304 = vunpack.c.h.b16 %v6065
    %v7305 = vunpack.c.l.b16 %v6066
    %v7306 = vunpack.c.h.b16 %v6066
    %v7307 = vunpack.c.l.b16 %v6067
    %v7308 = vunpack.c.h.b16 %v6067
    %v7309 = vunpack.c.l.b16 %v6068
    %v7310 = vunpack.c.h.b16 %v6068
    %v7311 = vunpack.c.l.b16 %v6069
    %v7312 = vunpack.c.h.b16 %v6069
    %v7313 = vunpack.c.l.b16 %v6070
    %v7314 = vunpack.c.h.b16 %v6070
    %v7315 = vunpack.c.l.b16 %v6071
    %v7316 = vunpack.c.h.b16 %v6071
    %v7317 = vunpack.c.l.b16 %v6072
    %v7318 = vunpack.c.h.b16 %v6072
    %v7319 = vunpack.c.l.b16 %v6073
    %v7320 = vunpack.c.h.b16 %v6073
    %v7321 = vunpack.c.l.b16 %v6074
    %v7322 = vunpack.c.h.b16 %v6074
    %v7323 = vunpack.c.l.b16 %v6075
    %v7324 = vunpack.c.h.b16 %v6075
    %v7325 = vunpack.c.l.b16 %v6076
    %v7326 = vunpack.c.h.b16 %v6076
    %v7327 = vunpack.c.l.b16 %v6077
    %v7328 = vunpack.c.h.b16 %v6077
    %v7329 = vunpack.c.l.b16 %v6078
    %v7330 = vunpack.c.h.b16 %v6078
    %v7331 = vunpack.c.l.b16 %v6079
    %v7332 = vunpack.c.h.b16 %v6079
    %v7333 = vunpack.c.l.b16 %v6080
    %v7334 = vunpack.c.h.b16 %v6080
    %v7335 = vunpack.c.l.b16 %v6081
    %v7336 = vunpack.c.h.b16 %v6081
    %v7337 = vunpack.c.l.b16 %v6082
    %v7338 = vunpack.c.h.b16 %v6082
    %v7339 = vunpack.c.l.b16 %v6083
    %v7340 = vunpack.c.h.b16 %v6083
    %v7341 = vunpack.c.l.b16 %v6084
    %v7342 = vunpack.c.h.b16 %v6084
    %v7343 = vunpack.c.l.b16 %v6085
    %v7344 = vunpack.c.h.b16 %v6085
    %v7345 = vunpack.c.l.b16 %v6086
    %v7346 = vunpack.c.h.b16 %v6086
    %v7347 = vunpack.c.l.b16 %v6087
    %v7348 = vunpack.c.h.b16 %v6087
    %v7349 = vunpack.c.l.b16 %v6088
    %v7350 = vunpack.c.h.b16 %v6088
    %v7351 = vunpack.c.l.b16 %v6089
    %v7352 = vunpack.c.h.b16 %v6089
    %v7353 = vunpack.c.l.b16 %v6090
    %v7354 = vunpack.c.h.b16 %v6090
    %v7355 = vunpack.c.l.b16 %v6091
    %v7356 = vunpack.c.h.b16 %v6091
    %v7357 = vunpack.c.l.b16 %v6092
    %v7358 = vunpack.c.h.b16 %v6092
    %v7359 = vunpack.c.l.b16 %v6093
    %v7360 = vunpack.c.h.b16 %v6093
    %v7361 = vunpack.c.l.b16 %v6094
    %v7362 = vunpack.c.h.b16 %v6094
    %v7363 = vunpack.c.l.b16 %v6095
    %v7364 = vunpack.c.h.b16 %v6095
    %v7365 = vunpack.c.l.b16 %v6096
    %v7366 = vunpack.c.h.b16 %v6096
    %v7367 = vunpack.c.l.b16 %v6097
    %v7368 = vunpack.c.h.b16 %v6097
    %v7369 = vunpack.c.l.b16 %v6098
    %v7370 = vunpack.c.h.b16 %v6098
    %v7371 = vunpack.c.l.b16 %v6099
    %v7372 = vunpack.c.h.b16 %v6099
    %v7373 = vunpack.c.l.b16 %v6100
    %v7374 = vunpack.c.h.b16 %v6100
    %v7375 = vunpack.c.l.b16 %v6101
    %v7376 = vunpack.c.h.b16 %v6101
    %v7377 = vunpack.c.l.b16 %v6102
    %v7378 = vunpack.c.h.b16 %v6102
    %v7379 = vunpack.c.l.b16 %v6103
    %v7380 = vunpack.c.h.b16 %v6103
    %v7381 = vunpack.c.l.b16 %v6104
    %v7382 = vunpack.c.h.b16 %v6104
    %v7383 = vunpack.c.l.b16 %v6105
    %v7384 = vunpack.c.h.b16 %v6105
    %v7385 = vunpack.c.l.b16 %v6106
    %v7386 = vunpack.c.h.b16 %v6106
    %v7387 = vunpack.c.l.b16 %v6107
    %v7388 = vunpack.c.h.b16 %v6107
    %v7389 = vunpack.c.l.b16 %v6108
    %v7390 = vunpack.c.h.b16 %v6108
    %v7391 = vunpack.c.l.b16 %v6109
    %v7392 = vunpack.c.h.b16 %v6109
    %v7393 = vunpack.c.l.b16 %v6110
    %v7394 = vunpack.c.h.b16 %v6110
    %v7395 = vunpack.c.l.b16 %v6111
    %v7396 = vunpack.c.h.b16 %v6111
    %v7397 = vunpack.c.l.b16 %v6112
    %v7398 = vunpack.c.h.b16 %v6112
    %v7399 = vunpack.c.l.b16 %v6113
    %v7400 = vunpack.c.h.b16 %v6113
    %v7401 = vunpack.c.l.b16 %v6114
    %v7402 = vunpack.c.h.b16 %v6114
    %v7403 = vunpack.c.l.b16 %v6115
    %v7404 = vunpack.c.h.b16 %v6115
    %v7405 = vunpack.c.l.b16 %v6116
    %v7406 = vunpack.c.h.b16 %v6116
    %v7407 = vunpack.c.l.b16 %v6117
    %v7408 = vunpack.c.h.b16 %v6117
    %v7409 = vunpack.c.l.b16 %v6118
    %v7410 = vunpack.c.h.b16 %v6118
    %v7411 = vunpack.c.l.b16 %v6119
    %v7412 = vunpack.c.h.b16 %v6119
    %v7413 = vunpack.c.l.b16 %v6120
    %v7414 = vunpack.c.h.b16 %v6120
    %v7415 = vunpack.c.l.b16 %v6121
    %v7416 = vunpack.c.h.b16 %v6121
    %v7417 = vunpack.c.l.b16 %v6122
    %v7418 = vunpack.c.h.b16 %v6122
    %v7419 = vunpack.c.l.b16 %v6123
    %v7420 = vunpack.c.h.b16 %v6123
    %v7421 = vunpack.c.l.b16 %v6124
    %v7422 = vunpack.c.h.b16 %v6124
    %v7423 = vunpack.c.l.b16 %v6125
    %v7424 = vunpack.c.h.b16 %v6125
    %v7425 = vunpack.c.l.b16 %v6126
    %v7426 = vunpack.c.h.b16 %v6126
    %v7427 = vunpack.c.l.b16 %v6127
    %v7428 = vunpack.c.h.b16 %v6127
    %v7429 = vunpack.c.l.b16 %v6128
    %v7430 = vunpack.c.h.b16 %v6128
    %v7431 = vunpack.c.l.b16 %v6129
    %v7432 = vunpack.c.h.b16 %v6129
    %v7433 = vunpack.c.l.b16 %v6130
    %v7434 = vunpack.c.h.b16 %v6130
    %v7435 = vunpack.c.l.b16 %v6131
    %v7436 = vunpack.c.h.b16 %v6131
    %v7437 = vunpack.c.l.b16 %v6132
    %v7438 = vunpack.c.h.b16 %v6132
    %v7439 = vunpack.c.l.b16 %v6133
    %v7440 = vunpack.c.h.b16 %v6133
    %v7441 = vunpack.c.l.b16 %v6134
    %v7442 = vunpack.c.h.b16 %v6134
    %v7443 = vunpack.c.l.b16 %v6135
    %v7444 = vunpack.c.h.b16 %v6135
    %v7445 = vunpack.c.l.b16 %v6136
    %v7446 = vunpack.c.h.b16 %v6136
    %v7447 = vunpack.c.l.b16 %v6137
    %v7448 = vunpack.c.h.b16 %v6137
    %v7449 = vunpack.c.l.b16 %v6138
    %v7450 = vunpack.c.h.b16 %v6138
    %v7451 = vunpack.c.l.b16 %v6139
    %v7452 = vunpack.c.h.b16 %v6139
    %v7453 = vunpack.c.l.b16 %v6140
    %v7454 = vunpack.c.h.b16 %v6140
    %v7455 = vunpack.c.l.b16 %v6141
    %v7456 = vunpack.c.h.b16 %v6141
    %v7457 = vunpack.c.l.b16 %v6142
    %v7458 = vunpack.c.h.b16 %v6142
    %v7459 = vunpack.c.l.b16 %v6143
    %v7460 = vunpack.c.h.b16 %v6143
    %v7461 = vunpack.c.l.b16 %v6144
    %v7462 = vunpack.c.h.b16 %v6144
    %v7463 = vunpack.c.l.b16 %v6145
    %v7464 = vunpack.c.h.b16 %v6145
    %v7465 = vunpack.c.l.b16 %v6146
    %v7466 = vunpack.c.h.b16 %v6146
    %v7467 = vunpack.c.l.b16 %v6147
    %v7468 = vunpack.c.h.b16 %v6147
    %v7469 = vunpack.c.l.b16 %v6148
    %v7470 = vunpack.c.h.b16 %v6148
    %v7471 = vunpack.c.l.b16 %v6149
    %v7472 = vunpack.c.h.b16 %v6149
    %v7473 = vunpack.c.l.b16 %v6150
    %v7474 = vunpack.c.h.b16 %v6150
    %v7475 = vunpack.c.l.b16 %v6151
    %v7476 = vunpack.c.h.b16 %v6151
    %v7477 = vunpack.c.l.b16 %v6152
    %v7478 = vunpack.c.h.b16 %v6152
    %v7479 = vunpack.c.l.b16 %v6153
    %v7480 = vunpack.c.h.b16 %v6153
    %v7481 = vunpack.c.l.b16 %v6154
    %v7482 = vunpack.c.h.b16 %v6154
    %v7483 = vunpack.c.l.b16 %v6155
    %v7484 = vunpack.c.h.b16 %v6155
    %v7485 = vunpack.c.l.b16 %v6156
    %v7486 = vunpack.c.h.b16 %v6156
    %v7487 = vunpack.c.l.b16 %v6157
    %v7488 = vunpack.c.h.b16 %v6157
    %v7489 = vunpack.c.l.b16 %v6158
    %v7490 = vunpack.c.h.b16 %v6158
    %v7491 = vunpack.c.l.b16 %v6159
    %v7492 = vunpack.c.h.b16 %v6159
    %v7493 = vunpack.c.l.b16 %v6160
    %v7494 = vunpack.c.h.b16 %v6160
    %v7495 = vunpack.c.l.b16 %v6161
    %v7496 = vunpack.c.h.b16 %v6161
    %v7497 = vunpack.c.l.b16 %v6162
    %v7498 = vunpack.c.h.b16 %v6162
    %v7499 = vunpack.c.l.b16 %v6163
    %v7500 = vunpack.c.h.b16 %v6163
    %v7501 = vunpack.c.l.b16 %v6164
    %v7502 = vunpack.c.h.b16 %v6164
    %v7503 = vunpack.c.l.b16 %v6165
    %v7504 = vunpack.c.h.b16 %v6165
    %v7505 = vunpack.c.l.b16 %v6166
    %v7506 = vunpack.c.h.b16 %v6166
    %v7507 = vunpack.c.l.b16 %v6167
    %v7508 = vunpack.c.h.b16 %v6167
    %v7509 = vunpack.c.l.b16 %v6168
    %v7510 = vunpack.c.h.b16 %v6168
    %v7511 = vunpack.c.l.b16 %v6169
    %v7512 = vunpack.c.h.b16 %v6169
    %v7513 = vunpack.c.l.b16 %v6170
    %v7514 = vunpack.c.h.b16 %v6170
    %v7515 = vunpack.c.l.b16 %v6171
    %v7516 = vunpack.c.h.b16 %v6171
    %v7517 = vunpack.c.l.b16 %v6172
    %v7518 = vunpack.c.h.b16 %v6172
    %v7519 = vunpack.c.l.b16 %v6173
    %v7520 = vunpack.c.h.b16 %v6173
    %v7521 = vunpack.c.l.b16 %v6174
    %v7522 = vunpack.c.h.b16 %v6174
    %v7523 = vunpack.c.l.b16 %v6175
    %v7524 = vunpack.c.h.b16 %v6175
    %v7525 = vunpack.c.l.b16 %v6176
    %v7526 = vunpack.c.h.b16 %v6176
    %v7527 = vunpack.c.l.b16 %v6177
    %v7528 = vunpack.c.h.b16 %v6177
    %v7529 = vunpack.c.l.b16 %v6178
    %v7530 = vunpack.c.h.b16 %v6178
    %v7531 = vunpack.c.l.b16 %v6179
    %v7532 = vunpack.c.h.b16 %v6179
    %v7533 = vunpack.c.l.b16 %v6180
    %v7534 = vunpack.c.h.b16 %v6180
    %v7535 = vunpack.c.l.b16 %v6181
    %v7536 = vunpack.c.h.b16 %v6181
    %v7537 = vunpack.c.l.b16 %v6182
    %v7538 = vunpack.c.h.b16 %v6182
    %v7539 = vunpack.c.l.b16 %v6183
    %v7540 = vunpack.c.h.b16 %v6183
    %v7541 = vunpack.c.l.b16 %v6184
    %v7542 = vunpack.c.h.b16 %v6184
    %v7543 = vunpack.c.l.b16 %v6185
    %v7544 = vunpack.c.h.b16 %v6185
    %v7545 = vunpack.c.l.b16 %v6186
    %v7546 = vunpack.c.h.b16 %v6186
    %v7547 = vunpack.c.l.b16 %v6187
    %v7548 = vunpack.c.h.b16 %v6187
    %v7549 = vunpack.c.l.b16 %v6188
    %v7550 = vunpack.c.h.b16 %v6188
    %v7551 = vunpack.c.l.b16 %v6189
    %v7552 = vunpack.c.h.b16 %v6189
    %v7553 = vunpack.c.l.b16 %v6190
    %v7554 = vunpack.c.h.b16 %v6190
    %v7555 = vunpack.c.l.b16 %v6191
    %v7556 = vunpack.c.h.b16 %v6191
    %v7557 = vunpack.c.l.b16 %v6192
    %v7558 = vunpack.c.h.b16 %v6192
    %v7559 = vunpack.c.l.b16 %v6193
    %v7560 = vunpack.c.h.b16 %v6193
    %v7561 = vunpack.c.l.b16 %v6194
    %v7562 = vunpack.c.h.b16 %v6194
    %v7563 = vunpack.c.l.b16 %v6195
    %v7564 = vunpack.c.h.b16 %v6195
    %v7565 = vunpack.c.l.b16 %v6196
    %v7566 = vunpack.c.h.b16 %v6196
    %v7567 = vunpack.c.l.b16 %v6197
    %v7568 = vunpack.c.h.b16 %v6197
    %v7569 = vunpack.c.l.b16 %v6198
    %v7570 = vunpack.c.h.b16 %v6198
    %v7571 = vunpack.c.l.b16 %v6199
    %v7572 = vunpack.c.h.b16 %v6199
    %v7573 = vunpack.c.l.b16 %v6200
    %v7574 = vunpack.c.h.b16 %v6200
    %v7575 = vunpack.c.l.b16 %v6201
    %v7576 = vunpack.c.h.b16 %v6201
    %v7577 = vunpack.c.l.b16 %v6202
    %v7578 = vunpack.c.h.b16 %v6202
    %v7579 = vunpack.c.l.b16 %v6203
    %v7580 = vunpack.c.h.b16 %v6203
    %v7581 = vunpack.c.l.b16 %v6204
    %v7582 = vunpack.c.h.b16 %v6204
    %v7583 = vunpack.c.l.b16 %v6205
    %v7584 = vunpack.c.h.b16 %v6205
    %v7585 = vunpack.c.l.b16 %v6206
    %v7586 = vunpack.c.h.b16 %v6206
    %v7587 = vunpack.c.l.b16 %v6207
    %v7588 = vunpack.c.h.b16 %v6207
    %v7589 = vunpack.c.l.b16 %v6208
    %v7590 = vunpack.c.h.b16 %v6208
    %v7591 = vunpack.c.l.b16 %v6209
    %v7592 = vunpack.c.h.b16 %v6209
    %v7593 = vunpack.c.l.b16 %v6210
    %v7594 = vunpack.c.h.b16 %v6210
    %v7595 = vunpack.c.l.b16 %v6211
    %v7596 = vunpack.c.h.b16 %v6211
    %v7597 = vunpack.c.l.b16 %v6212
    %v7598 = vunpack.c.h.b16 %v6212
    %v7599 = vunpack.c.l.b16 %v6213
    %v7600 = vunpack.c.h.b16 %v6213
    %v7601 = vunpack.c.l.b16 %v6214
    %v7602 = vunpack.c.h.b16 %v6214
    %v7603 = vunpack.c.l.b16 %v6215
    %v7604 = vunpack.c.h.b16 %v6215
    %v7605 = vunpack.c.l.b16 %v6216
    %v7606 = vunpack.c.h.b16 %v6216
    %v7607 = vunpack.c.l.b16 %v6217
    %v7608 = vunpack.c.h.b16 %v6217
    %v7609 = vunpack.c.l.b16 %v6218
    %v7610 = vunpack.c.h.b16 %v6218
    %v7611 = vunpack.c.l.b16 %v6219
    %v7612 = vunpack.c.h.b16 %v6219
    %v7613 = vunpack.c.l.b16 %v6220
    %v7614 = vunpack.c.h.b16 %v6220
    %v7615 = vunpack.c.l.b16 %v6221
    %v7616 = vunpack.c.h.b16 %v6221
    %v7617 = vunpack.c.l.b16 %v6222
    %v7618 = vunpack.c.h.b16 %v6222
    %v7619 = vunpack.c.l.b16 %v6223
    %v7620 = vunpack.c.h.b16 %v6223
    %v7621 = vunpack.c.l.b16 %v6224
    %v7622 = vunpack.c.h.b16 %v6224
    %v7623 = vunpack.c.l.b16 %v6225
    %v7624 = vunpack.c.h.b16 %v6225
    %v7625 = vunpack.c.l.b16 %v6226
    %v7626 = vunpack.c.h.b16 %v6226
    %v7627 = vunpack.c.l.b16 %v6227
    %v7628 = vunpack.c.h.b16 %v6227
    %v7629 = vunpack.c.l.b16 %v6228
    %v7630 = vunpack.c.h.b16 %v6228
    %v7631 = vunpack.c.l.b16 %v6229
    %v7632 = vunpack.c.h.b16 %v6229
    %v7633 = vunpack.c.l.b16 %v6230
    %v7634 = vunpack.c.h.b16 %v6230
    %v7635 = vunpack.c.l.b16 %v6231
    %v7636 = vunpack.c.h.b16 %v6231
    %v7637 = vunpack.c.l.b16 %v6232
    %v7638 = vunpack.c.h.b16 %v6232
    %v7639 = vunpack.c.l.b16 %v6233
    %v7640 = vunpack.c.h.b16 %v6233
    %v7641 = vunpack.c.l.b16 %v6234
    %v7642 = vunpack.c.h.b16 %v6234
    %v7643 = vunpack.c.l.b16 %v6235
    %v7644 = vunpack.c.h.b16 %v6235
    %v7645 = vunpack.c.l.b16 %v6236
    %v7646 = vunpack.c.h.b16 %v6236
    %v7647 = vunpack.c.l.b16 %v6237
    %v7648 = vunpack.c.h.b16 %v6237
    %v7649 = vunpack.c.l.b16 %v6238
    %v7650 = vunpack.c.h.b16 %v6238
    %v7651 = vunpack.c.l.b16 %v6239
    %v7652 = vunpack.c.h.b16 %v6239
    %v7653 = vunpack.c.l.b16 %v6240
    %v7654 = vunpack.c.h.b16 %v6240
    %v7655 = vunpack.c.l.b16 %v6241
    %v7656 = vunpack.c.h.b16 %v6241
    %v7657 = vunpack.c.l.b16 %v6242
    %v7658 = vunpack.c.h.b16 %v6242
    %v7659 = vunpack.c.l.b16 %v6243
    %v7660 = vunpack.c.h.b16 %v6243
    %v7661 = vunpack.c.l.b16 %v6244
    %v7662 = vunpack.c.h.b16 %v6244
    %v7663 = vunpack.c.l.b16 %v6245
    %v7664 = vunpack.c.h.b16 %v6245
    %v7665 = vunpack.c.l.b16 %v6246
    %v7666 = vunpack.c.h.b16 %v6246
    %v7667 = vunpack.c.l.b16 %v6247
    %v7668 = vunpack.c.h.b16 %v6247
    %v7669 = vunpack.c.l.b16 %v6248
    %v7670 = vunpack.c.h.b16 %v6248
    %v7671 = vunpack.c.l.b16 %v6249
    %v7672 = vunpack.c.h.b16 %v6249
    %v7673 = vunpack.c.l.b16 %v6250
    %v7674 = vunpack.c.h.b16 %v6250
    %v7675 = vunpack.c.l.b16 %v6251
    %v7676 = vunpack.c.h.b16 %v6251
    %v7677 = vunpack.c.l.b16 %v6252
    %v7678 = vunpack.c.h.b16 %v6252
    %v7679 = vunpack.c.l.b16 %v6253
    %v7680 = vunpack.c.h.b16 %v6253
    %v7681 = vunpack.c.l.b16 %v6254
    %v7682 = vunpack.c.h.b16 %v6254
    %v7683 = vunpack.c.l.b16 %v6255
    %v7684 = vunpack.c.h.b16 %v6255
    %v7685 = vunpack.c.l.b16 %v6256
    %v7686 = vunpack.c.h.b16 %v6256
    %v7687 = vunpack.c.l.b16 %v6257
    %v7688 = vunpack.c.h.b16 %v6257
    %v7689 = vunpack.c.l.b16 %v6258
    %v7690 = vunpack.c.h.b16 %v6258
    %v7691 = vunpack.c.l.b16 %v6259
    %v7692 = vunpack.c.h.b16 %v6259
    %v7693 = vunpack.c.l.b16 %v6260
    %v7694 = vunpack.c.h.b16 %v6260
    %v7695 = vunpack.c.l.b16 %v6261
    %v7696 = vunpack.c.h.b16 %v6261
    %v7697 = vunpack.c.l.b16 %v6262
    %v7698 = vunpack.c.h.b16 %v6262
    %v7699 = vunpack.c.l.b16 %v6263
    %v7700 = vunpack.c.h.b16 %v6263
    %v7701 = vunpack.c.l.b16 %v6264
    %v7702 = vunpack.c.h.b16 %v6264
    %v7703 = vunpack.c.l.b16 %v6265
    %v7704 = vunpack.c.h.b16 %v6265
    %v7705 = vunpack.c.l.b16 %v6266
    %v7706 = vunpack.c.h.b16 %v6266
    %v7707 = vunpack.c.l.b16 %v6267
    %v7708 = vunpack.c.h.b16 %v6267
    %v7709 = vunpack.c.l.b16 %v6268
    %v7710 = vunpack.c.h.b16 %v6268
    %v7711 = vunpack.c.l.b16 %v6269
    %v7712 = vunpack.c.h.b16 %v6269
    %v7713 = vunpack.c.l.b16 %v6270
    %v7714 = vunpack.c.h.b16 %v6270
    %v7715 = vunpack.c.l.b16 %v6271
    %v7716 = vunpack.c.h.b16 %v6271
    %v7717 = vunpack.c.l.b16 %v6272
    %v7718 = vunpack.c.h.b16 %v6272
    %v7719 = vunpack.c.l.b16 %v6273
    %v7720 = vunpack.c.h.b16 %v6273
    %v7721 = vunpack.c.l.b16 %v6274
    %v7722 = vunpack.c.h.b16 %v6274
    %v7723 = vunpack.c.l.b16 %v6275
    %v7724 = vunpack.c.h.b16 %v6275
    %v7725 = vunpack.c.l.b16 %v6276
    %v7726 = vunpack.c.h.b16 %v6276
    %v7727 = vunpack.c.l.b16 %v6277
    %v7728 = vunpack.c.h.b16 %v6277
    %v7729 = vunpack.c.l.b16 %v6278
    %v7730 = vunpack.c.h.b16 %v6278
    %v7731 = vunpack.c.l.b16 %v6279
    %v7732 = vunpack.c.h.b16 %v6279
    %v7733 = vunpack.c.l.b16 %v6280
    %v7734 = vunpack.c.h.b16 %v6280
    %v7735 = vunpack.c.l.b16 %v6281
    %v7736 = vunpack.c.h.b16 %v6281
    %v7737 = vunpack.c.l.b16 %v6282
    %v7738 = vunpack.c.h.b16 %v6282
    %v7739 = vunpack.c.l.b16 %v6283
    %v7740 = vunpack.c.h.b16 %v6283
    %v7741 = vunpack.c.l.b16 %v6284
    %v7742 = vunpack.c.h.b16 %v6284
    %v7743 = vunpack.c.l.b16 %v6285
    %v7744 = vunpack.c.h.b16 %v6285
    %v7745 = vunpack.c.l.b16 %v6286
    %v7746 = vunpack.c.h.b16 %v6286
    %v7747 = vunpack.c.l.b16 %v6287
    %v7748 = vunpack.c.h.b16 %v6287
    %v7749 = vunpack.c.l.b16 %v6288
    %v7750 = vunpack.c.h.b16 %v6288
    %v7751 = vunpack.c.l.b16 %v6289
    %v7752 = vunpack.c.h.b16 %v6289
    %v7753 = vunpack.c.l.b16 %v6290
    %v7754 = vunpack.c.h.b16 %v6290
    %v7755 = vunpack.c.l.b16 %v6291
    %v7756 = vunpack.c.h.b16 %v6291
    %v7757 = vunpack.c.l.b16 %v6292
    %v7758 = vunpack.c.h.b16 %v6292
    %v7759 = vunpack.c.l.b16 %v6293
    %v7760 = vunpack.c.h.b16 %v6293
    %v7761 = vunpack.c.l.b16 %v6294
    %v7762 = vunpack.c.h.b16 %v6294
    %v7763 = vunpack.c.l.b16 %v6295
    %v7764 = vunpack.c.h.b16 %v6295
    %v7765 = vunpack.c.l.b16 %v6296
    %v7766 = vunpack.c.h.b16 %v6296
    %v7767 = vunpack.c.l.b16 %v6297
    %v7768 = vunpack.c.h.b16 %v6297
    %v7769 = vunpack.c.l.b16 %v6298
    %v7770 = vunpack.c.h.b16 %v6298
    %v7771 = vunpack.c.l.b16 %v6299
    %v7772 = vunpack.c.h.b16 %v6299
    %v7773 = vunpack.c.l.b16 %v6300
    %v7774 = vunpack.c.h.b16 %v6300
    %v7775 = vunpack.c.l.b16 %v6301
    %v7776 = vunpack.c.h.b16 %v6301
    %v7777 = vunpack.c.l.b16 %v6302
    %v7778 = vunpack.c.h.b16 %v6302
    %v7779 = vunpack.c.l.b16 %v6303
    %v7780 = vunpack.c.h.b16 %v6303
    %v7781 = vunpack.c.l.b16 %v6304
    %v7782 = vunpack.c.h.b16 %v6304
    %v7783 = vunpack.c.l.b16 %v6305
    %v7784 = vunpack.c.h.b16 %v6305
    %v7785 = vunpack.c.l.b16 %v6306
    %v7786 = vunpack.c.h.b16 %v6306
    %v7787 = vunpack.c.l.b16 %v6307
    %v7788 = vunpack.c.h.b16 %v6307
    %v7789 = vunpack.c.l.b16 %v6308
    %v7790 = vunpack.c.h.b16 %v6308
    %v7791 = vunpack.c.l.b16 %v6309
    %v7792 = vunpack.c.h.b16 %v6309
    %v7793 = vunpack.c.l.b16 %v6310
    %v7794 = vunpack.c.h.b16 %v6310
    %v7795 = vunpack.c.l.b16 %v6311
    %v7796 = vunpack.c.h.b16 %v6311
    %v7797 = vunpack.c.l.b16 %v6312
    %v7798 = vunpack.c.h.b16 %v6312
    %v7799 = vunpack.c.l.b16 %v6313
    %v7800 = vunpack.c.h.b16 %v6313
    %v7801 = vunpack.c.l.b16 %v6314
    %v7802 = vunpack.c.h.b16 %v6314
    %v7803 = vunpack.c.l.b16 %v6315
    %v7804 = vunpack.c.h.b16 %v6315
    %v7805 = vunpack.c.l.b16 %v6316
    %v7806 = vunpack.c.h.b16 %v6316
    %v7807 = vunpack.c.l.b16 %v6317
    %v7808 = vunpack.c.h.b16 %v6317
    %v7809 = vunpack.c.l.b16 %v6318
    %v7810 = vunpack.c.h.b16 %v6318
    %v7811 = vunpack.c.l.b16 %v6319
    %v7812 = vunpack.c.h.b16 %v6319
    %v7813 = vunpack.c.l.b16 %v6320
    %v7814 = vunpack.c.h.b16 %v6320
    %v7815 = vunpack.c.l.b16 %v6321
    %v7816 = vunpack.c.h.b16 %v6321
    %v7817 = vunpack.c.l.b16 %v6322
    %v7818 = vunpack.c.h.b16 %v6322
    %v7819 = vunpack.c.l.b16 %v6323
    %v7820 = vunpack.c.h.b16 %v6323
    %v7821 = vunpack.c.l.b16 %v6324
    %v7822 = vunpack.c.h.b16 %v6324
    %v7823 = vunpack.c.l.b16 %v6325
    %v7824 = vunpack.c.h.b16 %v6325
    %v7825 = vunpack.c.l.b16 %v6326
    %v7826 = vunpack.c.h.b16 %v6326
    %v7827 = vunpack.c.l.b16 %v6327
    %v7828 = vunpack.c.h.b16 %v6327
    %v7829 = vunpack.c.l.b16 %v6328
    %v7830 = vunpack.c.h.b16 %v6328
    %v7831 = vunpack.c.l.b16 %v6329
    %v7832 = vunpack.c.h.b16 %v6329
    %v7833 = vunpack.c.l.b16 %v6330
    %v7834 = vunpack.c.h.b16 %v6330
    %v7835 = vunpack.c.l.b16 %v6331
    %v7836 = vunpack.c.h.b16 %v6331
    %v7837 = vunpack.c.l.b16 %v6332
    %v7838 = vunpack.c.h.b16 %v6332
    %v7839 = vunpack.c.l.b16 %v6333
    %v7840 = vunpack.c.h.b16 %v6333
    %v7841 = vunpack.c.l.b16 %v6334
    %v7842 = vunpack.c.h.b16 %v6334
    %v7843 = vunpack.c.l.b16 %v6335
    %v7844 = vunpack.c.h.b16 %v6335
    %v7845 = vunpack.c.l.b16 %v6336
    %v7846 = vunpack.c.h.b16 %v6336
    %v7847 = vunpack.c.l.b16 %v6337
    %v7848 = vunpack.c.h.b16 %v6337
    %v7849 = vunpack.c.l.b16 %v6338
    %v7850 = vunpack.c.h.b16 %v6338
    %v7851 = vunpack.c.l.b16 %v6339
    %v7852 = vunpack.c.h.b16 %v6339
    %v7853 = vunpack.c.l.b16 %v6340
    %v7854 = vunpack.c.h.b16 %v6340
    %v7855 = vunpack.c.l.b16 %v6341
    %v7856 = vunpack.c.h.b16 %v6341
    %v7857 = vunpack.c.l.b16 %v6342
    %v7858 = vunpack.c.h.b16 %v6342
    %v7859 = vunpack.c.l.b16 %v6343
    %v7860 = vunpack.c.h.b16 %v6343
    %v7861 = vunpack.c.l.b16 %v6344
    %v7862 = vunpack.c.h.b16 %v6344
    %v7863 = vunpack.c.l.b16 %v6345
    %v7864 = vunpack.c.h.b16 %v6345
    %v7865 = vunpack.c.l.b16 %v6346
    %v7866 = vunpack.c.h.b16 %v6346
    %v7867 = vunpack.c.l.b16 %v6347
    %v7868 = vunpack.c.h.b16 %v6347
    %v7869 = vunpack.c.l.b16 %v6348
    %v7870 = vunpack.c.h.b16 %v6348
    %v7871 = vunpack.c.l.b16 %v6349
    %v7872 = vunpack.c.h.b16 %v6349
    %v7873 = vunpack.c.l.b16 %v6350
    %v7874 = vunpack.c.h.b16 %v6350
    %v7875 = vunpack.c.l.b16 %v6351
    %v7876 = vunpack.c.h.b16 %v6351
    %v7877 = vunpack.c.l.b16 %v6352
    %v7878 = vunpack.c.h.b16 %v6352
    %v7879 = vunpack.c.l.b16 %v6353
    %v7880 = vunpack.c.h.b16 %v6353
    %v7881 = vunpack.c.l.b16 %v6354
    %v7882 = vunpack.c.h.b16 %v6354
    %v7883 = vunpack.c.l.b16 %v6355
    %v7884 = vunpack.c.h.b16 %v6355
    %v7885 = vunpack.c.l.b16 %v6356
    %v7886 = vunpack.c.h.b16 %v6356
    %v7887 = vunpack.c.l.b16 %v6357
    %v7888 = vunpack.c.h.b16 %v6357
    %v7889 = vunpack.c.l.b16 %v6358
    %v7890 = vunpack.c.h.b16 %v6358
    %v7891 = vunpack.c.l.b16 %v6359
    %v7892 = vunpack.c.h.b16 %v6359
    %v7893 = vunpack.c.l.b16 %v6360
    %v7894 = vunpack.c.h.b16 %v6360
    %v7895 = vunpack.c.l.b16 %v6361
    %v7896 = vunpack.c.h.b16 %v6361
    %v7897 = vunpack.c.l.b16 %v6362
    %v7898 = vunpack.c.h.b16 %v6362
    %v7899 = vunpack.c.l.b16 %v6363
    %v7900 = vunpack.c.h.b16 %v6363
    %v7901 = vunpack.c.l.b16 %v6364
    %v7902 = vunpack.c.h.b16 %v6364
    %v7903 = vunpack.c.l.b16 %v6365
    %v7904 = vunpack.c.h.b16 %v6365
    %v7905 = vunpack.c.l.b16 %v6366
    %v7906 = vunpack.c.h.b16 %v6366
    %v7907 = vunpack.c.l.b16 %v6367
    %v7908 = vunpack.c.h.b16 %v6367
    %v7909 = vunpack.c.l.b16 %v6368
    %v7910 = vunpack.c.h.b16 %v6368
    %v7911 = vunpack.c.l.b16 %v6369
    %v7912 = vunpack.c.h.b16 %v6369
    %v7913 = vunpack.c.l.b16 %v6370
    %v7914 = vunpack.c.h.b16 %v6370
    %v7915 = vunpack.c.l.b16 %v6371
    %v7916 = vunpack.c.h.b16 %v6371
    %v7917 = vunpack.c.l.b16 %v6372
    %v7918 = vunpack.c.h.b16 %v6372
    %v7919 = vunpack.c.l.b16 %v6373
    %v7920 = vunpack.c.h.b16 %v6373
    %v7921 = vunpack.c.l.b16 %v6374
    %v7922 = vunpack.c.h.b16 %v6374
    %v7923 = vunpack.c.l.b16 %v6375
    %v7924 = vunpack.c.h.b16 %v6375
    %v7925 = vunpack.c.l.b16 %v6376
    %v7926 = vunpack.c.h.b16 %v6376
    %v7927 = vunpack.c.l.b16 %v6377
    %v7928 = vunpack.c.h.b16 %v6377
    %v7929 = vunpack.c.l.b16 %v6378
    %v7930 = vunpack.c.h.b16 %v6378
    %v7931 = vunpack.c.l.b16 %v6379
    %v7932 = vunpack.c.h.b16 %v6379
    %v7933 = vunpack.c.l.b16 %v6380
    %v7934 = vunpack.c.h.b16 %v6380
    %v7935 = vunpack.c.l.b16 %v6381
    %v7936 = vunpack.c.h.b16 %v6381
    %v7937 = vunpack.c.l.b16 %v6382
    %v7938 = vunpack.c.h.b16 %v6382
    %v7939 = vunpack.c.l.b16 %v6383
    %v7940 = vunpack.c.h.b16 %v6383
    %v7941 = vunpack.c.l.b16 %v6384
    %v7942 = vunpack.c.h.b16 %v6384
    %v7943 = vunpack.c.l.b16 %v6385
    %v7944 = vunpack.c.h.b16 %v6385
    %v7945 = vunpack.c.l.b16 %v6386
    %v7946 = vunpack.c.h.b16 %v6386
    %v7947 = vunpack.c.l.b16 %v6387
    %v7948 = vunpack.c.h.b16 %v6387
    %v7949 = vunpack.c.l.b16 %v6388
    %v7950 = vunpack.c.h.b16 %v6388
    %v7951 = vunpack.c.l.b16 %v6389
    %v7952 = vunpack.c.h.b16 %v6389
    %v7953 = vunpack.c.l.b16 %v6390
    %v7954 = vunpack.c.h.b16 %v6390
    %v7955 = vunpack.c.l.b16 %v6391
    %v7956 = vunpack.c.h.b16 %v6391
    %v7957 = vunpack.c.l.b16 %v6392
    %v7958 = vunpack.c.h.b16 %v6392
    %v7959 = vunpack.c.l.b16 %v6393
    %v7960 = vunpack.c.h.b16 %v6393
    %v7961 = vunpack.c.l.b16 %v6394
    %v7962 = vunpack.c.h.b16 %v6394
    %v7963 = vunpack.c.l.b16 %v6395
    %v7964 = vunpack.c.h.b16 %v6395
    %v7965 = vunpack.c.l.b16 %v6396
    %v7966 = vunpack.c.h.b16 %v6396
    %v7967 = vunpack.c.l.b16 %v6397
    %v7968 = vunpack.c.h.b16 %v6397
    %v7969 = vunpack.c.l.b16 %v6398
    %v7970 = vunpack.c.h.b16 %v6398
    %v7971 = vunpack.c.l.b16 %v6399
    %v7972 = vunpack.c.h.b16 %v6399
    %v7973 = vunpack.c.l.b16 %v6400
    %v7974 = vunpack.c.h.b16 %v6400
    %v7975 = vunpack.c.l.b16 %v6401
    %v7976 = vunpack.c.h.b16 %v6401
    %v7977 = vunpack.c.l.b16 %v6402
    %v7978 = vunpack.c.h.b16 %v6402
    %v7979 = vunpack.c.l.b16 %v6403
    %v7980 = vunpack.c.h.b16 %v6403
    %v7981 = vunpack.c.l.b16 %v6404
    %v7982 = vunpack.c.h.b16 %v6404
    %v7983 = vpack.c.b16 %v6967, %v6959
    %v7984 = vpack.c.b16 %v6968, %v6960
    %v7985 = vpack.c.b16 %v6969, %v6961
    %v7986 = vpack.c.b16 %v6970, %v6962
    %v7987 = vpack.c.b16 %v6971, %v6963
    %v7988 = vpack.c.b16 %v6972, %v6964
    %v7989 = vpack.c.b16 %v6973, %v6965
    %v7990 = vpack.c.b16 %v6974, %v6966
    %v7991 = vpack.c.b16 %v6983, %v6975
    %v7992 = vpack.c.b16 %v6984, %v6976
    %v7993 = vpack.c.b16 %v6985, %v6977
    %v7994 = vpack.c.b16 %v6986, %v6978
    %v7995 = vpack.c.b16 %v6987, %v6979
    %v7996 = vpack.c.b16 %v6988, %v6980
    %v7997 = vpack.c.b16 %v6989, %v6981
    %v7998 = vpack.c.b16 %v6990, %v6982
    %v7999 = vpack.c.b16 %v6999, %v6991
    %v8000 = vpack.c.b16 %v7000, %v6992
    %v8001 = vpack.c.b16 %v7001, %v6993
    %v8002 = vpack.c.b16 %v7002, %v6994
    %v8003 = vpack.c.b16 %v7003, %v6995
    %v8004 = vpack.c.b16 %v7004, %v6996
    %v8005 = vpack.c.b16 %v7005, %v6997
    %v8006 = vpack.c.b16 %v7006, %v6998
    %v8007 = vpack.c.b16 %v7015, %v7007
    %v8008 = vpack.c.b16 %v7016, %v7008
    %v8009 = vpack.c.b16 %v7017, %v7009
    %v8010 = vpack.c.b16 %v7018, %v7010
    %v8011 = vpack.c.b16 %v7019, %v7011
    %v8012 = vpack.c.b16 %v7020, %v7012
    %v8013 = vpack.c.b16 %v7021, %v7013
    %v8014 = vpack.c.b16 %v7022, %v7014
    %v8015 = vpack.c.b16 %v7031, %v7023
    %v8016 = vpack.c.b16 %v7032, %v7024
    %v8017 = vpack.c.b16 %v7033, %v7025
    %v8018 = vpack.c.b16 %v7034, %v7026
    %v8019 = vpack.c.b16 %v7035, %v7027
    %v8020 = vpack.c.b16 %v7036, %v7028
    %v8021 = vpack.c.b16 %v7037, %v7029
    %v8022 = vpack.c.b16 %v7038, %v7030
    %v8023 = vpack.c.b16 %v7047, %v7039
    %v8024 = vpack.c.b16 %v7048, %v7040
    %v8025 = vpack.c.b16 %v7049, %v7041
    %v8026 = vpack.c.b16 %v7050, %v7042
    %v8027 = vpack.c.b16 %v7051, %v7043
    %v8028 = vpack.c.b16 %v7052, %v7044
    %v8029 = vpack.c.b16 %v7053, %v7045
    %v8030 = vpack.c.b16 %v7054, %v7046
    %v8031 = vpack.c.b16 %v7063, %v7055
    %v8032 = vpack.c.b16 %v7064, %v7056
    %v8033 = vpack.c.b16 %v7065, %v7057
    %v8034 = vpack.c.b16 %v7066, %v7058
    %v8035 = vpack.c.b16 %v7067, %v7059
    %v8036 = vpack.c.b16 %v7068, %v7060
    %v8037 = vpack.c.b16 %v7069, %v7061
    %v8038 = vpack.c.b16 %v7070, %v7062
    %v8039 = vpack.c.b16 %v7079, %v7071
    %v8040 = vpack.c.b16 %v7080, %v7072
    %v8041 = vpack.c.b16 %v7081, %v7073
    %v8042 = vpack.c.b16 %v7082, %v7074
    %v8043 = vpack.c.b16 %v7083, %v7075
    %v8044 = vpack.c.b16 %v7084, %v7076
    %v8045 = vpack.c.b16 %v7085, %v7077
    %v8046 = vpack.c.b16 %v7086, %v7078
    %v8047 = vpack.c.b16 %v7095, %v7087
    %v8048 = vpack.c.b16 %v7096, %v7088
    %v8049 = vpack.c.b16 %v7097, %v7089
    %v8050 = vpack.c.b16 %v7098, %v7090
    %v8051 = vpack.c.b16 %v7099, %v7091
    %v8052 = vpack.c.b16 %v7100, %v7092
    %v8053 = vpack.c.b16 %v7101, %v7093
    %v8054 = vpack.c.b16 %v7102, %v7094
    %v8055 = vpack.c.b16 %v7111, %v7103
    %v8056 = vpack.c.b16 %v7112, %v7104
    %v8057 = vpack.c.b16 %v7113, %v7105
    %v8058 = vpack.c.b16 %v7114, %v7106
    %v8059 = vpack.c.b16 %v7115, %v7107
    %v8060 = vpack.c.b16 %v7116, %v7108
    %v8061 = vpack.c.b16 %v7117, %v7109
    %v8062 = vpack.c.b16 %v7118, %v7110
    %v8063 = vpack.c.b16 %v7127, %v7119
    %v8064 = vpack.c.b16 %v7128, %v7120
    %v8065 = vpack.c.b16 %v7129, %v7121
    %v8066 = vpack.c.b16 %v7130, %v7122
    %v8067 = vpack.c.b16 %v7131, %v7123
    %v8068 = vpack.c.b16 %v7132, %v7124
    %v8069 = vpack.c.b16 %v7133, %v7125
    %v8070 = vpack.c.b16 %v7134, %v7126
    %v8071 = vpack.c.b16 %v7143, %v7135
    %v8072 = vpack.c.b16 %v7144, %v7136
    %v8073 = vpack.c.b16 %v7145, %v7137
    %v8074 = vpack.c.b16 %v7146, %v7138
    %v8075 = vpack.c.b16 %v7147, %v7139
    %v8076 = vpack.c.b16 %v7148, %v7140
    %v8077 = vpack.c.b16 %v7149, %v7141
    %v8078 = vpack.c.b16 %v7150, %v7142
    %v8079 = vpack.c.b16 %v7159, %v7151
    %v8080 = vpack.c.b16 %v7160, %v7152
    %v8081 = vpack.c.b16 %v7161, %v7153
    %v8082 = vpack.c.b16 %v7162, %v7154
    %v8083 = vpack.c.b16 %v7163, %v7155
    %v8084 = vpack.c.b16 %v7164, %v7156
    %v8085 = vpack.c.b16 %v7165, %v7157
    %v8086 = vpack.c.b16 %v7166, %v7158
    %v8087 = vpack.c.b16 %v7175, %v7167
    %v8088 = vpack.c.b16 %v7176, %v7168
    %v8089 = vpack.c.b16 %v7177, %v7169
    %v8090 = vpack.c.b16 %v7178, %v7170
    %v8091 = vpack.c.b16 %v7179, %v7171
    %v8092 = vpack.c.b16 %v7180, %v7172
    %v8093 = vpack.c.b16 %v7181, %v7173
    %v8094 = vpack.c.b16 %v7182, %v7174
    %v8095 = vpack.c.b16 %v7191, %v7183
    %v8096 = vpack.c.b16 %v7192, %v7184
    %v8097 = vpack.c.b16 %v7193, %v7185
    %v8098 = vpack.c.b16 %v7194, %v7186
    %v8099 = vpack.c.b16 %v7195, %v7187
    %v8100 = vpack.c.b16 %v7196, %v7188
    %v8101 = vpack.c.b16 %v7197, %v7189
    %v8102 = vpack.c.b16 %v7198, %v7190
    %v8103 = vpack.c.b16 %v7207, %v7199
    %v8104 = vpack.c.b16 %v7208, %v7200
    %v8105 = vpack.c.b16 %v7209, %v7201
    %v8106 = vpack.c.b16 %v7210, %v7202
    %v8107 = vpack.c.b16 %v7211, %v7203
    %v8108 = vpack.c.b16 %v7212, %v7204
    %v8109 = vpack.c.b16 %v7213, %v7205
    %v8110 = vpack.c.b16 %v7214, %v7206
    %v8111 = vpack.c.b16 %v7223, %v7215
    %v8112 = vpack.c.b16 %v7224, %v7216
    %v8113 = vpack.c.b16 %v7225, %v7217
    %v8114 = vpack.c.b16 %v7226, %v7218
    %v8115 = vpack.c.b16 %v7227, %v7219
    %v8116 = vpack.c.b16 %v7228, %v7220
    %v8117 = vpack.c.b16 %v7229, %v7221
    %v8118 = vpack.c.b16 %v7230, %v7222
    %v8119 = vpack.c.b16 %v7239, %v7231
    %v8120 = vpack.c.b16 %v7240, %v7232
    %v8121 = vpack.c.b16 %v7241, %v7233
    %v8122 = vpack.c.b16 %v7242, %v7234
    %v8123 = vpack.c.b16 %v7243, %v7235
    %v8124 = vpack.c.b16 %v7244, %v7236
    %v8125 = vpack.c.b16 %v7245, %v7237
    %v8126 = vpack.c.b16 %v7246, %v7238
    %v8127 = vpack.c.b16 %v7255, %v7247
    %v8128 = vpack.c.b16 %v7256, %v7248
    %v8129 = vpack.c.b16 %v7257, %v7249
    %v8130 = vpack.c.b16 %v7258, %v7250
    %v8131 = vpack.c.b16 %v7259, %v7251
    %v8132 = vpack.c.b16 %v7260, %v7252
    %v8133 = vpack.c.b16 %v7261, %v7253
    %v8134 = vpack.c.b16 %v7262, %v7254
    %v8135 = vpack.c.b16 %v7271, %v7263
    %v8136 = vpack.c.b16 %v7272, %v7264
    %v8137 = vpack.c.b16 %v7273, %v7265
    %v8138 = vpack.c.b16 %v7274, %v7266
    %v8139 = vpack.c.b16 %v7275, %v7267
    %v8140 = vpack.c.b16 %v7276, %v7268
    %v8141 = vpack.c.b16 %v7277, %v7269
    %v8142 = vpack.c.b16 %v7278, %v7270
    %v8143 = vpack.c.b16 %v7287, %v7279
    %v8144 = vpack.c.b16 %v7288, %v7280
    %v8145 = vpack.c.b16 %v7289, %v7281
    %v8146 = vpack.c.b16 %v7290, %v7282
    %v8147 = vpack.c.b16 %v7291, %v7283
    %v8148 = vpack.c.b16 %v7292, %v7284
    %v8149 = vpack.c.b16 %v7293, %v7285
    %v8150 = vpack.c.b16 %v7294, %v7286
    %v8151 = vpack.c.b16 %v7303, %v7295
    %v8152 = vpack.c.b16 %v7304, %v7296
    %v8153 = vpack.c.b16 %v7305, %v7297
    %v8154 = vpack.c.b16 %v7306, %v7298
    %v8155 = vpack.c.b16 %v7307, %v7299
    %v8156 = vpack.c.b16 %v7308, %v7300
    %v8157 = vpack.c.b16 %v7309, %v7301
    %v8158 = vpack.c.b16 %v7310, %v7302
    %v8159 = vpack.c.b16 %v7319, %v7311
    %v8160 = vpack.c.b16 %v7320, %v7312
    %v8161 = vpack.c.b16 %v7321, %v7313
    %v8162 = vpack.c.b16 %v7322, %v7314
    %v8163 = vpack.c.b16 %v7323, %v7315
    %v8164 = vpack.c.b16 %v7324, %v7316
    %v8165 = vpack.c.b16 %v7325, %v7317
    %v8166 = vpack.c.b16 %v7326, %v7318
    %v8167 = vpack.c.b16 %v7335, %v7327
    %v8168 = vpack.c.b16 %v7336, %v7328
    %v8169 = vpack.c.b16 %v7337, %v7329
    %v8170 = vpack.c.b16 %v7338, %v7330
    %v8171 = vpack.c.b16 %v7339, %v7331
    %v8172 = vpack.c.b16 %v7340, %v7332
    %v8173 = vpack.c.b16 %v7341, %v7333
    %v8174 = vpack.c.b16 %v7342, %v7334
    %v8175 = vpack.c.b16 %v7351, %v7343
    %v8176 = vpack.c.b16 %v7352, %v7344
    %v8177 = vpack.c.b16 %v7353, %v7345
    %v8178 = vpack.c.b16 %v7354, %v7346
    %v8179 = vpack.c.b16 %v7355, %v7347
    %v8180 = vpack.c.b16 %v7356, %v7348
    %v8181 = vpack.c.b16 %v7357, %v7349
    %v8182 = vpack.c.b16 %v7358, %v7350
    %v8183 = vpack.c.b16 %v7367, %v7359
    %v8184 = vpack.c.b16 %v7368, %v7360
    %v8185 = vpack.c.b16 %v7369, %v7361
    %v8186 = vpack.c.b16 %v7370, %v7362
    %v8187 = vpack.c.b16 %v7371, %v7363
    %v8188 = vpack.c.b16 %v7372, %v7364
    %v8189 = vpack.c.b16 %v7373, %v7365
    %v8190 = vpack.c.b16 %v7374, %v7366
    %v8191 = vpack.c.b16 %v7383, %v7375
    %v8192 = vpack.c.b16 %v7384, %v7376
    %v8193 = vpack.c.b16 %v7385, %v7377
    %v8194 = vpack.c.b16 %v7386, %v7378
    %v8195 = vpack.c.b16 %v7387, %v7379
    %v8196 = vpack.c.b16 %v7388, %v7380
    %v8197 = vpack.c.b16 %v7389, %v7381
    %v8198 = vpack.c.b16 %v7390, %v7382
    %v8199 = vpack.c.b16 %v7399, %v7391
    %v8200 = vpack.c.b16 %v7400, %v7392
    %v8201 = vpack.c.b16 %v7401, %v7393
    %v8202 = vpack.c.b16 %v7402, %v7394
    %v8203 = vpack.c.b16 %v7403, %v7395
    %v8204 = vpack.c.b16 %v7404, %v7396
    %v8205 = vpack.c.b16 %v7405, %v7397
    %v8206 = vpack.c.b16 %v7406, %v7398
    %v8207 = vpack.c.b16 %v7415, %v7407
    %v8208 = vpack.c.b16 %v7416, %v7408
    %v8209 = vpack.c.b16 %v7417, %v7409
    %v8210 = vpack.c.b16 %v7418, %v7410
    %v8211 = vpack.c.b16 %v7419, %v7411
    %v8212 = vpack.c.b16 %v7420, %v7412
    %v8213 = vpack.c.b16 %v7421, %v7413
    %v8214 = vpack.c.b16 %v7422, %v7414
    %v8215 = vpack.c.b16 %v7431, %v7423
    %v8216 = vpack.c.b16 %v7432, %v7424
    %v8217 = vpack.c.b16 %v7433, %v7425
    %v8218 = vpack.c.b16 %v7434, %v7426
    %v8219 = vpack.c.b16 %v7435, %v7427
    %v8220 = vpack.c.b16 %v7436, %v7428
    %v8221 = vpack.c.b16 %v7437, %v7429
    %v8222 = vpack.c.b16 %v7438, %v7430
    %v8223 = vpack.c.b16 %v7447, %v7439
    %v8224 = vpack.c.b16 %v7448, %v7440
    %v8225 = vpack.c.b16 %v7449, %v7441
    %v8226 = vpack.c.b16 %v7450, %v7442
    %v8227 = vpack.c.b16 %v7451, %v7443
    %v8228 = vpack.c.b16 %v7452, %v7444
    %v8229 = vpack.c.b16 %v7453, %v7445
    %v8230 = vpack.c.b16 %v7454, %v7446
    %v8231 = vpack.c.b16 %v7463, %v7455
    %v8232 = vpack.c.b16 %v7464, %v7456
    %v8233 = vpack.c.b16 %v7465, %v7457
    %v8234 = vpack.c.b16 %v7466, %v7458
    %v8235 = vpack.c.b16 %v7467, %v7459
    %v8236 = vpack.c.b16 %v7468, %v7460
    %v8237 = vpack.c.b16 %v7469, %v7461
    %v8238 = vpack.c.b16 %v7470, %v7462
    %v8239 = vpack.c.b16 %v7479, %v7471
    %v8240 = vpack.c.b16 %v7480, %v7472
    %v8241 = vpack.c.b16 %v7481, %v7473
    %v8242 = vpack.c.b16 %v7482, %v7474
    %v8243 = vpack.c.b16 %v7483, %v7475
    %v8244 = vpack.c.b16 %v7484, %v7476
    %v8245 = vpack.c.b16 %v7485, %v7477
    %v8246 = vpack.c.b16 %v7486, %v7478
    %v8247 = vpack.c.b16 %v7495, %v7487
    %v8248 = vpack.c.b16 %v7496, %v7488
    %v8249 = vpack.c.b16 %v7497, %v7489
    %v8250 = vpack.c.b16 %v7498, %v7490
    %v8251 = vpack.c.b16 %v7499, %v7491
    %v8252 = vpack.c.b16 %v7500, %v7492
    %v8253 = vpack.c.b16 %v7501, %v7493
    %v8254 = vpack.c.b16 %v7502, %v7494
    %v8255 = vpack.c.b16 %v7511, %v7503
    %v8256 = vpack.c.b16 %v7512, %v7504
    %v8257 = vpack.c.b16 %v7513, %v7505
    %v8258 = vpack.c.b16 %v7514, %v7506
    %v8259 = vpack.c.b16 %v7515, %v7507
    %v8260 = vpack.c.b16 %v7516, %v7508
    %v8261 = vpack.c.b16 %v7517, %v7509
    %v8262 = vpack.c.b16 %v7518, %v7510
    %v8263 = vpack.c.b16 %v7527, %v7519
    %v8264 = vpack.c.b16 %v7528, %v7520
    %v8265 = vpack.c.b16 %v7529, %v7521
    %v8266 = vpack.c.b16 %v7530, %v7522
    %v8267 = vpack.c.b16 %v7531, %v7523
    %v8268 = vpack.c.b16 %v7532, %v7524
    %v8269 = vpack.c.b16 %v7533, %v7525
    %v8270 = vpack.c.b16 %v7534, %v7526
    %v8271 = vpack.c.b16 %v7543, %v7535
    %v8272 = vpack.c.b16 %v7544, %v7536
    %v8273 = vpack.c.b16 %v7545, %v7537
    %v8274 = vpack.c.b16 %v7546, %v7538
    %v8275 = vpack.c.b16 %v7547, %v7539
    %v8276 = vpack.c.b16 %v7548, %v7540
    %v8277 = vpack.c.b16 %v7549, %v7541
    %v8278 = vpack.c.b16 %v7550, %v7542
    %v8279 = vpack.c.b16 %v7559, %v7551
    %v8280 = vpack.c.b16 %v7560, %v7552
    %v8281 = vpack.c.b16 %v7561, %v7553
    %v8282 = vpack.c.b16 %v7562, %v7554
    %v8283 = vpack.c.b16 %v7563, %v7555
    %v8284 = vpack.c.b16 %v7564, %v7556
    %v8285 = vpack.c.b16 %v7565, %v7557
    %v8286 = vpack.c.b16 %v7566, %v7558
    %v8287 = vpack.c.b16 %v7575, %v7567
    %v8288 = vpack.c.b16 %v7576, %v7568
    %v8289 = vpack.c.b16 %v7577, %v7569
    %v8290 = vpack.c.b16 %v7578, %v7570
    %v8291 = vpack.c.b16 %v7579, %v7571
    %v8292 = vpack.c.b16 %v7580, %v7572
    %v8293 = vpack.c.b16 %v7581, %v7573
    %v8294 = vpack.c.b16 %v7582, %v7574
    %v8295 = vpack.c.b16 %v7591, %v7583
    %v8296 = vpack.c.b16 %v7592, %v7584
    %v8297 = vpack.c.b16 %v7593, %v7585
    %v8298 = vpack.c.b16 %v7594, %v7586
    %v8299 = vpack.c.b16 %v7595, %v7587
    %v8300 = vpack.c.b16 %v7596, %v7588
    %v8301 = vpack.c.b16 %v7597, %v7589
    %v8302 = vpack.c.b16 %v7598, %v7590
    %v8303 = vpack.c.b16 %v7607, %v7599
    %v8304 = vpack.c.b16 %v7608, %v7600
    %v8305 = vpack.c.b16 %v7609, %v7601
    %v8306 = vpack.c.b16 %v7610, %v7602
    %v8307 = vpack.c.b16 %v7611, %v7603
    %v8308 = vpack.c.b16 %v7612, %v7604
    %v8309 = vpack.c.b16 %v7613, %v7605
    %v8310 = vpack.c.b16 %v7614, %v7606
    %v8311 = vpack.c.b16 %v7623, %v7615
    %v8312 = vpack.c.b16 %v7624, %v7616
    %v8313 = vpack.c.b16 %v7625, %v7617
    %v8314 = vpack.c.b16 %v7626, %v7618
    %v8315 = vpack.c.b16 %v7627, %v7619
    %v8316 = vpack.c.b16 %v7628, %v7620
    %v8317 = vpack.c.b16 %v7629, %v7621
    %v8318 = vpack.c.b16 %v7630, %v7622
    %v8319 = vpack.c.b16 %v7639, %v7631
    %v8320 = vpack.c.b16 %v7640, %v7632
    %v8321 = vpack.c.b16 %v7641, %v7633
    %v8322 = vpack.c.b16 %v7642, %v7634
    %v8323 = vpack.c.b16 %v7643, %v7635
    %v8324 = vpack.c.b16 %v7644, %v7636
    %v8325 = vpack.c.b16 %v7645, %v7637
    %v8326 = vpack.c.b16 %v7646, %v7638
    %v8327 = vpack.c.b16 %v7655, %v7647
    %v8328 = vpack.c.b16 %v7656, %v7648
    %v8329 = vpack.c.b16 %v7657, %v7649
    %v8330 = vpack.c.b16 %v7658, %v7650
    %v8331 = vpack.c.b16 %v7659, %v7651
    %v8332 = vpack.c.b16 %v7660, %v7652
    %v8333 = vpack.c.b16 %v7661, %v7653
    %v8334 = vpack.c.b16 %v7662, %v7654
    %v8335 = vpack.c.b16 %v7671, %v7663
    %v8336 = vpack.c.b16 %v7672, %v7664
    %v8337 = vpack.c.b16 %v7673, %v7665
    %v8338 = vpack.c.b16 %v7674, %v7666
    %v8339 = vpack.c.b16 %v7675, %v7667
    %v8340 = vpack.c.b16 %v7676, %v7668
    %v8341 = vpack.c.b16 %v7677, %v7669
    %v8342 = vpack.c.b16 %v7678, %v7670
    %v8343 = vpack.c.b16 %v7687, %v7679
    %v8344 = vpack.c.b16 %v7688, %v7680
    %v8345 = vpack.c.b16 %v7689, %v7681
    %v8346 = vpack.c.b16 %v7690, %v7682
    %v8347 = vpack.c.b16 %v7691, %v7683
    %v8348 = vpack.c.b16 %v7692, %v7684
    %v8349 = vpack.c.b16 %v7693, %v7685
    %v8350 = vpack.c.b16 %v7694, %v7686
    %v8351 = vpack.c.b16 %v7703, %v7695
    %v8352 = vpack.c.b16 %v7704, %v7696
    %v8353 = vpack.c.b16 %v7705, %v7697
    %v8354 = vpack.c.b16 %v7706, %v7698
    %v8355 = vpack.c.b16 %v7707, %v7699
    %v8356 = vpack.c.b16 %v7708, %v7700
    %v8357 = vpack.c.b16 %v7709, %v7701
    %v8358 = vpack.c.b16 %v7710, %v7702
    %v8359 = vpack.c.b16 %v7719, %v7711
    %v8360 = vpack.c.b16 %v7720, %v7712
    %v8361 = vpack.c.b16 %v7721, %v7713
    %v8362 = vpack.c.b16 %v7722, %v7714
    %v8363 = vpack.c.b16 %v7723, %v7715
    %v8364 = vpack.c.b16 %v7724, %v7716
    %v8365 = vpack.c.b16 %v7725, %v7717
    %v8366 = vpack.c.b16 %v7726, %v7718
    %v8367 = vpack.c.b16 %v7735, %v7727
    %v8368 = vpack.c.b16 %v7736, %v7728
    %v8369 = vpack.c.b16 %v7737, %v7729
    %v8370 = vpack.c.b16 %v7738, %v7730
    %v8371 = vpack.c.b16 %v7739, %v7731
    %v8372 = vpack.c.b16 %v7740, %v7732
    %v8373 = vpack.c.b16 %v7741, %v7733
    %v8374 = vpack.c.b16 %v7742, %v7734
    %v8375 = vpack.c.b16 %v7751, %v7743
    %v8376 = vpack.c.b16 %v7752, %v7744
    %v8377 = vpack.c.b16 %v7753, %v7745
    %v8378 = vpack.c.b16 %v7754, %v7746
    %v8379 = vpack.c.b16 %v7755, %v7747
    %v8380 = vpack.c.b16 %v7756, %v7748
    %v8381 = vpack.c.b16 %v7757, %v7749
    %v8382 = vpack.c.b16 %v7758, %v7750
    %v8383 = vpack.c.b16 %v7767, %v7759
    %v8384 = vpack.c.b16 %v7768, %v7760
    %v8385 = vpack.c.b16 %v7769, %v7761
    %v8386 = vpack.c.b16 %v7770, %v7762
    %v8387 = vpack.c.b16 %v7771, %v7763
    %v8388 = vpack.c.b16 %v7772, %v7764
    %v8389 = vpack.c.b16 %v7773, %v7765
    %v8390 = vpack.c.b16 %v7774, %v7766
    %v8391 = vpack.c.b16 %v7783, %v7775
    %v8392 = vpack.c.b16 %v7784, %v7776
    %v8393 = vpack.c.b16 %v7785, %v7777
    %v8394 = vpack.c.b16 %v7786, %v7778
    %v8395 = vpack.c.b16 %v7787, %v7779
    %v8396 = vpack.c.b16 %v7788, %v7780
    %v8397 = vpack.c.b16 %v7789, %v7781
    %v8398 = vpack.c.b16 %v7790, %v7782
    %v8399 = vpack.c.b16 %v7799, %v7791
    %v8400 = vpack.c.b16 %v7800, %v7792
    %v8401 = vpack.c.b16 %v7801, %v7793
    %v8402 = vpack.c.b16 %v7802, %v7794
    %v8403 = vpack.c.b16 %v7803, %v7795
    %v8404 = vpack.c.b16 %v7804, %v7796
    %v8405 = vpack.c.b16 %v7805, %v7797
    %v8406 = vpack.c.b16 %v7806, %v7798
    %v8407 = vpack.c.b16 %v7815, %v7807
    %v8408 = vpack.c.b16 %v7816, %v7808
    %v8409 = vpack.c.b16 %v7817, %v7809
    %v8410 = vpack.c.b16 %v7818, %v7810
    %v8411 = vpack.c.b16 %v7819, %v7811
    %v8412 = vpack.c.b16 %v7820, %v7812
    %v8413 = vpack.c.b16 %v7821, %v7813
    %v8414 = vpack.c.b16 %v7822, %v7814
    %v8415 = vpack.c.b16 %v7831, %v7823
    %v8416 = vpack.c.b16 %v7832, %v7824
    %v8417 = vpack.c.b16 %v7833, %v7825
    %v8418 = vpack.c.b16 %v7834, %v7826
    %v8419 = vpack.c.b16 %v7835, %v7827
    %v8420 = vpack.c.b16 %v7836, %v7828
    %v8421 = vpack.c.b16 %v7837, %v7829
    %v8422 = vpack.c.b16 %v7838, %v7830
    %v8423 = vpack.c.b16 %v7847, %v7839
    %v8424 = vpack.c.b16 %v7848, %v7840
    %v8425 = vpack.c.b16 %v7849, %v7841
    %v8426 = vpack.c.b16 %v7850, %v7842
    %v8427 = vpack.c.b16 %v7851, %v7843
    %v8428 = vpack.c.b16 %v7852, %v7844
    %v8429 = vpack.c.b16 %v7853, %v7845
    %v8430 = vpack.c.b16 %v7854, %v7846
    %v8431 = vpack.c.b16 %v7863, %v7855
    %v8432 = vpack.c.b16 %v7864, %v7856
    %v8433 = vpack.c.b16 %v7865, %v7857
    %v8434 = vpack.c.b16 %v7866, %v7858
    %v8435 = vpack.c.b16 %v7867, %v7859
    %v8436 = vpack.c.b16 %v7868, %v7860
    %v8437 = vpack.c.b16 %v7869, %v7861
    %v8438 = vpack.c.b16 %v7870, %v7862
    %v8439 = vpack.c.b16 %v7879, %v7871
    %v8440 = vpack.c.b16 %v7880, %v7872
    %v8441 = vpack.c.b16 %v7881, %v7873
    %v8442 = vpack.c.b16 %v7882, %v7874
    %v8443 = vpack.c.b16 %v7883, %v7875
    %v8444 = vpack.c.b16 %v7884, %v7876
    %v8445 = vpack.c.b16 %v7885, %v7877
    %v8446 = vpack.c.b16 %v7886, %v7878
    %v8447 = vpack.c.b16 %v7895, %v7887
    %v8448 = vpack.c.b16 %v7896, %v7888
    %v8449 = vpack.c.b16 %v7897, %v7889
    %v8450 = vpack.c.b16 %v7898, %v7890
    %v8451 = vpack.c.b16 %v7899, %v7891
    %v8452 = vpack.c.b16 %v7900, %v7892
    %v8453 = vpack.c.b16 %v7901, %v7893
    %v8454 = vpack.c.b16 %v7902, %v7894
    %v8455 = vpack.c.b16 %v7911, %v7903
    %v8456 = vpack.c.b16 %v7912, %v7904
    %v8457 = vpack.c.b16 %v7913, %v7905
    %v8458 = vpack.c.b16 %v7914, %v7906
    %v8459 = vpack.c.b16 %v7915, %v7907
    %v8460 = vpack.c.b16 %v7916, %v7908
    %v8461 = vpack.c.b16 %v7917, %v7909
    %v8462 = vpack.c.b16 %v7918, %v7910
    %v8463 = vpack.c.b16 %v7927, %v7919
    %v8464 = vpack.c.b16 %v7928, %v7920
    %v8465 = vpack.c.b16 %v7929, %v7921
    %v8466 = vpack.c.b16 %v7930, %v7922
    %v8467 = vpack.c.b16 %v7931, %v7923
    %v8468 = vpack.c.b16 %v7932, %v7924
    %v8469 = vpack.c.b16 %v7933, %v7925
    %v8470 = vpack.c.b16 %v7934, %v7926
    %v8471 = vpack.c.b16 %v7943, %v7935
    %v8472 = vpack.c.b16 %v7944, %v7936
    %v8473 = vpack.c.b16 %v7945, %v7937
    %v8474 = vpack.c.b16 %v7946, %v7938
    %v8475 = vpack.c.b16 %v7947, %v7939
    %v8476 = vpack.c.b16 %v7948, %v7940
    %v8477 = vpack.c.b16 %v7949, %v7941
    %v8478 = vpack.c.b16 %v7950, %v7942
    %v8479 = vpack.c.b16 %v7959, %v7951
    %v8480 = vpack.c.b16 %v7960, %v7952
    %v8481 = vpack.c.b16 %v7961, %v7953
    %v8482 = vpack.c.b16 %v7962, %v7954
    %v8483 = vpack.c.b16 %v7963, %v7955
    %v8484 = vpack.c.b16 %v7964, %v7956
    %v8485 = vpack.c.b16 %v7965, %v7957
    %v8486 = vpack.c.b16 %v7966, %v7958
    %v8487 = vpack.c.b16 %v7975, %v7967
    %v8488 = vpack.c.b16 %v7976, %v7968
    %v8489 = vpack.c.b16 %v7977, %v7969
    %v8490 = vpack.c.b16 %v7978, %v7970
    %v8491 = vpack.c.b16 %v7979, %v7971
    %v8492 = vpack.c.b16 %v7980, %v7972
    %v8493 = vpack.c.b16 %v7981, %v7973
    %v8494 = vpack.c.b16 %v7982, %v7974
    %9007 = vmatprep.subr.bf16.mxu0 %v7984
    %9008 = vmatpush1.bf16.msra.mxu0 %v7983
    %9009 = vmatprep.subr.bf16.mxu0 %v7992
    %9010 = vmatpush1.bf16.msra.mxu0 %v7991
    %9011 = vmatprep.subr.bf16.mxu0 %v8000
    %9012 = vmatpush1.bf16.msra.mxu0 %v7999
    %9013 = vmatprep.subr.bf16.mxu0 %v8008
    %9014 = vmatpush1.bf16.msra.mxu0 %v8007
    %9015 = vmatprep.subr.bf16.mxu0 %v8016
    %9016 = vmatpush1.bf16.msra.mxu0 %v8015
    %9017 = vmatprep.subr.bf16.mxu0 %v8024
    %9018 = vmatpush1.bf16.msra.mxu0 %v8023
    %9019 = vmatprep.subr.bf16.mxu0 %v8032
    %9020 = vmatpush1.bf16.msra.mxu0 %v8031
    %9021 = vmatprep.subr.bf16.mxu0 %v8040
    %9022 = vmatpush1.bf16.msra.mxu0 %v8039
    %9023 = vmatprep.subr.bf16.mxu0 %v8048
    %9024 = vmatpush1.bf16.msra.mxu0 %v8047
    %9025 = vmatprep.subr.bf16.mxu0 %v8056
    %9026 = vmatpush1.bf16.msra.mxu0 %v8055
    %9027 = vmatprep.subr.bf16.mxu0 %v8064
    %9028 = vmatpush1.bf16.msra.mxu0 %v8063
    %9029 = vmatprep.subr.bf16.mxu0 %v8072
    %9030 = vmatpush1.bf16.msra.mxu0 %v8071
    %9031 = vmatprep.subr.bf16.mxu0 %v8080
    %9032 = vmatpush1.bf16.msra.mxu0 %v8079
    %9033 = vmatprep.subr.bf16.mxu0 %v8088
    %9034 = vmatpush1.bf16.msra.mxu0 %v8087
    %9035 = vmatprep.subr.bf16.mxu0 %v8096
    %9036 = vmatpush1.bf16.msra.mxu0 %v8095
    %9037 = vmatprep.subr.bf16.mxu0 %v8104
    %9038 = vmatpush1.bf16.msra.mxu0 %v8103
    %9039 = vmatprep.mubr.bf16.mxu0 %v5878
    %9040 = vmatmul.mubr.bf16.gmra.mrb[0].mxu0 %v5877
    %v9041 = vpop.f32.mrb[0].mxu0
    %v9042 = vadd.f32 %v6410, %v9041
    %v9043 = vpop.f32.mrb[0].mxu0
    %v9044 = vadd.f32 %v6414, %v9043
    %v9045 = vpop.f32.mrb[0].mxu0
    %v9046 = vpop.f32.mrb[0].mxu0
    %9047 = vdwg.mxu0
    %9048 = vmatprep.subr.bf16.mxu0 %v8112
    %9049 = vmatpush1.bf16.msra.mxu0 %v8111
    %9050 = vmatprep.subr.bf16.mxu0 %v8120
    %9051 = vmatpush1.bf16.msra.mxu0 %v8119
    %9052 = vmatprep.subr.bf16.mxu0 %v8128
    %9053 = vmatpush1.bf16.msra.mxu0 %v8127
    %9054 = vmatprep.subr.bf16.mxu0 %v8136
    %9055 = vmatpush1.bf16.msra.mxu0 %v8135
    %9056 = vmatprep.subr.bf16.mxu0 %v8144
    %9057 = vmatpush1.bf16.msra.mxu0 %v8143
    %9058 = vmatprep.subr.bf16.mxu0 %v8152
    %9059 = vmatpush1.bf16.msra.mxu0 %v8151
    %9060 = vmatprep.subr.bf16.mxu0 %v8160
    %9061 = vmatpush1.bf16.msra.mxu0 %v8159
    %9062 = vmatprep.subr.bf16.mxu0 %v8168
    %9063 = vmatpush1.bf16.msra.mxu0 %v8167
    %9064 = vmatprep.subr.bf16.mxu0 %v8176
    %9065 = vmatpush1.bf16.msra.mxu0 %v8175
    %9066 = vmatprep.subr.bf16.mxu0 %v8184
    %9067 = vmatpush1.bf16.msra.mxu0 %v8183
    %9068 = vmatprep.subr.bf16.mxu0 %v8192
    %9069 = vmatpush1.bf16.msra.mxu0 %v8191
    %9070 = vmatprep.subr.bf16.mxu0 %v8200
    %9071 = vmatpush1.bf16.msra.mxu0 %v8199
    %9072 = vmatprep.subr.bf16.mxu0 %v8208
    %9073 = vmatpush1.bf16.msra.mxu0 %v8207
    %9074 = vmatprep.subr.bf16.mxu0 %v8216
    %9075 = vmatpush1.bf16.msra.mxu0 %v8215
    %9076 = vmatprep.subr.bf16.mxu0 %v8224
    %9077 = vmatpush1.bf16.msra.mxu0 %v8223
    %9078 = vmatprep.subr.bf16.mxu0 %v8232
    %9079 = vmatpush1.bf16.msra.mxu0 %v8231
    %9080 = vmatprep.mubr.bf16.mxu0 %v5880
    %9081 = vmatmul.mubr.bf16.gmra.mrb[0].mxu0 %v5879
    %v9082 = vpop.f32.mrb[0].mxu0
    %v9083 = vadd.f32 %v9042, %v9082
    %v9084 = vpop.f32.mrb[0].mxu0
    %v9085 = vadd.f32 %v9044, %v9084
    %v9086 = vpop.f32.mrb[0].mxu0
    %v9087 = vpop.f32.mrb[0].mxu0
    %9088 = vdwg.mxu0
    %9089 = vmatprep.subr.bf16.mxu0 %v8240
    %9090 = vmatpush1.bf16.msra.mxu0 %v8239
    %9091 = vmatprep.subr.bf16.mxu0 %v8248
    %9092 = vmatpush1.bf16.msra.mxu0 %v8247
    %9093 = vmatprep.subr.bf16.mxu0 %v8256
    %9094 = vmatpush1.bf16.msra.mxu0 %v8255
    %9095 = vmatprep.subr.bf16.mxu0 %v8264
    %9096 = vmatpush1.bf16.msra.mxu0 %v8263
    %9097 = vmatprep.subr.bf16.mxu0 %v8272
    %9098 = vmatpush1.bf16.msra.mxu0 %v8271
    %9099 = vmatprep.subr.bf16.mxu0 %v8280
    %9100 = vmatpush1.bf16.msra.mxu0 %v8279
    %9101 = vmatprep.subr.bf16.mxu0 %v8288
    %9102 = vmatpush1.bf16.msra.mxu0 %v8287
    %9103 = vmatprep.subr.bf16.mxu0 %v8296
    %9104 = vmatpush1.bf16.msra.mxu0 %v8295
    %9105 = vmatprep.subr.bf16.mxu0 %v8304
    %9106 = vmatpush1.bf16.msra.mxu0 %v8303
    %9107 = vmatprep.subr.bf16.mxu0 %v8312
    %9108 = vmatpush1.bf16.msra.mxu0 %v8311
    %9109 = vmatprep.subr.bf16.mxu0 %v8320
    %9110 = vmatpush1.bf16.msra.mxu0 %v8319
    %9111 = vmatprep.subr.bf16.mxu0 %v8328
    %9112 = vmatpush1.bf16.msra.mxu0 %v8327
    %9113 = vmatprep.subr.bf16.mxu0 %v8336
    %9114 = vmatpush1.bf16.msra.mxu0 %v8335
    %9115 = vmatprep.subr.bf16.mxu0 %v8344
    %9116 = vmatpush1.bf16.msra.mxu0 %v8343
    %9117 = vmatprep.subr.bf16.mxu0 %v8352
    %9118 = vmatpush1.bf16.msra.mxu0 %v8351
    %9119 = vmatprep.subr.bf16.mxu0 %v8360
    %9120 = vmatpush1.bf16.msra.mxu0 %v8359
    %9121 = vmatprep.mubr.bf16.mxu0 %v5882
    %9122 = vmatmul.mubr.bf16.gmra.mrb[0].mxu0 %v5881
    %v9123 = vpop.f32.mrb[0].mxu0
    %v9124 = vadd.f32 %v9083, %v9123
    %v9125 = vpop.f32.mrb[0].mxu0
    %v9126 = vadd.f32 %v9085, %v9125
    %v9127 = vpop.f32.mrb[0].mxu0
    %v9128 = vpop.f32.mrb[0].mxu0
    %9129 = vdwg.mxu0
    %9130 = vmatprep.subr.bf16.mxu0 %v8368
    %9131 = vmatpush1.bf16.msra.mxu0 %v8367
    %9132 = vmatprep.subr.bf16.mxu0 %v8376
    %9133 = vmatpush1.bf16.msra.mxu0 %v8375
    %9134 = vmatprep.subr.bf16.mxu0 %v8384
    %9135 = vmatpush1.bf16.msra.mxu0 %v8383
    %9136 = vmatprep.subr.bf16.mxu0 %v8392
    %9137 = vmatpush1.bf16.msra.mxu0 %v8391
    %9138 = vmatprep.subr.bf16.mxu0 %v8400
    %9139 = vmatpush1.bf16.msra.mxu0 %v8399
    %9140 = vmatprep.subr.bf16.mxu0 %v8408
    %9141 = vmatpush1.bf16.msra.mxu0 %v8407
    %9142 = vmatprep.subr.bf16.mxu0 %v8416
    %9143 = vmatpush1.bf16.msra.mxu0 %v8415
    %9144 = vmatprep.subr.bf16.mxu0 %v8424
    %9145 = vmatpush1.bf16.msra.mxu0 %v8423
    %9146 = vmatprep.subr.bf16.mxu0 %v8432
    %9147 = vmatpush1.bf16.msra.mxu0 %v8431
    %9148 = vmatprep.subr.bf16.mxu0 %v8440
    %9149 = vmatpush1.bf16.msra.mxu0 %v8439
    %9150 = vmatprep.subr.bf16.mxu0 %v8448
    %9151 = vmatpush1.bf16.msra.mxu0 %v8447
    %9152 = vmatprep.subr.bf16.mxu0 %v8456
    %9153 = vmatpush1.bf16.msra.mxu0 %v8455
    %9154 = vmatprep.subr.bf16.mxu0 %v8464
    %9155 = vmatpush1.bf16.msra.mxu0 %v8463
    %9156 = vmatprep.subr.bf16.mxu0 %v8472
    %9157 = vmatpush1.bf16.msra.mxu0 %v8471
    %9158 = vmatprep.subr.bf16.mxu0 %v8480
    %9159 = vmatpush1.bf16.msra.mxu0 %v8479
    %9160 = vmatprep.subr.bf16.mxu0 %v8488
    %9161 = vmatpush1.bf16.msra.mxu0 %v8487
    %9162 = vmatprep.mubr.bf16.mxu0 %v5884
    %9163 = vmatmul.mubr.bf16.gmra.mrb[0].mxu0 %v5883
    %v9164 = vpop.f32.mrb[0].mxu0
    %v9165 = vadd.f32 %v9124, %v9164
    %v9166 = vpop.f32.mrb[0].mxu0
    %v9167 = vadd.f32 %v9126, %v9166
    %v9168 = vpop.f32.mrb[0].mxu0
    %v9169 = vpop.f32.mrb[0].mxu0
    %9170 = vdwg.mxu0
    %9171 = vmatprep.subr.bf16.mxu0 %v7986
    %9172 = vmatpush1.bf16.msra.mxu0 %v7985
    %9173 = vmatprep.subr.bf16.mxu0 %v7994
    %9174 = vmatpush1.bf16.msra.mxu0 %v7993
    %9175 = vmatprep.subr.bf16.mxu0 %v8002
    %9176 = vmatpush1.bf16.msra.mxu0 %v8001
    %9177 = vmatprep.subr.bf16.mxu0 %v8010
    %9178 = vmatpush1.bf16.msra.mxu0 %v8009
    %9179 = vmatprep.subr.bf16.mxu0 %v8018
    %9180 = vmatpush1.bf16.msra.mxu0 %v8017
    %9181 = vmatprep.subr.bf16.mxu0 %v8026
    %9182 = vmatpush1.bf16.msra.mxu0 %v8025
    %9183 = vmatprep.subr.bf16.mxu0 %v8034
    %9184 = vmatpush1.bf16.msra.mxu0 %v8033
    %9185 = vmatprep.subr.bf16.mxu0 %v8042
    %9186 = vmatpush1.bf16.msra.mxu0 %v8041
    %9187 = vmatprep.subr.bf16.mxu0 %v8050
    %9188 = vmatpush1.bf16.msra.mxu0 %v8049
    %9189 = vmatprep.subr.bf16.mxu0 %v8058
    %9190 = vmatpush1.bf16.msra.mxu0 %v8057
    %9191 = vmatprep.subr.bf16.mxu0 %v8066
    %9192 = vmatpush1.bf16.msra.mxu0 %v8065
    %9193 = vmatprep.subr.bf16.mxu0 %v8074
    %9194 = vmatpush1.bf16.msra.mxu0 %v8073
    %9195 = vmatprep.subr.bf16.mxu0 %v8082
    %9196 = vmatpush1.bf16.msra.mxu0 %v8081
    %9197 = vmatprep.subr.bf16.mxu0 %v8090
    %9198 = vmatpush1.bf16.msra.mxu0 %v8089
    %9199 = vmatprep.subr.bf16.mxu0 %v8098
    %9200 = vmatpush1.bf16.msra.mxu0 %v8097
    %9201 = vmatprep.subr.bf16.mxu0 %v8106
    %9202 = vmatpush1.bf16.msra.mxu0 %v8105
    %9203 = vmatprep.mubr.bf16.mxu0 %v5878
    %9204 = vmatmul.mubr.bf16.gmra.mrb[0].mxu0 %v5877
    %v9205 = vpop.f32.mrb[0].mxu0
    %v9206 = vadd.f32 %v6418, %v9205
    %v9207 = vpop.f32.mrb[0].mxu0
    %v9208 = vadd.f32 %v6422, %v9207
    %v9209 = vpop.f32.mrb[0].mxu0
    %v9210 = vpop.f32.mrb[0].mxu0
    %9211 = vdwg.mxu0
    %9212 = vmatprep.subr.bf16.mxu0 %v8114
    %9213 = vmatpush1.bf16.msra.mxu0 %v8113
    %9214 = vmatprep.subr.bf16.mxu0 %v8122
    %9215 = vmatpush1.bf16.msra.mxu0 %v8121
    %9216 = vmatprep.subr.bf16.mxu0 %v8130
    %9217 = vmatpush1.bf16.msra.mxu0 %v8129
    %9218 = vmatprep.subr.bf16.mxu0 %v8138
    %9219 = vmatpush1.bf16.msra.mxu0 %v8137
    %9220 = vmatprep.subr.bf16.mxu0 %v8146
    %9221 = vmatpush1.bf16.msra.mxu0 %v8145
    %9222 = vmatprep.subr.bf16.mxu0 %v8154
    %9223 = vmatpush1.bf16.msra.mxu0 %v8153
    %9224 = vmatprep.subr.bf16.mxu0 %v8162
    %9225 = vmatpush1.bf16.msra.mxu0 %v8161
    %9226 = vmatprep.subr.bf16.mxu0 %v8170
    %9227 = vmatpush1.bf16.msra.mxu0 %v8169
    %9228 = vmatprep.subr.bf16.mxu0 %v8178
    %9229 = vmatpush1.bf16.msra.mxu0 %v8177
    %9230 = vmatprep.subr.bf16.mxu0 %v8186
    %9231 = vmatpush1.bf16.msra.mxu0 %v8185
    %9232 = vmatprep.subr.bf16.mxu0 %v8194
    %9233 = vmatpush1.bf16.msra.mxu0 %v8193
    %9234 = vmatprep.subr.bf16.mxu0 %v8202
    %9235 = vmatpush1.bf16.msra.mxu0 %v8201
    %9236 = vmatprep.subr.bf16.mxu0 %v8210
    %9237 = vmatpush1.bf16.msra.mxu0 %v8209
    %9238 = vmatprep.subr.bf16.mxu0 %v8218
    %9239 = vmatpush1.bf16.msra.mxu0 %v8217
    %9240 = vmatprep.subr.bf16.mxu0 %v8226
    %9241 = vmatpush1.bf16.msra.mxu0 %v8225
    %9242 = vmatprep.subr.bf16.mxu0 %v8234
    %9243 = vmatpush1.bf16.msra.mxu0 %v8233
    %9244 = vmatprep.mubr.bf16.mxu0 %v5880
    %9245 = vmatmul.mubr.bf16.gmra.mrb[0].mxu0 %v5879
    %v9246 = vpop.f32.mrb[0].mxu0
    %v9247 = vadd.f32 %v9206, %v9246
    %v9248 = vpop.f32.mrb[0].mxu0
    %v9249 = vadd.f32 %v9208, %v9248
    %v9250 = vpop.f32.mrb[0].mxu0
    %v9251 = vpop.f32.mrb[0].mxu0
    %9252 = vdwg.mxu0
    %9253 = vmatprep.subr.bf16.mxu0 %v8242
    %9254 = vmatpush1.bf16.msra.mxu0 %v8241
    %9255 = vmatprep.subr.bf16.mxu0 %v8250
    %9256 = vmatpush1.bf16.msra.mxu0 %v8249
    %9257 = vmatprep.subr.bf16.mxu0 %v8258
    %9258 = vmatpush1.bf16.msra.mxu0 %v8257
    %9259 = vmatprep.subr.bf16.mxu0 %v8266
    %9260 = vmatpush1.bf16.msra.mxu0 %v8265
    %9261 = vmatprep.subr.bf16.mxu0 %v8274
    %9262 = vmatpush1.bf16.msra.mxu0 %v8273
    %9263 = vmatprep.subr.bf16.mxu0 %v8282
    %9264 = vmatpush1.bf16.msra.mxu0 %v8281
    %9265 = vmatprep.subr.bf16.mxu0 %v8290
    %9266 = vmatpush1.bf16.msra.mxu0 %v8289
    %9267 = vmatprep.subr.bf16.mxu0 %v8298
    %9268 = vmatpush1.bf16.msra.mxu0 %v8297
    %9269 = vmatprep.subr.bf16.mxu0 %v8306
    %9270 = vmatpush1.bf16.msra.mxu0 %v8305
    %9271 = vmatprep.subr.bf16.mxu0 %v8314
    %9272 = vmatpush1.bf16.msra.mxu0 %v8313
    %9273 = vmatprep.subr.bf16.mxu0 %v8322
    %9274 = vmatpush1.bf16.msra.mxu0 %v8321
    %9275 = vmatprep.subr.bf16.mxu0 %v8330
    %9276 = vmatpush1.bf16.msra.mxu0 %v8329
    %9277 = vmatprep.subr.bf16.mxu0 %v8338
    %9278 = vmatpush1.bf16.msra.mxu0 %v8337
    %9279 = vmatprep.subr.bf16.mxu0 %v8346
    %9280 = vmatpush1.bf16.msra.mxu0 %v8345
    %9281 = vmatprep.subr.bf16.mxu0 %v8354
    %9282 = vmatpush1.bf16.msra.mxu0 %v8353
    %9283 = vmatprep.subr.bf16.mxu0 %v8362
    %9284 = vmatpush1.bf16.msra.mxu0 %v8361
    %9285 = vmatprep.mubr.bf16.mxu0 %v5882
    %9286 = vmatmul.mubr.bf16.gmra.mrb[0].mxu0 %v5881
    %v9287 = vpop.f32.mrb[0].mxu0
    %v9288 = vadd.f32 %v9247, %v9287
    %v9289 = vpop.f32.mrb[0].mxu0
    %v9290 = vadd.f32 %v9249, %v9289
    %v9291 = vpop.f32.mrb[0].mxu0
    %v9292 = vpop.f32.mrb[0].mxu0
    %9293 = vdwg.mxu0
    %9294 = vmatprep.subr.bf16.mxu0 %v8370
    %9295 = vmatpush1.bf16.msra.mxu0 %v8369
    %9296 = vmatprep.subr.bf16.mxu0 %v8378
    %9297 = vmatpush1.bf16.msra.mxu0 %v8377
    %9298 = vmatprep.subr.bf16.mxu0 %v8386
    %9299 = vmatpush1.bf16.msra.mxu0 %v8385
    %9300 = vmatprep.subr.bf16.mxu0 %v8394
    %9301 = vmatpush1.bf16.msra.mxu0 %v8393
    %9302 = vmatprep.subr.bf16.mxu0 %v8402
    %9303 = vmatpush1.bf16.msra.mxu0 %v8401
    %9304 = vmatprep.subr.bf16.mxu0 %v8410
    %9305 = vmatpush1.bf16.msra.mxu0 %v8409
    %9306 = vmatprep.subr.bf16.mxu0 %v8418
    %9307 = vmatpush1.bf16.msra.mxu0 %v8417
    %9308 = vmatprep.subr.bf16.mxu0 %v8426
    %9309 = vmatpush1.bf16.msra.mxu0 %v8425
    %9310 = vmatprep.subr.bf16.mxu0 %v8434
    %9311 = vmatpush1.bf16.msra.mxu0 %v8433
    %9312 = vmatprep.subr.bf16.mxu0 %v8442
    %9313 = vmatpush1.bf16.msra.mxu0 %v8441
    %9314 = vmatprep.subr.bf16.mxu0 %v8450
    %9315 = vmatpush1.bf16.msra.mxu0 %v8449
    %9316 = vmatprep.subr.bf16.mxu0 %v8458
    %9317 = vmatpush1.bf16.msra.mxu0 %v8457
    %9318 = vmatprep.subr.bf16.mxu0 %v8466
    %9319 = vmatpush1.bf16.msra.mxu0 %v8465
    %9320 = vmatprep.subr.bf16.mxu0 %v8474
    %9321 = vmatpush1.bf16.msra.mxu0 %v8473
    %9322 = vmatprep.subr.bf16.mxu0 %v8482
    %9323 = vmatpush1.bf16.msra.mxu0 %v8481
    %9324 = vmatprep.subr.bf16.mxu0 %v8490
    %9325 = vmatpush1.bf16.msra.mxu0 %v8489
    %9326 = vmatprep.mubr.bf16.mxu0 %v5884
    %9327 = vmatmul.mubr.bf16.gmra.mrb[0].mxu0 %v5883
    %v9328 = vpop.f32.mrb[0].mxu0
    %v9329 = vadd.f32 %v9288, %v9328
    %v9330 = vpop.f32.mrb[0].mxu0
    %v9331 = vadd.f32 %v9290, %v9330
    %v9332 = vpop.f32.mrb[0].mxu0
    %v9333 = vpop.f32.mrb[0].mxu0
    %9334 = vdwg.mxu0
    %9335 = vmatprep.subr.bf16.mxu0 %v7988
    %9336 = vmatpush1.bf16.msra.mxu0 %v7987
    %9337 = vmatprep.subr.bf16.mxu0 %v7996
    %9338 = vmatpush1.bf16.msra.mxu0 %v7995
    %9339 = vmatprep.subr.bf16.mxu0 %v8004
    %9340 = vmatpush1.bf16.msra.mxu0 %v8003
    %9341 = vmatprep.subr.bf16.mxu0 %v8012
    %9342 = vmatpush1.bf16.msra.mxu0 %v8011
    %9343 = vmatprep.subr.bf16.mxu0 %v8020
    %9344 = vmatpush1.bf16.msra.mxu0 %v8019
    %9345 = vmatprep.subr.bf16.mxu0 %v8028
    %9346 = vmatpush1.bf16.msra.mxu0 %v8027
    %9347 = vmatprep.subr.bf16.mxu0 %v8036
    %9348 = vmatpush1.bf16.msra.mxu0 %v8035
    %9349 = vmatprep.subr.bf16.mxu0 %v8044
    %9350 = vmatpush1.bf16.msra.mxu0 %v8043
    %9351 = vmatprep.subr.bf16.mxu0 %v8052
    %9352 = vmatpush1.bf16.msra.mxu0 %v8051
    %9353 = vmatprep.subr.bf16.mxu0 %v8060
    %9354 = vmatpush1.bf16.msra.mxu0 %v8059
    %9355 = vmatprep.subr.bf16.mxu0 %v8068
    %9356 = vmatpush1.bf16.msra.mxu0 %v8067
    %9357 = vmatprep.subr.bf16.mxu0 %v8076
    %9358 = vmatpush1.bf16.msra.mxu0 %v8075
    %9359 = vmatprep.subr.bf16.mxu0 %v8084
    %9360 = vmatpush1.bf16.msra.mxu0 %v8083
    %9361 = vmatprep.subr.bf16.mxu0 %v8092
    %9362 = vmatpush1.bf16.msra.mxu0 %v8091
    %9363 = vmatprep.subr.bf16.mxu0 %v8100
    %9364 = vmatpush1.bf16.msra.mxu0 %v8099
    %9365 = vmatprep.subr.bf16.mxu0 %v8108
    %9366 = vmatpush1.bf16.msra.mxu0 %v8107
    %9367 = vmatprep.mubr.bf16.mxu0 %v5878
    %9368 = vmatmul.mubr.bf16.gmra.mrb[0].mxu0 %v5877
    %v9369 = vpop.f32.mrb[0].mxu0
    %v9370 = vadd.f32 %v6426, %v9369
    %v9371 = vpop.f32.mrb[0].mxu0
    %v9372 = vadd.f32 %v6430, %v9371
    %v9373 = vpop.f32.mrb[0].mxu0
    %v9374 = vpop.f32.mrb[0].mxu0
    %9375 = vdwg.mxu0
    %9376 = vmatprep.subr.bf16.mxu0 %v8116
    %9377 = vmatpush1.bf16.msra.mxu0 %v8115
    %9378 = vmatprep.subr.bf16.mxu0 %v8124
    %9379 = vmatpush1.bf16.msra.mxu0 %v8123
    %9380 = vmatprep.subr.bf16.mxu0 %v8132
    %9381 = vmatpush1.bf16.msra.mxu0 %v8131
    %9382 = vmatprep.subr.bf16.mxu0 %v8140
    %9383 = vmatpush1.bf16.msra.mxu0 %v8139
    %9384 = vmatprep.subr.bf16.mxu0 %v8148
    %9385 = vmatpush1.bf16.msra.mxu0 %v8147
    %9386 = vmatprep.subr.bf16.mxu0 %v8156
    %9387 = vmatpush1.bf16.msra.mxu0 %v8155
    %9388 = vmatprep.subr.bf16.mxu0 %v8164
    %9389 = vmatpush1.bf16.msra.mxu0 %v8163
    %9390 = vmatprep.subr.bf16.mxu0 %v8172
    %9391 = vmatpush1.bf16.msra.mxu0 %v8171
    %9392 = vmatprep.subr.bf16.mxu0 %v8180
    %9393 = vmatpush1.bf16.msra.mxu0 %v8179
    %9394 = vmatprep.subr.bf16.mxu0 %v8188
    %9395 = vmatpush1.bf16.msra.mxu0 %v8187
    %9396 = vmatprep.subr.bf16.mxu0 %v8196
    %9397 = vmatpush1.bf16.msra.mxu0 %v8195
    %9398 = vmatprep.subr.bf16.mxu0 %v8204
    %9399 = vmatpush1.bf16.msra.mxu0 %v8203
    %9400 = vmatprep.subr.bf16.mxu0 %v8212
    %9401 = vmatpush1.bf16.msra.mxu0 %v8211
    %9402 = vmatprep.subr.bf16.mxu0 %v8220
    %9403 = vmatpush1.bf16.msra.mxu0 %v8219
    %9404 = vmatprep.subr.bf16.mxu0 %v8228
    %9405 = vmatpush1.bf16.msra.mxu0 %v8227
    %9406 = vmatprep.subr.bf16.mxu0 %v8236
    %9407 = vmatpush1.bf16.msra.mxu0 %v8235
    %9408 = vmatprep.mubr.bf16.mxu0 %v5880
    %9409 = vmatmul.mubr.bf16.gmra.mrb[0].mxu0 %v5879
    %v9410 = vpop.f32.mrb[0].mxu0
    %v9411 = vadd.f32 %v9370, %v9410
    %v9412 = vpop.f32.mrb[0].mxu0
    %v9413 = vadd.f32 %v9372, %v9412
    %v9414 = vpop.f32.mrb[0].mxu0
    %v9415 = vpop.f32.mrb[0].mxu0
    %9416 = vdwg.mxu0
    %9417 = vmatprep.subr.bf16.mxu0 %v8244
    %9418 = vmatpush1.bf16.msra.mxu0 %v8243
    %9419 = vmatprep.subr.bf16.mxu0 %v8252
    %9420 = vmatpush1.bf16.msra.mxu0 %v8251
    %9421 = vmatprep.subr.bf16.mxu0 %v8260
    %9422 = vmatpush1.bf16.msra.mxu0 %v8259
    %9423 = vmatprep.subr.bf16.mxu0 %v8268
    %9424 = vmatpush1.bf16.msra.mxu0 %v8267
    %9425 = vmatprep.subr.bf16.mxu0 %v8276
    %9426 = vmatpush1.bf16.msra.mxu0 %v8275
    %9427 = vmatprep.subr.bf16.mxu0 %v8284
    %9428 = vmatpush1.bf16.msra.mxu0 %v8283
    %9429 = vmatprep.subr.bf16.mxu0 %v8292
    %9430 = vmatpush1.bf16.msra.mxu0 %v8291
    %9431 = vmatprep.subr.bf16.mxu0 %v8300
    %9432 = vmatpush1.bf16.msra.mxu0 %v8299
    %9433 = vmatprep.subr.bf16.mxu0 %v8308
    %9434 = vmatpush1.bf16.msra.mxu0 %v8307
    %9435 = vmatprep.subr.bf16.mxu0 %v8316
    %9436 = vmatpush1.bf16.msra.mxu0 %v8315
    %9437 = vmatprep.subr.bf16.mxu0 %v8324
    %9438 = vmatpush1.bf16.msra.mxu0 %v8323
    %9439 = vmatprep.subr.bf16.mxu0 %v8332
    %9440 = vmatpush1.bf16.msra.mxu0 %v8331
    %9441 = vmatprep.subr.bf16.mxu0 %v8340
    %9442 = vmatpush1.bf16.msra.mxu0 %v8339
    %9443 = vmatprep.subr.bf16.mxu0 %v8348
    %9444 = vmatpush1.bf16.msra.mxu0 %v8347
    %9445 = vmatprep.subr.bf16.mxu0 %v8356
    %9446 = vmatpush1.bf16.msra.mxu0 %v8355
    %9447 = vmatprep.subr.bf16.mxu0 %v8364
    %9448 = vmatpush1.bf16.msra.mxu0 %v8363
    %9449 = vmatprep.mubr.bf16.mxu0 %v5882
    %9450 = vmatmul.mubr.bf16.gmra.mrb[0].mxu0 %v5881
    %v9451 = vpop.f32.mrb[0].mxu0
    %v9452 = vadd.f32 %v9411, %v9451
    %v9453 = vpop.f32.mrb[0].mxu0
    %v9454 = vadd.f32 %v9413, %v9453
    %v9455 = vpop.f32.mrb[0].mxu0
    %v9456 = vpop.f32.mrb[0].mxu0
    %9457 = vdwg.mxu0
    %9458 = vmatprep.subr.bf16.mxu0 %v8372
    %9459 = vmatpush1.bf16.msra.mxu0 %v8371
    %9460 = vmatprep.subr.bf16.mxu0 %v8380
    %9461 = vmatpush1.bf16.msra.mxu0 %v8379
    %9462 = vmatprep.subr.bf16.mxu0 %v8388
    %9463 = vmatpush1.bf16.msra.mxu0 %v8387
    %9464 = vmatprep.subr.bf16.mxu0 %v8396
    %9465 = vmatpush1.bf16.msra.mxu0 %v8395
    %9466 = vmatprep.subr.bf16.mxu0 %v8404
    %9467 = vmatpush1.bf16.msra.mxu0 %v8403
    %9468 = vmatprep.subr.bf16.mxu0 %v8412
    %9469 = vmatpush1.bf16.msra.mxu0 %v8411
    %9470 = vmatprep.subr.bf16.mxu0 %v8420
    %9471 = vmatpush1.bf16.msra.mxu0 %v8419
    %9472 = vmatprep.subr.bf16.mxu0 %v8428
    %9473 = vmatpush1.bf16.msra.mxu0 %v8427
    %9474 = vmatprep.subr.bf16.mxu0 %v8436
    %9475 = vmatpush1.bf16.msra.mxu0 %v8435
    %9476 = vmatprep.subr.bf16.mxu0 %v8444
    %9477 = vmatpush1.bf16.msra.mxu0 %v8443
    %9478 = vmatprep.subr.bf16.mxu0 %v8452
    %9479 = vmatpush1.bf16.msra.mxu0 %v8451
    %9480 = vmatprep.subr.bf16.mxu0 %v8460
    %9481 = vmatpush1.bf16.msra.mxu0 %v8459
    %9482 = vmatprep.subr.bf16.mxu0 %v8468
    %9483 = vmatpush1.bf16.msra.mxu0 %v8467
    %9484 = vmatprep.subr.bf16.mxu0 %v8476
    %9485 = vmatpush1.bf16.msra.mxu0 %v8475
    %9486 = vmatprep.subr.bf16.mxu0 %v8484
    %9487 = vmatpush1.bf16.msra.mxu0 %v8483
    %9488 = vmatprep.subr.bf16.mxu0 %v8492
    %9489 = vmatpush1.bf16.msra.mxu0 %v8491
    %9490 = vmatprep.mubr.bf16.mxu0 %v5884
    %9491 = vmatmul.mubr.bf16.gmra.mrb[0].mxu0 %v5883
    %v9492 = vpop.f32.mrb[0].mxu0
    %v9493 = vadd.f32 %v9452, %v9492
    %v9494 = vpop.f32.mrb[0].mxu0
    %v9495 = vadd.f32 %v9454, %v9494
    %v9496 = vpop.f32.mrb[0].mxu0
    %v9497 = vpop.f32.mrb[0].mxu0
    %9498 = vdwg.mxu0
    %9499 = vmatprep.subr.bf16.mxu0 %v7990
    %9500 = vmatpush1.bf16.msra.mxu0 %v7989
    %9501 = vmatprep.subr.bf16.mxu0 %v7998
    %9502 = vmatpush1.bf16.msra.mxu0 %v7997
    %9503 = vmatprep.subr.bf16.mxu0 %v8006
    %9504 = vmatpush1.bf16.msra.mxu0 %v8005
    %9505 = vmatprep.subr.bf16.mxu0 %v8014
    %9506 = vmatpush1.bf16.msra.mxu0 %v8013
    %9507 = vmatprep.subr.bf16.mxu0 %v8022
    %9508 = vmatpush1.bf16.msra.mxu0 %v8021
    %9509 = vmatprep.subr.bf16.mxu0 %v8030
    %9510 = vmatpush1.bf16.msra.mxu0 %v8029
    %9511 = vmatprep.subr.bf16.mxu0 %v8038
    %9512 = vmatpush1.bf16.msra.mxu0 %v8037
    %9513 = vmatprep.subr.bf16.mxu0 %v8046
    %9514 = vmatpush1.bf16.msra.mxu0 %v8045
    %9515 = vmatprep.subr.bf16.mxu0 %v8054
    %9516 = vmatpush1.bf16.msra.mxu0 %v8053
    %9517 = vmatprep.subr.bf16.mxu0 %v8062
    %9518 = vmatpush1.bf16.msra.mxu0 %v8061
    %9519 = vmatprep.subr.bf16.mxu0 %v8070
    %9520 = vmatpush1.bf16.msra.mxu0 %v8069
    %9521 = vmatprep.subr.bf16.mxu0 %v8078
    %9522 = vmatpush1.bf16.msra.mxu0 %v8077
    %9523 = vmatprep.subr.bf16.mxu0 %v8086
    %9524 = vmatpush1.bf16.msra.mxu0 %v8085
    %9525 = vmatprep.subr.bf16.mxu0 %v8094
    %9526 = vmatpush1.bf16.msra.mxu0 %v8093
    %9527 = vmatprep.subr.bf16.mxu0 %v8102
    %9528 = vmatpush1.bf16.msra.mxu0 %v8101
    %9529 = vmatprep.subr.bf16.mxu0 %v8110
    %9530 = vmatpush1.bf16.msra.mxu0 %v8109
    %9531 = vmatprep.mubr.bf16.mxu0 %v5878
    %9532 = vmatmul.mubr.bf16.gmra.mrb[0].mxu0 %v5877
    %v9533 = vpop.f32.mrb[0].mxu0
    %v9534 = vadd.f32 %v6434, %v9533
    %v9535 = vpop.f32.mrb[0].mxu0
    %v9536 = vadd.f32 %v6438, %v9535
    %v9537 = vpop.f32.mrb[0].mxu0
    %v9538 = vpop.f32.mrb[0].mxu0
    %9539 = vdwg.mxu0
    %9540 = vmatprep.subr.bf16.mxu0 %v8118
    %9541 = vmatpush1.bf16.msra.mxu0 %v8117
    %9542 = vmatprep.subr.bf16.mxu0 %v8126
    %9543 = vmatpush1.bf16.msra.mxu0 %v8125
    %9544 = vmatprep.subr.bf16.mxu0 %v8134
    %9545 = vmatpush1.bf16.msra.mxu0 %v8133
    %9546 = vmatprep.subr.bf16.mxu0 %v8142
    %9547 = vmatpush1.bf16.msra.mxu0 %v8141
    %9548 = vmatprep.subr.bf16.mxu0 %v8150
    %9549 = vmatpush1.bf16.msra.mxu0 %v8149
    %9550 = vmatprep.subr.bf16.mxu0 %v8158
    %9551 = vmatpush1.bf16.msra.mxu0 %v8157
    %9552 = vmatprep.subr.bf16.mxu0 %v8166
    %9553 = vmatpush1.bf16.msra.mxu0 %v8165
    %9554 = vmatprep.subr.bf16.mxu0 %v8174
    %9555 = vmatpush1.bf16.msra.mxu0 %v8173
    %9556 = vmatprep.subr.bf16.mxu0 %v8182
    %9557 = vmatpush1.bf16.msra.mxu0 %v8181
    %9558 = vmatprep.subr.bf16.mxu0 %v8190
    %9559 = vmatpush1.bf16.msra.mxu0 %v8189
    %9560 = vmatprep.subr.bf16.mxu0 %v8198
    %9561 = vmatpush1.bf16.msra.mxu0 %v8197
    %9562 = vmatprep.subr.bf16.mxu0 %v8206
    %9563 = vmatpush1.bf16.msra.mxu0 %v8205
    %9564 = vmatprep.subr.bf16.mxu0 %v8214
    %9565 = vmatpush1.bf16.msra.mxu0 %v8213
    %9566 = vmatprep.subr.bf16.mxu0 %v8222
    %9567 = vmatpush1.bf16.msra.mxu0 %v8221
    %9568 = vmatprep.subr.bf16.mxu0 %v8230
    %9569 = vmatpush1.bf16.msra.mxu0 %v8229
    %9570 = vmatprep.subr.bf16.mxu0 %v8238
    %9571 = vmatpush1.bf16.msra.mxu0 %v8237
    %9572 = vmatprep.mubr.bf16.mxu0 %v5880
    %9573 = vmatmul.mubr.bf16.gmra.mrb[0].mxu0 %v5879
    %v9574 = vpop.f32.mrb[0].mxu0
    %v9575 = vadd.f32 %v9534, %v9574
    %v9576 = vpop.f32.mrb[0].mxu0
    %v9577 = vadd.f32 %v9536, %v9576
    %v9578 = vpop.f32.mrb[0].mxu0
    %v9579 = vpop.f32.mrb[0].mxu0
    %9580 = vdwg.mxu0
    %9581 = vmatprep.subr.bf16.mxu0 %v8246
    %9582 = vmatpush1.bf16.msra.mxu0 %v8245
    %9583 = vmatprep.subr.bf16.mxu0 %v8254
    %9584 = vmatpush1.bf16.msra.mxu0 %v8253
    %9585 = vmatprep.subr.bf16.mxu0 %v8262
    %9586 = vmatpush1.bf16.msra.mxu0 %v8261
    %9587 = vmatprep.subr.bf16.mxu0 %v8270
    %9588 = vmatpush1.bf16.msra.mxu0 %v8269
    %9589 = vmatprep.subr.bf16.mxu0 %v8278
    %9590 = vmatpush1.bf16.msra.mxu0 %v8277
    %9591 = vmatprep.subr.bf16.mxu0 %v8286
    %9592 = vmatpush1.bf16.msra.mxu0 %v8285
    %9593 = vmatprep.subr.bf16.mxu0 %v8294
    %9594 = vmatpush1.bf16.msra.mxu0 %v8293
    %9595 = vmatprep.subr.bf16.mxu0 %v8302
    %9596 = vmatpush1.bf16.msra.mxu0 %v8301
    %9597 = vmatprep.subr.bf16.mxu0 %v8310
    %9598 = vmatpush1.bf16.msra.mxu0 %v8309
    %9599 = vmatprep.subr.bf16.mxu0 %v8318
    %9600 = vmatpush1.bf16.msra.mxu0 %v8317
    %9601 = vmatprep.subr.bf16.mxu0 %v8326
    %9602 = vmatpush1.bf16.msra.mxu0 %v8325
    %9603 = vmatprep.subr.bf16.mxu0 %v8334
    %9604 = vmatpush1.bf16.msra.mxu0 %v8333
    %9605 = vmatprep.subr.bf16.mxu0 %v8342
    %9606 = vmatpush1.bf16.msra.mxu0 %v8341
    %9607 = vmatprep.subr.bf16.mxu0 %v8350
    %9608 = vmatpush1.bf16.msra.mxu0 %v8349
    %9609 = vmatprep.subr.bf16.mxu0 %v8358
    %9610 = vmatpush1.bf16.msra.mxu0 %v8357
    %9611 = vmatprep.subr.bf16.mxu0 %v8366
    %9612 = vmatpush1.bf16.msra.mxu0 %v8365
    %9613 = vmatprep.mubr.bf16.mxu0 %v5882
    %9614 = vmatmul.mubr.bf16.gmra.mrb[0].mxu0 %v5881
    %v9615 = vpop.f32.mrb[0].mxu0
    %v9616 = vadd.f32 %v9575, %v9615
    %v9617 = vpop.f32.mrb[0].mxu0
    %v9618 = vadd.f32 %v9577, %v9617
    %v9619 = vpop.f32.mrb[0].mxu0
    %v9620 = vpop.f32.mrb[0].mxu0
    %9621 = vdwg.mxu0
    %9622 = vmatprep.subr.bf16.mxu0 %v8374
    %9623 = vmatpush1.bf16.msra.mxu0 %v8373
    %9624 = vmatprep.subr.bf16.mxu0 %v8382
    %9625 = vmatpush1.bf16.msra.mxu0 %v8381
    %9626 = vmatprep.subr.bf16.mxu0 %v8390
    %9627 = vmatpush1.bf16.msra.mxu0 %v8389
    %9628 = vmatprep.subr.bf16.mxu0 %v8398
    %9629 = vmatpush1.bf16.msra.mxu0 %v8397
    %9630 = vmatprep.subr.bf16.mxu0 %v8406
    %9631 = vmatpush1.bf16.msra.mxu0 %v8405
    %9632 = vmatprep.subr.bf16.mxu0 %v8414
    %9633 = vmatpush1.bf16.msra.mxu0 %v8413
    %9634 = vmatprep.subr.bf16.mxu0 %v8422
    %9635 = vmatpush1.bf16.msra.mxu0 %v8421
    %9636 = vmatprep.subr.bf16.mxu0 %v8430
    %9637 = vmatpush1.bf16.msra.mxu0 %v8429
    %9638 = vmatprep.subr.bf16.mxu0 %v8438
    %9639 = vmatpush1.bf16.msra.mxu0 %v8437
    %9640 = vmatprep.subr.bf16.mxu0 %v8446
    %9641 = vmatpush1.bf16.msra.mxu0 %v8445
    %9642 = vmatprep.subr.bf16.mxu0 %v8454
    %9643 = vmatpush1.bf16.msra.mxu0 %v8453
    %9644 = vmatprep.subr.bf16.mxu0 %v8462
    %9645 = vmatpush1.bf16.msra.mxu0 %v8461
    %9646 = vmatprep.subr.bf16.mxu0 %v8470
    %9647 = vmatpush1.bf16.msra.mxu0 %v8469
    %9648 = vmatprep.subr.bf16.mxu0 %v8478
    %9649 = vmatpush1.bf16.msra.mxu0 %v8477
    %9650 = vmatprep.subr.bf16.mxu0 %v8486
    %9651 = vmatpush1.bf16.msra.mxu0 %v8485
    %9652 = vmatprep.subr.bf16.mxu0 %v8494
    %9653 = vmatpush1.bf16.msra.mxu0 %v8493
    %9654 = vmatprep.mubr.bf16.mxu0 %v5884
    %9655 = vmatmul.mubr.bf16.gmra.mrb[0].mxu0 %v5883
    %v9656 = vpop.f32.mrb[0].mxu0
    %v9657 = vadd.f32 %v9616, %v9656
    %v9658 = vpop.f32.mrb[0].mxu0
    %v9659 = vadd.f32 %v9618, %v9658
    %v9660 = vpop.f32.mrb[0].mxu0
    %v9661 = vpop.f32.mrb[0].mxu0
    %9662 = vdwg.mxu0
    %v9671 = vcombine.low %v9165, %v9167
    %v9672 = vcombine.low %v9329, %v9331
    %v9674 = vunpack.c.l.s4 1983009808
    %v9675 = vunpack.c.0.s8 %v9674
    %v9676 = vlaneseq
    %v9677 = vshrl.u32 %v9676, 7
    %v9678 = vsub.s32 %v9675, %v9677
    %v9679 = vrot.slane %v9671, %v9678
    %v9681 = vunpack.c.l.s4 1983009808
    %v9682 = vunpack.c.0.s8 %v9681
    %v9683 = vlaneseq
    %v9684 = vshrl.u32 %v9683, 7
    %v9685 = vsub.s32 %v9682, %v9684
    %v9686 = vrot.slane %v9672, %v9685
    %v9687 = vcombine.low %v9679, %v9686
    %v9688 = vcombine.low %v9493, %v9495
    %v9689 = vcombine.low %v9657, %v9659
    %v9691 = vunpack.c.l.s4 1983009808
    %v9692 = vunpack.c.0.s8 %v9691
    %v9693 = vlaneseq
    %v9694 = vshrl.u32 %v9693, 7
    %v9695 = vsub.s32 %v9692, %v9694
    %v9696 = vrot.slane %v9688, %v9695
    %v9698 = vunpack.c.l.s4 1983009808
    %v9699 = vunpack.c.0.s8 %v9698
    %v9700 = vlaneseq
    %v9701 = vshrl.u32 %v9700, 7
    %v9702 = vsub.s32 %v9699, %v9701
    %v9703 = vrot.slane %v9689, %v9702
    %v9704 = vcombine.low %v9696, %v9703
    %9707 = vst [vmem:[#allocation13] sm:$0xff] %v9687
    %9708 = vst [vmem:[#allocation13 + $0x8] sm:$0xff] %v9704
    %v9709 = vld [vmem:[%s5] sm:$0xf]
    %v9710 = vld [vmem:[%s5 + $0x4] sm:$0xf]
    %v9711 = vld [vmem:[%s5 + $0x8] sm:$0xf]
    %v9712 = vld [vmem:[%s5 + $0xc] sm:$0xf]
    %v9713 = vld [vmem:[%s5 + $0x10] sm:$0xf]
    %v9714 = vld [vmem:[%s5 + $0x14] sm:$0xf]
    %v9715 = vld [vmem:[%s5 + $0x18] sm:$0xf]
    %v9716 = vld [vmem:[%s5 + $0x1c] sm:$0xf]
    %v9717 = vld [vmem:[%s5 + $0x20] sm:$0xf]
    %v9718 = vld [vmem:[%s5 + $0x24] sm:$0xf]
    %v9719 = vld [vmem:[%s5 + $0x28] sm:$0xf]
    %v9720 = vld [vmem:[%s5 + $0x2c] sm:$0xf]
    %v9721 = vld [vmem:[%s5 + $0x30] sm:$0xf]
    %v9722 = vld [vmem:[%s5 + $0x34] sm:$0xf]
    %v9723 = vld [vmem:[%s5 + $0x38] sm:$0xf]
    %v9724 = vld [vmem:[%s5 + $0x3c] sm:$0xf]
    %v9725 = vld [vmem:[%s5 + $0x40] sm:$0xf]
    %v9726 = vld [vmem:[%s5 + $0x44] sm:$0xf]
    %v9727 = vld [vmem:[%s5 + $0x48] sm:$0xf]
    %v9728 = vld [vmem:[%s5 + $0x4c] sm:$0xf]
    %v9729 = vld [vmem:[%s5 + $0x50] sm:$0xf]
    %v9730 = vld [vmem:[%s5 + $0x54] sm:$0xf]
    %v9731 = vld [vmem:[%s5 + $0x58] sm:$0xf]
    %v9732 = vld [vmem:[%s5 + $0x5c] sm:$0xf]
    %v9733 = vld [vmem:[%s5 + $0x60] sm:$0xf]
    %v9734 = vld [vmem:[%s5 + $0x64] sm:$0xf]
    %v9735 = vld [vmem:[%s5 + $0x68] sm:$0xf]
    %v9736 = vld [vmem:[%s5 + $0x6c] sm:$0xf]
    %v9737 = vld [vmem:[%s5 + $0x70] sm:$0xf]
    %v9738 = vld [vmem:[%s5 + $0x74] sm:$0xf]
    %v9739 = vld [vmem:[%s5 + $0x78] sm:$0xf]
    %v9740 = vld [vmem:[%s5 + $0x7c] sm:$0xf]
    %v9741 = vld [vmem:[%s5 + $0x80] sm:$0xf]
    %v9742 = vld [vmem:[%s5 + $0x84] sm:$0xf]
    %v9743 = vld [vmem:[%s5 + $0x88] sm:$0xf]
    %v9744 = vld [vmem:[%s5 + $0x8c] sm:$0xf]
    %v9745 = vld [vmem:[%s5 + $0x90] sm:$0xf]
    %v9746 = vld [vmem:[%s5 + $0x94] sm:$0xf]
    %v9747 = vld [vmem:[%s5 + $0x98] sm:$0xf]
    %v9748 = vld [vmem:[%s5 + $0x9c] sm:$0xf]
    %v9749 = vld [vmem:[%s5 + $0xa0] sm:$0xf]
    %v9750 = vld [vmem:[%s5 + $0xa4] sm:$0xf]
    %v9751 = vld [vmem:[%s5 + $0xa8] sm:$0xf]
    %v9752 = vld [vmem:[%s5 + $0xac] sm:$0xf]
    %v9753 = vld [vmem:[%s5 + $0xb0] sm:$0xf]
    %v9754 = vld [vmem:[%s5 + $0xb4] sm:$0xf]
    %v9755 = vld [vmem:[%s5 + $0xb8] sm:$0xf]
    %v9756 = vld [vmem:[%s5 + $0xbc] sm:$0xf]
    %v9757 = vld [vmem:[%s5 + $0xc0] sm:$0x1]
    %v9758 = vld [vmem:[#allocation10] sm:$0x1]
    %v9760 = vlaneseq
    %v9761 = vshrl.u32 %v9760, 7
    %v9762 = vsub.s32 0, %v9761
    %v9763 = vrot.slane %v9758, %v9762
    %v9814 = vunpack.c.l.b16 %v9709
    %v9815 = vunpack.c.l.b16 %v9710
    %v9816 = vunpack.c.l.b16 %v9711
    %v9817 = vunpack.c.l.b16 %v9712
    %v9818 = vunpack.c.l.b16 %v9713
    %v9819 = vunpack.c.l.b16 %v9714
    %v9820 = vunpack.c.l.b16 %v9715
    %v9821 = vunpack.c.l.b16 %v9716
    %v9822 = vunpack.c.l.b16 %v9717
    %v9823 = vunpack.c.l.b16 %v9718
    %v9824 = vunpack.c.l.b16 %v9719
    %v9825 = vunpack.c.l.b16 %v9720
    %v9826 = vunpack.c.l.b16 %v9721
    %v9827 = vunpack.c.l.b16 %v9722
    %v9828 = vunpack.c.l.b16 %v9723
    %v9829 = vunpack.c.l.b16 %v9724
    %v9830 = vunpack.c.l.b16 %v9725
    %v9831 = vunpack.c.l.b16 %v9726
    %v9832 = vunpack.c.l.b16 %v9727
    %v9833 = vunpack.c.l.b16 %v9728
    %v9834 = vunpack.c.l.b16 %v9729
    %v9835 = vunpack.c.l.b16 %v9730
    %v9836 = vunpack.c.l.b16 %v9731
    %v9837 = vunpack.c.l.b16 %v9732
    %v9838 = vunpack.c.l.b16 %v9733
    %v9839 = vunpack.c.l.b16 %v9734
    %v9840 = vunpack.c.l.b16 %v9735
    %v9841 = vunpack.c.l.b16 %v9736
    %v9842 = vunpack.c.l.b16 %v9737
    %v9843 = vunpack.c.l.b16 %v9738
    %v9844 = vunpack.c.l.b16 %v9739
    %v9845 = vunpack.c.l.b16 %v9740
    %v9846 = vunpack.c.l.b16 %v9741
    %v9847 = vunpack.c.l.b16 %v9742
    %v9848 = vunpack.c.l.b16 %v9743
    %v9849 = vunpack.c.l.b16 %v9744
    %v9850 = vunpack.c.l.b16 %v9745
    %v9851 = vunpack.c.l.b16 %v9746
    %v9852 = vunpack.c.l.b16 %v9747
    %v9853 = vunpack.c.l.b16 %v9748
    %v9854 = vunpack.c.l.b16 %v9749
    %v9855 = vunpack.c.l.b16 %v9750
    %v9856 = vunpack.c.l.b16 %v9751
    %v9857 = vunpack.c.l.b16 %v9752
    %v9858 = vunpack.c.l.b16 %v9753
    %v9859 = vunpack.c.l.b16 %v9754
    %v9860 = vunpack.c.l.b16 %v9755
    %v9861 = vunpack.c.l.b16 %v9756
    %v9862 = vunpack.c.l.b16 %v9757
    %v9863 = vpack.c.b16 %v9815, %v9814
    %v9864 = vpack.c.b16 %v9817, %v9816
    %v9865 = vpack.c.b16 %v9819, %v9818
    %v9866 = vpack.c.b16 %v9821, %v9820
    %v9867 = vpack.c.b16 %v9823, %v9822
    %v9868 = vpack.c.b16 %v9825, %v9824
    %v9869 = vpack.c.b16 %v9827, %v9826
    %v9870 = vpack.c.b16 %v9829, %v9828
    %v9871 = vpack.c.b16 %v9831, %v9830
    %v9872 = vpack.c.b16 %v9833, %v9832
    %v9873 = vpack.c.b16 %v9835, %v9834
    %v9874 = vpack.c.b16 %v9837, %v9836
    %v9875 = vpack.c.b16 %v9839, %v9838
    %v9876 = vpack.c.b16 %v9841, %v9840
    %v9877 = vpack.c.b16 %v9843, %v9842
    %v9878 = vpack.c.b16 %v9845, %v9844
    %v9879 = vpack.c.b16 %v9847, %v9846
    %v9880 = vpack.c.b16 %v9849, %v9848
    %v9881 = vpack.c.b16 %v9851, %v9850
    %v9882 = vpack.c.b16 %v9853, %v9852
    %v9883 = vpack.c.b16 %v9855, %v9854
    %v9884 = vpack.c.b16 %v9857, %v9856
    %v9885 = vpack.c.b16 %v9859, %v9858
    %v9886 = vpack.c.b16 %v9861, %v9860
    %v9887 = vpack.c.b16 %v9862, %v9862
    %vm9912 = vcmask 15360
    %v9914 = vsel %vm9912, %v5888, 0
    %vm9916 = vcmask 1040384
    %v9918 = vsel %vm9916, %v9887, 0
    %9920 = vmatprep.subr.bf16.mxu0 0
    %9921 = vmatpush1.bf16.msra.mxu0 %v9863
    %9922 = vmatprep.subr.bf16.mxu0 0
    %9923 = vmatpush1.bf16.msra.mxu0 %v9864
    %9924 = vmatprep.subr.bf16.mxu0 0
    %9925 = vmatpush1.bf16.msra.mxu0 %v9865
    %9926 = vmatprep.subr.bf16.mxu0 0
    %9927 = vmatpush1.bf16.msra.mxu0 %v9866
    %9928 = vmatprep.subr.bf16.mxu0 0
    %9929 = vmatpush1.bf16.msra.mxu0 %v9867
    %9930 = vmatprep.subr.bf16.mxu0 0
    %9931 = vmatpush1.bf16.msra.mxu0 %v9868
    %9932 = vmatprep.subr.bf16.mxu0 0
    %9933 = vmatpush1.bf16.msra.mxu0 %v9869
    %9934 = vmatprep.subr.bf16.mxu0 0
    %9935 = vmatpush1.bf16.msra.mxu0 %v9870
    %9936 = vmatprep.subr.bf16.mxu0 0
    %9937 = vmatpush1.bf16.msra.mxu0 %v9871
    %9938 = vmatprep.subr.bf16.mxu0 0
    %9939 = vmatpush1.bf16.msra.mxu0 %v9872
    %9940 = vmatprep.subr.bf16.mxu0 0
    %9941 = vmatpush1.bf16.msra.mxu0 %v9873
    %9942 = vmatprep.subr.bf16.mxu0 0
    %9943 = vmatpush1.bf16.msra.mxu0 %v9874
    %9944 = vmatprep.subr.bf16.mxu0 0
    %9945 = vmatpush1.bf16.msra.mxu0 %v9875
    %9946 = vmatprep.subr.bf16.mxu0 0
    %9947 = vmatpush1.bf16.msra.mxu0 %v9876
    %9948 = vmatprep.subr.bf16.mxu0 0
    %9949 = vmatpush1.bf16.msra.mxu0 %v9877
    %9950 = vmatprep.subr.bf16.mxu0 0
    %9951 = vmatpush1.bf16.msra.mxu0 %v9878
    %9952 = vmatprep.mubr.bf16.mxu0 %v5886
    %9953 = vmatmul.mubr.bf16.gmra.mrb[0].mxu0 %v5885
    %v9954 = vpop.f32.mrb[0].mxu0
    %v9955 = vadd.f32 %v9763, %v9954
    %v9956 = vpop.f32.mrb[0].mxu0
    %v9957 = vpop.f32.mrb[0].mxu0
    %v9958 = vpop.f32.mrb[0].mxu0
    %9959 = vdwg.mxu0
    %9960 = vmatprep.subr.bf16.mxu0 0
    %9961 = vmatpush1.bf16.msra.mxu0 %v9879
    %9962 = vmatprep.subr.bf16.mxu0 0
    %9963 = vmatpush1.bf16.msra.mxu0 %v9880
    %9964 = vmatprep.subr.bf16.mxu0 0
    %9965 = vmatpush1.bf16.msra.mxu0 %v9881
    %9966 = vmatprep.subr.bf16.mxu0 0
    %9967 = vmatpush1.bf16.msra.mxu0 %v9882
    %9968 = vmatprep.subr.bf16.mxu0 0
    %9969 = vmatpush1.bf16.msra.mxu0 %v9883
    %9970 = vmatprep.subr.bf16.mxu0 0
    %9971 = vmatpush1.bf16.msra.mxu0 %v9884
    %9972 = vmatprep.subr.bf16.mxu0 0
    %9973 = vmatpush1.bf16.msra.mxu0 %v9885
    %9974 = vmatprep.subr.bf16.mxu0 0
    %9975 = vmatpush1.bf16.msra.mxu0 %v9886
    %9976 = vmatprep.subr.bf16.mxu0 0
    %9977 = vmatpush1.bf16.msra.mxu0 %v9918
    %9978 = vmatprep.subr.bf16.mxu0 0
    %9979 = vmatpush1.bf16.msra.mxu0 0
    %9980 = vmatprep.subr.bf16.mxu0 0
    %9981 = vmatpush1.bf16.msra.mxu0 0
    %9982 = vmatprep.subr.bf16.mxu0 0
    %9983 = vmatpush1.bf16.msra.mxu0 0
    %9984 = vmatprep.subr.bf16.mxu0 0
    %9985 = vmatpush1.bf16.msra.mxu0 0
    %9986 = vmatprep.subr.bf16.mxu0 0
    %9987 = vmatpush1.bf16.msra.mxu0 0
    %9988 = vmatprep.subr.bf16.mxu0 0
    %9989 = vmatpush1.bf16.msra.mxu0 0
    %9990 = vmatprep.subr.bf16.mxu0 0
    %9991 = vmatpush1.bf16.msra.mxu0 0
    %9992 = vmatprep.mubr.bf16.mxu0 %v9914
    %9993 = vmatmul.mubr.bf16.gmra.mrb[0].mxu0 %v5887
    %v9994 = vpop.f32.mrb[0].mxu0
    %v9995 = vadd.f32 %v9955, %v9994
    %v9996 = vpop.f32.mrb[0].mxu0
    %v9997 = vpop.f32.mrb[0].mxu0
    %v9998 = vpop.f32.mrb[0].mxu0
    %9999 = vdwg.mxu0
    %vm10000 = vcmask 25600
    %10001 = vst.msk [vmem:[#allocation14] sm:$0x3] %vm10000, %v9995
    %v10002 = vld [vmem:[%s7] sm:$0xf]
    %v10003 = vld [vmem:[%s7 + $0x4] sm:$0xf]
    %v10004 = vld [vmem:[%s7 + $0x8] sm:$0xf]
    %v10005 = vld [vmem:[%s7 + $0xc] sm:$0xf]
    %v10006 = vld [vmem:[%s7 + $0x10] sm:$0xf]
    %v10007 = vld [vmem:[%s7 + $0x14] sm:$0xf]
    %v10008 = vld [vmem:[%s7 + $0x18] sm:$0xf]
    %v10009 = vld [vmem:[%s7 + $0x1c] sm:$0xf]
    %v10010 = vld [vmem:[%s7 + $0x20] sm:$0xf]
    %v10011 = vld [vmem:[%s7 + $0x24] sm:$0xf]
    %v10012 = vld [vmem:[%s7 + $0x28] sm:$0xf]
    %v10013 = vld [vmem:[%s7 + $0x2c] sm:$0xf]
    %v10014 = vld [vmem:[%s7 + $0x30] sm:$0xf]
    %v10015 = vld [vmem:[%s7 + $0x34] sm:$0xf]
    %v10016 = vld [vmem:[%s7 + $0x38] sm:$0xf]
    %v10017 = vld [vmem:[%s7 + $0x3c] sm:$0xf]
    %v10018 = vld [vmem:[%s7 + $0x40] sm:$0xf]
    %v10019 = vld [vmem:[%s7 + $0x44] sm:$0xf]
    %v10020 = vld [vmem:[%s7 + $0x48] sm:$0xf]
    %v10021 = vld [vmem:[%s7 + $0x4c] sm:$0xf]
    %v10022 = vld [vmem:[%s7 + $0x50] sm:$0xf]
    %v10023 = vld [vmem:[%s7 + $0x54] sm:$0xf]
    %v10024 = vld [vmem:[%s7 + $0x58] sm:$0xf]
    %v10025 = vld [vmem:[%s7 + $0x5c] sm:$0xf]
    %v10026 = vld [vmem:[%s7 + $0x60] sm:$0xf]
    %v10027 = vld [vmem:[%s7 + $0x64] sm:$0xf]
    %v10028 = vld [vmem:[%s7 + $0x68] sm:$0xf]
    %v10029 = vld [vmem:[%s7 + $0x6c] sm:$0xf]
    %v10030 = vld [vmem:[%s7 + $0x70] sm:$0xf]
    %v10031 = vld [vmem:[%s7 + $0x74] sm:$0xf]
    %v10032 = vld [vmem:[%s7 + $0x78] sm:$0xf]
    %v10033 = vld [vmem:[%s7 + $0x7c] sm:$0xf]
    %v10034 = vld [vmem:[%s7 + $0x80] sm:$0xf]
    %v10035 = vld [vmem:[%s7 + $0x84] sm:$0xf]
    %v10036 = vld [vmem:[%s7 + $0x88] sm:$0xf]
    %v10037 = vld [vmem:[%s7 + $0x8c] sm:$0xf]
    %v10038 = vld [vmem:[%s7 + $0x90] sm:$0xf]
    %v10039 = vld [vmem:[%s7 + $0x94] sm:$0xf]
    %v10040 = vld [vmem:[%s7 + $0x98] sm:$0xf]
    %v10041 = vld [vmem:[%s7 + $0x9c] sm:$0xf]
    %v10042 = vld [vmem:[%s7 + $0xa0] sm:$0xf]
    %v10043 = vld [vmem:[%s7 + $0xa4] sm:$0xf]
    %v10044 = vld [vmem:[%s7 + $0xa8] sm:$0xf]
    %v10045 = vld [vmem:[%s7 + $0xac] sm:$0xf]
    %v10046 = vld [vmem:[%s7 + $0xb0] sm:$0xf]
    %v10047 = vld [vmem:[%s7 + $0xb4] sm:$0xf]
    %v10048 = vld [vmem:[%s7 + $0xb8] sm:$0xf]
    %v10049 = vld [vmem:[%s7 + $0xbc] sm:$0xf]
    %v10050 = vld [vmem:[%s7 + $0xc0] sm:$0x1]
    %v10051 = vld [vmem:[#allocation11] sm:$0x1]
    %v10053 = vlaneseq
    %v10054 = vshrl.u32 %v10053, 7
    %v10055 = vsub.s32 0, %v10054
    %v10056 = vrot.slane %v10051, %v10055
    %v10107 = vunpack.c.l.b16 %v10002
    %v10108 = vunpack.c.l.b16 %v10003
    %v10109 = vunpack.c.l.b16 %v10004
    %v10110 = vunpack.c.l.b16 %v10005
    %v10111 = vunpack.c.l.b16 %v10006
    %v10112 = vunpack.c.l.b16 %v10007
    %v10113 = vunpack.c.l.b16 %v10008
    %v10114 = vunpack.c.l.b16 %v10009
    %v10115 = vunpack.c.l.b16 %v10010
    %v10116 = vunpack.c.l.b16 %v10011
    %v10117 = vunpack.c.l.b16 %v10012
    %v10118 = vunpack.c.l.b16 %v10013
    %v10119 = vunpack.c.l.b16 %v10014
    %v10120 = vunpack.c.l.b16 %v10015
    %v10121 = vunpack.c.l.b16 %v10016
    %v10122 = vunpack.c.l.b16 %v10017
    %v10123 = vunpack.c.l.b16 %v10018
    %v10124 = vunpack.c.l.b16 %v10019
    %v10125 = vunpack.c.l.b16 %v10020
    %v10126 = vunpack.c.l.b16 %v10021
    %v10127 = vunpack.c.l.b16 %v10022
    %v10128 = vunpack.c.l.b16 %v10023
    %v10129 = vunpack.c.l.b16 %v10024
    %v10130 = vunpack.c.l.b16 %v10025
    %v10131 = vunpack.c.l.b16 %v10026
    %v10132 = vunpack.c.l.b16 %v10027
    %v10133 = vunpack.c.l.b16 %v10028
    %v10134 = vunpack.c.l.b16 %v10029
    %v10135 = vunpack.c.l.b16 %v10030
    %v10136 = vunpack.c.l.b16 %v10031
    %v10137 = vunpack.c.l.b16 %v10032
    %v10138 = vunpack.c.l.b16 %v10033
    %v10139 = vunpack.c.l.b16 %v10034
    %v10140 = vunpack.c.l.b16 %v10035
    %v10141 = vunpack.c.l.b16 %v10036
    %v10142 = vunpack.c.l.b16 %v10037
    %v10143 = vunpack.c.l.b16 %v10038
    %v10144 = vunpack.c.l.b16 %v10039
    %v10145 = vunpack.c.l.b16 %v10040
    %v10146 = vunpack.c.l.b16 %v10041
    %v10147 = vunpack.c.l.b16 %v10042
    %v10148 = vunpack.c.l.b16 %v10043
    %v10149 = vunpack.c.l.b16 %v10044
    %v10150 = vunpack.c.l.b16 %v10045
    %v10151 = vunpack.c.l.b16 %v10046
    %v10152 = vunpack.c.l.b16 %v10047
    %v10153 = vunpack.c.l.b16 %v10048
    %v10154 = vunpack.c.l.b16 %v10049
    %v10155 = vunpack.c.l.b16 %v10050
    %v10156 = vpack.c.b16 %v10108, %v10107
    %v10157 = vpack.c.b16 %v10110, %v10109
    %v10158 = vpack.c.b16 %v10112, %v10111
    %v10159 = vpack.c.b16 %v10114, %v10113
    %v10160 = vpack.c.b16 %v10116, %v10115
    %v10161 = vpack.c.b16 %v10118, %v10117
    %v10162 = vpack.c.b16 %v10120, %v10119
    %v10163 = vpack.c.b16 %v10122, %v10121
    %v10164 = vpack.c.b16 %v10124, %v10123
    %v10165 = vpack.c.b16 %v10126, %v10125
    %v10166 = vpack.c.b16 %v10128, %v10127
    %v10167 = vpack.c.b16 %v10130, %v10129
    %v10168 = vpack.c.b16 %v10132, %v10131
    %v10169 = vpack.c.b16 %v10134, %v10133
    %v10170 = vpack.c.b16 %v10136, %v10135
    %v10171 = vpack.c.b16 %v10138, %v10137
    %v10172 = vpack.c.b16 %v10140, %v10139
    %v10173 = vpack.c.b16 %v10142, %v10141
    %v10174 = vpack.c.b16 %v10144, %v10143
    %v10175 = vpack.c.b16 %v10146, %v10145
    %v10176 = vpack.c.b16 %v10148, %v10147
    %v10177 = vpack.c.b16 %v10150, %v10149
    %v10178 = vpack.c.b16 %v10152, %v10151
    %v10179 = vpack.c.b16 %v10154, %v10153
    %v10180 = vpack.c.b16 %v10155, %v10155
    %vm10205 = vcmask 7168
    %v10207 = vsel %vm10205, %v5892, 0
    %v10209 = vsel 0, 4294967295, 65535
    %v10210 = vsel %vm9916, %v10209, 0
    %v10212 = vand.u32 %v10180, %v10210
    %10214 = vmatprep.subr.bf16.mxu0 0
    %10215 = vmatpush1.bf16.msra.mxu0 %v10156
    %10216 = vmatprep.subr.bf16.mxu0 0
    %10217 = vmatpush1.bf16.msra.mxu0 %v10157
    %10218 = vmatprep.subr.bf16.mxu0 0
    %10219 = vmatpush1.bf16.msra.mxu0 %v10158
    %10220 = vmatprep.subr.bf16.mxu0 0
    %10221 = vmatpush1.bf16.msra.mxu0 %v10159
    %10222 = vmatprep.subr.bf16.mxu0 0
    %10223 = vmatpush1.bf16.msra.mxu0 %v10160
    %10224 = vmatprep.subr.bf16.mxu0 0
    %10225 = vmatpush1.bf16.msra.mxu0 %v10161
    %10226 = vmatprep.subr.bf16.mxu0 0
    %10227 = vmatpush1.bf16.msra.mxu0 %v10162
    %10228 = vmatprep.subr.bf16.mxu0 0
    %10229 = vmatpush1.bf16.msra.mxu0 %v10163
    %10230 = vmatprep.subr.bf16.mxu0 0
    %10231 = vmatpush1.bf16.msra.mxu0 %v10164
    %10232 = vmatprep.subr.bf16.mxu0 0
    %10233 = vmatpush1.bf16.msra.mxu0 %v10165
    %10234 = vmatprep.subr.bf16.mxu0 0
    %10235 = vmatpush1.bf16.msra.mxu0 %v10166
    %10236 = vmatprep.subr.bf16.mxu0 0
    %10237 = vmatpush1.bf16.msra.mxu0 %v10167
    %10238 = vmatprep.subr.bf16.mxu0 0
    %10239 = vmatpush1.bf16.msra.mxu0 %v10168
    %10240 = vmatprep.subr.bf16.mxu0 0
    %10241 = vmatpush1.bf16.msra.mxu0 %v10169
    %10242 = vmatprep.subr.bf16.mxu0 0
    %10243 = vmatpush1.bf16.msra.mxu0 %v10170
    %10244 = vmatprep.subr.bf16.mxu0 0
    %10245 = vmatpush1.bf16.msra.mxu0 %v10171
    %10246 = vmatprep.mubr.bf16.mxu0 %v5890
    %10247 = vmatmul.mubr.bf16.gmra.mrb[0].mxu0 %v5889
    %v10248 = vpop.f32.mrb[0].mxu0
    %v10249 = vadd.f32 %v10056, %v10248
    %v10250 = vpop.f32.mrb[0].mxu0
    %v10251 = vpop.f32.mrb[0].mxu0
    %v10252 = vpop.f32.mrb[0].mxu0
    %10253 = vdwg.mxu0
    %10254 = vmatprep.subr.bf16.mxu0 0
    %10255 = vmatpush1.bf16.msra.mxu0 %v10172
    %10256 = vmatprep.subr.bf16.mxu0 0
    %10257 = vmatpush1.bf16.msra.mxu0 %v10173
    %10258 = vmatprep.subr.bf16.mxu0 0
    %10259 = vmatpush1.bf16.msra.mxu0 %v10174
    %10260 = vmatprep.subr.bf16.mxu0 0
    %10261 = vmatpush1.bf16.msra.mxu0 %v10175
    %10262 = vmatprep.subr.bf16.mxu0 0
    %10263 = vmatpush1.bf16.msra.mxu0 %v10176
    %10264 = vmatprep.subr.bf16.mxu0 0
    %10265 = vmatpush1.bf16.msra.mxu0 %v10177
    %10266 = vmatprep.subr.bf16.mxu0 0
    %10267 = vmatpush1.bf16.msra.mxu0 %v10178
    %10268 = vmatprep.subr.bf16.mxu0 0
    %10269 = vmatpush1.bf16.msra.mxu0 %v10179
    %10270 = vmatprep.subr.bf16.mxu0 0
    %10271 = vmatpush1.bf16.msra.mxu0 %v10212
    %10272 = vmatprep.subr.bf16.mxu0 0
    %10273 = vmatpush1.bf16.msra.mxu0 0
    %10274 = vmatprep.subr.bf16.mxu0 0
    %10275 = vmatpush1.bf16.msra.mxu0 0
    %10276 = vmatprep.subr.bf16.mxu0 0
    %10277 = vmatpush1.bf16.msra.mxu0 0
    %10278 = vmatprep.subr.bf16.mxu0 0
    %10279 = vmatpush1.bf16.msra.mxu0 0
    %10280 = vmatprep.subr.bf16.mxu0 0
    %10281 = vmatpush1.bf16.msra.mxu0 0
    %10282 = vmatprep.subr.bf16.mxu0 0
    %10283 = vmatpush1.bf16.msra.mxu0 0
    %10284 = vmatprep.subr.bf16.mxu0 0
    %10285 = vmatpush1.bf16.msra.mxu0 0
    %10286 = vmatprep.mubr.bf16.mxu0 %v10207
    %10287 = vmatmul.mubr.bf16.gmra.mrb[0].mxu0 %v5891
    %v10288 = vpop.f32.mrb[0].mxu0
    %v10289 = vadd.f32 %v10249, %v10288
    %v10290 = vpop.f32.mrb[0].mxu0
    %v10291 = vpop.f32.mrb[0].mxu0
    %v10292 = vpop.f32.mrb[0].mxu0
    %10293 = vdwg.mxu0
    %vm10294 = vcmask 9216
    %10295 = vst.msk [vmem:[#allocation16] sm:$0x3] %vm10294, %v10289
    // Predicated region
    $region62: #{conv_autoencoder_forward.3} parent=1 // pred_check
      _
    $region63: #{conv_autoencoder_forward.3} parent=1 // pred_check_branch
      %10297 = sbr.rel (0) target = $region65
    $region64: #{conv_autoencoder_forward.3} parent=1 // pred_region
      %s10299 = ssub.s32 256, 256
      %10300 = vsyncadd [#allocation4], %s10299
      %s10302 = sshll.u32 [#allocation13], 4
      %s10303 = int_to_ptr.vmem [resolvable:$true] %s10302
      %10305 = dma.vmem_to_hbm [thread:$0]  %s10303, 256, %s9, [#allocation4]
    $region65: #{conv_autoencoder_forward.3} parent=1 // pred_fallthru
      _
    // Predicated region
    $region66: #{conv_autoencoder_forward.3} parent=1 // pred_check
      _
    $region67: #{conv_autoencoder_forward.3} parent=1 // pred_check_branch
      %10307 = sbr.rel (0) target = $region69
    $region68: #{conv_autoencoder_forward.3} parent=1 // pred_region
      %s10309 = ssub.s32 32, 32
      %10310 = vsyncadd [#allocation15], %s10309
      %s10312 = sshll.u32 [#allocation14], 4
      %s10313 = int_to_ptr.vmem [resolvable:$true] %s10312
      %10315 = dma.vmem_to_hbm [thread:$0]  %s10313, 32, %s10, [#allocation15]
    $region69: #{conv_autoencoder_forward.3} parent=1 // pred_fallthru
      _
    // Predicated region
    $region70: #{conv_autoencoder_forward.3} parent=1 // pred_check
      _
    $region71: #{conv_autoencoder_forward.3} parent=1 // pred_check_branch
      %10317 = sbr.rel (0) target = $region73
    $region72: #{conv_autoencoder_forward.3} parent=1 // pred_region
      %s10319 = ssub.s32 32, 32
      %10320 = vsyncadd [#allocation15], %s10319
      %s10322 = sshll.u32 [#allocation16], 4
      %s10323 = int_to_ptr.vmem [resolvable:$true] %s10322
      %10325 = dma.vmem_to_hbm [thread:$0]  %s10323, 32, %s11, [#allocation15]
    $region73: #{conv_autoencoder_forward.3} parent=1 // pred_fallthru
      _
    // Predicated region
    $region74: #{conv_autoencoder_forward.3} parent=1 // pred_check
      _
    $region75: #{conv_autoencoder_forward.3} parent=1 // pred_check_branch
      %10327 = sbr.rel (0) target = $region77
    $region76: #{conv_autoencoder_forward.3} parent=1 // pred_region
      %10328 = dma.done [#allocation4], 256
    $region77: #{conv_autoencoder_forward.3} parent=1 // pred_fallthru
      _
    // Predicated region
    $region78: #{conv_autoencoder_forward.3} parent=1 // pred_check
      _
    $region79: #{conv_autoencoder_forward.3} parent=1 // pred_check_branch
      %10330 = sbr.rel (0) target = $region81
    $region80: #{conv_autoencoder_forward.3} parent=1 // pred_region
      %10331 = dma.done [#allocation15], 32
    $region81: #{conv_autoencoder_forward.3} parent=1 // pred_fallthru
      _
    // Predicated region
    $region82: #{conv_autoencoder_forward.3} parent=1 // pred_check
      _
    $region83: #{conv_autoencoder_forward.3} parent=1 // pred_check_branch
      %10333 = sbr.rel (0) target = $region85
    $region84: #{conv_autoencoder_forward.3} parent=1 // pred_region
      %10334 = dma.done [#allocation15], 32
    $region85: #{conv_autoencoder_forward.3} parent=1 // pred_fallthru
      _
    %10335 = vsyncpa [#allocation3], 1
    %10336 = vsyncpa [#allocation6], 1
    %10337 = vsyncpa [#allocation9], 1
    %10338 = vsyncpa [#allocation12], 1
    %10339 = vsyncpa [#allocation4], 1
    %10340 = vsyncpa [#allocation15], 1

</llo_original>
